<compile_context>
chip_gen: v5e
topology: v5e:2x2
jax: 0.10.0
libtpu: 0.0.40
codegen_flags: <defaults>
</compile_context>

<pallas_src>
import math

import jax
import jax.numpy as jnp
from jax import lax
from jax.experimental import pallas as pl
from jax.experimental.pallas import tpu as pltpu

D_MODEL = 256
NHEAD = 4
HEAD_DIM = D_MODEL // NHEAD
NUM_LAYERS = 4
DIM_FF = 1024
LN_EPS = 1e-5          # nn.LayerNorm default
NEG_INF = -1e9         # additive mask value (softmax-equivalent to -inf)

_ARB = pltpu.CompilerParams(dimension_semantics=("arbitrary",))

# packed-vector row indices (encoder): bq bk bv bo ln1g ln1b b2 ln2g ln2b
E_BQ, E_BK, E_BV, E_BO, E_LN1G, E_LN1B, E_B2, E_LN2G, E_LN2B = range(9)
# packed-vector row indices (decoder): self(bq bk bv bo) ln1(g b) cross(bq bk bv bo) ln2(g b) b2 ln3(g b)
(D_SBQ, D_SBK, D_SBV, D_SBO, D_LN1G, D_LN1B,
 D_CBQ, D_CBK, D_CBV, D_CBO, D_LN2G, D_LN2B,
 D_B2, D_LN3G, D_LN3B) = range(15)


# ----------------------------- BlockSpec helpers -----------------------------

def _full_spec(a):
    """Full-array block, constant index map -> fetched once, resident across the layer grid."""
    zeros = (0,) * a.ndim
    return pl.BlockSpec(tuple(a.shape), lambda l: zeros)


def _layer_spec(a):
    """Per-layer block (1, *rest) indexed by the layer grid axis -> streamed/double-buffered."""
    trailing = (0,) * (a.ndim - 1)
    return pl.BlockSpec((1,) + tuple(a.shape[1:]), lambda l: (l,) + trailing)


# ----------------------------- in-kernel building blocks -----------------------------

def _layer_norm(y, g, b):
    mean = jnp.mean(y, axis=-1, keepdims=True)
    var = jnp.mean(jnp.square(y - mean), axis=-1, keepdims=True)
    return (y - mean) * lax.rsqrt(var + LN_EPS) * g + b


def _attention(xq, xkv, mask_add, wq, bq, wk, bk, wv, bv, wo, bo):
    """Multi-head attention on 2-D (rows, D) slabs (batch folded into rows).

    mask_add: additive f32 mask of shape (rows_q, rows_k) (cross-batch blocking + padding
    and/or causal structure).  bf16 matmul operands, f32 accumulation.
    """
    xq16 = xq.astype(jnp.bfloat16)
    xkv16 = xkv.astype(jnp.bfloat16)
    q = jnp.dot(xq16, wq, preferred_element_type=jnp.float32) + bq
    k = jnp.dot(xkv16, wk, preferred_element_type=jnp.float32) + bk
    v = jnp.dot(xkv16, wv, preferred_element_type=jnp.float32) + bv
    q16 = q.astype(jnp.bfloat16)
    k16 = k.astype(jnp.bfloat16)
    v16 = v.astype(jnp.bfloat16)
    scale = 1.0 / math.sqrt(HEAD_DIM)

    out = None
    for h in range(NHEAD):                      # static -> unrolled at trace time
        sl = slice(h * HEAD_DIM, (h + 1) * HEAD_DIM)
        qh, kh, vh = q16[:, sl], k16[:, sl], v16[:, sl]
        # q @ k^T via dot_general (contract last dims) -- no explicit transpose materialized.
        s = lax.dot_general(qh, kh, (((1,), (1,)), ((), ())),
                            preferred_element_type=jnp.float32) * scale
        s = s + mask_add
        s = s - jnp.max(s, axis=-1, keepdims=True)
        p = jnp.exp(s)
        p = p / jnp.sum(p, axis=-1, keepdims=True)
        ctx = jnp.dot(p.astype(jnp.bfloat16), vh, preferred_element_type=jnp.float32)
        # Fold the output projection per-head (accumulate), avoiding a lane-wise head concat.
        contrib = jnp.dot(ctx.astype(jnp.bfloat16), wo[sl, :],
                          preferred_element_type=jnp.float32)
        out = contrib if out is None else out + contrib
    return out + bo


def _ffn(x, w1, b1, w2, b2):
    h = jnp.dot(x.astype(jnp.bfloat16), w1, preferred_element_type=jnp.float32) + b1
    h = jnp.maximum(h, 0.0)
    return jnp.dot(h.astype(jnp.bfloat16), w2, preferred_element_type=jnp.float32) + b2


# ----------------------------- fused stack kernels -----------------------------

def _enc_stack_kernel(x_ref, mask_ref, aw_ref, w1_ref, w2_ref, vec_ref, b1_ref,
                      fin_ref, o_ref):
    l = pl.program_id(0)
    last = pl.num_programs(0) - 1

    # The output block (constant index map -> VMEM-resident across the layer axis) doubles as
    # the running activation; seed it from the embeddings on the first layer step.
    @pl.when(l == 0)
    def _():
        o_ref[...] = x_ref[...]

    x = o_ref[...]                           # (R, D) f32 running activation
    mask = mask_ref[...]                     # (R, R) additive mask (padding + cross-batch)
    vrow = lambda i: vec_ref[0, i:i + 1]     # (1, D) packed bias / LN rows

    a = _attention(x, x, mask,
                   aw_ref[0, 0], vrow(E_BQ), aw_ref[0, 1], vrow(E_BK),
                   aw_ref[0, 2], vrow(E_BV), aw_ref[0, 3], vrow(E_BO))
    x = _layer_norm(x + a, vrow(E_LN1G), vrow(E_LN1B))
    f = _ffn(x, w1_ref[0], b1_ref[0], w2_ref[0], vrow(E_B2))
    x = _layer_norm(x + f, vrow(E_LN2G), vrow(E_LN2B))

    @pl.when(l != last)
    def _():
        o_ref[...] = x

    @pl.when(l == last)
    def _():
        # Final encoder LayerNorm folded into the last layer step.
        o_ref[...] = _layer_norm(x, fin_ref[0:1], fin_ref[1:2])


def _dec_stack_kernel(y_ref, mem_ref, smask_ref, cmask_ref, aw_ref, w1_ref, w2_ref,
                      vec_ref, b1_ref, fin_ref, fcw_ref, fcb_ref, o_ref, act_ref):
    l = pl.program_id(0)
    last = pl.num_programs(0) - 1

    @pl.when(l == 0)
    def _():
        act_ref[...] = y_ref[...]

    y = act_ref[...]                         # (Rt, D) f32 running activation (VMEM scratch)
    mem = mem_ref[...]                       # (Rs, D) f32 encoder memory (resident)
    vrow = lambda i: vec_ref[0, i:i + 1]

    # masked (causal + cross-batch) self-attention
    a = _attention(y, y, smask_ref[...],
                   aw_ref[0, 0], vrow(D_SBQ), aw_ref[0, 1], vrow(D_SBK),
                   aw_ref[0, 2], vrow(D_SBV), aw_ref[0, 3], vrow(D_SBO))
    y = _layer_norm(y + a, vrow(D_LN1G), vrow(D_LN1B))
    # cross-attention (memory_key_padding_mask is None in the spec -> cross-batch block only)
    c = _attention(y, mem, cmask_ref[...],
                   aw_ref[0, 4], vrow(D_CBQ), aw_ref[0, 5], vrow(D_CBK),
                   aw_ref[0, 6], vrow(D_CBV), aw_ref[0, 7], vrow(D_CBO))
    y = _layer_norm(y + c, vrow(D_LN2G), vrow(D_LN2B))
    f = _ffn(y, w1_ref[0], b1_ref[0], w2_ref[0], vrow(D_B2))
    y = _layer_norm(y + f, vrow(D_LN3G), vrow(D_LN3B))

    act_ref[...] = y

    @pl.when(l == last)
    def _():
        # Final decoder LayerNorm + fc_out projection folded into the last layer step.
        yf = _layer_norm(y, fin_ref[0:1], fin_ref[1:2])
        o_ref[...] = (jnp.dot(yf.astype(jnp.bfloat16), fcw_ref[...],
                              preferred_element_type=jnp.float32) + fcb_ref[...])


# ----------------------------- pallas_call wrappers -----------------------------

def encoder_stack(x, mask, p):
    R, D = x.shape
    args = (x, mask, p['enc_attn_w'], p['enc_w1'], p['enc_w2'],
            p['enc_vec'], p['enc_b1'], p['enc_final'])
    in_specs = [_full_spec(x), _full_spec(mask),
                _layer_spec(p['enc_attn_w']), _layer_spec(p['enc_w1']),
                _layer_spec(p['enc_w2']), _layer_spec(p['enc_vec']),
                _layer_spec(p['enc_b1']), _full_spec(p['enc_final'])]
    return pl.pallas_call(
        _enc_stack_kernel,
        out_shape=jax.ShapeDtypeStruct((R, D), jnp.float32),
        grid=(NUM_LAYERS,),
        in_specs=in_specs,
        out_specs=pl.BlockSpec((R, D), lambda l: (0, 0)),
        input_output_aliases={0: 0},        # activation updated in place (same HBM buffer)
        compiler_params=_ARB,
    )(*args)


def decoder_stack(y, mem, smask, cmask, p):
    Rt, D = y.shape
    Vp = p['fc_w'].shape[1]
    args = (y, mem, smask, cmask, p['dec_attn_w'], p['dec_w1'], p['dec_w2'],
            p['dec_vec'], p['dec_b1'], p['dec_final'], p['fc_w'], p['fc_b'])
    in_specs = [_full_spec(y), _full_spec(mem), _full_spec(smask), _full_spec(cmask),
                _layer_spec(p['dec_attn_w']), _layer_spec(p['dec_w1']),
                _layer_spec(p['dec_w2']), _layer_spec(p['dec_vec']),
                _layer_spec(p['dec_b1']), _full_spec(p['dec_final']),
                _full_spec(p['fc_w']), _full_spec(p['fc_b'])]
    return pl.pallas_call(
        _dec_stack_kernel,
        out_shape=jax.ShapeDtypeStruct((Rt, Vp), jnp.float32),
        grid=(NUM_LAYERS,),
        in_specs=in_specs,
        out_specs=pl.BlockSpec((Rt, Vp), lambda l: (0, 0)),
        scratch_shapes=[pltpu.VMEM((Rt, D), jnp.float32)],
        compiler_params=_ARB,
    )(*args)


# ----------------------------- model glue (plain JAX) -----------------------------

def positional_encoding(max_len, d_model):
    position = jnp.arange(max_len, dtype=jnp.float32)[:, None]
    div_term = jnp.exp(jnp.arange(0, d_model, 2, dtype=jnp.float32)
                       * (-math.log(10000.0) / d_model))
    pe = jnp.zeros((max_len, d_model), jnp.float32)
    pe = pe.at[:, 0::2].set(jnp.sin(position * div_term))
    pe = pe.at[:, 1::2].set(jnp.cos(position * div_term))
    return pe


def init_params(key, src_vocab, tgt_vocab):
    keys = iter(jax.random.split(key, 32))

    def nrm(shape, scale=0.02, dtype=jnp.float32):
        return (scale * jax.random.normal(next(keys), shape, dtype=jnp.float32)).astype(dtype)

    L = NUM_LAYERS

    # ---- encoder stacks (leading layer dim, streamed per grid step) ----
    enc_attn_w = nrm((L, 4, D_MODEL, D_MODEL), dtype=jnp.bfloat16)      # wq wk wv wo
    enc_w1 = nrm((L, D_MODEL, DIM_FF), dtype=jnp.bfloat16)
    enc_w2 = nrm((L, DIM_FF, D_MODEL), dtype=jnp.bfloat16)
    enc_vec = jnp.zeros((L, 9, D_MODEL), jnp.float32)
    enc_vec = enc_vec.at[:, [E_BQ, E_BK, E_BV, E_BO, E_B2]].set(nrm((L, 5, D_MODEL)))
    enc_vec = enc_vec.at[:, [E_LN1G, E_LN2G]].set(1.0)
    enc_b1 = nrm((L, 1, DIM_FF))

    # ---- decoder stacks ----
    dec_attn_w = nrm((L, 8, D_MODEL, D_MODEL), dtype=jnp.bfloat16)      # self(4) + cross(4)
    dec_w1 = nrm((L, D_MODEL, DIM_FF), dtype=jnp.bfloat16)
    dec_w2 = nrm((L, DIM_FF, D_MODEL), dtype=jnp.bfloat16)
    dec_vec = jnp.zeros((L, 15, D_MODEL), jnp.float32)
    dec_vec = dec_vec.at[:, [D_SBQ, D_SBK, D_SBV, D_SBO,
                             D_CBQ, D_CBK, D_CBV, D_CBO, D_B2]].set(nrm((L, 9, D_MODEL)))
    dec_vec = dec_vec.at[:, [D_LN1G, D_LN2G, D_LN3G]].set(1.0)
    dec_b1 = nrm((L, 1, DIM_FF))

    # final encoder/decoder LayerNorms: row 0 = gamma, row 1 = beta
    ln_final = jnp.stack([jnp.ones((D_MODEL,), jnp.float32),
                          jnp.zeros((D_MODEL,), jnp.float32)])

    # fc_out padded to a lane-dense multiple of 128 (padding lanes stay zero)
    vpad = pl.cdiv(tgt_vocab, 128) * 128
    fc_w = jnp.zeros((D_MODEL, vpad), jnp.float32)
    fc_w = fc_w.at[:, :tgt_vocab].set(nrm((D_MODEL, tgt_vocab)))
    fc_b = jnp.zeros((1, vpad), jnp.float32)
    fc_b = fc_b.at[:, :tgt_vocab].set(nrm((1, tgt_vocab)))

    return {
        'src_embed': nrm((src_vocab, D_MODEL), 1.0),     # nn.Embedding default N(0,1)
        'tgt_embed': nrm((tgt_vocab, D_MODEL), 1.0),
        'pe': positional_encoding(100, D_MODEL),
        'enc_attn_w': enc_attn_w, 'enc_w1': enc_w1, 'enc_w2': enc_w2,
        'enc_vec': enc_vec, 'enc_b1': enc_b1, 'enc_final': ln_final,
        'dec_attn_w': dec_attn_w, 'dec_w1': dec_w1, 'dec_w2': dec_w2,
        'dec_vec': dec_vec, 'dec_b1': dec_b1, 'dec_final': ln_final,
        'fc_w': fc_w.astype(jnp.bfloat16),
        'fc_b': fc_b,
    }


@jax.jit
def transformer_forward(params, src, tgt):
    """Returns logits padded to a lane-dense vocab multiple of 128 (slice at the consumer)."""
    B, Ss = src.shape
    _, St = tgt.shape
    pe = params['pe']
    scale = math.sqrt(D_MODEL)

    # embedding * sqrt(d_model) + positional encoding (token gather stays in XLA glue)
    src_emb = jnp.take(params['src_embed'], src, axis=0) * scale + pe[:Ss][None]
    tgt_emb = jnp.take(params['tgt_embed'], tgt, axis=0) * scale + pe[:St][None]
    x = src_emb.reshape(B * Ss, D_MODEL).astype(jnp.float32)
    y = tgt_emb.reshape(B * St, D_MODEL).astype(jnp.float32)

    # Additive masks on the (B*S) folded row space, built once per forward:
    #   encoder: key-padding (src==0) + cross-batch blocking
    #   decoder self: causal + cross-batch blocking
    #   cross-attn: cross-batch blocking only (memory_key_padding_mask is None in the spec)
    bid_s = jnp.arange(B * Ss) // Ss
    bid_t = jnp.arange(B * St) // St
    pos_t = jnp.arange(B * St) % St
    pad = src.reshape(-1) == 0
    enc_mask = jnp.where((bid_s[:, None] == bid_s[None, :]) & (~pad)[None, :],
                         0.0, NEG_INF).astype(jnp.float32)
    dec_mask = jnp.where((bid_t[:, None] == bid_t[None, :])
                         & (pos_t[None, :] <= pos_t[:, None]),
                         0.0, NEG_INF).astype(jnp.float32)
    cross_mask = jnp.where(bid_t[:, None] == bid_s[None, :],
                           0.0, NEG_INF).astype(jnp.float32)

    mem = encoder_stack(x, enc_mask, params)                       # (B*Ss, D), final LN applied
    logits = decoder_stack(y, mem, dec_mask, cross_mask, params)   # (B*St, Vpad), lane-dense
    return logits.reshape(B, St, -1)


if __name__ == "__main__":
    SRC_VOCAB, TGT_VOCAB = 64, 72
    B, S_SRC, S_TGT = 2, 8, 8

    key = jax.random.PRNGKey(0)
    kp, ks, kt = jax.random.split(key, 3)
    params = init_params(kp, SRC_VOCAB, TGT_VOCAB)

    src = jax.random.randint(ks, (B, S_SRC), 1, SRC_VOCAB).astype(jnp.int32)
    src = src.at[:, -2:].set(0)   # padding tokens exercise src_key_padding_mask
    tgt = jax.random.randint(kt, (B, S_TGT), 1, TGT_VOCAB).astype(jnp.int32)

    logits_padded = transformer_forward(params, src, tgt)
    jax.block_until_ready(logits_padded)

    out = logits_padded[..., :TGT_VOCAB]   # consumer-side slice of the lane-dense padded logits
    assert out.shape == (B, S_TGT, TGT_VOCAB) and out.dtype == jnp.float32
    assert bool(jnp.all(jnp.isfinite(out)))
    print("KERNEL_OK")
</pallas_src>

<mosaic_0001>
module attributes {stable_mosaic.version = 11 : i64} {
  func.func @_enc_stack_kernel(%arg0: i32, %arg1: memref<16x256xf32, #tpu.memory_space<vmem>>, %arg2: memref<16x16xf32, #tpu.memory_space<vmem>>, %arg3: memref<1x4x256x256xbf16, #tpu.memory_space<vmem>>, %arg4: memref<1x256x1024xbf16, #tpu.memory_space<vmem>>, %arg5: memref<1x1024x256xbf16, #tpu.memory_space<vmem>>, %arg6: memref<1x9x256xf32, #tpu.memory_space<vmem>>, %arg7: memref<1x1x1024xf32, #tpu.memory_space<vmem>>, %arg8: memref<2x256xf32, #tpu.memory_space<vmem>>, %arg9: memref<16x256xf32, #tpu.memory_space<vmem>>) attributes {dimension_semantics = [#tpu.dimension_semantics<arbitrary>], iteration_bounds = array<i64: 4>, scalar_prefetch = 0 : i64, scratch_operands = 0 : i64, tpu.core_type = #tpu.core_type<tc>, window_params = [{pipeline_mode = #tpu.pipeline_mode<synchronous>, transform_indices = @transform_0, window_bounds = array<i64: 16, 256>}, {pipeline_mode = #tpu.pipeline_mode<synchronous>, transform_indices = @transform_1, window_bounds = array<i64: 16, 16>}, {transform_indices = @transform_2, window_bounds = array<i64: 1, 4, 256, 256>}, {transform_indices = @transform_3, window_bounds = array<i64: 1, 256, 1024>}, {transform_indices = @transform_4, window_bounds = array<i64: 1, 1024, 256>}, {transform_indices = @transform_5, window_bounds = array<i64: 1, 9, 256>}, {transform_indices = @transform_6, window_bounds = array<i64: 1, 1, 1024>}, {pipeline_mode = #tpu.pipeline_mode<synchronous>, transform_indices = @transform_7, window_bounds = array<i64: 2, 256>}, {pipeline_mode = #tpu.pipeline_mode<synchronous>, transform_indices = @transform_8, window_bounds = array<i64: 16, 256>}]} {
    %c0_i32 = arith.constant 0 : i32
    %0 = arith.cmpi eq, %arg0, %c0_i32 : i32
    %1 = arith.extui %0 : i1 to i32
    %c0_i32_0 = arith.constant 0 : i32
    %2 = arith.cmpi ne, %1, %c0_i32_0 : i32
    scf.if %2 {
      %c0_90 = arith.constant 0 : index
      %c0_91 = arith.constant 0 : index
      %202 = vector.load %arg1[%c0_90, %c0_91] : memref<16x256xf32, #tpu.memory_space<vmem>>, vector<16x256xf32>
      %c0_92 = arith.constant 0 : index
      %c0_93 = arith.constant 0 : index
      %203 = vector.load %arg9[%c0_92, %c0_93] : memref<16x256xf32, #tpu.memory_space<vmem>>, vector<16x256xf32>
      tpu.vector_store %arg9[%c0_92, %c0_93], %202 {strides = array<i32>} : memref<16x256xf32, #tpu.memory_space<vmem>>, vector<16x256xf32>,
    } else {
    }
    %c0 = arith.constant 0 : index
    %c0_1 = arith.constant 0 : index
    %3 = vector.load %arg9[%c0, %c0_1] : memref<16x256xf32, #tpu.memory_space<vmem>>, vector<16x256xf32>
    %c0_2 = arith.constant 0 : index
    %c0_3 = arith.constant 0 : index
    %4 = vector.load %arg2[%c0_2, %c0_3] : memref<16x16xf32, #tpu.memory_space<vmem>>, vector<16x16xf32>
    %c0_4 = arith.constant 0 : index
    %c0_5 = arith.constant 0 : index
    %c0_6 = arith.constant 0 : index
    %c0_7 = arith.constant 0 : index
    %5 = vector.load %arg3[%c0_4, %c0_5, %c0_6, %c0_7] : memref<1x4x256x256xbf16, #tpu.memory_space<vmem>>, vector<1x1x256x256xbf16>
    %6 = vector.shape_cast %5 : vector<1x1x256x256xbf16> to vector<256x256xbf16>
    %c0_8 = arith.constant 0 : index
    %c0_9 = arith.constant 0 : index
    %c0_10 = arith.constant 0 : index
    %7 = vector.load %arg6[%c0_8, %c0_9, %c0_10] : memref<1x9x256xf32, #tpu.memory_space<vmem>>, vector<1x1x256xf32>
    %8 = vector.shape_cast %7 : vector<1x1x256xf32> to vector<1x256xf32>
    %c0_11 = arith.constant 0 : index
    %c1 = arith.constant 1 : index
    %c0_12 = arith.constant 0 : index
    %c0_13 = arith.constant 0 : index
    %9 = vector.load %arg3[%c0_11, %c1, %c0_12, %c0_13] : memref<1x4x256x256xbf16, #tpu.memory_space<vmem>>, vector<1x1x256x256xbf16>
    %10 = vector.shape_cast %9 : vector<1x1x256x256xbf16> to vector<256x256xbf16>
    %c0_14 = arith.constant 0 : index
    %c1_15 = arith.constant 1 : index
    %c0_16 = arith.constant 0 : index
    %11 = vector.load %arg6[%c0_14, %c1_15, %c0_16] : memref<1x9x256xf32, #tpu.memory_space<vmem>>, vector<1x1x256xf32>
    %12 = vector.shape_cast %11 : vector<1x1x256xf32> to vector<1x256xf32>
    %c0_17 = arith.constant 0 : index
    %c2 = arith.constant 2 : index
    %c0_18 = arith.constant 0 : index
    %c0_19 = arith.constant 0 : index
    %13 = vector.load %arg3[%c0_17, %c2, %c0_18, %c0_19] : memref<1x4x256x256xbf16, #tpu.memory_space<vmem>>, vector<1x1x256x256xbf16>
    %14 = vector.shape_cast %13 : vector<1x1x256x256xbf16> to vector<256x256xbf16>
    %c0_20 = arith.constant 0 : index
    %c2_21 = arith.constant 2 : index
    %c0_22 = arith.constant 0 : index
    %15 = vector.load %arg6[%c0_20, %c2_21, %c0_22] : memref<1x9x256xf32, #tpu.memory_space<vmem>>, vector<1x1x256xf32>
    %16 = vector.shape_cast %15 : vector<1x1x256xf32> to vector<1x256xf32>
    %c0_23 = arith.constant 0 : index
    %c3 = arith.constant 3 : index
    %c0_24 = arith.constant 0 : index
    %c0_25 = arith.constant 0 : index
    %17 = vector.load %arg3[%c0_23, %c3, %c0_24, %c0_25] : memref<1x4x256x256xbf16, #tpu.memory_space<vmem>>, vector<1x1x256x256xbf16>
    %18 = vector.shape_cast %17 : vector<1x1x256x256xbf16> to vector<256x256xbf16>
    %c0_26 = arith.constant 0 : index
    %c3_27 = arith.constant 3 : index
    %c0_28 = arith.constant 0 : index
    %19 = vector.load %arg6[%c0_26, %c3_27, %c0_28] : memref<1x9x256xf32, #tpu.memory_space<vmem>>, vector<1x1x256xf32>
    %20 = vector.shape_cast %19 : vector<1x1x256xf32> to vector<1x256xf32>
    %21 = arith.truncf %3 : vector<16x256xf32> to vector<16x256xbf16>
    %22 = arith.truncf %3 : vector<16x256xf32> to vector<16x256xbf16>
    %cst = arith.constant dense<0.000000e+00> : vector<16x256xf32>
    %23 = tpu.matmul %21, %6, %cst {dimension_numbers = #tpu.dot_dimension_numbers<[1], [0], [0], [1], [0, 0, 1, 1], [], []>} : vector<16x256xbf16>, vector<256x256xbf16>, vector<16x256xf32> -> vector<16x256xf32>
    %24 = vector.broadcast %8 : vector<1x256xf32> to vector<16x256xf32>
    %25 = arith.addf %23, %24 : vector<16x256xf32>
    %cst_29 = arith.constant dense<0.000000e+00> : vector<16x256xf32>
    %26 = tpu.matmul %22, %10, %cst_29 {dimension_numbers = #tpu.dot_dimension_numbers<[1], [0], [0], [1], [0, 0, 1, 1], [], []>} : vector<16x256xbf16>, vector<256x256xbf16>, vector<16x256xf32> -> vector<16x256xf32>
    %27 = vector.broadcast %12 : vector<1x256xf32> to vector<16x256xf32>
    %28 = arith.addf %26, %27 : vector<16x256xf32>
    %cst_30 = arith.constant dense<0.000000e+00> : vector<16x256xf32>
    %29 = tpu.matmul %22, %14, %cst_30 {dimension_numbers = #tpu.dot_dimension_numbers<[1], [0], [0], [1], [0, 0, 1, 1], [], []>} : vector<16x256xbf16>, vector<256x256xbf16>, vector<16x256xf32> -> vector<16x256xf32>
    %30 = vector.broadcast %16 : vector<1x256xf32> to vector<16x256xf32>
    %31 = arith.addf %29, %30 : vector<16x256xf32>
    %32 = arith.truncf %25 : vector<16x256xf32> to vector<16x256xbf16>
    %33 = arith.truncf %28 : vector<16x256xf32> to vector<16x256xbf16>
    %34 = arith.truncf %31 : vector<16x256xf32> to vector<16x256xbf16>
    %35 = vector.extract_strided_slice %32 {offsets = [0, 0], sizes = [16, 64], strides = [1, 1]} : vector<16x256xbf16> to vector<16x64xbf16>
    %36 = vector.extract_strided_slice %33 {offsets = [0, 0], sizes = [16, 64], strides = [1, 1]} : vector<16x256xbf16> to vector<16x64xbf16>
    %37 = vector.extract_strided_slice %34 {offsets = [0, 0], sizes = [16, 64], strides = [1, 1]} : vector<16x256xbf16> to vector<16x64xbf16>
    %cst_31 = arith.constant dense<0.000000e+00> : vector<16x16xf32>
    %38 = tpu.matmul %35, %36, %cst_31 {dimension_numbers = #tpu.dot_dimension_numbers<[1], [1], [0], [0], [0, 0, 1, 0], [], []>} : vector<16x64xbf16>, vector<16x64xbf16>, vector<16x16xf32> -> vector<16x16xf32>
    %cst_32 = arith.constant 1.250000e-01 : f32
    %39 = vector.broadcast %cst_32 : f32 to vector<16x16xf32>
    %40 = arith.mulf %38, %39 : vector<16x16xf32>
    %41 = arith.addf %40, %4 : vector<16x16xf32>
    %cst_33 = arith.constant dense<0xFF800000> : vector<16xf32>
    %42 = vector.multi_reduction <maximumf>, %41, %cst_33 [1] : vector<16x16xf32> to vector<16xf32>
    %43 = vector.shape_cast %42 : vector<16xf32> to vector<16x1xf32>
    %44 = vector.broadcast %43 : vector<16x1xf32> to vector<16x16xf32>
    %45 = arith.subf %41, %44 : vector<16x16xf32>
    %46 = math.exp %45 : vector<16x16xf32>
    %cst_34 = arith.constant dense<0.000000e+00> : vector<16xf32>
    %47 = vector.multi_reduction <add>, %46, %cst_34 [1] : vector<16x16xf32> to vector<16xf32>
    %48 = vector.shape_cast %47 : vector<16xf32> to vector<16x1xf32>
    %49 = vector.broadcast %48 : vector<16x1xf32> to vector<16x16xf32>
    %50 = arith.divf %46, %49 : vector<16x16xf32>
    %51 = arith.truncf %50 : vector<16x16xf32> to vector<16x16xbf16>
    %cst_35 = arith.constant dense<0.000000e+00> : vector<16x64xf32>
    %52 = tpu.matmul %51, %37, %cst_35 {dimension_numbers = #tpu.dot_dimension_numbers<[1], [0], [0], [1], [0, 0, 1, 1], [], []>} : vector<16x16xbf16>, vector<16x64xbf16>, vector<16x64xf32> -> vector<16x64xf32>
    %53 = arith.truncf %52 : vector<16x64xf32> to vector<16x64xbf16>
    %54 = vector.extract_strided_slice %18 {offsets = [0, 0], sizes = [64, 256], strides = [1, 1]} : vector<256x256xbf16> to vector<64x256xbf16>
    %cst_36 = arith.constant dense<0.000000e+00> : vector<16x256xf32>
    %55 = tpu.matmul %53, %54, %cst_36 {dimension_numbers = #tpu.dot_dimension_numbers<[1], [0], [0], [1], [0, 0, 1, 1], [], []>} : vector<16x64xbf16>, vector<64x256xbf16>, vector<16x256xf32> -> vector<16x256xf32>
    %56 = vector.extract_strided_slice %32 {offsets = [0, 64], sizes = [16, 64], strides = [1, 1]} : vector<16x256xbf16> to vector<16x64xbf16>
    %57 = vector.extract_strided_slice %33 {offsets = [0, 64], sizes = [16, 64], strides = [1, 1]} : vector<16x256xbf16> to vector<16x64xbf16>
    %58 = vector.extract_strided_slice %34 {offsets = [0, 64], sizes = [16, 64], strides = [1, 1]} : vector<16x256xbf16> to vector<16x64xbf16>
    %cst_37 = arith.constant dense<0.000000e+00> : vector<16x16xf32>
    %59 = tpu.matmul %56, %57, %cst_37 {dimension_numbers = #tpu.dot_dimension_numbers<[1], [1], [0], [0], [0, 0, 1, 0], [], []>} : vector<16x64xbf16>, vector<16x64xbf16>, vector<16x16xf32> -> vector<16x16xf32>
    %cst_38 = arith.constant 1.250000e-01 : f32
    %60 = vector.broadcast %cst_38 : f32 to vector<16x16xf32>
    %61 = arith.mulf %59, %60 : vector<16x16xf32>
    %62 = arith.addf %61, %4 : vector<16x16xf32>
    %cst_39 = arith.constant dense<0xFF800000> : vector<16xf32>
    %63 = vector.multi_reduction <maximumf>, %62, %cst_39 [1] : vector<16x16xf32> to vector<16xf32>
    %64 = vector.shape_cast %63 : vector<16xf32> to vector<16x1xf32>
    %65 = vector.broadcast %64 : vector<16x1xf32> to vector<16x16xf32>
    %66 = arith.subf %62, %65 : vector<16x16xf32>
    %67 = math.exp %66 : vector<16x16xf32>
    %cst_40 = arith.constant dense<0.000000e+00> : vector<16xf32>
    %68 = vector.multi_reduction <add>, %67, %cst_40 [1] : vector<16x16xf32> to vector<16xf32>
    %69 = vector.shape_cast %68 : vector<16xf32> to vector<16x1xf32>
    %70 = vector.broadcast %69 : vector<16x1xf32> to vector<16x16xf32>
    %71 = arith.divf %67, %70 : vector<16x16xf32>
    %72 = arith.truncf %71 : vector<16x16xf32> to vector<16x16xbf16>
    %cst_41 = arith.constant dense<0.000000e+00> : vector<16x64xf32>
    %73 = tpu.matmul %72, %58, %cst_41 {dimension_numbers = #tpu.dot_dimension_numbers<[1], [0], [0], [1], [0, 0, 1, 1], [], []>} : vector<16x16xbf16>, vector<16x64xbf16>, vector<16x64xf32> -> vector<16x64xf32>
    %74 = arith.truncf %73 : vector<16x64xf32> to vector<16x64xbf16>
    %75 = vector.extract_strided_slice %18 {offsets = [64, 0], sizes = [64, 256], strides = [1, 1]} : vector<256x256xbf16> to vector<64x256xbf16>
    %cst_42 = arith.constant dense<0.000000e+00> : vector<16x256xf32>
    %76 = tpu.matmul %74, %75, %cst_42 {dimension_numbers = #tpu.dot_dimension_numbers<[1], [0], [0], [1], [0, 0, 1, 1], [], []>} : vector<16x64xbf16>, vector<64x256xbf16>, vector<16x256xf32> -> vector<16x256xf32>
    %77 = arith.addf %55, %76 : vector<16x256xf32>
    %78 = vector.extract_strided_slice %32 {offsets = [0, 128], sizes = [16, 64], strides = [1, 1]} : vector<16x256xbf16> to vector<16x64xbf16>
    %79 = vector.extract_strided_slice %33 {offsets = [0, 128], sizes = [16, 64], strides = [1, 1]} : vector<16x256xbf16> to vector<16x64xbf16>
    %80 = vector.extract_strided_slice %34 {offsets = [0, 128], sizes = [16, 64], strides = [1, 1]} : vector<16x256xbf16> to vector<16x64xbf16>
    %cst_43 = arith.constant dense<0.000000e+00> : vector<16x16xf32>
    %81 = tpu.matmul %78, %79, %cst_43 {dimension_numbers = #tpu.dot_dimension_numbers<[1], [1], [0], [0], [0, 0, 1, 0], [], []>} : vector<16x64xbf16>, vector<16x64xbf16>, vector<16x16xf32> -> vector<16x16xf32>
    %cst_44 = arith.constant 1.250000e-01 : f32
    %82 = vector.broadcast %cst_44 : f32 to vector<16x16xf32>
    %83 = arith.mulf %81, %82 : vector<16x16xf32>
    %84 = arith.addf %83, %4 : vector<16x16xf32>
    %cst_45 = arith.constant dense<0xFF800000> : vector<16xf32>
    %85 = vector.multi_reduction <maximumf>, %84, %cst_45 [1] : vector<16x16xf32> to vector<16xf32>
    %86 = vector.shape_cast %85 : vector<16xf32> to vector<16x1xf32>
    %87 = vector.broadcast %86 : vector<16x1xf32> to vector<16x16xf32>
    %88 = arith.subf %84, %87 : vector<16x16xf32>
    %89 = math.exp %88 : vector<16x16xf32>
    %cst_46 = arith.constant dense<0.000000e+00> : vector<16xf32>
    %90 = vector.multi_reduction <add>, %89, %cst_46 [1] : vector<16x16xf32> to vector<16xf32>
    %91 = vector.shape_cast %90 : vector<16xf32> to vector<16x1xf32>
    %92 = vector.broadcast %91 : vector<16x1xf32> to vector<16x16xf32>
    %93 = arith.divf %89, %92 : vector<16x16xf32>
    %94 = arith.truncf %93 : vector<16x16xf32> to vector<16x16xbf16>
    %cst_47 = arith.constant dense<0.000000e+00> : vector<16x64xf32>
    %95 = tpu.matmul %94, %80, %cst_47 {dimension_numbers = #tpu.dot_dimension_numbers<[1], [0], [0], [1], [0, 0, 1, 1], [], []>} : vector<16x16xbf16>, vector<16x64xbf16>, vector<16x64xf32> -> vector<16x64xf32>
    %96 = arith.truncf %95 : vector<16x64xf32> to vector<16x64xbf16>
    %97 = vector.extract_strided_slice %18 {offsets = [128, 0], sizes = [64, 256], strides = [1, 1]} : vector<256x256xbf16> to vector<64x256xbf16>
    %cst_48 = arith.constant dense<0.000000e+00> : vector<16x256xf32>
    %98 = tpu.matmul %96, %97, %cst_48 {dimension_numbers = #tpu.dot_dimension_numbers<[1], [0], [0], [1], [0, 0, 1, 1], [], []>} : vector<16x64xbf16>, vector<64x256xbf16>, vector<16x256xf32> -> vector<16x256xf32>
    %99 = arith.addf %77, %98 : vector<16x256xf32>
    %100 = vector.extract_strided_slice %32 {offsets = [0, 192], sizes = [16, 64], strides = [1, 1]} : vector<16x256xbf16> to vector<16x64xbf16>
    %101 = vector.extract_strided_slice %33 {offsets = [0, 192], sizes = [16, 64], strides = [1, 1]} : vector<16x256xbf16> to vector<16x64xbf16>
    %102 = vector.extract_strided_slice %34 {offsets = [0, 192], sizes = [16, 64], strides = [1, 1]} : vector<16x256xbf16> to vector<16x64xbf16>
    %cst_49 = arith.constant dense<0.000000e+00> : vector<16x16xf32>
    %103 = tpu.matmul %100, %101, %cst_49 {dimension_numbers = #tpu.dot_dimension_numbers<[1], [1], [0], [0], [0, 0, 1, 0], [], []>} : vector<16x64xbf16>, vector<16x64xbf16>, vector<16x16xf32> -> vector<16x16xf32>
    %cst_50 = arith.constant 1.250000e-01 : f32
    %104 = vector.broadcast %cst_50 : f32 to vector<16x16xf32>
    %105 = arith.mulf %103, %104 : vector<16x16xf32>
    %106 = arith.addf %105, %4 : vector<16x16xf32>
    %cst_51 = arith.constant dense<0xFF800000> : vector<16xf32>
    %107 = vector.multi_reduction <maximumf>, %106, %cst_51 [1] : vector<16x16xf32> to vector<16xf32>
    %108 = vector.shape_cast %107 : vector<16xf32> to vector<16x1xf32>
    %109 = vector.broadcast %108 : vector<16x1xf32> to vector<16x16xf32>
    %110 = arith.subf %106, %109 : vector<16x16xf32>
    %111 = math.exp %110 : vector<16x16xf32>
    %cst_52 = arith.constant dense<0.000000e+00> : vector<16xf32>
    %112 = vector.multi_reduction <add>, %111, %cst_52 [1] : vector<16x16xf32> to vector<16xf32>
    %113 = vector.shape_cast %112 : vector<16xf32> to vector<16x1xf32>
    %114 = vector.broadcast %113 : vector<16x1xf32> to vector<16x16xf32>
    %115 = arith.divf %111, %114 : vector<16x16xf32>
    %116 = arith.truncf %115 : vector<16x16xf32> to vector<16x16xbf16>
    %cst_53 = arith.constant dense<0.000000e+00> : vector<16x64xf32>
    %117 = tpu.matmul %116, %102, %cst_53 {dimension_numbers = #tpu.dot_dimension_numbers<[1], [0], [0], [1], [0, 0, 1, 1], [], []>} : vector<16x16xbf16>, vector<16x64xbf16>, vector<16x64xf32> -> vector<16x64xf32>
    %118 = arith.truncf %117 : vector<16x64xf32> to vector<16x64xbf16>
    %119 = vector.extract_strided_slice %18 {offsets = [192, 0], sizes = [64, 256], strides = [1, 1]} : vector<256x256xbf16> to vector<64x256xbf16>
    %cst_54 = arith.constant dense<0.000000e+00> : vector<16x256xf32>
    %120 = tpu.matmul %118, %119, %cst_54 {dimension_numbers = #tpu.dot_dimension_numbers<[1], [0], [0], [1], [0, 0, 1, 1], [], []>} : vector<16x64xbf16>, vector<64x256xbf16>, vector<16x256xf32> -> vector<16x256xf32>
    %121 = arith.addf %99, %120 : vector<16x256xf32>
    %122 = vector.broadcast %20 : vector<1x256xf32> to vector<16x256xf32>
    %123 = arith.addf %121, %122 : vector<16x256xf32>
    %124 = arith.addf %3, %123 : vector<16x256xf32>
    %c0_55 = arith.constant 0 : index
    %c4 = arith.constant 4 : index
    %c0_56 = arith.constant 0 : index
    %125 = vector.load %arg6[%c0_55, %c4, %c0_56] : memref<1x9x256xf32, #tpu.memory_space<vmem>>, vector<1x1x256xf32>
    %126 = vector.shape_cast %125 : vector<1x1x256xf32> to vector<1x256xf32>
    %c0_57 = arith.constant 0 : index
    %c5 = arith.constant 5 : index
    %c0_58 = arith.constant 0 : index
    %127 = vector.load %arg6[%c0_57, %c5, %c0_58] : memref<1x9x256xf32, #tpu.memory_space<vmem>>, vector<1x1x256xf32>
    %128 = vector.shape_cast %127 : vector<1x1x256xf32> to vector<1x256xf32>
    %cst_59 = arith.constant dense<0.000000e+00> : vector<16xf32>
    %129 = vector.multi_reduction <add>, %124, %cst_59 [1] : vector<16x256xf32> to vector<16xf32>
    %130 = vector.shape_cast %129 : vector<16xf32> to vector<16x1xf32>
    %cst_60 = arith.constant 2.560000e+02 : f32
    %131 = vector.broadcast %cst_60 : f32 to vector<16x1xf32>
    %132 = arith.divf %130, %131 : vector<16x1xf32>
    %133 = vector.broadcast %132 : vector<16x1xf32> to vector<16x256xf32>
    %134 = arith.subf %124, %133 : vector<16x256xf32>
    %135 = arith.mulf %134, %134 : vector<16x256xf32>
    %cst_61 = arith.constant dense<0.000000e+00> : vector<16xf32>
    %136 = vector.multi_reduction <add>, %135, %cst_61 [1] : vector<16x256xf32> to vector<16xf32>
    %137 = vector.shape_cast %136 : vector<16xf32> to vector<16x1xf32>
    %cst_62 = arith.constant 2.560000e+02 : f32
    %138 = vector.broadcast %cst_62 : f32 to vector<16x1xf32>
    %139 = arith.divf %137, %138 : vector<16x1xf32>
    %140 = vector.broadcast %132 : vector<16x1xf32> to vector<16x256xf32>
    %141 = arith.subf %124, %140 : vector<16x256xf32>
    %cst_63 = arith.constant 9.99999974E-6 : f32
    %142 = vector.broadcast %cst_63 : f32 to vector<16x1xf32>
    %143 = arith.addf %139, %142 : vector<16x1xf32>
    %144 = math.rsqrt %143 : vector<16x1xf32>
    %145 = vector.broadcast %144 : vector<16x1xf32> to vector<16x256xf32>
    %146 = arith.mulf %141, %145 : vector<16x256xf32>
    %147 = vector.broadcast %126 : vector<1x256xf32> to vector<16x256xf32>
    %148 = arith.mulf %146, %147 : vector<16x256xf32>
    %149 = vector.broadcast %128 : vector<1x256xf32> to vector<16x256xf32>
    %150 = arith.addf %148, %149 : vector<16x256xf32>
    %c0_64 = arith.constant 0 : index
    %c0_65 = arith.constant 0 : index
    %c0_66 = arith.constant 0 : index
    %151 = vector.load %arg4[%c0_64, %c0_65, %c0_66] : memref<1x256x1024xbf16, #tpu.memory_space<vmem>>, vector<1x256x1024xbf16>
    %152 = vector.shape_cast %151 : vector<1x256x1024xbf16> to vector<256x1024xbf16>
    %c0_67 = arith.constant 0 : index
    %c0_68 = arith.constant 0 : index
    %c0_69 = arith.constant 0 : index
    %153 = vector.load %arg7[%c0_67, %c0_68, %c0_69] : memref<1x1x1024xf32, #tpu.memory_space<vmem>>, vector<1x1x1024xf32>
    %154 = vector.shape_cast %153 : vector<1x1x1024xf32> to vector<1x1024xf32>
    %c0_70 = arith.constant 0 : index
    %c0_71 = arith.constant 0 : index
    %c0_72 = arith.constant 0 : index
    %155 = vector.load %arg5[%c0_70, %c0_71, %c0_72] : memref<1x1024x256xbf16, #tpu.memory_space<vmem>>, vector<1x1024x256xbf16>
    %156 = vector.shape_cast %155 : vector<1x1024x256xbf16> to vector<1024x256xbf16>
    %c0_73 = arith.constant 0 : index
    %c6 = arith.constant 6 : index
    %c0_74 = arith.constant 0 : index
    %157 = vector.load %arg6[%c0_73, %c6, %c0_74] : memref<1x9x256xf32, #tpu.memory_space<vmem>>, vector<1x1x256xf32>
    %158 = vector.shape_cast %157 : vector<1x1x256xf32> to vector<1x256xf32>
    %159 = arith.truncf %150 : vector<16x256xf32> to vector<16x256xbf16>
    %cst_75 = arith.constant dense<0.000000e+00> : vector<16x1024xf32>
    %160 = tpu.matmul %159, %152, %cst_75 {dimension_numbers = #tpu.dot_dimension_numbers<[1], [0], [0], [1], [0, 0, 1, 1], [], []>} : vector<16x256xbf16>, vector<256x1024xbf16>, vector<16x1024xf32> -> vector<16x1024xf32>
    %161 = vector.broadcast %154 : vector<1x1024xf32> to vector<16x1024xf32>
    %162 = arith.addf %160, %161 : vector<16x1024xf32>
    %cst_76 = arith.constant 0.000000e+00 : f32
    %163 = vector.broadcast %cst_76 : f32 to vector<16x1024xf32>
    %164 = arith.maximumf %162, %163 : vector<16x1024xf32>
    %165 = arith.truncf %164 : vector<16x1024xf32> to vector<16x1024xbf16>
    %cst_77 = arith.constant dense<0.000000e+00> : vector<16x256xf32>
    %166 = tpu.matmul %165, %156, %cst_77 {dimension_numbers = #tpu.dot_dimension_numbers<[1], [0], [0], [1], [0, 0, 1, 1], [], []>} : vector<16x1024xbf16>, vector<1024x256xbf16>, vector<16x256xf32> -> vector<16x256xf32>
    %167 = vector.broadcast %158 : vector<1x256xf32> to vector<16x256xf32>
    %168 = arith.addf %166, %167 : vector<16x256xf32>
    %169 = arith.addf %150, %168 : vector<16x256xf32>
    %c0_78 = arith.constant 0 : index
    %c7 = arith.constant 7 : index
    %c0_79 = arith.constant 0 : index
    %170 = vector.load %arg6[%c0_78, %c7, %c0_79] : memref<1x9x256xf32, #tpu.memory_space<vmem>>, vector<1x1x256xf32>
    %171 = vector.shape_cast %170 : vector<1x1x256xf32> to vector<1x256xf32>
    %c0_80 = arith.constant 0 : index
    %c8 = arith.constant 8 : index
    %c0_81 = arith.constant 0 : index
    %172 = vector.load %arg6[%c0_80, %c8, %c0_81] : memref<1x9x256xf32, #tpu.memory_space<vmem>>, vector<1x1x256xf32>
    %173 = vector.shape_cast %172 : vector<1x1x256xf32> to vector<1x256xf32>
    %cst_82 = arith.constant dense<0.000000e+00> : vector<16xf32>
    %174 = vector.multi_reduction <add>, %169, %cst_82 [1] : vector<16x256xf32> to vector<16xf32>
    %175 = vector.shape_cast %174 : vector<16xf32> to vector<16x1xf32>
    %cst_83 = arith.constant 2.560000e+02 : f32
    %176 = vector.broadcast %cst_83 : f32 to vector<16x1xf32>
    %177 = arith.divf %175, %176 : vector<16x1xf32>
    %178 = vector.broadcast %177 : vector<16x1xf32> to vector<16x256xf32>
    %179 = arith.subf %169, %178 : vector<16x256xf32>
    %180 = arith.mulf %179, %179 : vector<16x256xf32>
    %cst_84 = arith.constant dense<0.000000e+00> : vector<16xf32>
    %181 = vector.multi_reduction <add>, %180, %cst_84 [1] : vector<16x256xf32> to vector<16xf32>
    %182 = vector.shape_cast %181 : vector<16xf32> to vector<16x1xf32>
    %cst_85 = arith.constant 2.560000e+02 : f32
    %183 = vector.broadcast %cst_85 : f32 to vector<16x1xf32>
    %184 = arith.divf %182, %183 : vector<16x1xf32>
    %185 = vector.broadcast %177 : vector<16x1xf32> to vector<16x256xf32>
    %186 = arith.subf %169, %185 : vector<16x256xf32>
    %cst_86 = arith.constant 9.99999974E-6 : f32
    %187 = vector.broadcast %cst_86 : f32 to vector<16x1xf32>
    %188 = arith.addf %184, %187 : vector<16x1xf32>
    %189 = math.rsqrt %188 : vector<16x1xf32>
    %190 = vector.broadcast %189 : vector<16x1xf32> to vector<16x256xf32>
    %191 = arith.mulf %186, %190 : vector<16x256xf32>
    %192 = vector.broadcast %171 : vector<1x256xf32> to vector<16x256xf32>
    %193 = arith.mulf %191, %192 : vector<16x256xf32>
    %194 = vector.broadcast %173 : vector<1x256xf32> to vector<16x256xf32>
    %195 = arith.addf %193, %194 : vector<16x256xf32>
    %c3_i32 = arith.constant 3 : i32
    %196 = arith.cmpi ne, %arg0, %c3_i32 : i32
    %197 = arith.extui %196 : i1 to i32
    %c0_i32_87 = arith.constant 0 : i32
    %198 = arith.cmpi ne, %197, %c0_i32_87 : i32
    scf.if %198 {
      %c0_90 = arith.constant 0 : index
      %c0_91 = arith.constant 0 : index
      %202 = vector.load %arg9[%c0_90, %c0_91] : memref<16x256xf32, #tpu.memory_space<vmem>>, vector<16x256xf32>
      tpu.vector_store %arg9[%c0_90, %c0_91], %195 {strides = array<i32>} : memref<16x256xf32, #tpu.memory_space<vmem>>, vector<16x256xf32>,
    } else {
    }
    %c3_i32_88 = arith.constant 3 : i32
    %199 = arith.cmpi eq, %arg0, %c3_i32_88 : i32
    %200 = arith.extui %199 : i1 to i32
    %c0_i32_89 = arith.constant 0 : i32
    %201 = arith.cmpi ne, %200, %c0_i32_89 : i32
    scf.if %201 {
      %c0_90 = arith.constant 0 : index
      %c0_91 = arith.constant 0 : index
      %202 = vector.load %arg8[%c0_90, %c0_91] : memref<2x256xf32, #tpu.memory_space<vmem>>, vector<1x256xf32>
      %c1_92 = arith.constant 1 : index
      %c0_93 = arith.constant 0 : index
      %203 = vector.load %arg8[%c1_92, %c0_93] : memref<2x256xf32, #tpu.memory_space<vmem>>, vector<1x256xf32>
      %cst_94 = arith.constant dense<0.000000e+00> : vector<16xf32>
      %204 = vector.multi_reduction <add>, %195, %cst_94 [1] : vector<16x256xf32> to vector<16xf32>
      %205 = vector.shape_cast %204 : vector<16xf32> to vector<16x1xf32>
      %cst_95 = arith.constant 2.560000e+02 : f32
      %206 = vector.broadcast %cst_95 : f32 to vector<16x1xf32>
      %207 = arith.divf %205, %206 : vector<16x1xf32>
      %208 = vector.broadcast %207 : vector<16x1xf32> to vector<16x256xf32>
      %209 = arith.subf %195, %208 : vector<16x256xf32>
      %210 = arith.mulf %209, %209 : vector<16x256xf32>
      %cst_96 = arith.constant dense<0.000000e+00> : vector<16xf32>
      %211 = vector.multi_reduction <add>, %210, %cst_96 [1] : vector<16x256xf32> to vector<16xf32>
      %212 = vector.shape_cast %211 : vector<16xf32> to vector<16x1xf32>
      %cst_97 = arith.constant 2.560000e+02 : f32
      %213 = vector.broadcast %cst_97 : f32 to vector<16x1xf32>
      %214 = arith.divf %212, %213 : vector<16x1xf32>
      %215 = vector.broadcast %207 : vector<16x1xf32> to vector<16x256xf32>
      %216 = arith.subf %195, %215 : vector<16x256xf32>
      %cst_98 = arith.constant 9.99999974E-6 : f32
      %217 = vector.broadcast %cst_98 : f32 to vector<16x1xf32>
      %218 = arith.addf %214, %217 : vector<16x1xf32>
      %219 = math.rsqrt %218 : vector<16x1xf32>
      %220 = vector.broadcast %219 : vector<16x1xf32> to vector<16x256xf32>
      %221 = arith.mulf %216, %220 : vector<16x256xf32>
      %222 = vector.broadcast %202 : vector<1x256xf32> to vector<16x256xf32>
      %223 = arith.mulf %221, %222 : vector<16x256xf32>
      %224 = vector.broadcast %203 : vector<1x256xf32> to vector<16x256xf32>
      %225 = arith.addf %223, %224 : vector<16x256xf32>
      %c0_99 = arith.constant 0 : index
      %c0_100 = arith.constant 0 : index
      %226 = vector.load %arg9[%c0_99, %c0_100] : memref<16x256xf32, #tpu.memory_space<vmem>>, vector<16x256xf32>
      tpu.vector_store %arg9[%c0_99, %c0_100], %225 {strides = array<i32>} : memref<16x256xf32, #tpu.memory_space<vmem>>, vector<16x256xf32>,
    } else {
    }
    return
  }
  func.func @transform_0(%arg0: i32) -> (i32, i32) {
    %c0_i32 = arith.constant 0 : i32
    %c0_i32_0 = arith.constant 0 : i32
    %c0_i32_1 = arith.constant 0 : i32
    return %c0_i32, %c0_i32_0 : i32, i32
  }
  func.func @transform_1(%arg0: i32) -> (i32, i32) {
    %c0_i32 = arith.constant 0 : i32
    %c0_i32_0 = arith.constant 0 : i32
    %c0_i32_1 = arith.constant 0 : i32
    return %c0_i32, %c0_i32_0 : i32, i32
  }
  func.func @transform_2(%arg0: i32) -> (i32, i32, i32, i32) {
    %c0_i32 = arith.constant 0 : i32
    %c0_i32_0 = arith.constant 0 : i32
    %c0_i32_1 = arith.constant 0 : i32
    %c0_i32_2 = arith.constant 0 : i32
    return %arg0, %c0_i32, %c0_i32_0, %c0_i32_1 : i32, i32, i32, i32
  }
  func.func @transform_3(%arg0: i32) -> (i32, i32, i32) {
    %c0_i32 = arith.constant 0 : i32
    %c0_i32_0 = arith.constant 0 : i32
    %c0_i32_1 = arith.constant 0 : i32
    return %arg0, %c0_i32, %c0_i32_0 : i32, i32, i32
  }
  func.func @transform_4(%arg0: i32) -> (i32, i32, i32) {
    %c0_i32 = arith.constant 0 : i32
    %c0_i32_0 = arith.constant 0 : i32
    %c0_i32_1 = arith.constant 0 : i32
    return %arg0, %c0_i32, %c0_i32_0 : i32, i32, i32
  }
  func.func @transform_5(%arg0: i32) -> (i32, i32, i32) {
    %c0_i32 = arith.constant 0 : i32
    %c0_i32_0 = arith.constant 0 : i32
    %c0_i32_1 = arith.constant 0 : i32
    return %arg0, %c0_i32, %c0_i32_0 : i32, i32, i32
  }
  func.func @transform_6(%arg0: i32) -> (i32, i32, i32) {
    %c0_i32 = arith.constant 0 : i32
    %c0_i32_0 = arith.constant 0 : i32
    %c0_i32_1 = arith.constant 0 : i32
    return %arg0, %c0_i32, %c0_i32_0 : i32, i32, i32
  }
  func.func @transform_7(%arg0: i32) -> (i32, i32) {
    %c0_i32 = arith.constant 0 : i32
    %c0_i32_0 = arith.constant 0 : i32
    %c0_i32_1 = arith.constant 0 : i32
    return %c0_i32, %c0_i32_0 : i32, i32
  }
  func.func @transform_8(%arg0: i32) -> (i32, i32) {
    %c0_i32 = arith.constant 0 : i32
    %c0_i32_0 = arith.constant 0 : i32
    %c0_i32_1 = arith.constant 0 : i32
    return %c0_i32, %c0_i32_0 : i32, i32
  }
}

module attributes {stable_mosaic.version = 11 : i64} {
  func.func @_dec_stack_kernel(%arg0: i32, %arg1: memref<16x256xf32, #tpu.memory_space<vmem>>, %arg2: memref<16x256xf32, #tpu.memory_space<vmem>>, %arg3: memref<16x16xf32, #tpu.memory_space<vmem>>, %arg4: memref<16x16xf32, #tpu.memory_space<vmem>>, %arg5: memref<1x8x256x256xbf16, #tpu.memory_space<vmem>>, %arg6: memref<1x256x1024xbf16, #tpu.memory_space<vmem>>, %arg7: memref<1x1024x256xbf16, #tpu.memory_space<vmem>>, %arg8: memref<1x15x256xf32, #tpu.memory_space<vmem>>, %arg9: memref<1x1x1024xf32, #tpu.memory_space<vmem>>, %arg10: memref<2x256xf32, #tpu.memory_space<vmem>>, %arg11: memref<256x128xbf16, #tpu.memory_space<vmem>>, %arg12: memref<1x128xf32, #tpu.memory_space<vmem>>, %arg13: memref<16x128xf32, #tpu.memory_space<vmem>>, %arg14: memref<16x256xf32, #tpu.memory_space<vmem>>) attributes {dimension_semantics = [#tpu.dimension_semantics<arbitrary>], iteration_bounds = array<i64: 4>, scalar_prefetch = 0 : i64, scratch_operands = 1 : i64, tpu.core_type = #tpu.core_type<tc>, window_params = [{pipeline_mode = #tpu.pipeline_mode<synchronous>, transform_indices = @transform_0, window_bounds = array<i64: 16, 256>}, {pipeline_mode = #tpu.pipeline_mode<synchronous>, transform_indices = @transform_1, window_bounds = array<i64: 16, 256>}, {pipeline_mode = #tpu.pipeline_mode<synchronous>, transform_indices = @transform_2, window_bounds = array<i64: 16, 16>}, {pipeline_mode = #tpu.pipeline_mode<synchronous>, transform_indices = @transform_3, window_bounds = array<i64: 16, 16>}, {transform_indices = @transform_4, window_bounds = array<i64: 1, 8, 256, 256>}, {transform_indices = @transform_5, window_bounds = array<i64: 1, 256, 1024>}, {transform_indices = @transform_6, window_bounds = array<i64: 1, 1024, 256>}, {transform_indices = @transform_7, window_bounds = array<i64: 1, 15, 256>}, {transform_indices = @transform_8, window_bounds = array<i64: 1, 1, 1024>}, {pipeline_mode = #tpu.pipeline_mode<synchronous>, transform_indices = @transform_9, window_bounds = array<i64: 2, 256>}, {pipeline_mode = #tpu.pipeline_mode<synchronous>, transform_indices = @transform_10, window_bounds = array<i64: 256, 128>}, {pipeline_mode = #tpu.pipeline_mode<synchronous>, transform_indices = @transform_11, window_bounds = array<i64: 1, 128>}, {pipeline_mode = #tpu.pipeline_mode<synchronous>, transform_indices = @transform_12, window_bounds = array<i64: 16, 128>}]} {
    %c0_i32 = arith.constant 0 : i32
    %0 = arith.cmpi eq, %arg0, %c0_i32 : i32
    %1 = arith.extui %0 : i1 to i32
    %c0_i32_0 = arith.constant 0 : i32
    %2 = arith.cmpi ne, %1, %c0_i32_0 : i32
    scf.if %2 {
      %c0_154 = arith.constant 0 : index
      %c0_155 = arith.constant 0 : index
      %348 = vector.load %arg1[%c0_154, %c0_155] : memref<16x256xf32, #tpu.memory_space<vmem>>, vector<16x256xf32>
      %c0_156 = arith.constant 0 : index
      %c0_157 = arith.constant 0 : index
      %349 = vector.load %arg14[%c0_156, %c0_157] : memref<16x256xf32, #tpu.memory_space<vmem>>, vector<16x256xf32>
      tpu.vector_store %arg14[%c0_156, %c0_157], %348 {strides = array<i32>} : memref<16x256xf32, #tpu.memory_space<vmem>>, vector<16x256xf32>,
    } else {
    }
    %c0 = arith.constant 0 : index
    %c0_1 = arith.constant 0 : index
    %3 = vector.load %arg14[%c0, %c0_1] : memref<16x256xf32, #tpu.memory_space<vmem>>, vector<16x256xf32>
    %c0_2 = arith.constant 0 : index
    %c0_3 = arith.constant 0 : index
    %4 = vector.load %arg2[%c0_2, %c0_3] : memref<16x256xf32, #tpu.memory_space<vmem>>, vector<16x256xf32>
    %c0_4 = arith.constant 0 : index
    %c0_5 = arith.constant 0 : index
    %5 = vector.load %arg3[%c0_4, %c0_5] : memref<16x16xf32, #tpu.memory_space<vmem>>, vector<16x16xf32>
    %c0_6 = arith.constant 0 : index
    %c0_7 = arith.constant 0 : index
    %c0_8 = arith.constant 0 : index
    %c0_9 = arith.constant 0 : index
    %6 = vector.load %arg5[%c0_6, %c0_7, %c0_8, %c0_9] : memref<1x8x256x256xbf16, #tpu.memory_space<vmem>>, vector<1x1x256x256xbf16>
    %7 = vector.shape_cast %6 : vector<1x1x256x256xbf16> to vector<256x256xbf16>
    %c0_10 = arith.constant 0 : index
    %c0_11 = arith.constant 0 : index
    %c0_12 = arith.constant 0 : index
    %8 = vector.load %arg8[%c0_10, %c0_11, %c0_12] : memref<1x15x256xf32, #tpu.memory_space<vmem>>, vector<1x1x256xf32>
    %9 = vector.shape_cast %8 : vector<1x1x256xf32> to vector<1x256xf32>
    %c0_13 = arith.constant 0 : index
    %c1 = arith.constant 1 : index
    %c0_14 = arith.constant 0 : index
    %c0_15 = arith.constant 0 : index
    %10 = vector.load %arg5[%c0_13, %c1, %c0_14, %c0_15] : memref<1x8x256x256xbf16, #tpu.memory_space<vmem>>, vector<1x1x256x256xbf16>
    %11 = vector.shape_cast %10 : vector<1x1x256x256xbf16> to vector<256x256xbf16>
    %c0_16 = arith.constant 0 : index
    %c1_17 = arith.constant 1 : index
    %c0_18 = arith.constant 0 : index
    %12 = vector.load %arg8[%c0_16, %c1_17, %c0_18] : memref<1x15x256xf32, #tpu.memory_space<vmem>>, vector<1x1x256xf32>
    %13 = vector.shape_cast %12 : vector<1x1x256xf32> to vector<1x256xf32>
    %c0_19 = arith.constant 0 : index
    %c2 = arith.constant 2 : index
    %c0_20 = arith.constant 0 : index
    %c0_21 = arith.constant 0 : index
    %14 = vector.load %arg5[%c0_19, %c2, %c0_20, %c0_21] : memref<1x8x256x256xbf16, #tpu.memory_space<vmem>>, vector<1x1x256x256xbf16>
    %15 = vector.shape_cast %14 : vector<1x1x256x256xbf16> to vector<256x256xbf16>
    %c0_22 = arith.constant 0 : index
    %c2_23 = arith.constant 2 : index
    %c0_24 = arith.constant 0 : index
    %16 = vector.load %arg8[%c0_22, %c2_23, %c0_24] : memref<1x15x256xf32, #tpu.memory_space<vmem>>, vector<1x1x256xf32>
    %17 = vector.shape_cast %16 : vector<1x1x256xf32> to vector<1x256xf32>
    %c0_25 = arith.constant 0 : index
    %c3 = arith.constant 3 : index
    %c0_26 = arith.constant 0 : index
    %c0_27 = arith.constant 0 : index
    %18 = vector.load %arg5[%c0_25, %c3, %c0_26, %c0_27] : memref<1x8x256x256xbf16, #tpu.memory_space<vmem>>, vector<1x1x256x256xbf16>
    %19 = vector.shape_cast %18 : vector<1x1x256x256xbf16> to vector<256x256xbf16>
    %c0_28 = arith.constant 0 : index
    %c3_29 = arith.constant 3 : index
    %c0_30 = arith.constant 0 : index
    %20 = vector.load %arg8[%c0_28, %c3_29, %c0_30] : memref<1x15x256xf32, #tpu.memory_space<vmem>>, vector<1x1x256xf32>
    %21 = vector.shape_cast %20 : vector<1x1x256xf32> to vector<1x256xf32>
    %22 = arith.truncf %3 : vector<16x256xf32> to vector<16x256xbf16>
    %23 = arith.truncf %3 : vector<16x256xf32> to vector<16x256xbf16>
    %cst = arith.constant dense<0.000000e+00> : vector<16x256xf32>
    %24 = tpu.matmul %22, %7, %cst {dimension_numbers = #tpu.dot_dimension_numbers<[1], [0], [0], [1], [0, 0, 1, 1], [], []>} : vector<16x256xbf16>, vector<256x256xbf16>, vector<16x256xf32> -> vector<16x256xf32>
    %25 = vector.broadcast %9 : vector<1x256xf32> to vector<16x256xf32>
    %26 = arith.addf %24, %25 : vector<16x256xf32>
    %cst_31 = arith.constant dense<0.000000e+00> : vector<16x256xf32>
    %27 = tpu.matmul %23, %11, %cst_31 {dimension_numbers = #tpu.dot_dimension_numbers<[1], [0], [0], [1], [0, 0, 1, 1], [], []>} : vector<16x256xbf16>, vector<256x256xbf16>, vector<16x256xf32> -> vector<16x256xf32>
    %28 = vector.broadcast %13 : vector<1x256xf32> to vector<16x256xf32>
    %29 = arith.addf %27, %28 : vector<16x256xf32>
    %cst_32 = arith.constant dense<0.000000e+00> : vector<16x256xf32>
    %30 = tpu.matmul %23, %15, %cst_32 {dimension_numbers = #tpu.dot_dimension_numbers<[1], [0], [0], [1], [0, 0, 1, 1], [], []>} : vector<16x256xbf16>, vector<256x256xbf16>, vector<16x256xf32> -> vector<16x256xf32>
    %31 = vector.broadcast %17 : vector<1x256xf32> to vector<16x256xf32>
    %32 = arith.addf %30, %31 : vector<16x256xf32>
    %33 = arith.truncf %26 : vector<16x256xf32> to vector<16x256xbf16>
    %34 = arith.truncf %29 : vector<16x256xf32> to vector<16x256xbf16>
    %35 = arith.truncf %32 : vector<16x256xf32> to vector<16x256xbf16>
    %36 = vector.extract_strided_slice %33 {offsets = [0, 0], sizes = [16, 64], strides = [1, 1]} : vector<16x256xbf16> to vector<16x64xbf16>
    %37 = vector.extract_strided_slice %34 {offsets = [0, 0], sizes = [16, 64], strides = [1, 1]} : vector<16x256xbf16> to vector<16x64xbf16>
    %38 = vector.extract_strided_slice %35 {offsets = [0, 0], sizes = [16, 64], strides = [1, 1]} : vector<16x256xbf16> to vector<16x64xbf16>
    %cst_33 = arith.constant dense<0.000000e+00> : vector<16x16xf32>
    %39 = tpu.matmul %36, %37, %cst_33 {dimension_numbers = #tpu.dot_dimension_numbers<[1], [1], [0], [0], [0, 0, 1, 0], [], []>} : vector<16x64xbf16>, vector<16x64xbf16>, vector<16x16xf32> -> vector<16x16xf32>
    %cst_34 = arith.constant 1.250000e-01 : f32
    %40 = vector.broadcast %cst_34 : f32 to vector<16x16xf32>
    %41 = arith.mulf %39, %40 : vector<16x16xf32>
    %42 = arith.addf %41, %5 : vector<16x16xf32>
    %cst_35 = arith.constant dense<0xFF800000> : vector<16xf32>
    %43 = vector.multi_reduction <maximumf>, %42, %cst_35 [1] : vector<16x16xf32> to vector<16xf32>
    %44 = vector.shape_cast %43 : vector<16xf32> to vector<16x1xf32>
    %45 = vector.broadcast %44 : vector<16x1xf32> to vector<16x16xf32>
    %46 = arith.subf %42, %45 : vector<16x16xf32>
    %47 = math.exp %46 : vector<16x16xf32>
    %cst_36 = arith.constant dense<0.000000e+00> : vector<16xf32>
    %48 = vector.multi_reduction <add>, %47, %cst_36 [1] : vector<16x16xf32> to vector<16xf32>
    %49 = vector.shape_cast %48 : vector<16xf32> to vector<16x1xf32>
    %50 = vector.broadcast %49 : vector<16x1xf32> to vector<16x16xf32>
    %51 = arith.divf %47, %50 : vector<16x16xf32>
    %52 = arith.truncf %51 : vector<16x16xf32> to vector<16x16xbf16>
    %cst_37 = arith.constant dense<0.000000e+00> : vector<16x64xf32>
    %53 = tpu.matmul %52, %38, %cst_37 {dimension_numbers = #tpu.dot_dimension_numbers<[1], [0], [0], [1], [0, 0, 1, 1], [], []>} : vector<16x16xbf16>, vector<16x64xbf16>, vector<16x64xf32> -> vector<16x64xf32>
    %54 = arith.truncf %53 : vector<16x64xf32> to vector<16x64xbf16>
    %55 = vector.extract_strided_slice %19 {offsets = [0, 0], sizes = [64, 256], strides = [1, 1]} : vector<256x256xbf16> to vector<64x256xbf16>
    %cst_38 = arith.constant dense<0.000000e+00> : vector<16x256xf32>
    %56 = tpu.matmul %54, %55, %cst_38 {dimension_numbers = #tpu.dot_dimension_numbers<[1], [0], [0], [1], [0, 0, 1, 1], [], []>} : vector<16x64xbf16>, vector<64x256xbf16>, vector<16x256xf32> -> vector<16x256xf32>
    %57 = vector.extract_strided_slice %33 {offsets = [0, 64], sizes = [16, 64], strides = [1, 1]} : vector<16x256xbf16> to vector<16x64xbf16>
    %58 = vector.extract_strided_slice %34 {offsets = [0, 64], sizes = [16, 64], strides = [1, 1]} : vector<16x256xbf16> to vector<16x64xbf16>
    %59 = vector.extract_strided_slice %35 {offsets = [0, 64], sizes = [16, 64], strides = [1, 1]} : vector<16x256xbf16> to vector<16x64xbf16>
    %cst_39 = arith.constant dense<0.000000e+00> : vector<16x16xf32>
    %60 = tpu.matmul %57, %58, %cst_39 {dimension_numbers = #tpu.dot_dimension_numbers<[1], [1], [0], [0], [0, 0, 1, 0], [], []>} : vector<16x64xbf16>, vector<16x64xbf16>, vector<16x16xf32> -> vector<16x16xf32>
    %cst_40 = arith.constant 1.250000e-01 : f32
    %61 = vector.broadcast %cst_40 : f32 to vector<16x16xf32>
    %62 = arith.mulf %60, %61 : vector<16x16xf32>
    %63 = arith.addf %62, %5 : vector<16x16xf32>
    %cst_41 = arith.constant dense<0xFF800000> : vector<16xf32>
    %64 = vector.multi_reduction <maximumf>, %63, %cst_41 [1] : vector<16x16xf32> to vector<16xf32>
    %65 = vector.shape_cast %64 : vector<16xf32> to vector<16x1xf32>
    %66 = vector.broadcast %65 : vector<16x1xf32> to vector<16x16xf32>
    %67 = arith.subf %63, %66 : vector<16x16xf32>
    %68 = math.exp %67 : vector<16x16xf32>
    %cst_42 = arith.constant dense<0.000000e+00> : vector<16xf32>
    %69 = vector.multi_reduction <add>, %68, %cst_42 [1] : vector<16x16xf32> to vector<16xf32>
    %70 = vector.shape_cast %69 : vector<16xf32> to vector<16x1xf32>
    %71 = vector.broadcast %70 : vector<16x1xf32> to vector<16x16xf32>
    %72 = arith.divf %68, %71 : vector<16x16xf32>
    %73 = arith.truncf %72 : vector<16x16xf32> to vector<16x16xbf16>
    %cst_43 = arith.constant dense<0.000000e+00> : vector<16x64xf32>
    %74 = tpu.matmul %73, %59, %cst_43 {dimension_numbers = #tpu.dot_dimension_numbers<[1], [0], [0], [1], [0, 0, 1, 1], [], []>} : vector<16x16xbf16>, vector<16x64xbf16>, vector<16x64xf32> -> vector<16x64xf32>
    %75 = arith.truncf %74 : vector<16x64xf32> to vector<16x64xbf16>
    %76 = vector.extract_strided_slice %19 {offsets = [64, 0], sizes = [64, 256], strides = [1, 1]} : vector<256x256xbf16> to vector<64x256xbf16>
    %cst_44 = arith.constant dense<0.000000e+00> : vector<16x256xf32>
    %77 = tpu.matmul %75, %76, %cst_44 {dimension_numbers = #tpu.dot_dimension_numbers<[1], [0], [0], [1], [0, 0, 1, 1], [], []>} : vector<16x64xbf16>, vector<64x256xbf16>, vector<16x256xf32> -> vector<16x256xf32>
    %78 = arith.addf %56, %77 : vector<16x256xf32>
    %79 = vector.extract_strided_slice %33 {offsets = [0, 128], sizes = [16, 64], strides = [1, 1]} : vector<16x256xbf16> to vector<16x64xbf16>
    %80 = vector.extract_strided_slice %34 {offsets = [0, 128], sizes = [16, 64], strides = [1, 1]} : vector<16x256xbf16> to vector<16x64xbf16>
    %81 = vector.extract_strided_slice %35 {offsets = [0, 128], sizes = [16, 64], strides = [1, 1]} : vector<16x256xbf16> to vector<16x64xbf16>
    %cst_45 = arith.constant dense<0.000000e+00> : vector<16x16xf32>
    %82 = tpu.matmul %79, %80, %cst_45 {dimension_numbers = #tpu.dot_dimension_numbers<[1], [1], [0], [0], [0, 0, 1, 0], [], []>} : vector<16x64xbf16>, vector<16x64xbf16>, vector<16x16xf32> -> vector<16x16xf32>
    %cst_46 = arith.constant 1.250000e-01 : f32
    %83 = vector.broadcast %cst_46 : f32 to vector<16x16xf32>
    %84 = arith.mulf %82, %83 : vector<16x16xf32>
    %85 = arith.addf %84, %5 : vector<16x16xf32>
    %cst_47 = arith.constant dense<0xFF800000> : vector<16xf32>
    %86 = vector.multi_reduction <maximumf>, %85, %cst_47 [1] : vector<16x16xf32> to vector<16xf32>
    %87 = vector.shape_cast %86 : vector<16xf32> to vector<16x1xf32>
    %88 = vector.broadcast %87 : vector<16x1xf32> to vector<16x16xf32>
    %89 = arith.subf %85, %88 : vector<16x16xf32>
    %90 = math.exp %89 : vector<16x16xf32>
    %cst_48 = arith.constant dense<0.000000e+00> : vector<16xf32>
    %91 = vector.multi_reduction <add>, %90, %cst_48 [1] : vector<16x16xf32> to vector<16xf32>
    %92 = vector.shape_cast %91 : vector<16xf32> to vector<16x1xf32>
    %93 = vector.broadcast %92 : vector<16x1xf32> to vector<16x16xf32>
    %94 = arith.divf %90, %93 : vector<16x16xf32>
    %95 = arith.truncf %94 : vector<16x16xf32> to vector<16x16xbf16>
    %cst_49 = arith.constant dense<0.000000e+00> : vector<16x64xf32>
    %96 = tpu.matmul %95, %81, %cst_49 {dimension_numbers = #tpu.dot_dimension_numbers<[1], [0], [0], [1], [0, 0, 1, 1], [], []>} : vector<16x16xbf16>, vector<16x64xbf16>, vector<16x64xf32> -> vector<16x64xf32>
    %97 = arith.truncf %96 : vector<16x64xf32> to vector<16x64xbf16>
    %98 = vector.extract_strided_slice %19 {offsets = [128, 0], sizes = [64, 256], strides = [1, 1]} : vector<256x256xbf16> to vector<64x256xbf16>
    %cst_50 = arith.constant dense<0.000000e+00> : vector<16x256xf32>
    %99 = tpu.matmul %97, %98, %cst_50 {dimension_numbers = #tpu.dot_dimension_numbers<[1], [0], [0], [1], [0, 0, 1, 1], [], []>} : vector<16x64xbf16>, vector<64x256xbf16>, vector<16x256xf32> -> vector<16x256xf32>
    %100 = arith.addf %78, %99 : vector<16x256xf32>
    %101 = vector.extract_strided_slice %33 {offsets = [0, 192], sizes = [16, 64], strides = [1, 1]} : vector<16x256xbf16> to vector<16x64xbf16>
    %102 = vector.extract_strided_slice %34 {offsets = [0, 192], sizes = [16, 64], strides = [1, 1]} : vector<16x256xbf16> to vector<16x64xbf16>
    %103 = vector.extract_strided_slice %35 {offsets = [0, 192], sizes = [16, 64], strides = [1, 1]} : vector<16x256xbf16> to vector<16x64xbf16>
    %cst_51 = arith.constant dense<0.000000e+00> : vector<16x16xf32>
    %104 = tpu.matmul %101, %102, %cst_51 {dimension_numbers = #tpu.dot_dimension_numbers<[1], [1], [0], [0], [0, 0, 1, 0], [], []>} : vector<16x64xbf16>, vector<16x64xbf16>, vector<16x16xf32> -> vector<16x16xf32>
    %cst_52 = arith.constant 1.250000e-01 : f32
    %105 = vector.broadcast %cst_52 : f32 to vector<16x16xf32>
    %106 = arith.mulf %104, %105 : vector<16x16xf32>
    %107 = arith.addf %106, %5 : vector<16x16xf32>
    %cst_53 = arith.constant dense<0xFF800000> : vector<16xf32>
    %108 = vector.multi_reduction <maximumf>, %107, %cst_53 [1] : vector<16x16xf32> to vector<16xf32>
    %109 = vector.shape_cast %108 : vector<16xf32> to vector<16x1xf32>
    %110 = vector.broadcast %109 : vector<16x1xf32> to vector<16x16xf32>
    %111 = arith.subf %107, %110 : vector<16x16xf32>
    %112 = math.exp %111 : vector<16x16xf32>
    %cst_54 = arith.constant dense<0.000000e+00> : vector<16xf32>
    %113 = vector.multi_reduction <add>, %112, %cst_54 [1] : vector<16x16xf32> to vector<16xf32>
    %114 = vector.shape_cast %113 : vector<16xf32> to vector<16x1xf32>
    %115 = vector.broadcast %114 : vector<16x1xf32> to vector<16x16xf32>
    %116 = arith.divf %112, %115 : vector<16x16xf32>
    %117 = arith.truncf %116 : vector<16x16xf32> to vector<16x16xbf16>
    %cst_55 = arith.constant dense<0.000000e+00> : vector<16x64xf32>
    %118 = tpu.matmul %117, %103, %cst_55 {dimension_numbers = #tpu.dot_dimension_numbers<[1], [0], [0], [1], [0, 0, 1, 1], [], []>} : vector<16x16xbf16>, vector<16x64xbf16>, vector<16x64xf32> -> vector<16x64xf32>
    %119 = arith.truncf %118 : vector<16x64xf32> to vector<16x64xbf16>
    %120 = vector.extract_strided_slice %19 {offsets = [192, 0], sizes = [64, 256], strides = [1, 1]} : vector<256x256xbf16> to vector<64x256xbf16>
    %cst_56 = arith.constant dense<0.000000e+00> : vector<16x256xf32>
    %121 = tpu.matmul %119, %120, %cst_56 {dimension_numbers = #tpu.dot_dimension_numbers<[1], [0], [0], [1], [0, 0, 1, 1], [], []>} : vector<16x64xbf16>, vector<64x256xbf16>, vector<16x256xf32> -> vector<16x256xf32>
    %122 = arith.addf %100, %121 : vector<16x256xf32>
    %123 = vector.broadcast %21 : vector<1x256xf32> to vector<16x256xf32>
    %124 = arith.addf %122, %123 : vector<16x256xf32>
    %125 = arith.addf %3, %124 : vector<16x256xf32>
    %c0_57 = arith.constant 0 : index
    %c4 = arith.constant 4 : index
    %c0_58 = arith.constant 0 : index
    %126 = vector.load %arg8[%c0_57, %c4, %c0_58] : memref<1x15x256xf32, #tpu.memory_space<vmem>>, vector<1x1x256xf32>
    %127 = vector.shape_cast %126 : vector<1x1x256xf32> to vector<1x256xf32>
    %c0_59 = arith.constant 0 : index
    %c5 = arith.constant 5 : index
    %c0_60 = arith.constant 0 : index
    %128 = vector.load %arg8[%c0_59, %c5, %c0_60] : memref<1x15x256xf32, #tpu.memory_space<vmem>>, vector<1x1x256xf32>
    %129 = vector.shape_cast %128 : vector<1x1x256xf32> to vector<1x256xf32>
    %cst_61 = arith.constant dense<0.000000e+00> : vector<16xf32>
    %130 = vector.multi_reduction <add>, %125, %cst_61 [1] : vector<16x256xf32> to vector<16xf32>
    %131 = vector.shape_cast %130 : vector<16xf32> to vector<16x1xf32>
    %cst_62 = arith.constant 2.560000e+02 : f32
    %132 = vector.broadcast %cst_62 : f32 to vector<16x1xf32>
    %133 = arith.divf %131, %132 : vector<16x1xf32>
    %134 = vector.broadcast %133 : vector<16x1xf32> to vector<16x256xf32>
    %135 = arith.subf %125, %134 : vector<16x256xf32>
    %136 = arith.mulf %135, %135 : vector<16x256xf32>
    %cst_63 = arith.constant dense<0.000000e+00> : vector<16xf32>
    %137 = vector.multi_reduction <add>, %136, %cst_63 [1] : vector<16x256xf32> to vector<16xf32>
    %138 = vector.shape_cast %137 : vector<16xf32> to vector<16x1xf32>
    %cst_64 = arith.constant 2.560000e+02 : f32
    %139 = vector.broadcast %cst_64 : f32 to vector<16x1xf32>
    %140 = arith.divf %138, %139 : vector<16x1xf32>
    %141 = vector.broadcast %133 : vector<16x1xf32> to vector<16x256xf32>
    %142 = arith.subf %125, %141 : vector<16x256xf32>
    %cst_65 = arith.constant 9.99999974E-6 : f32
    %143 = vector.broadcast %cst_65 : f32 to vector<16x1xf32>
    %144 = arith.addf %140, %143 : vector<16x1xf32>
    %145 = math.rsqrt %144 : vector<16x1xf32>
    %146 = vector.broadcast %145 : vector<16x1xf32> to vector<16x256xf32>
    %147 = arith.mulf %142, %146 : vector<16x256xf32>
    %148 = vector.broadcast %127 : vector<1x256xf32> to vector<16x256xf32>
    %149 = arith.mulf %147, %148 : vector<16x256xf32>
    %150 = vector.broadcast %129 : vector<1x256xf32> to vector<16x256xf32>
    %151 = arith.addf %149, %150 : vector<16x256xf32>
    %c0_66 = arith.constant 0 : index
    %c0_67 = arith.constant 0 : index
    %152 = vector.load %arg4[%c0_66, %c0_67] : memref<16x16xf32, #tpu.memory_space<vmem>>, vector<16x16xf32>
    %c0_68 = arith.constant 0 : index
    %c4_69 = arith.constant 4 : index
    %c0_70 = arith.constant 0 : index
    %c0_71 = arith.constant 0 : index
    %153 = vector.load %arg5[%c0_68, %c4_69, %c0_70, %c0_71] : memref<1x8x256x256xbf16, #tpu.memory_space<vmem>>, vector<1x1x256x256xbf16>
    %154 = vector.shape_cast %153 : vector<1x1x256x256xbf16> to vector<256x256xbf16>
    %c0_72 = arith.constant 0 : index
    %c6 = arith.constant 6 : index
    %c0_73 = arith.constant 0 : index
    %155 = vector.load %arg8[%c0_72, %c6, %c0_73] : memref<1x15x256xf32, #tpu.memory_space<vmem>>, vector<1x1x256xf32>
    %156 = vector.shape_cast %155 : vector<1x1x256xf32> to vector<1x256xf32>
    %c0_74 = arith.constant 0 : index
    %c5_75 = arith.constant 5 : index
    %c0_76 = arith.constant 0 : index
    %c0_77 = arith.constant 0 : index
    %157 = vector.load %arg5[%c0_74, %c5_75, %c0_76, %c0_77] : memref<1x8x256x256xbf16, #tpu.memory_space<vmem>>, vector<1x1x256x256xbf16>
    %158 = vector.shape_cast %157 : vector<1x1x256x256xbf16> to vector<256x256xbf16>
    %c0_78 = arith.constant 0 : index
    %c7 = arith.constant 7 : index
    %c0_79 = arith.constant 0 : index
    %159 = vector.load %arg8[%c0_78, %c7, %c0_79] : memref<1x15x256xf32, #tpu.memory_space<vmem>>, vector<1x1x256xf32>
    %160 = vector.shape_cast %159 : vector<1x1x256xf32> to vector<1x256xf32>
    %c0_80 = arith.constant 0 : index
    %c6_81 = arith.constant 6 : index
    %c0_82 = arith.constant 0 : index
    %c0_83 = arith.constant 0 : index
    %161 = vector.load %arg5[%c0_80, %c6_81, %c0_82, %c0_83] : memref<1x8x256x256xbf16, #tpu.memory_space<vmem>>, vector<1x1x256x256xbf16>
    %162 = vector.shape_cast %161 : vector<1x1x256x256xbf16> to vector<256x256xbf16>
    %c0_84 = arith.constant 0 : index
    %c8 = arith.constant 8 : index
    %c0_85 = arith.constant 0 : index
    %163 = vector.load %arg8[%c0_84, %c8, %c0_85] : memref<1x15x256xf32, #tpu.memory_space<vmem>>, vector<1x1x256xf32>
    %164 = vector.shape_cast %163 : vector<1x1x256xf32> to vector<1x256xf32>
    %c0_86 = arith.constant 0 : index
    %c7_87 = arith.constant 7 : index
    %c0_88 = arith.constant 0 : index
    %c0_89 = arith.constant 0 : index
    %165 = vector.load %arg5[%c0_86, %c7_87, %c0_88, %c0_89] : memref<1x8x256x256xbf16, #tpu.memory_space<vmem>>, vector<1x1x256x256xbf16>
    %166 = vector.shape_cast %165 : vector<1x1x256x256xbf16> to vector<256x256xbf16>
    %c0_90 = arith.constant 0 : index
    %c9 = arith.constant 9 : index
    %c0_91 = arith.constant 0 : index
    %167 = vector.load %arg8[%c0_90, %c9, %c0_91] : memref<1x15x256xf32, #tpu.memory_space<vmem>>, vector<1x1x256xf32>
    %168 = vector.shape_cast %167 : vector<1x1x256xf32> to vector<1x256xf32>
    %169 = arith.truncf %151 : vector<16x256xf32> to vector<16x256xbf16>
    %170 = arith.truncf %4 : vector<16x256xf32> to vector<16x256xbf16>
    %cst_92 = arith.constant dense<0.000000e+00> : vector<16x256xf32>
    %171 = tpu.matmul %169, %154, %cst_92 {dimension_numbers = #tpu.dot_dimension_numbers<[1], [0], [0], [1], [0, 0, 1, 1], [], []>} : vector<16x256xbf16>, vector<256x256xbf16>, vector<16x256xf32> -> vector<16x256xf32>
    %172 = vector.broadcast %156 : vector<1x256xf32> to vector<16x256xf32>
    %173 = arith.addf %171, %172 : vector<16x256xf32>
    %cst_93 = arith.constant dense<0.000000e+00> : vector<16x256xf32>
    %174 = tpu.matmul %170, %158, %cst_93 {dimension_numbers = #tpu.dot_dimension_numbers<[1], [0], [0], [1], [0, 0, 1, 1], [], []>} : vector<16x256xbf16>, vector<256x256xbf16>, vector<16x256xf32> -> vector<16x256xf32>
    %175 = vector.broadcast %160 : vector<1x256xf32> to vector<16x256xf32>
    %176 = arith.addf %174, %175 : vector<16x256xf32>
    %cst_94 = arith.constant dense<0.000000e+00> : vector<16x256xf32>
    %177 = tpu.matmul %170, %162, %cst_94 {dimension_numbers = #tpu.dot_dimension_numbers<[1], [0], [0], [1], [0, 0, 1, 1], [], []>} : vector<16x256xbf16>, vector<256x256xbf16>, vector<16x256xf32> -> vector<16x256xf32>
    %178 = vector.broadcast %164 : vector<1x256xf32> to vector<16x256xf32>
    %179 = arith.addf %177, %178 : vector<16x256xf32>
    %180 = arith.truncf %173 : vector<16x256xf32> to vector<16x256xbf16>
    %181 = arith.truncf %176 : vector<16x256xf32> to vector<16x256xbf16>
    %182 = arith.truncf %179 : vector<16x256xf32> to vector<16x256xbf16>
    %183 = vector.extract_strided_slice %180 {offsets = [0, 0], sizes = [16, 64], strides = [1, 1]} : vector<16x256xbf16> to vector<16x64xbf16>
    %184 = vector.extract_strided_slice %181 {offsets = [0, 0], sizes = [16, 64], strides = [1, 1]} : vector<16x256xbf16> to vector<16x64xbf16>
    %185 = vector.extract_strided_slice %182 {offsets = [0, 0], sizes = [16, 64], strides = [1, 1]} : vector<16x256xbf16> to vector<16x64xbf16>
    %cst_95 = arith.constant dense<0.000000e+00> : vector<16x16xf32>
    %186 = tpu.matmul %183, %184, %cst_95 {dimension_numbers = #tpu.dot_dimension_numbers<[1], [1], [0], [0], [0, 0, 1, 0], [], []>} : vector<16x64xbf16>, vector<16x64xbf16>, vector<16x16xf32> -> vector<16x16xf32>
    %cst_96 = arith.constant 1.250000e-01 : f32
    %187 = vector.broadcast %cst_96 : f32 to vector<16x16xf32>
    %188 = arith.mulf %186, %187 : vector<16x16xf32>
    %189 = arith.addf %188, %152 : vector<16x16xf32>
    %cst_97 = arith.constant dense<0xFF800000> : vector<16xf32>
    %190 = vector.multi_reduction <maximumf>, %189, %cst_97 [1] : vector<16x16xf32> to vector<16xf32>
    %191 = vector.shape_cast %190 : vector<16xf32> to vector<16x1xf32>
    %192 = vector.broadcast %191 : vector<16x1xf32> to vector<16x16xf32>
    %193 = arith.subf %189, %192 : vector<16x16xf32>
    %194 = math.exp %193 : vector<16x16xf32>
    %cst_98 = arith.constant dense<0.000000e+00> : vector<16xf32>
    %195 = vector.multi_reduction <add>, %194, %cst_98 [1] : vector<16x16xf32> to vector<16xf32>
    %196 = vector.shape_cast %195 : vector<16xf32> to vector<16x1xf32>
    %197 = vector.broadcast %196 : vector<16x1xf32> to vector<16x16xf32>
    %198 = arith.divf %194, %197 : vector<16x16xf32>
    %199 = arith.truncf %198 : vector<16x16xf32> to vector<16x16xbf16>
    %cst_99 = arith.constant dense<0.000000e+00> : vector<16x64xf32>
    %200 = tpu.matmul %199, %185, %cst_99 {dimension_numbers = #tpu.dot_dimension_numbers<[1], [0], [0], [1], [0, 0, 1, 1], [], []>} : vector<16x16xbf16>, vector<16x64xbf16>, vector<16x64xf32> -> vector<16x64xf32>
    %201 = arith.truncf %200 : vector<16x64xf32> to vector<16x64xbf16>
    %202 = vector.extract_strided_slice %166 {offsets = [0, 0], sizes = [64, 256], strides = [1, 1]} : vector<256x256xbf16> to vector<64x256xbf16>
    %cst_100 = arith.constant dense<0.000000e+00> : vector<16x256xf32>
    %203 = tpu.matmul %201, %202, %cst_100 {dimension_numbers = #tpu.dot_dimension_numbers<[1], [0], [0], [1], [0, 0, 1, 1], [], []>} : vector<16x64xbf16>, vector<64x256xbf16>, vector<16x256xf32> -> vector<16x256xf32>
    %204 = vector.extract_strided_slice %180 {offsets = [0, 64], sizes = [16, 64], strides = [1, 1]} : vector<16x256xbf16> to vector<16x64xbf16>
    %205 = vector.extract_strided_slice %181 {offsets = [0, 64], sizes = [16, 64], strides = [1, 1]} : vector<16x256xbf16> to vector<16x64xbf16>
    %206 = vector.extract_strided_slice %182 {offsets = [0, 64], sizes = [16, 64], strides = [1, 1]} : vector<16x256xbf16> to vector<16x64xbf16>
    %cst_101 = arith.constant dense<0.000000e+00> : vector<16x16xf32>
    %207 = tpu.matmul %204, %205, %cst_101 {dimension_numbers = #tpu.dot_dimension_numbers<[1], [1], [0], [0], [0, 0, 1, 0], [], []>} : vector<16x64xbf16>, vector<16x64xbf16>, vector<16x16xf32> -> vector<16x16xf32>
    %cst_102 = arith.constant 1.250000e-01 : f32
    %208 = vector.broadcast %cst_102 : f32 to vector<16x16xf32>
    %209 = arith.mulf %207, %208 : vector<16x16xf32>
    %210 = arith.addf %209, %152 : vector<16x16xf32>
    %cst_103 = arith.constant dense<0xFF800000> : vector<16xf32>
    %211 = vector.multi_reduction <maximumf>, %210, %cst_103 [1] : vector<16x16xf32> to vector<16xf32>
    %212 = vector.shape_cast %211 : vector<16xf32> to vector<16x1xf32>
    %213 = vector.broadcast %212 : vector<16x1xf32> to vector<16x16xf32>
    %214 = arith.subf %210, %213 : vector<16x16xf32>
    %215 = math.exp %214 : vector<16x16xf32>
    %cst_104 = arith.constant dense<0.000000e+00> : vector<16xf32>
    %216 = vector.multi_reduction <add>, %215, %cst_104 [1] : vector<16x16xf32> to vector<16xf32>
    %217 = vector.shape_cast %216 : vector<16xf32> to vector<16x1xf32>
    %218 = vector.broadcast %217 : vector<16x1xf32> to vector<16x16xf32>
    %219 = arith.divf %215, %218 : vector<16x16xf32>
    %220 = arith.truncf %219 : vector<16x16xf32> to vector<16x16xbf16>
    %cst_105 = arith.constant dense<0.000000e+00> : vector<16x64xf32>
    %221 = tpu.matmul %220, %206, %cst_105 {dimension_numbers = #tpu.dot_dimension_numbers<[1], [0], [0], [1], [0, 0, 1, 1], [], []>} : vector<16x16xbf16>, vector<16x64xbf16>, vector<16x64xf32> -> vector<16x64xf32>
    %222 = arith.truncf %221 : vector<16x64xf32> to vector<16x64xbf16>
    %223 = vector.extract_strided_slice %166 {offsets = [64, 0], sizes = [64, 256], strides = [1, 1]} : vector<256x256xbf16> to vector<64x256xbf16>
    %cst_106 = arith.constant dense<0.000000e+00> : vector<16x256xf32>
    %224 = tpu.matmul %222, %223, %cst_106 {dimension_numbers = #tpu.dot_dimension_numbers<[1], [0], [0], [1], [0, 0, 1, 1], [], []>} : vector<16x64xbf16>, vector<64x256xbf16>, vector<16x256xf32> -> vector<16x256xf32>
    %225 = arith.addf %203, %224 : vector<16x256xf32>
    %226 = vector.extract_strided_slice %180 {offsets = [0, 128], sizes = [16, 64], strides = [1, 1]} : vector<16x256xbf16> to vector<16x64xbf16>
    %227 = vector.extract_strided_slice %181 {offsets = [0, 128], sizes = [16, 64], strides = [1, 1]} : vector<16x256xbf16> to vector<16x64xbf16>
    %228 = vector.extract_strided_slice %182 {offsets = [0, 128], sizes = [16, 64], strides = [1, 1]} : vector<16x256xbf16> to vector<16x64xbf16>
    %cst_107 = arith.constant dense<0.000000e+00> : vector<16x16xf32>
    %229 = tpu.matmul %226, %227, %cst_107 {dimension_numbers = #tpu.dot_dimension_numbers<[1], [1], [0], [0], [0, 0, 1, 0], [], []>} : vector<16x64xbf16>, vector<16x64xbf16>, vector<16x16xf32> -> vector<16x16xf32>
    %cst_108 = arith.constant 1.250000e-01 : f32
    %230 = vector.broadcast %cst_108 : f32 to vector<16x16xf32>
    %231 = arith.mulf %229, %230 : vector<16x16xf32>
    %232 = arith.addf %231, %152 : vector<16x16xf32>
    %cst_109 = arith.constant dense<0xFF800000> : vector<16xf32>
    %233 = vector.multi_reduction <maximumf>, %232, %cst_109 [1] : vector<16x16xf32> to vector<16xf32>
    %234 = vector.shape_cast %233 : vector<16xf32> to vector<16x1xf32>
    %235 = vector.broadcast %234 : vector<16x1xf32> to vector<16x16xf32>
    %236 = arith.subf %232, %235 : vector<16x16xf32>
    %237 = math.exp %236 : vector<16x16xf32>
    %cst_110 = arith.constant dense<0.000000e+00> : vector<16xf32>
    %238 = vector.multi_reduction <add>, %237, %cst_110 [1] : vector<16x16xf32> to vector<16xf32>
    %239 = vector.shape_cast %238 : vector<16xf32> to vector<16x1xf32>
    %240 = vector.broadcast %239 : vector<16x1xf32> to vector<16x16xf32>
    %241 = arith.divf %237, %240 : vector<16x16xf32>
    %242 = arith.truncf %241 : vector<16x16xf32> to vector<16x16xbf16>
    %cst_111 = arith.constant dense<0.000000e+00> : vector<16x64xf32>
    %243 = tpu.matmul %242, %228, %cst_111 {dimension_numbers = #tpu.dot_dimension_numbers<[1], [0], [0], [1], [0, 0, 1, 1], [], []>} : vector<16x16xbf16>, vector<16x64xbf16>, vector<16x64xf32> -> vector<16x64xf32>
    %244 = arith.truncf %243 : vector<16x64xf32> to vector<16x64xbf16>
    %245 = vector.extract_strided_slice %166 {offsets = [128, 0], sizes = [64, 256], strides = [1, 1]} : vector<256x256xbf16> to vector<64x256xbf16>
    %cst_112 = arith.constant dense<0.000000e+00> : vector<16x256xf32>
    %246 = tpu.matmul %244, %245, %cst_112 {dimension_numbers = #tpu.dot_dimension_numbers<[1], [0], [0], [1], [0, 0, 1, 1], [], []>} : vector<16x64xbf16>, vector<64x256xbf16>, vector<16x256xf32> -> vector<16x256xf32>
    %247 = arith.addf %225, %246 : vector<16x256xf32>
    %248 = vector.extract_strided_slice %180 {offsets = [0, 192], sizes = [16, 64], strides = [1, 1]} : vector<16x256xbf16> to vector<16x64xbf16>
    %249 = vector.extract_strided_slice %181 {offsets = [0, 192], sizes = [16, 64], strides = [1, 1]} : vector<16x256xbf16> to vector<16x64xbf16>
    %250 = vector.extract_strided_slice %182 {offsets = [0, 192], sizes = [16, 64], strides = [1, 1]} : vector<16x256xbf16> to vector<16x64xbf16>
    %cst_113 = arith.constant dense<0.000000e+00> : vector<16x16xf32>
    %251 = tpu.matmul %248, %249, %cst_113 {dimension_numbers = #tpu.dot_dimension_numbers<[1], [1], [0], [0], [0, 0, 1, 0], [], []>} : vector<16x64xbf16>, vector<16x64xbf16>, vector<16x16xf32> -> vector<16x16xf32>
    %cst_114 = arith.constant 1.250000e-01 : f32
    %252 = vector.broadcast %cst_114 : f32 to vector<16x16xf32>
    %253 = arith.mulf %251, %252 : vector<16x16xf32>
    %254 = arith.addf %253, %152 : vector<16x16xf32>
    %cst_115 = arith.constant dense<0xFF800000> : vector<16xf32>
    %255 = vector.multi_reduction <maximumf>, %254, %cst_115 [1] : vector<16x16xf32> to vector<16xf32>
    %256 = vector.shape_cast %255 : vector<16xf32> to vector<16x1xf32>
    %257 = vector.broadcast %256 : vector<16x1xf32> to vector<16x16xf32>
    %258 = arith.subf %254, %257 : vector<16x16xf32>
    %259 = math.exp %258 : vector<16x16xf32>
    %cst_116 = arith.constant dense<0.000000e+00> : vector<16xf32>
    %260 = vector.multi_reduction <add>, %259, %cst_116 [1] : vector<16x16xf32> to vector<16xf32>
    %261 = vector.shape_cast %260 : vector<16xf32> to vector<16x1xf32>
    %262 = vector.broadcast %261 : vector<16x1xf32> to vector<16x16xf32>
    %263 = arith.divf %259, %262 : vector<16x16xf32>
    %264 = arith.truncf %263 : vector<16x16xf32> to vector<16x16xbf16>
    %cst_117 = arith.constant dense<0.000000e+00> : vector<16x64xf32>
    %265 = tpu.matmul %264, %250, %cst_117 {dimension_numbers = #tpu.dot_dimension_numbers<[1], [0], [0], [1], [0, 0, 1, 1], [], []>} : vector<16x16xbf16>, vector<16x64xbf16>, vector<16x64xf32> -> vector<16x64xf32>
    %266 = arith.truncf %265 : vector<16x64xf32> to vector<16x64xbf16>
    %267 = vector.extract_strided_slice %166 {offsets = [192, 0], sizes = [64, 256], strides = [1, 1]} : vector<256x256xbf16> to vector<64x256xbf16>
    %cst_118 = arith.constant dense<0.000000e+00> : vector<16x256xf32>
    %268 = tpu.matmul %266, %267, %cst_118 {dimension_numbers = #tpu.dot_dimension_numbers<[1], [0], [0], [1], [0, 0, 1, 1], [], []>} : vector<16x64xbf16>, vector<64x256xbf16>, vector<16x256xf32> -> vector<16x256xf32>
    %269 = arith.addf %247, %268 : vector<16x256xf32>
    %270 = vector.broadcast %168 : vector<1x256xf32> to vector<16x256xf32>
    %271 = arith.addf %269, %270 : vector<16x256xf32>
    %272 = arith.addf %151, %271 : vector<16x256xf32>
    %c0_119 = arith.constant 0 : index
    %c10 = arith.constant 10 : index
    %c0_120 = arith.constant 0 : index
    %273 = vector.load %arg8[%c0_119, %c10, %c0_120] : memref<1x15x256xf32, #tpu.memory_space<vmem>>, vector<1x1x256xf32>
    %274 = vector.shape_cast %273 : vector<1x1x256xf32> to vector<1x256xf32>
    %c0_121 = arith.constant 0 : index
    %c11 = arith.constant 11 : index
    %c0_122 = arith.constant 0 : index
    %275 = vector.load %arg8[%c0_121, %c11, %c0_122] : memref<1x15x256xf32, #tpu.memory_space<vmem>>, vector<1x1x256xf32>
    %276 = vector.shape_cast %275 : vector<1x1x256xf32> to vector<1x256xf32>
    %cst_123 = arith.constant dense<0.000000e+00> : vector<16xf32>
    %277 = vector.multi_reduction <add>, %272, %cst_123 [1] : vector<16x256xf32> to vector<16xf32>
    %278 = vector.shape_cast %277 : vector<16xf32> to vector<16x1xf32>
    %cst_124 = arith.constant 2.560000e+02 : f32
    %279 = vector.broadcast %cst_124 : f32 to vector<16x1xf32>
    %280 = arith.divf %278, %279 : vector<16x1xf32>
    %281 = vector.broadcast %280 : vector<16x1xf32> to vector<16x256xf32>
    %282 = arith.subf %272, %281 : vector<16x256xf32>
    %283 = arith.mulf %282, %282 : vector<16x256xf32>
    %cst_125 = arith.constant dense<0.000000e+00> : vector<16xf32>
    %284 = vector.multi_reduction <add>, %283, %cst_125 [1] : vector<16x256xf32> to vector<16xf32>
    %285 = vector.shape_cast %284 : vector<16xf32> to vector<16x1xf32>
    %cst_126 = arith.constant 2.560000e+02 : f32
    %286 = vector.broadcast %cst_126 : f32 to vector<16x1xf32>
    %287 = arith.divf %285, %286 : vector<16x1xf32>
    %288 = vector.broadcast %280 : vector<16x1xf32> to vector<16x256xf32>
    %289 = arith.subf %272, %288 : vector<16x256xf32>
    %cst_127 = arith.constant 9.99999974E-6 : f32
    %290 = vector.broadcast %cst_127 : f32 to vector<16x1xf32>
    %291 = arith.addf %287, %290 : vector<16x1xf32>
    %292 = math.rsqrt %291 : vector<16x1xf32>
    %293 = vector.broadcast %292 : vector<16x1xf32> to vector<16x256xf32>
    %294 = arith.mulf %289, %293 : vector<16x256xf32>
    %295 = vector.broadcast %274 : vector<1x256xf32> to vector<16x256xf32>
    %296 = arith.mulf %294, %295 : vector<16x256xf32>
    %297 = vector.broadcast %276 : vector<1x256xf32> to vector<16x256xf32>
    %298 = arith.addf %296, %297 : vector<16x256xf32>
    %c0_128 = arith.constant 0 : index
    %c0_129 = arith.constant 0 : index
    %c0_130 = arith.constant 0 : index
    %299 = vector.load %arg6[%c0_128, %c0_129, %c0_130] : memref<1x256x1024xbf16, #tpu.memory_space<vmem>>, vector<1x256x1024xbf16>
    %300 = vector.shape_cast %299 : vector<1x256x1024xbf16> to vector<256x1024xbf16>
    %c0_131 = arith.constant 0 : index
    %c0_132 = arith.constant 0 : index
    %c0_133 = arith.constant 0 : index
    %301 = vector.load %arg9[%c0_131, %c0_132, %c0_133] : memref<1x1x1024xf32, #tpu.memory_space<vmem>>, vector<1x1x1024xf32>
    %302 = vector.shape_cast %301 : vector<1x1x1024xf32> to vector<1x1024xf32>
    %c0_134 = arith.constant 0 : index
    %c0_135 = arith.constant 0 : index
    %c0_136 = arith.constant 0 : index
    %303 = vector.load %arg7[%c0_134, %c0_135, %c0_136] : memref<1x1024x256xbf16, #tpu.memory_space<vmem>>, vector<1x1024x256xbf16>
    %304 = vector.shape_cast %303 : vector<1x1024x256xbf16> to vector<1024x256xbf16>
    %c0_137 = arith.constant 0 : index
    %c12 = arith.constant 12 : index
    %c0_138 = arith.constant 0 : index
    %305 = vector.load %arg8[%c0_137, %c12, %c0_138] : memref<1x15x256xf32, #tpu.memory_space<vmem>>, vector<1x1x256xf32>
    %306 = vector.shape_cast %305 : vector<1x1x256xf32> to vector<1x256xf32>
    %307 = arith.truncf %298 : vector<16x256xf32> to vector<16x256xbf16>
    %cst_139 = arith.constant dense<0.000000e+00> : vector<16x1024xf32>
    %308 = tpu.matmul %307, %300, %cst_139 {dimension_numbers = #tpu.dot_dimension_numbers<[1], [0], [0], [1], [0, 0, 1, 1], [], []>} : vector<16x256xbf16>, vector<256x1024xbf16>, vector<16x1024xf32> -> vector<16x1024xf32>
    %309 = vector.broadcast %302 : vector<1x1024xf32> to vector<16x1024xf32>
    %310 = arith.addf %308, %309 : vector<16x1024xf32>
    %cst_140 = arith.constant 0.000000e+00 : f32
    %311 = vector.broadcast %cst_140 : f32 to vector<16x1024xf32>
    %312 = arith.maximumf %310, %311 : vector<16x1024xf32>
    %313 = arith.truncf %312 : vector<16x1024xf32> to vector<16x1024xbf16>
    %cst_141 = arith.constant dense<0.000000e+00> : vector<16x256xf32>
    %314 = tpu.matmul %313, %304, %cst_141 {dimension_numbers = #tpu.dot_dimension_numbers<[1], [0], [0], [1], [0, 0, 1, 1], [], []>} : vector<16x1024xbf16>, vector<1024x256xbf16>, vector<16x256xf32> -> vector<16x256xf32>
    %315 = vector.broadcast %306 : vector<1x256xf32> to vector<16x256xf32>
    %316 = arith.addf %314, %315 : vector<16x256xf32>
    %317 = arith.addf %298, %316 : vector<16x256xf32>
    %c0_142 = arith.constant 0 : index
    %c13 = arith.constant 13 : index
    %c0_143 = arith.constant 0 : index
    %318 = vector.load %arg8[%c0_142, %c13, %c0_143] : memref<1x15x256xf32, #tpu.memory_space<vmem>>, vector<1x1x256xf32>
    %319 = vector.shape_cast %318 : vector<1x1x256xf32> to vector<1x256xf32>
    %c0_144 = arith.constant 0 : index
    %c14 = arith.constant 14 : index
    %c0_145 = arith.constant 0 : index
    %320 = vector.load %arg8[%c0_144, %c14, %c0_145] : memref<1x15x256xf32, #tpu.memory_space<vmem>>, vector<1x1x256xf32>
    %321 = vector.shape_cast %320 : vector<1x1x256xf32> to vector<1x256xf32>
    %cst_146 = arith.constant dense<0.000000e+00> : vector<16xf32>
    %322 = vector.multi_reduction <add>, %317, %cst_146 [1] : vector<16x256xf32> to vector<16xf32>
    %323 = vector.shape_cast %322 : vector<16xf32> to vector<16x1xf32>
    %cst_147 = arith.constant 2.560000e+02 : f32
    %324 = vector.broadcast %cst_147 : f32 to vector<16x1xf32>
    %325 = arith.divf %323, %324 : vector<16x1xf32>
    %326 = vector.broadcast %325 : vector<16x1xf32> to vector<16x256xf32>
    %327 = arith.subf %317, %326 : vector<16x256xf32>
    %328 = arith.mulf %327, %327 : vector<16x256xf32>
    %cst_148 = arith.constant dense<0.000000e+00> : vector<16xf32>
    %329 = vector.multi_reduction <add>, %328, %cst_148 [1] : vector<16x256xf32> to vector<16xf32>
    %330 = vector.shape_cast %329 : vector<16xf32> to vector<16x1xf32>
    %cst_149 = arith.constant 2.560000e+02 : f32
    %331 = vector.broadcast %cst_149 : f32 to vector<16x1xf32>
    %332 = arith.divf %330, %331 : vector<16x1xf32>
    %333 = vector.broadcast %325 : vector<16x1xf32> to vector<16x256xf32>
    %334 = arith.subf %317, %333 : vector<16x256xf32>
    %cst_150 = arith.constant 9.99999974E-6 : f32
    %335 = vector.broadcast %cst_150 : f32 to vector<16x1xf32>
    %336 = arith.addf %332, %335 : vector<16x1xf32>
    %337 = math.rsqrt %336 : vector<16x1xf32>
    %338 = vector.broadcast %337 : vector<16x1xf32> to vector<16x256xf32>
    %339 = arith.mulf %334, %338 : vector<16x256xf32>
    %340 = vector.broadcast %319 : vector<1x256xf32> to vector<16x256xf32>
    %341 = arith.mulf %339, %340 : vector<16x256xf32>
    %342 = vector.broadcast %321 : vector<1x256xf32> to vector<16x256xf32>
    %343 = arith.addf %341, %342 : vector<16x256xf32>
    %c0_151 = arith.constant 0 : index
    %c0_152 = arith.constant 0 : index
    %344 = vector.load %arg14[%c0_151, %c0_152] : memref<16x256xf32, #tpu.memory_space<vmem>>, vector<16x256xf32>
    tpu.vector_store %arg14[%c0_151, %c0_152], %343 {strides = array<i32>} : memref<16x256xf32, #tpu.memory_space<vmem>>, vector<16x256xf32>,
    %c3_i32 = arith.constant 3 : i32
    %345 = arith.cmpi eq, %arg0, %c3_i32 : i32
    %346 = arith.extui %345 : i1 to i32
    %c0_i32_153 = arith.constant 0 : i32
    %347 = arith.cmpi ne, %346, %c0_i32_153 : i32
    scf.if %347 {
      %c0_154 = arith.constant 0 : index
      %c0_155 = arith.constant 0 : index
      %348 = vector.load %arg10[%c0_154, %c0_155] : memref<2x256xf32, #tpu.memory_space<vmem>>, vector<1x256xf32>
      %c1_156 = arith.constant 1 : index
      %c0_157 = arith.constant 0 : index
      %349 = vector.load %arg10[%c1_156, %c0_157] : memref<2x256xf32, #tpu.memory_space<vmem>>, vector<1x256xf32>
      %cst_158 = arith.constant dense<0.000000e+00> : vector<16xf32>
      %350 = vector.multi_reduction <add>, %343, %cst_158 [1] : vector<16x256xf32> to vector<16xf32>
      %351 = vector.shape_cast %350 : vector<16xf32> to vector<16x1xf32>
      %cst_159 = arith.constant 2.560000e+02 : f32
      %352 = vector.broadcast %cst_159 : f32 to vector<16x1xf32>
      %353 = arith.divf %351, %352 : vector<16x1xf32>
      %354 = vector.broadcast %353 : vector<16x1xf32> to vector<16x256xf32>
      %355 = arith.subf %343, %354 : vector<16x256xf32>
      %356 = arith.mulf %355, %355 : vector<16x256xf32>
      %cst_160 = arith.constant dense<0.000000e+00> : vector<16xf32>
      %357 = vector.multi_reduction <add>, %356, %cst_160 [1] : vector<16x256xf32> to vector<16xf32>
      %358 = vector.shape_cast %357 : vector<16xf32> to vector<16x1xf32>
      %cst_161 = arith.constant 2.560000e+02 : f32
      %359 = vector.broadcast %cst_161 : f32 to vector<16x1xf32>
      %360 = arith.divf %358, %359 : vector<16x1xf32>
      %361 = vector.broadcast %353 : vector<16x1xf32> to vector<16x256xf32>
      %362 = arith.subf %343, %361 : vector<16x256xf32>
      %cst_162 = arith.constant 9.99999974E-6 : f32
      %363 = vector.broadcast %cst_162 : f32 to vector<16x1xf32>
      %364 = arith.addf %360, %363 : vector<16x1xf32>
      %365 = math.rsqrt %364 : vector<16x1xf32>
      %366 = vector.broadcast %365 : vector<16x1xf32> to vector<16x256xf32>
      %367 = arith.mulf %362, %366 : vector<16x256xf32>
      %368 = vector.broadcast %348 : vector<1x256xf32> to vector<16x256xf32>
      %369 = arith.mulf %367, %368 : vector<16x256xf32>
      %370 = vector.broadcast %349 : vector<1x256xf32> to vector<16x256xf32>
      %371 = arith.addf %369, %370 : vector<16x256xf32>
      %372 = arith.truncf %371 : vector<16x256xf32> to vector<16x256xbf16>
      %c0_163 = arith.constant 0 : index
      %c0_164 = arith.constant 0 : index
      %373 = vector.load %arg11[%c0_163, %c0_164] : memref<256x128xbf16, #tpu.memory_space<vmem>>, vector<256x128xbf16>
      %cst_165 = arith.constant dense<0.000000e+00> : vector<16x128xf32>
      %374 = tpu.matmul %372, %373, %cst_165 {dimension_numbers = #tpu.dot_dimension_numbers<[1], [0], [0], [1], [0, 0, 1, 1], [], []>} : vector<16x256xbf16>, vector<256x128xbf16>, vector<16x128xf32> -> vector<16x128xf32>
      %c0_166 = arith.constant 0 : index
      %c0_167 = arith.constant 0 : index
      %375 = vector.load %arg12[%c0_166, %c0_167] : memref<1x128xf32, #tpu.memory_space<vmem>>, vector<1x128xf32>
      %376 = vector.broadcast %375 : vector<1x128xf32> to vector<16x128xf32>
      %377 = arith.addf %374, %376 : vector<16x128xf32>
      %c0_168 = arith.constant 0 : index
      %c0_169 = arith.constant 0 : index
      %378 = vector.load %arg13[%c0_168, %c0_169] : memref<16x128xf32, #tpu.memory_space<vmem>>, vector<16x128xf32>
      tpu.vector_store %arg13[%c0_168, %c0_169], %377 {strides = array<i32>} : memref<16x128xf32, #tpu.memory_space<vmem>>, vector<16x128xf32>,
    } else {
    }
    return
  }
  func.func @transform_0(%arg0: i32) -> (i32, i32) {
    %c0_i32 = arith.constant 0 : i32
    %c0_i32_0 = arith.constant 0 : i32
    %c0_i32_1 = arith.constant 0 : i32
    return %c0_i32, %c0_i32_0 : i32, i32
  }
  func.func @transform_1(%arg0: i32) -> (i32, i32) {
    %c0_i32 = arith.constant 0 : i32
    %c0_i32_0 = arith.constant 0 : i32
    %c0_i32_1 = arith.constant 0 : i32
    return %c0_i32, %c0_i32_0 : i32, i32
  }
  func.func @transform_2(%arg0: i32) -> (i32, i32) {
    %c0_i32 = arith.constant 0 : i32
    %c0_i32_0 = arith.constant 0 : i32
    %c0_i32_1 = arith.constant 0 : i32
    return %c0_i32, %c0_i32_0 : i32, i32
  }
  func.func @transform_3(%arg0: i32) -> (i32, i32) {
    %c0_i32 = arith.constant 0 : i32
    %c0_i32_0 = arith.constant 0 : i32
    %c0_i32_1 = arith.constant 0 : i32
    return %c0_i32, %c0_i32_0 : i32, i32
  }
  func.func @transform_4(%arg0: i32) -> (i32, i32, i32, i32) {
    %c0_i32 = arith.constant 0 : i32
    %c0_i32_0 = arith.constant 0 : i32
    %c0_i32_1 = arith.constant 0 : i32
    %c0_i32_2 = arith.constant 0 : i32
    return %arg0, %c0_i32, %c0_i32_0, %c0_i32_1 : i32, i32, i32, i32
  }
  func.func @transform_5(%arg0: i32) -> (i32, i32, i32) {
    %c0_i32 = arith.constant 0 : i32
    %c0_i32_0 = arith.constant 0 : i32
    %c0_i32_1 = arith.constant 0 : i32
    return %arg0, %c0_i32, %c0_i32_0 : i32, i32, i32
  }
  func.func @transform_6(%arg0: i32) -> (i32, i32, i32) {
    %c0_i32 = arith.constant 0 : i32
    %c0_i32_0 = arith.constant 0 : i32
    %c0_i32_1 = arith.constant 0 : i32
    return %arg0, %c0_i32, %c0_i32_0 : i32, i32, i32
  }
  func.func @transform_7(%arg0: i32) -> (i32, i32, i32) {
    %c0_i32 = arith.constant 0 : i32
    %c0_i32_0 = arith.constant 0 : i32
    %c0_i32_1 = arith.constant 0 : i32
    return %arg0, %c0_i32, %c0_i32_0 : i32, i32, i32
  }
  func.func @transform_8(%arg0: i32) -> (i32, i32, i32) {
    %c0_i32 = arith.constant 0 : i32
    %c0_i32_0 = arith.constant 0 : i32
    %c0_i32_1 = arith.constant 0 : i32
    return %arg0, %c0_i32, %c0_i32_0 : i32, i32, i32
  }
  func.func @transform_9(%arg0: i32) -> (i32, i32) {
    %c0_i32 = arith.constant 0 : i32
    %c0_i32_0 = arith.constant 0 : i32
    %c0_i32_1 = arith.constant 0 : i32
    return %c0_i32, %c0_i32_0 : i32, i32
  }
  func.func @transform_10(%arg0: i32) -> (i32, i32) {
    %c0_i32 = arith.constant 0 : i32
    %c0_i32_0 = arith.constant 0 : i32
    %c0_i32_1 = arith.constant 0 : i32
    return %c0_i32, %c0_i32_0 : i32, i32
  }
  func.func @transform_11(%arg0: i32) -> (i32, i32) {
    %c0_i32 = arith.constant 0 : i32
    %c0_i32_0 = arith.constant 0 : i32
    %c0_i32_1 = arith.constant 0 : i32
    return %c0_i32, %c0_i32_0 : i32, i32
  }
  func.func @transform_12(%arg0: i32) -> (i32, i32) {
    %c0_i32 = arith.constant 0 : i32
    %c0_i32_0 = arith.constant 0 : i32
    %c0_i32_1 = arith.constant 0 : i32
    return %c0_i32, %c0_i32_0 : i32, i32
  }
}

</mosaic_0001>

<llo_original>
// kernel: transformer_forward.2
$region0: #{transformer_forward.2}
  #allocation0 [shape = 'u32[]', space=smem, size = 0x4, offset = 0x4, fixed_abs, tag = 'smem constant byte address 0x4 - core index']
  #allocation1 [shape = 'u32[72,128]{1,0:T(1,128)}', space=vmem, size = 0x9000, scoped, tag = 'internal scratch']
  %s0 = inlined_call_operand.vmem [shape: f32[16,256], index: 0, kind: input, shape index: {}, may-alias: {0,8}]
  %s1 = inlined_call_operand.vmem [shape: f32[16,16], index: 1, kind: input, shape index: {}]
  %s2 = inlined_call_operand.hbm [shape: bf16[4,4,256,256], index: 2, kind: input, shape index: {}]
  %s3 = inlined_call_operand.hbm [shape: bf16[4,256,1024], index: 3, kind: input, shape index: {}]
  %s4 = inlined_call_operand.hbm [shape: bf16[4,1024,256], index: 4, kind: input, shape index: {}]
  %s5 = inlined_call_operand.vmem [shape: f32[4,9,256], index: 5, kind: input, shape index: {}]
  %s6 = inlined_call_operand.hbm [shape: f32[4,1,1024], index: 6, kind: input, shape index: {}]
  %s7 = inlined_call_operand.hbm [shape: f32[2,256], index: 7, kind: input, shape index: {}]
  %s8 = inlined_call_operand.vmem [shape: f32[16,256], index: 8, kind: output, shape index: {}, may-alias: {0,8}]
  %s9 = sld [smem:[#allocation0]]
  $region97: #{transformer_forward.2} parent=0
    _
  %s11 = ssub.s32 1, %s9
  %s12 = scalar_select 0, %s11, %s9
  $region1: #{transformer_forward.2} parent=0
    #allocation2 [shape = 'u8[1048576]{0}', space=vmem, size = 0x100000, scoped, tag = 'input window, operand 2']
    #allocation3 [shape = 's32[2]{0}', space=sflag, size = 0x8, scoped, tag = 'scoped memory for transformer_forward.2']
    #allocation4 [shape = 'u8[1048576]{0}', space=vmem, size = 0x100000, scoped, tag = 'input window, operand 3']
    #allocation5 [shape = 's32[2]{0}', space=sflag, size = 0x8, scoped, tag = 'scoped memory for transformer_forward.2']
    #allocation6 [shape = 'u8[1048576]{0}', space=vmem, size = 0x100000, scoped, tag = 'input window, operand 4']
    #allocation7 [shape = 'u8[8192]{0}', space=vmem, size = 0x2000, scoped, tag = 'input window, operand 6']
    #allocation8 [shape = 's32[2]{0}', space=sflag, size = 0x8, scoped, tag = 'scoped memory for transformer_forward.2']
    #allocation9 [shape = 'u8[2048]{0}', space=vmem, size = 0x800, scoped, tag = 'input window, operand 7, single buffered']
    %13 = vsyncpa [#allocation3], 0
    %s14 = scalar_lea.sflag [#allocation3], 1
    %15 = vsyncpa %s14, 0
    %16 = vsyncpa [#allocation5], 0
    %s17 = scalar_lea.sflag [#allocation5], 1
    %18 = vsyncpa %s17, 0
    %19 = vsyncpa [#allocation8], 0
    %s20 = scalar_lea.sflag [#allocation8], 1
    %21 = vsyncpa %s20, 0
    loop: start=0, step=1, limit=6
    $region2: #{transformer_forward.2} parent=1 // loop_pre_header
      _
    $region3: #{transformer_forward.2} parent=1 // loop_header
      %s23 = sphi 0, %s27
      %p24 = scmp.ge.s32.totalorder %s23, 6
      %s31 = sphi 0, %s31
      %s33 = sphi 0, %s31
      %s34 = sphi 0, %s33
      %s48 = sphi 0, %s34
      %s52 = sphi 0, %s52
      %s54 = sphi 0, %s52
      %s55 = sphi 0, %s54
      %s69 = sphi 0, %s55
      %s75 = sphi 0, %s77
      %s78 = sphi 0, %s75
      %s79 = sphi 0, %s78
      %s95 = sphi 0, %s79
      %s101 = sphi 0, %s103
      %s104 = sphi 0, %s101
      %s105 = sphi 0, %s104
      %s121 = sphi 0, %s105
      %s127 = sphi 0, %s129
      %s130 = sphi 0, %s127
      %s131 = sphi 0, %s130
      %s147 = sphi 0, %s131
      %s153 = sphi 0, %s155
      %s156 = sphi 0, %s153
      %s157 = sphi 0, %s156
      %s173 = sphi 0, %s157
      %s179 = sphi 0, %s181
      %s182 = sphi 0, %s179
      %s183 = sphi 0, %s182
      %s199 = sphi 0, %s183
      %s203 = sphi 0, %s203
      %s205 = sphi 0, %s203
      %s206 = sphi 0, %s205
      %s220 = sphi 0, %s206
      %s224 = sphi 0, %s224
      %s226 = sphi 0, %s224
      %s227 = sphi 0, %s226
      %s241 = sphi 0, %s227
    $region4: #{transformer_forward.2} parent=1 // loop_header_branch
      %26 = sbr.rel (%p24) target = $region8
    $region5: #{transformer_forward.2} parent=1 // loop_body
      %s28 = ssub.s32 %s23, 1
      %s29 = ssub.s32 %s23, 2
      %s30 = sadd.s32 %s23, 1
      %s32 = sadd.s32 %s31, 1
      %p35 = scmp.eq.s32.totalorder %s23, 3
      %p36 = scmp.ne.s32.totalorder %s31, %s33
      %p37 = scmp.eq.s32.totalorder %s23, 0
      %p38 = por %p36, %p37
      %p39 = scmp.ne.s32.totalorder %s31, %s33
      %p40 = scmp.eq.s32.totalorder %s28, 3
      %p41 = por %p39, %p40
      %p42 = scmp.ne.s32.totalorder %s33, %s34
      %p43 = scmp.eq.s32.totalorder %s28, 0
      %p44 = por %p42, %p43
      %p45 = scmp.ne.s32.totalorder %s33, %s34
      %p46 = scmp.eq.s32.totalorder %s29, 3
      %p47 = por %p45, %p46
      %p49 = scmp.ne.s32.totalorder %s34, %s48
      %p50 = scmp.eq.s32.totalorder %s29, 0
      %p51 = por %p49, %p50
      %s53 = sadd.s32 %s52, 1
      %p56 = scmp.eq.s32.totalorder %s23, 3
      %p57 = scmp.ne.s32.totalorder %s52, %s54
      %p58 = scmp.eq.s32.totalorder %s23, 0
      %p59 = por %p57, %p58
      %p60 = scmp.ne.s32.totalorder %s52, %s54
      %p61 = scmp.eq.s32.totalorder %s28, 3
      %p62 = por %p60, %p61
      %p63 = scmp.ne.s32.totalorder %s54, %s55
      %p64 = scmp.eq.s32.totalorder %s28, 0
      %p65 = por %p63, %p64
      %p66 = scmp.ne.s32.totalorder %s54, %s55
      %p67 = scmp.eq.s32.totalorder %s29, 3
      %p68 = por %p66, %p67
      %p70 = scmp.ne.s32.totalorder %s55, %s69
      %p71 = scmp.eq.s32.totalorder %s29, 0
      %p72 = por %p70, %p71
      %s73 = ssub.s32 %s23, %s30
      %p74 = scmp.eq.s32.totalorder %s73, 0
      %s76 = sadd.s32 %s75, 1
      %s77 = scalar_select %p74, %s75, %s76
      %p80 = pneg %p74
      %p81 = scmp.eq.s32.totalorder %s23, 3
      %p82 = por %p80, %p81
      %p83 = scmp.ne.s32.totalorder %s75, %s78
      %p84 = scmp.eq.s32.totalorder %s23, 0
      %p85 = por %p83, %p84
      %p86 = scmp.ne.s32.totalorder %s75, %s78
      %p87 = scmp.eq.s32.totalorder %s28, 3
      %p88 = por %p86, %p87
      %p89 = scmp.ne.s32.totalorder %s78, %s79
      %p90 = scmp.eq.s32.totalorder %s28, 0
      %p91 = por %p89, %p90
      %p92 = scmp.ne.s32.totalorder %s78, %s79
      %p93 = scmp.eq.s32.totalorder %s29, 3
      %p94 = por %p92, %p93
      %p96 = scmp.ne.s32.totalorder %s79, %s95
      %p97 = scmp.eq.s32.totalorder %s29, 0
      %p98 = por %p96, %p97
      %s99 = ssub.s32 %s23, %s30
      %p100 = scmp.eq.s32.totalorder %s99, 0
      %s102 = sadd.s32 %s101, 1
      %s103 = scalar_select %p100, %s101, %s102
      %p106 = pneg %p100
      %p107 = scmp.eq.s32.totalorder %s23, 3
      %p108 = por %p106, %p107
      %p109 = scmp.ne.s32.totalorder %s101, %s104
      %p110 = scmp.eq.s32.totalorder %s23, 0
      %p111 = por %p109, %p110
      %p112 = scmp.ne.s32.totalorder %s101, %s104
      %p113 = scmp.eq.s32.totalorder %s28, 3
      %p114 = por %p112, %p113
      %p115 = scmp.ne.s32.totalorder %s104, %s105
      %p116 = scmp.eq.s32.totalorder %s28, 0
      %p117 = por %p115, %p116
      %p118 = scmp.ne.s32.totalorder %s104, %s105
      %p119 = scmp.eq.s32.totalorder %s29, 3
      %p120 = por %p118, %p119
      %p122 = scmp.ne.s32.totalorder %s105, %s121
      %p123 = scmp.eq.s32.totalorder %s29, 0
      %p124 = por %p122, %p123
      %s125 = ssub.s32 %s23, %s30
      %p126 = scmp.eq.s32.totalorder %s125, 0
      %s128 = sadd.s32 %s127, 1
      %s129 = scalar_select %p126, %s127, %s128
      %p132 = pneg %p126
      %p133 = scmp.eq.s32.totalorder %s23, 3
      %p134 = por %p132, %p133
      %p135 = scmp.ne.s32.totalorder %s127, %s130
      %p136 = scmp.eq.s32.totalorder %s23, 0
      %p137 = por %p135, %p136
      %p138 = scmp.ne.s32.totalorder %s127, %s130
      %p139 = scmp.eq.s32.totalorder %s28, 3
      %p140 = por %p138, %p139
      %p141 = scmp.ne.s32.totalorder %s130, %s131
      %p142 = scmp.eq.s32.totalorder %s28, 0
      %p143 = por %p141, %p142
      %p144 = scmp.ne.s32.totalorder %s130, %s131
      %p145 = scmp.eq.s32.totalorder %s29, 3
      %p146 = por %p144, %p145
      %p148 = scmp.ne.s32.totalorder %s131, %s147
      %p149 = scmp.eq.s32.totalorder %s29, 0
      %p150 = por %p148, %p149
      %s151 = ssub.s32 %s23, %s30
      %p152 = scmp.eq.s32.totalorder %s151, 0
      %s154 = sadd.s32 %s153, 1
      %s155 = scalar_select %p152, %s153, %s154
      %p158 = pneg %p152
      %p159 = scmp.eq.s32.totalorder %s23, 3
      %p160 = por %p158, %p159
      %p161 = scmp.ne.s32.totalorder %s153, %s156
      %p162 = scmp.eq.s32.totalorder %s23, 0
      %p163 = por %p161, %p162
      %p164 = scmp.ne.s32.totalorder %s153, %s156
      %p165 = scmp.eq.s32.totalorder %s28, 3
      %p166 = por %p164, %p165
      %p167 = scmp.ne.s32.totalorder %s156, %s157
      %p168 = scmp.eq.s32.totalorder %s28, 0
      %p169 = por %p167, %p168
      %p170 = scmp.ne.s32.totalorder %s156, %s157
      %p171 = scmp.eq.s32.totalorder %s29, 3
      %p172 = por %p170, %p171
      %p174 = scmp.ne.s32.totalorder %s157, %s173
      %p175 = scmp.eq.s32.totalorder %s29, 0
      %p176 = por %p174, %p175
      %s177 = ssub.s32 %s23, %s30
      %p178 = scmp.eq.s32.totalorder %s177, 0
      %s180 = sadd.s32 %s179, 1
      %s181 = scalar_select %p178, %s179, %s180
      %p184 = pneg %p178
      %p185 = scmp.eq.s32.totalorder %s23, 3
      %p186 = por %p184, %p185
      %p187 = scmp.ne.s32.totalorder %s179, %s182
      %p188 = scmp.eq.s32.totalorder %s23, 0
      %p189 = por %p187, %p188
      %p190 = scmp.ne.s32.totalorder %s179, %s182
      %p191 = scmp.eq.s32.totalorder %s28, 3
      %p192 = por %p190, %p191
      %p193 = scmp.ne.s32.totalorder %s182, %s183
      %p194 = scmp.eq.s32.totalorder %s28, 0
      %p195 = por %p193, %p194
      %p196 = scmp.ne.s32.totalorder %s182, %s183
      %p197 = scmp.eq.s32.totalorder %s29, 3
      %p198 = por %p196, %p197
      %p200 = scmp.ne.s32.totalorder %s183, %s199
      %p201 = scmp.eq.s32.totalorder %s29, 0
      %p202 = por %p200, %p201
      %s204 = sadd.s32 %s203, 1
      %p207 = scmp.eq.s32.totalorder %s23, 3
      %p208 = scmp.ne.s32.totalorder %s203, %s205
      %p209 = scmp.eq.s32.totalorder %s23, 0
      %p210 = por %p208, %p209
      %p211 = scmp.ne.s32.totalorder %s203, %s205
      %p212 = scmp.eq.s32.totalorder %s28, 3
      %p213 = por %p211, %p212
      %p214 = scmp.ne.s32.totalorder %s205, %s206
      %p215 = scmp.eq.s32.totalorder %s28, 0
      %p216 = por %p214, %p215
      %p217 = scmp.ne.s32.totalorder %s205, %s206
      %p218 = scmp.eq.s32.totalorder %s29, 3
      %p219 = por %p217, %p218
      %p221 = scmp.ne.s32.totalorder %s206, %s220
      %p222 = scmp.eq.s32.totalorder %s29, 0
      %p223 = por %p221, %p222
      %s225 = sadd.s32 %s224, 1
      %p228 = scmp.eq.s32.totalorder %s23, 3
      %p229 = scmp.ne.s32.totalorder %s224, %s226
      %p230 = scmp.eq.s32.totalorder %s23, 0
      %p231 = por %p229, %p230
      %p232 = scmp.ne.s32.totalorder %s224, %s226
      %p233 = scmp.eq.s32.totalorder %s28, 3
      %p234 = por %p232, %p233
      %p235 = scmp.ne.s32.totalorder %s226, %s227
      %p236 = scmp.eq.s32.totalorder %s28, 0
      %p237 = por %p235, %p236
      %p238 = scmp.ne.s32.totalorder %s226, %s227
      %p239 = scmp.eq.s32.totalorder %s29, 3
      %p240 = por %p238, %p239
      %p242 = scmp.ne.s32.totalorder %s227, %s241
      %p243 = scmp.eq.s32.totalorder %s29, 0
      %p244 = por %p242, %p243
      %p245 = scmp.le.s32.totalorder 1, %s23
      %p246 = scmp.lt.s32.totalorder %s23, 5
      %p247 = pnand %p245, %p246
      %p248 = pneg %p247
      // Predicated region
      $region9: #{transformer_forward.2} parent=5 // pred_check
        _
      $region10: #{transformer_forward.2} parent=5 // pred_check_branch
        %250 = sbr.rel (%p247) target = $region12
      $region11: #{transformer_forward.2} parent=5 // pred_region
        %s251 = ssub.s32 %s23, 1
        // Predicated region
        $region13: #{transformer_forward.2} parent=11 // pred_check
          %p252 = pneg %p44
        $region14: #{transformer_forward.2} parent=11 // pred_check_branch
          %254 = sbr.rel (%p252) target = $region16
        $region15: #{transformer_forward.2} parent=11 // pred_region
          _
        $region16: #{transformer_forward.2} parent=11 // pred_fallthru
          _
        // Predicated region
        $region17: #{transformer_forward.2} parent=11 // pred_check
          %p255 = pneg %p65
        $region18: #{transformer_forward.2} parent=11 // pred_check_branch
          %257 = sbr.rel (%p255) target = $region20
        $region19: #{transformer_forward.2} parent=11 // pred_region
          _
        $region20: #{transformer_forward.2} parent=11 // pred_fallthru
          _
        // Predicated region
        $region21: #{transformer_forward.2} parent=11 // pred_check
          %p258 = pneg %p216
        $region22: #{transformer_forward.2} parent=11 // pred_check_branch
          %260 = sbr.rel (%p258) target = $region24
        $region23: #{transformer_forward.2} parent=11 // pred_region
          %262 = vsyncadd [#allocation8], 0
          %s264 = sshll.u32 %s7, 4
          %s265 = int_to_ptr.hbm [resolvable:$true] %s264
          %s266 = sshll.u32 [#allocation9], 4
          %s267 = int_to_ptr.vmem [resolvable:$true] %s266
          %269 = dma.hbm_to_vmem [thread:$0]  %s265, 64, %s267, [#allocation8]
        $region24: #{transformer_forward.2} parent=11 // pred_fallthru
          _
      $region12: #{transformer_forward.2} parent=5 // pred_fallthru
        _
      %p270 = scmp.lt.s32.totalorder %s23, 4
      // Predicated region
      $region25: #{transformer_forward.2} parent=5 // pred_check
        %p271 = pneg %p270
      $region26: #{transformer_forward.2} parent=5 // pred_check_branch
        %273 = sbr.rel (%p271) target = $region28
      $region27: #{transformer_forward.2} parent=5 // pred_region
        // Predicated region
        $region29: #{transformer_forward.2} parent=27 // pred_check
          %p274 = pneg %p85
        $region30: #{transformer_forward.2} parent=27 // pred_check_branch
          %276 = sbr.rel (%p274) target = $region32
        $region31: #{transformer_forward.2} parent=27 // pred_region
          %s277 = sand.u32 %s75, 1
          %s278 = scalar_lea.sflag [#allocation3], %s277
          %s279 = sand.u32 %s75, 1
          %s280 = smul.addr %s279, 1024
          %s281 = scalar_lea.vmem [#allocation2], %s280
          %283 = vsyncadd %s278, 0
          %s284 = smul.addr %s23, 256
          %s285 = smul.addr %s284, 4
          %s286 = scalar_lea.hbm %s2, %s285
          %s287 = sshll.u32 %s286, 4
          %s288 = int_to_ptr.hbm [resolvable:$true] %s287
          %s289 = sshll.u32 %s281, 4
          %s290 = int_to_ptr.vmem [resolvable:$true] %s289
          %295 = dma.hbm_to_vmem [thread:$0]  %s288, 16384, %s290, %s278, 128, 128, 8
        $region32: #{transformer_forward.2} parent=27 // pred_fallthru
          _
        // Predicated region
        $region33: #{transformer_forward.2} parent=27 // pred_check
          %p296 = pneg %p111
        $region34: #{transformer_forward.2} parent=27 // pred_check_branch
          %298 = sbr.rel (%p296) target = $region36
        $region35: #{transformer_forward.2} parent=27 // pred_region
          %s299 = sand.u32 %s23, 1
          %s300 = scalar_lea.sflag [#allocation5], %s299
          %s301 = sand.u32 %s101, 1
          %s302 = smul.addr %s301, 1024
          %s303 = scalar_lea.vmem [#allocation4], %s302
          %305 = vsyncadd %s300, 0
          %s306 = smul.addr %s23, 256
          %s307 = smul.addr %s306, 4
          %s308 = scalar_lea.hbm %s3, %s307
          %s309 = sshll.u32 %s308, 4
          %s310 = int_to_ptr.hbm [resolvable:$true] %s309
          %s311 = sshll.u32 %s303, 4
          %s312 = int_to_ptr.vmem [resolvable:$true] %s311
          %317 = dma.hbm_to_vmem [thread:$0]  %s310, 16384, %s312, %s300, 512, 512, 32
        $region36: #{transformer_forward.2} parent=27 // pred_fallthru
          _
        // Predicated region
        $region37: #{transformer_forward.2} parent=27 // pred_check
          %p318 = pneg %p137
        $region38: #{transformer_forward.2} parent=27 // pred_check_branch
          %320 = sbr.rel (%p318) target = $region40
        $region39: #{transformer_forward.2} parent=27 // pred_region
          %s321 = sand.u32 %s23, 1
          %s322 = scalar_lea.sflag [#allocation5], %s321
          %s323 = sand.u32 %s127, 1
          %s324 = smul.addr %s323, 1024
          %s325 = scalar_lea.vmem [#allocation6], %s324
          %327 = vsyncadd %s322, 0
          %s328 = smul.addr %s23, 256
          %s329 = smul.addr %s328, 4
          %s330 = scalar_lea.hbm %s4, %s329
          %s331 = sshll.u32 %s330, 4
          %s332 = int_to_ptr.hbm [resolvable:$true] %s331
          %s333 = sshll.u32 %s325, 4
          %s334 = int_to_ptr.vmem [resolvable:$true] %s333
          %339 = dma.hbm_to_vmem [thread:$0]  %s332, 16384, %s334, %s322, 128, 128, 8
        $region40: #{transformer_forward.2} parent=27 // pred_fallthru
          _
        // Predicated region
        $region41: #{transformer_forward.2} parent=27 // pred_check
          %p340 = pneg %p163
        $region42: #{transformer_forward.2} parent=27 // pred_check_branch
          %342 = sbr.rel (%p340) target = $region44
        $region43: #{transformer_forward.2} parent=27 // pred_region
          %p343 = scmp.lt.s32.totalorder %s23, 3
          %s344 = scalar_select %p343, %s23, 3
          %s345 = smul.addr %s344, 4
          %s346 = smul.addr %s345, 8
          %s347 = scalar_lea.vmem %s5, %s346
        $region44: #{transformer_forward.2} parent=27 // pred_fallthru
          _
        // Predicated region
        $region45: #{transformer_forward.2} parent=27 // pred_check
          %p348 = pneg %p189
        $region46: #{transformer_forward.2} parent=27 // pred_check_branch
          %350 = sbr.rel (%p348) target = $region48
        $region47: #{transformer_forward.2} parent=27 // pred_region
          %s351 = sand.u32 %s23, 1
          %s352 = scalar_lea.sflag [#allocation8], %s351
          %s353 = sand.u32 %s179, 1
          %s354 = smul.addr %s353, 8
          %s355 = scalar_lea.vmem [#allocation7], %s354
          %357 = vsyncadd %s352, 0
          %s358 = smul.addr %s23, 8
          %s359 = scalar_lea.hbm %s6, %s358
          %s361 = sshll.u32 %s359, 4
          %s362 = int_to_ptr.hbm [resolvable:$true] %s361
          %s363 = sshll.u32 %s355, 4
          %s364 = int_to_ptr.vmem [resolvable:$true] %s363
          %366 = dma.hbm_to_vmem [thread:$0]  %s362, 128, %s364, %s352
        $region48: #{transformer_forward.2} parent=27 // pred_fallthru
          _
      $region28: #{transformer_forward.2} parent=5 // pred_fallthru
        _
      %p367 = scmp.le.s32.totalorder 1, %s23
      %p368 = scmp.lt.s32.totalorder %s23, 5
      %p369 = pnand %p367, %p368
      %p370 = pneg %p369
      // Predicated region
      $region49: #{transformer_forward.2} parent=5 // pred_check
        _
      $region50: #{transformer_forward.2} parent=5 // pred_check_branch
        %372 = sbr.rel (%p369) target = $region52
      $region51: #{transformer_forward.2} parent=5 // pred_region
        %s373 = ssub.s32 %s23, 1
        %s374 = sand.u32 %s78, 1
        %s375 = scalar_lea.sflag [#allocation3], %s374
        %s376 = sand.u32 %s78, 1
        %s377 = smul.addr %s376, 1024
        %s378 = scalar_lea.vmem [#allocation2], %s377
        // Predicated region
        $region53: #{transformer_forward.2} parent=51 // pred_check
          %p379 = pneg %p91
        $region54: #{transformer_forward.2} parent=51 // pred_check_branch
          %381 = sbr.rel (%p379) target = $region56
        $region55: #{transformer_forward.2} parent=51 // pred_region
          %383 = dma.done %s375, 16384
        $region56: #{transformer_forward.2} parent=51 // pred_fallthru
          _
        %s384 = sand.u32 %s28, 1
        %s385 = scalar_lea.sflag [#allocation5], %s384
        %s386 = sand.u32 %s104, 1
        %s387 = smul.addr %s386, 1024
        %s388 = scalar_lea.vmem [#allocation4], %s387
        // Predicated region
        $region57: #{transformer_forward.2} parent=51 // pred_check
          %p389 = pneg %p117
        $region58: #{transformer_forward.2} parent=51 // pred_check_branch
          %391 = sbr.rel (%p389) target = $region60
        $region59: #{transformer_forward.2} parent=51 // pred_region
          %393 = dma.done %s385, 16384
        $region60: #{transformer_forward.2} parent=51 // pred_fallthru
          _
        %s394 = sand.u32 %s28, 1
        %s395 = scalar_lea.sflag [#allocation5], %s394
        %s396 = sand.u32 %s130, 1
        %s397 = smul.addr %s396, 1024
        %s398 = scalar_lea.vmem [#allocation6], %s397
        // Predicated region
        $region61: #{transformer_forward.2} parent=51 // pred_check
          %p399 = pneg %p143
        $region62: #{transformer_forward.2} parent=51 // pred_check_branch
          %401 = sbr.rel (%p399) target = $region64
        $region63: #{transformer_forward.2} parent=51 // pred_region
          %403 = dma.done %s395, 16384
        $region64: #{transformer_forward.2} parent=51 // pred_fallthru
          _
        %s404 = sand.u32 %s28, 1
        %s405 = scalar_lea.sflag [#allocation8], %s404
        %s406 = sand.u32 %s182, 1
        %s407 = smul.addr %s406, 8
        %s408 = scalar_lea.vmem [#allocation7], %s407
        // Predicated region
        $region65: #{transformer_forward.2} parent=51 // pred_check
          %p409 = pneg %p195
        $region66: #{transformer_forward.2} parent=51 // pred_check_branch
          %411 = sbr.rel (%p409) target = $region68
        $region67: #{transformer_forward.2} parent=51 // pred_region
          %413 = dma.done %s405, 128
        $region68: #{transformer_forward.2} parent=51 // pred_fallthru
          _
        // Predicated region
        $region69: #{transformer_forward.2} parent=51 // pred_check
          %p414 = pneg %p216
        $region70: #{transformer_forward.2} parent=51 // pred_check_branch
          %416 = sbr.rel (%p414) target = $region72
        $region71: #{transformer_forward.2} parent=51 // pred_region
          %418 = dma.done [#allocation8], 64
        $region72: #{transformer_forward.2} parent=51 // pred_fallthru
          _
        %p419 = pneg %p44
        %p420 = pneg %p41
        %p421 = pneg %p65
        %p422 = pneg %p62
        %s423 = sand.u32 %s78, 1
        %s424 = scalar_lea.sflag [#allocation3], %s423
        %s425 = sand.u32 %s78, 1
        %s426 = smul.addr %s425, 1024
        %s427 = scalar_lea.vmem [#allocation2], %s426
        %p428 = pneg %p91
        %p429 = pneg %p88
        %s430 = sand.u32 %s28, 1
        %s431 = scalar_lea.sflag [#allocation5], %s430
        %s432 = sand.u32 %s104, 1
        %s433 = smul.addr %s432, 1024
        %s434 = scalar_lea.vmem [#allocation4], %s433
        %p435 = pneg %p117
        %p436 = pneg %p114
        %s437 = sand.u32 %s28, 1
        %s438 = scalar_lea.sflag [#allocation5], %s437
        %s439 = sand.u32 %s130, 1
        %s440 = smul.addr %s439, 1024
        %s441 = scalar_lea.vmem [#allocation6], %s440
        %p442 = pneg %p143
        %p443 = pneg %p140
        %p444 = scmp.lt.s32.totalorder %s28, 3
        %s445 = scalar_select %p444, %s28, 3
        %s446 = smul.addr %s445, 4
        %s447 = smul.addr %s446, 8
        %s448 = scalar_lea.vmem %s5, %s447
        %p449 = pneg %p169
        %p450 = pneg %p166
        %s451 = sand.u32 %s28, 1
        %s452 = scalar_lea.sflag [#allocation8], %s451
        %s453 = sand.u32 %s182, 1
        %s454 = smul.addr %s453, 8
        %s455 = scalar_lea.vmem [#allocation7], %s454
        %p456 = pneg %p195
        %p457 = pneg %p192
        %p458 = pneg %p216
        %p459 = pneg %p213
        %p460 = pneg %p237
        %p461 = pneg %p234
        %p462 = scmp.lt.s32.totalorder %s28, 3
        %s463 = scalar_select %p462, %s28, 3
        %s464 = smul.addr %s463, 4
        %s465 = smul.addr %s464, 8
        %s466 = scalar_lea.vmem %s5, %s465
        %p468 = scmp.eq.s32.totalorder %s28, 0
        // Predicated region
        $region73: #{transformer_forward.2} parent=51 // pred_check
          %p469 = pneg %p468
        $region74: #{transformer_forward.2} parent=51 // pred_check_branch
          %471 = sbr.rel (%p469) target = $region76
        $region75: #{transformer_forward.2} parent=51 // pred_region
          %v472 = vld [vmem:[%s0] sm:$0xff]
          %v473 = vld [vmem:[%s0 + $0x8] sm:$0xff]
          %v474 = vld [vmem:[%s0 + $0x10] sm:$0xff]
          %v475 = vld [vmem:[%s0 + $0x18] sm:$0xff]
          %476 = vst [vmem:[%s8] sm:$0xff] %v472
          %477 = vst [vmem:[%s8 + $0x8] sm:$0xff] %v473
          %478 = vst [vmem:[%s8 + $0x10] sm:$0xff] %v474
          %479 = vst [vmem:[%s8 + $0x18] sm:$0xff] %v475
        $region76: #{transformer_forward.2} parent=51 // pred_fallthru
          _
        %v480 = vld [vmem:[%s8] sm:$0xff]
        %v481 = vld [vmem:[%s8 + $0x8] sm:$0xff]
        %v482 = vld [vmem:[%s8 + $0x10] sm:$0xff]
        %v483 = vld [vmem:[%s8 + $0x18] sm:$0xff]
        %v484 = vld [vmem:[%s1] sm:$0xff]
        %v485 = vld [vmem:[%s1 + $0x8] sm:$0xff]
        %v486 = vld [vmem:[%s378] sm:$0xff]
        %v487 = vld [vmem:[%s378 + $0x8] sm:$0xff]
        %v488 = vld [vmem:[%s378 + $0x10] sm:$0xff]
        %v489 = vld [vmem:[%s378 + $0x18] sm:$0xff]
        %v490 = vld [vmem:[%s378 + $0x20] sm:$0xff]
        %v491 = vld [vmem:[%s378 + $0x28] sm:$0xff]
        %v492 = vld [vmem:[%s378 + $0x30] sm:$0xff]
        %v493 = vld [vmem:[%s378 + $0x38] sm:$0xff]
        %v494 = vld [vmem:[%s378 + $0x40] sm:$0xff]
        %v495 = vld [vmem:[%s378 + $0x48] sm:$0xff]
        %v496 = vld [vmem:[%s378 + $0x50] sm:$0xff]
        %v497 = vld [vmem:[%s378 + $0x58] sm:$0xff]
        %v498 = vld [vmem:[%s378 + $0x60] sm:$0xff]
        %v499 = vld [vmem:[%s378 + $0x68] sm:$0xff]
        %v500 = vld [vmem:[%s378 + $0x70] sm:$0xff]
        %v501 = vld [vmem:[%s378 + $0x78] sm:$0xff]
        %v502 = vld [vmem:[%s378 + $0x80] sm:$0xff]
        %v503 = vld [vmem:[%s378 + $0x88] sm:$0xff]
        %v504 = vld [vmem:[%s378 + $0x90] sm:$0xff]
        %v505 = vld [vmem:[%s378 + $0x98] sm:$0xff]
        %v506 = vld [vmem:[%s378 + $0xa0] sm:$0xff]
        %v507 = vld [vmem:[%s378 + $0xa8] sm:$0xff]
        %v508 = vld [vmem:[%s378 + $0xb0] sm:$0xff]
        %v509 = vld [vmem:[%s378 + $0xb8] sm:$0xff]
        %v510 = vld [vmem:[%s378 + $0xc0] sm:$0xff]
        %v511 = vld [vmem:[%s378 + $0xc8] sm:$0xff]
        %v512 = vld [vmem:[%s378 + $0xd0] sm:$0xff]
        %v513 = vld [vmem:[%s378 + $0xd8] sm:$0xff]
        %v514 = vld [vmem:[%s378 + $0xe0] sm:$0xff]
        %v515 = vld [vmem:[%s378 + $0xe8] sm:$0xff]
        %v516 = vld [vmem:[%s378 + $0xf0] sm:$0xff]
        %v517 = vld [vmem:[%s378 + $0xf8] sm:$0xff]
        %v518 = vld [vmem:[%s466] ss:$8 sm:$0x3]
        %s519 = scalar_lea.vmem %s378, 256 [#allocation2]
        %v520 = vld [vmem:[%s519] sm:$0xff]
        %v521 = vld [vmem:[%s519 + $0x8] sm:$0xff]
        %v522 = vld [vmem:[%s519 + $0x10] sm:$0xff]
        %v523 = vld [vmem:[%s519 + $0x18] sm:$0xff]
        %v524 = vld [vmem:[%s519 + $0x20] sm:$0xff]
        %v525 = vld [vmem:[%s519 + $0x28] sm:$0xff]
        %v526 = vld [vmem:[%s519 + $0x30] sm:$0xff]
        %v527 = vld [vmem:[%s519 + $0x38] sm:$0xff]
        %v528 = vld [vmem:[%s519 + $0x40] sm:$0xff]
        %v529 = vld [vmem:[%s519 + $0x48] sm:$0xff]
        %v530 = vld [vmem:[%s519 + $0x50] sm:$0xff]
        %v531 = vld [vmem:[%s519 + $0x58] sm:$0xff]
        %v532 = vld [vmem:[%s519 + $0x60] sm:$0xff]
        %v533 = vld [vmem:[%s519 + $0x68] sm:$0xff]
        %v534 = vld [vmem:[%s519 + $0x70] sm:$0xff]
        %v535 = vld [vmem:[%s519 + $0x78] sm:$0xff]
        %v536 = vld [vmem:[%s519 + $0x80] sm:$0xff]
        %v537 = vld [vmem:[%s519 + $0x88] sm:$0xff]
        %v538 = vld [vmem:[%s519 + $0x90] sm:$0xff]
        %v539 = vld [vmem:[%s519 + $0x98] sm:$0xff]
        %v540 = vld [vmem:[%s519 + $0xa0] sm:$0xff]
        %v541 = vld [vmem:[%s519 + $0xa8] sm:$0xff]
        %v542 = vld [vmem:[%s519 + $0xb0] sm:$0xff]
        %v543 = vld [vmem:[%s519 + $0xb8] sm:$0xff]
        %v544 = vld [vmem:[%s519 + $0xc0] sm:$0xff]
        %v545 = vld [vmem:[%s519 + $0xc8] sm:$0xff]
        %v546 = vld [vmem:[%s519 + $0xd0] sm:$0xff]
        %v547 = vld [vmem:[%s519 + $0xd8] sm:$0xff]
        %v548 = vld [vmem:[%s519 + $0xe0] sm:$0xff]
        %v549 = vld [vmem:[%s519 + $0xe8] sm:$0xff]
        %v550 = vld [vmem:[%s519 + $0xf0] sm:$0xff]
        %v551 = vld [vmem:[%s519 + $0xf8] sm:$0xff]
        %s552 = scalar_lea.vmem %s466, 1
        %v553 = vld [vmem:[%s552] ss:$8 sm:$0x3]
        %s554 = scalar_lea.vmem %s378, 512 [#allocation2]
        %v555 = vld [vmem:[%s554] sm:$0xff]
        %v556 = vld [vmem:[%s554 + $0x8] sm:$0xff]
        %v557 = vld [vmem:[%s554 + $0x10] sm:$0xff]
        %v558 = vld [vmem:[%s554 + $0x18] sm:$0xff]
        %v559 = vld [vmem:[%s554 + $0x20] sm:$0xff]
        %v560 = vld [vmem:[%s554 + $0x28] sm:$0xff]
        %v561 = vld [vmem:[%s554 + $0x30] sm:$0xff]
        %v562 = vld [vmem:[%s554 + $0x38] sm:$0xff]
        %v563 = vld [vmem:[%s554 + $0x40] sm:$0xff]
        %v564 = vld [vmem:[%s554 + $0x48] sm:$0xff]
        %v565 = vld [vmem:[%s554 + $0x50] sm:$0xff]
        %v566 = vld [vmem:[%s554 + $0x58] sm:$0xff]
        %v567 = vld [vmem:[%s554 + $0x60] sm:$0xff]
        %v568 = vld [vmem:[%s554 + $0x68] sm:$0xff]
        %v569 = vld [vmem:[%s554 + $0x70] sm:$0xff]
        %v570 = vld [vmem:[%s554 + $0x78] sm:$0xff]
        %v571 = vld [vmem:[%s554 + $0x80] sm:$0xff]
        %v572 = vld [vmem:[%s554 + $0x88] sm:$0xff]
        %v573 = vld [vmem:[%s554 + $0x90] sm:$0xff]
        %v574 = vld [vmem:[%s554 + $0x98] sm:$0xff]
        %v575 = vld [vmem:[%s554 + $0xa0] sm:$0xff]
        %v576 = vld [vmem:[%s554 + $0xa8] sm:$0xff]
        %v577 = vld [vmem:[%s554 + $0xb0] sm:$0xff]
        %v578 = vld [vmem:[%s554 + $0xb8] sm:$0xff]
        %v579 = vld [vmem:[%s554 + $0xc0] sm:$0xff]
        %v580 = vld [vmem:[%s554 + $0xc8] sm:$0xff]
        %v581 = vld [vmem:[%s554 + $0xd0] sm:$0xff]
        %v582 = vld [vmem:[%s554 + $0xd8] sm:$0xff]
        %v583 = vld [vmem:[%s554 + $0xe0] sm:$0xff]
        %v584 = vld [vmem:[%s554 + $0xe8] sm:$0xff]
        %v585 = vld [vmem:[%s554 + $0xf0] sm:$0xff]
        %v586 = vld [vmem:[%s554 + $0xf8] sm:$0xff]
        %s587 = scalar_lea.vmem %s466, 2
        %v588 = vld [vmem:[%s587] ss:$8 sm:$0x3]
        %s589 = scalar_lea.vmem %s378, 768 [#allocation2]
        %v590 = vld [vmem:[%s589] sm:$0xff]
        %v591 = vld [vmem:[%s589 + $0x8] sm:$0xff]
        %v592 = vld [vmem:[%s589 + $0x10] sm:$0xff]
        %v593 = vld [vmem:[%s589 + $0x18] sm:$0xff]
        %v594 = vld [vmem:[%s589 + $0x20] sm:$0xff]
        %v595 = vld [vmem:[%s589 + $0x28] sm:$0xff]
        %v596 = vld [vmem:[%s589 + $0x30] sm:$0xff]
        %v597 = vld [vmem:[%s589 + $0x38] sm:$0xff]
        %v598 = vld [vmem:[%s589 + $0x40] sm:$0xff]
        %v599 = vld [vmem:[%s589 + $0x48] sm:$0xff]
        %v600 = vld [vmem:[%s589 + $0x50] sm:$0xff]
        %v601 = vld [vmem:[%s589 + $0x58] sm:$0xff]
        %v602 = vld [vmem:[%s589 + $0x60] sm:$0xff]
        %v603 = vld [vmem:[%s589 + $0x68] sm:$0xff]
        %v604 = vld [vmem:[%s589 + $0x70] sm:$0xff]
        %v605 = vld [vmem:[%s589 + $0x78] sm:$0xff]
        %v606 = vld [vmem:[%s589 + $0x80] sm:$0xff]
        %v607 = vld [vmem:[%s589 + $0x88] sm:$0xff]
        %v608 = vld [vmem:[%s589 + $0x90] sm:$0xff]
        %v609 = vld [vmem:[%s589 + $0x98] sm:$0xff]
        %v610 = vld [vmem:[%s589 + $0xa0] sm:$0xff]
        %v611 = vld [vmem:[%s589 + $0xa8] sm:$0xff]
        %v612 = vld [vmem:[%s589 + $0xb0] sm:$0xff]
        %v613 = vld [vmem:[%s589 + $0xb8] sm:$0xff]
        %v614 = vld [vmem:[%s589 + $0xc0] sm:$0xff]
        %v615 = vld [vmem:[%s589 + $0xc8] sm:$0xff]
        %v616 = vld [vmem:[%s589 + $0xd0] sm:$0xff]
        %v617 = vld [vmem:[%s589 + $0xd8] sm:$0xff]
        %v618 = vld [vmem:[%s589 + $0xe0] sm:$0xff]
        %v619 = vld [vmem:[%s589 + $0xe8] sm:$0xff]
        %v620 = vld [vmem:[%s589 + $0xf0] sm:$0xff]
        %v621 = vld [vmem:[%s589 + $0xf8] sm:$0xff]
        %s622 = scalar_lea.vmem %s466, 3
        %v623 = vld [vmem:[%s622] ss:$8 sm:$0x3]
        %v624 = vpack.c.bf16 %v482, %v480
        %v625 = vpack.c.bf16 %v483, %v481
        %v627 = vperm.slane %v518, 0
        %v628 = vperm.slane %v518, 1
        %v663 = vunpack.c.l.b16 %v486
        %v664 = vunpack.c.h.b16 %v486
        %v665 = vunpack.c.l.b16 %v487
        %v666 = vunpack.c.h.b16 %v487
        %v667 = vunpack.c.l.b16 %v488
        %v668 = vunpack.c.h.b16 %v488
        %v669 = vunpack.c.l.b16 %v489
        %v670 = vunpack.c.h.b16 %v489
        %v671 = vunpack.c.l.b16 %v490
        %v672 = vunpack.c.h.b16 %v490
        %v673 = vunpack.c.l.b16 %v491
        %v674 = vunpack.c.h.b16 %v491
        %v675 = vunpack.c.l.b16 %v492
        %v676 = vunpack.c.h.b16 %v492
        %v677 = vunpack.c.l.b16 %v493
        %v678 = vunpack.c.h.b16 %v493
        %v679 = vunpack.c.l.b16 %v494
        %v680 = vunpack.c.h.b16 %v494
        %v681 = vunpack.c.l.b16 %v495
        %v682 = vunpack.c.h.b16 %v495
        %v683 = vunpack.c.l.b16 %v496
        %v684 = vunpack.c.h.b16 %v496
        %v685 = vunpack.c.l.b16 %v497
        %v686 = vunpack.c.h.b16 %v497
        %v687 = vunpack.c.l.b16 %v498
        %v688 = vunpack.c.h.b16 %v498
        %v689 = vunpack.c.l.b16 %v499
        %v690 = vunpack.c.h.b16 %v499
        %v691 = vunpack.c.l.b16 %v500
        %v692 = vunpack.c.h.b16 %v500
        %v693 = vunpack.c.l.b16 %v501
        %v694 = vunpack.c.h.b16 %v501
        %v695 = vunpack.c.l.b16 %v502
        %v696 = vunpack.c.h.b16 %v502
        %v697 = vunpack.c.l.b16 %v503
        %v698 = vunpack.c.h.b16 %v503
        %v699 = vunpack.c.l.b16 %v504
        %v700 = vunpack.c.h.b16 %v504
        %v701 = vunpack.c.l.b16 %v505
        %v702 = vunpack.c.h.b16 %v505
        %v703 = vunpack.c.l.b16 %v506
        %v704 = vunpack.c.h.b16 %v506
        %v705 = vunpack.c.l.b16 %v507
        %v706 = vunpack.c.h.b16 %v507
        %v707 = vunpack.c.l.b16 %v508
        %v708 = vunpack.c.h.b16 %v508
        %v709 = vunpack.c.l.b16 %v509
        %v710 = vunpack.c.h.b16 %v509
        %v711 = vunpack.c.l.b16 %v510
        %v712 = vunpack.c.h.b16 %v510
        %v713 = vunpack.c.l.b16 %v511
        %v714 = vunpack.c.h.b16 %v511
        %v715 = vunpack.c.l.b16 %v512
        %v716 = vunpack.c.h.b16 %v512
        %v717 = vunpack.c.l.b16 %v513
        %v718 = vunpack.c.h.b16 %v513
        %v719 = vunpack.c.l.b16 %v514
        %v720 = vunpack.c.h.b16 %v514
        %v721 = vunpack.c.l.b16 %v515
        %v722 = vunpack.c.h.b16 %v515
        %v723 = vunpack.c.l.b16 %v516
        %v724 = vunpack.c.h.b16 %v516
        %v725 = vunpack.c.l.b16 %v517
        %v726 = vunpack.c.h.b16 %v517
        %v727 = vpack.c.b16 %v665, %v663
        %v728 = vpack.c.b16 %v666, %v664
        %v729 = vpack.c.b16 %v669, %v667
        %v730 = vpack.c.b16 %v670, %v668
        %v731 = vpack.c.b16 %v673, %v671
        %v732 = vpack.c.b16 %v674, %v672
        %v733 = vpack.c.b16 %v677, %v675
        %v734 = vpack.c.b16 %v678, %v676
        %v735 = vpack.c.b16 %v681, %v679
        %v736 = vpack.c.b16 %v682, %v680
        %v737 = vpack.c.b16 %v685, %v683
        %v738 = vpack.c.b16 %v686, %v684
        %v739 = vpack.c.b16 %v689, %v687
        %v740 = vpack.c.b16 %v690, %v688
        %v741 = vpack.c.b16 %v693, %v691
        %v742 = vpack.c.b16 %v694, %v692
        %v743 = vpack.c.b16 %v697, %v695
        %v744 = vpack.c.b16 %v698, %v696
        %v745 = vpack.c.b16 %v701, %v699
        %v746 = vpack.c.b16 %v702, %v700
        %v747 = vpack.c.b16 %v705, %v703
        %v748 = vpack.c.b16 %v706, %v704
        %v749 = vpack.c.b16 %v709, %v707
        %v750 = vpack.c.b16 %v710, %v708
        %v751 = vpack.c.b16 %v713, %v711
        %v752 = vpack.c.b16 %v714, %v712
        %v753 = vpack.c.b16 %v717, %v715
        %v754 = vpack.c.b16 %v718, %v716
        %v755 = vpack.c.b16 %v721, %v719
        %v756 = vpack.c.b16 %v722, %v720
        %v757 = vpack.c.b16 %v725, %v723
        %v758 = vpack.c.b16 %v726, %v724
        %791 = vmatpush.bf16.msra.mxu0 %v741
        %792 = vmatpush.bf16.msra.mxu0 %v739
        %793 = vmatpush.bf16.msra.mxu0 %v737
        %794 = vmatpush.bf16.msra.mxu0 %v735
        %795 = vmatpush.bf16.msra.mxu0 %v733
        %796 = vmatpush.bf16.msra.mxu0 %v731
        %797 = vmatpush.bf16.msra.mxu0 %v729
        %798 = vmatpush.bf16.msra.mxu0 %v727
        %799 = vmatmul.bf16.gmra.mxu0 %v624
        %v800 = vpop.f32.mrf.mxu0
        %v801 = vadd.f32 %v627, %v800
        %v802 = vpop.f32.mrf.mxu0
        %v803 = vadd.f32 %v627, %v802
        %804 = vdwg.mxu0
        %805 = vmatpush.bf16.msra.mxu0 %v757
        %806 = vmatpush.bf16.msra.mxu0 %v755
        %807 = vmatpush.bf16.msra.mxu0 %v753
        %808 = vmatpush.bf16.msra.mxu0 %v751
        %809 = vmatpush.bf16.msra.mxu0 %v749
        %810 = vmatpush.bf16.msra.mxu0 %v747
        %811 = vmatpush.bf16.msra.mxu0 %v745
        %812 = vmatpush.bf16.msra.mxu0 %v743
        %813 = vmatmul.bf16.gmra.mxu0 %v625
        %v814 = vpop.f32.mrf.mxu0
        %v815 = vadd.f32 %v801, %v814
        %v816 = vpop.f32.mrf.mxu0
        %v817 = vadd.f32 %v803, %v816
        %818 = vdwg.mxu0
        %819 = vmatpush.bf16.msra.mxu0 %v742
        %820 = vmatpush.bf16.msra.mxu0 %v740
        %821 = vmatpush.bf16.msra.mxu0 %v738
        %822 = vmatpush.bf16.msra.mxu0 %v736
        %823 = vmatpush.bf16.msra.mxu0 %v734
        %824 = vmatpush.bf16.msra.mxu0 %v732
        %825 = vmatpush.bf16.msra.mxu0 %v730
        %826 = vmatpush.bf16.msra.mxu0 %v728
        %827 = vmatmul.bf16.gmra.mxu0 %v624
        %v828 = vpop.f32.mrf.mxu0
        %v829 = vadd.f32 %v628, %v828
        %v830 = vpop.f32.mrf.mxu0
        %v831 = vadd.f32 %v628, %v830
        %832 = vdwg.mxu0
        %833 = vmatpush.bf16.msra.mxu0 %v758
        %834 = vmatpush.bf16.msra.mxu0 %v756
        %835 = vmatpush.bf16.msra.mxu0 %v754
        %836 = vmatpush.bf16.msra.mxu0 %v752
        %837 = vmatpush.bf16.msra.mxu0 %v750
        %838 = vmatpush.bf16.msra.mxu0 %v748
        %839 = vmatpush.bf16.msra.mxu0 %v746
        %840 = vmatpush.bf16.msra.mxu0 %v744
        %841 = vmatmul.bf16.gmra.mxu0 %v625
        %v842 = vpop.f32.mrf.mxu0
        %v843 = vadd.f32 %v829, %v842
        %v844 = vpop.f32.mrf.mxu0
        %v845 = vadd.f32 %v831, %v844
        %846 = vdwg.mxu0
        %v848 = vperm.slane %v553, 0
        %v849 = vperm.slane %v553, 1
        %v884 = vunpack.c.l.b16 %v520
        %v885 = vunpack.c.h.b16 %v520
        %v886 = vunpack.c.l.b16 %v521
        %v887 = vunpack.c.h.b16 %v521
        %v888 = vunpack.c.l.b16 %v522
        %v889 = vunpack.c.h.b16 %v522
        %v890 = vunpack.c.l.b16 %v523
        %v891 = vunpack.c.h.b16 %v523
        %v892 = vunpack.c.l.b16 %v524
        %v893 = vunpack.c.h.b16 %v524
        %v894 = vunpack.c.l.b16 %v525
        %v895 = vunpack.c.h.b16 %v525
        %v896 = vunpack.c.l.b16 %v526
        %v897 = vunpack.c.h.b16 %v526
        %v898 = vunpack.c.l.b16 %v527
        %v899 = vunpack.c.h.b16 %v527
        %v900 = vunpack.c.l.b16 %v528
        %v901 = vunpack.c.h.b16 %v528
        %v902 = vunpack.c.l.b16 %v529
        %v903 = vunpack.c.h.b16 %v529
        %v904 = vunpack.c.l.b16 %v530
        %v905 = vunpack.c.h.b16 %v530
        %v906 = vunpack.c.l.b16 %v531
        %v907 = vunpack.c.h.b16 %v531
        %v908 = vunpack.c.l.b16 %v532
        %v909 = vunpack.c.h.b16 %v532
        %v910 = vunpack.c.l.b16 %v533
        %v911 = vunpack.c.h.b16 %v533
        %v912 = vunpack.c.l.b16 %v534
        %v913 = vunpack.c.h.b16 %v534
        %v914 = vunpack.c.l.b16 %v535
        %v915 = vunpack.c.h.b16 %v535
        %v916 = vunpack.c.l.b16 %v536
        %v917 = vunpack.c.h.b16 %v536
        %v918 = vunpack.c.l.b16 %v537
        %v919 = vunpack.c.h.b16 %v537
        %v920 = vunpack.c.l.b16 %v538
        %v921 = vunpack.c.h.b16 %v538
        %v922 = vunpack.c.l.b16 %v539
        %v923 = vunpack.c.h.b16 %v539
        %v924 = vunpack.c.l.b16 %v540
        %v925 = vunpack.c.h.b16 %v540
        %v926 = vunpack.c.l.b16 %v541
        %v927 = vunpack.c.h.b16 %v541
        %v928 = vunpack.c.l.b16 %v542
        %v929 = vunpack.c.h.b16 %v542
        %v930 = vunpack.c.l.b16 %v543
        %v931 = vunpack.c.h.b16 %v543
        %v932 = vunpack.c.l.b16 %v544
        %v933 = vunpack.c.h.b16 %v544
        %v934 = vunpack.c.l.b16 %v545
        %v935 = vunpack.c.h.b16 %v545
        %v936 = vunpack.c.l.b16 %v546
        %v937 = vunpack.c.h.b16 %v546
        %v938 = vunpack.c.l.b16 %v547
        %v939 = vunpack.c.h.b16 %v547
        %v940 = vunpack.c.l.b16 %v548
        %v941 = vunpack.c.h.b16 %v548
        %v942 = vunpack.c.l.b16 %v549
        %v943 = vunpack.c.h.b16 %v549
        %v944 = vunpack.c.l.b16 %v550
        %v945 = vunpack.c.h.b16 %v550
        %v946 = vunpack.c.l.b16 %v551
        %v947 = vunpack.c.h.b16 %v551
        %v948 = vpack.c.b16 %v886, %v884
        %v949 = vpack.c.b16 %v887, %v885
        %v950 = vpack.c.b16 %v890, %v888
        %v951 = vpack.c.b16 %v891, %v889
        %v952 = vpack.c.b16 %v894, %v892
        %v953 = vpack.c.b16 %v895, %v893
        %v954 = vpack.c.b16 %v898, %v896
        %v955 = vpack.c.b16 %v899, %v897
        %v956 = vpack.c.b16 %v902, %v900
        %v957 = vpack.c.b16 %v903, %v901
        %v958 = vpack.c.b16 %v906, %v904
        %v959 = vpack.c.b16 %v907, %v905
        %v960 = vpack.c.b16 %v910, %v908
        %v961 = vpack.c.b16 %v911, %v909
        %v962 = vpack.c.b16 %v914, %v912
        %v963 = vpack.c.b16 %v915, %v913
        %v964 = vpack.c.b16 %v918, %v916
        %v965 = vpack.c.b16 %v919, %v917
        %v966 = vpack.c.b16 %v922, %v920
        %v967 = vpack.c.b16 %v923, %v921
        %v968 = vpack.c.b16 %v926, %v924
        %v969 = vpack.c.b16 %v927, %v925
        %v970 = vpack.c.b16 %v930, %v928
        %v971 = vpack.c.b16 %v931, %v929
        %v972 = vpack.c.b16 %v934, %v932
        %v973 = vpack.c.b16 %v935, %v933
        %v974 = vpack.c.b16 %v938, %v936
        %v975 = vpack.c.b16 %v939, %v937
        %v976 = vpack.c.b16 %v942, %v940
        %v977 = vpack.c.b16 %v943, %v941
        %v978 = vpack.c.b16 %v946, %v944
        %v979 = vpack.c.b16 %v947, %v945
        %1012 = vmatpush.bf16.msra.mxu0 %v962
        %1013 = vmatpush.bf16.msra.mxu0 %v960
        %1014 = vmatpush.bf16.msra.mxu0 %v958
        %1015 = vmatpush.bf16.msra.mxu0 %v956
        %1016 = vmatpush.bf16.msra.mxu0 %v954
        %1017 = vmatpush.bf16.msra.mxu0 %v952
        %1018 = vmatpush.bf16.msra.mxu0 %v950
        %1019 = vmatpush.bf16.msra.mxu0 %v948
        %1020 = vmatmul.bf16.gmra.mxu0 %v624
        %v1021 = vpop.f32.mrf.mxu0
        %v1022 = vadd.f32 %v848, %v1021
        %v1023 = vpop.f32.mrf.mxu0
        %v1024 = vadd.f32 %v848, %v1023
        %1025 = vdwg.mxu0
        %1026 = vmatpush.bf16.msra.mxu0 %v978
        %1027 = vmatpush.bf16.msra.mxu0 %v976
        %1028 = vmatpush.bf16.msra.mxu0 %v974
        %1029 = vmatpush.bf16.msra.mxu0 %v972
        %1030 = vmatpush.bf16.msra.mxu0 %v970
        %1031 = vmatpush.bf16.msra.mxu0 %v968
        %1032 = vmatpush.bf16.msra.mxu0 %v966
        %1033 = vmatpush.bf16.msra.mxu0 %v964
        %1034 = vmatmul.bf16.gmra.mxu0 %v625
        %v1035 = vpop.f32.mrf.mxu0
        %v1036 = vadd.f32 %v1022, %v1035
        %v1037 = vpop.f32.mrf.mxu0
        %v1038 = vadd.f32 %v1024, %v1037
        %1039 = vdwg.mxu0
        %1040 = vmatpush.bf16.msra.mxu0 %v963
        %1041 = vmatpush.bf16.msra.mxu0 %v961
        %1042 = vmatpush.bf16.msra.mxu0 %v959
        %1043 = vmatpush.bf16.msra.mxu0 %v957
        %1044 = vmatpush.bf16.msra.mxu0 %v955
        %1045 = vmatpush.bf16.msra.mxu0 %v953
        %1046 = vmatpush.bf16.msra.mxu0 %v951
        %1047 = vmatpush.bf16.msra.mxu0 %v949
        %1048 = vmatmul.bf16.gmra.mxu0 %v624
        %v1049 = vpop.f32.mrf.mxu0
        %v1050 = vadd.f32 %v849, %v1049
        %v1051 = vpop.f32.mrf.mxu0
        %v1052 = vadd.f32 %v849, %v1051
        %1053 = vdwg.mxu0
        %1054 = vmatpush.bf16.msra.mxu0 %v979
        %1055 = vmatpush.bf16.msra.mxu0 %v977
        %1056 = vmatpush.bf16.msra.mxu0 %v975
        %1057 = vmatpush.bf16.msra.mxu0 %v973
        %1058 = vmatpush.bf16.msra.mxu0 %v971
        %1059 = vmatpush.bf16.msra.mxu0 %v969
        %1060 = vmatpush.bf16.msra.mxu0 %v967
        %1061 = vmatpush.bf16.msra.mxu0 %v965
        %1062 = vmatmul.bf16.gmra.mxu0 %v625
        %v1063 = vpop.f32.mrf.mxu0
        %v1064 = vadd.f32 %v1050, %v1063
        %v1065 = vpop.f32.mrf.mxu0
        %v1066 = vadd.f32 %v1052, %v1065
        %1067 = vdwg.mxu0
        %v1069 = vperm.slane %v588, 0
        %v1070 = vperm.slane %v588, 1
        %v1105 = vunpack.c.l.b16 %v555
        %v1106 = vunpack.c.h.b16 %v555
        %v1107 = vunpack.c.l.b16 %v556
        %v1108 = vunpack.c.h.b16 %v556
        %v1109 = vunpack.c.l.b16 %v557
        %v1110 = vunpack.c.h.b16 %v557
        %v1111 = vunpack.c.l.b16 %v558
        %v1112 = vunpack.c.h.b16 %v558
        %v1113 = vunpack.c.l.b16 %v559
        %v1114 = vunpack.c.h.b16 %v559
        %v1115 = vunpack.c.l.b16 %v560
        %v1116 = vunpack.c.h.b16 %v560
        %v1117 = vunpack.c.l.b16 %v561
        %v1118 = vunpack.c.h.b16 %v561
        %v1119 = vunpack.c.l.b16 %v562
        %v1120 = vunpack.c.h.b16 %v562
        %v1121 = vunpack.c.l.b16 %v563
        %v1122 = vunpack.c.h.b16 %v563
        %v1123 = vunpack.c.l.b16 %v564
        %v1124 = vunpack.c.h.b16 %v564
        %v1125 = vunpack.c.l.b16 %v565
        %v1126 = vunpack.c.h.b16 %v565
        %v1127 = vunpack.c.l.b16 %v566
        %v1128 = vunpack.c.h.b16 %v566
        %v1129 = vunpack.c.l.b16 %v567
        %v1130 = vunpack.c.h.b16 %v567
        %v1131 = vunpack.c.l.b16 %v568
        %v1132 = vunpack.c.h.b16 %v568
        %v1133 = vunpack.c.l.b16 %v569
        %v1134 = vunpack.c.h.b16 %v569
        %v1135 = vunpack.c.l.b16 %v570
        %v1136 = vunpack.c.h.b16 %v570
        %v1137 = vunpack.c.l.b16 %v571
        %v1138 = vunpack.c.h.b16 %v571
        %v1139 = vunpack.c.l.b16 %v572
        %v1140 = vunpack.c.h.b16 %v572
        %v1141 = vunpack.c.l.b16 %v573
        %v1142 = vunpack.c.h.b16 %v573
        %v1143 = vunpack.c.l.b16 %v574
        %v1144 = vunpack.c.h.b16 %v574
        %v1145 = vunpack.c.l.b16 %v575
        %v1146 = vunpack.c.h.b16 %v575
        %v1147 = vunpack.c.l.b16 %v576
        %v1148 = vunpack.c.h.b16 %v576
        %v1149 = vunpack.c.l.b16 %v577
        %v1150 = vunpack.c.h.b16 %v577
        %v1151 = vunpack.c.l.b16 %v578
        %v1152 = vunpack.c.h.b16 %v578
        %v1153 = vunpack.c.l.b16 %v579
        %v1154 = vunpack.c.h.b16 %v579
        %v1155 = vunpack.c.l.b16 %v580
        %v1156 = vunpack.c.h.b16 %v580
        %v1157 = vunpack.c.l.b16 %v581
        %v1158 = vunpack.c.h.b16 %v581
        %v1159 = vunpack.c.l.b16 %v582
        %v1160 = vunpack.c.h.b16 %v582
        %v1161 = vunpack.c.l.b16 %v583
        %v1162 = vunpack.c.h.b16 %v583
        %v1163 = vunpack.c.l.b16 %v584
        %v1164 = vunpack.c.h.b16 %v584
        %v1165 = vunpack.c.l.b16 %v585
        %v1166 = vunpack.c.h.b16 %v585
        %v1167 = vunpack.c.l.b16 %v586
        %v1168 = vunpack.c.h.b16 %v586
        %v1169 = vpack.c.b16 %v1107, %v1105
        %v1170 = vpack.c.b16 %v1108, %v1106
        %v1171 = vpack.c.b16 %v1111, %v1109
        %v1172 = vpack.c.b16 %v1112, %v1110
        %v1173 = vpack.c.b16 %v1115, %v1113
        %v1174 = vpack.c.b16 %v1116, %v1114
        %v1175 = vpack.c.b16 %v1119, %v1117
        %v1176 = vpack.c.b16 %v1120, %v1118
        %v1177 = vpack.c.b16 %v1123, %v1121
        %v1178 = vpack.c.b16 %v1124, %v1122
        %v1179 = vpack.c.b16 %v1127, %v1125
        %v1180 = vpack.c.b16 %v1128, %v1126
        %v1181 = vpack.c.b16 %v1131, %v1129
        %v1182 = vpack.c.b16 %v1132, %v1130
        %v1183 = vpack.c.b16 %v1135, %v1133
        %v1184 = vpack.c.b16 %v1136, %v1134
        %v1185 = vpack.c.b16 %v1139, %v1137
        %v1186 = vpack.c.b16 %v1140, %v1138
        %v1187 = vpack.c.b16 %v1143, %v1141
        %v1188 = vpack.c.b16 %v1144, %v1142
        %v1189 = vpack.c.b16 %v1147, %v1145
        %v1190 = vpack.c.b16 %v1148, %v1146
        %v1191 = vpack.c.b16 %v1151, %v1149
        %v1192 = vpack.c.b16 %v1152, %v1150
        %v1193 = vpack.c.b16 %v1155, %v1153
        %v1194 = vpack.c.b16 %v1156, %v1154
        %v1195 = vpack.c.b16 %v1159, %v1157
        %v1196 = vpack.c.b16 %v1160, %v1158
        %v1197 = vpack.c.b16 %v1163, %v1161
        %v1198 = vpack.c.b16 %v1164, %v1162
        %v1199 = vpack.c.b16 %v1167, %v1165
        %v1200 = vpack.c.b16 %v1168, %v1166
        %1233 = vmatpush.bf16.msra.mxu0 %v1183
        %1234 = vmatpush.bf16.msra.mxu0 %v1181
        %1235 = vmatpush.bf16.msra.mxu0 %v1179
        %1236 = vmatpush.bf16.msra.mxu0 %v1177
        %1237 = vmatpush.bf16.msra.mxu0 %v1175
        %1238 = vmatpush.bf16.msra.mxu0 %v1173
        %1239 = vmatpush.bf16.msra.mxu0 %v1171
        %1240 = vmatpush.bf16.msra.mxu0 %v1169
        %1241 = vmatmul.bf16.gmra.mxu0 %v624
        %v1242 = vpop.f32.mrf.mxu0
        %v1243 = vadd.f32 %v1069, %v1242
        %v1244 = vpop.f32.mrf.mxu0
        %v1245 = vadd.f32 %v1069, %v1244
        %1246 = vdwg.mxu0
        %1247 = vmatpush.bf16.msra.mxu0 %v1199
        %1248 = vmatpush.bf16.msra.mxu0 %v1197
        %1249 = vmatpush.bf16.msra.mxu0 %v1195
        %1250 = vmatpush.bf16.msra.mxu0 %v1193
        %1251 = vmatpush.bf16.msra.mxu0 %v1191
        %1252 = vmatpush.bf16.msra.mxu0 %v1189
        %1253 = vmatpush.bf16.msra.mxu0 %v1187
        %1254 = vmatpush.bf16.msra.mxu0 %v1185
        %1255 = vmatmul.bf16.gmra.mxu0 %v625
        %v1256 = vpop.f32.mrf.mxu0
        %v1257 = vadd.f32 %v1243, %v1256
        %v1258 = vpop.f32.mrf.mxu0
        %v1259 = vadd.f32 %v1245, %v1258
        %1260 = vdwg.mxu0
        %1261 = vmatpush.bf16.msra.mxu0 %v1184
        %1262 = vmatpush.bf16.msra.mxu0 %v1182
        %1263 = vmatpush.bf16.msra.mxu0 %v1180
        %1264 = vmatpush.bf16.msra.mxu0 %v1178
        %1265 = vmatpush.bf16.msra.mxu0 %v1176
        %1266 = vmatpush.bf16.msra.mxu0 %v1174
        %1267 = vmatpush.bf16.msra.mxu0 %v1172
        %1268 = vmatpush.bf16.msra.mxu0 %v1170
        %1269 = vmatmul.bf16.gmra.mxu0 %v624
        %v1270 = vpop.f32.mrf.mxu0
        %v1271 = vadd.f32 %v1070, %v1270
        %v1272 = vpop.f32.mrf.mxu0
        %v1273 = vadd.f32 %v1070, %v1272
        %1274 = vdwg.mxu0
        %1275 = vmatpush.bf16.msra.mxu0 %v1200
        %1276 = vmatpush.bf16.msra.mxu0 %v1198
        %1277 = vmatpush.bf16.msra.mxu0 %v1196
        %1278 = vmatpush.bf16.msra.mxu0 %v1194
        %1279 = vmatpush.bf16.msra.mxu0 %v1192
        %1280 = vmatpush.bf16.msra.mxu0 %v1190
        %1281 = vmatpush.bf16.msra.mxu0 %v1188
        %1282 = vmatpush.bf16.msra.mxu0 %v1186
        %1283 = vmatmul.bf16.gmra.mxu0 %v625
        %v1284 = vpop.f32.mrf.mxu0
        %v1285 = vadd.f32 %v1271, %v1284
        %v1286 = vpop.f32.mrf.mxu0
        %v1287 = vadd.f32 %v1273, %v1286
        %1288 = vdwg.mxu0
        %v1289 = vpack.c.bf16 %v843, %v815
        %v1290 = vpack.c.bf16 %v845, %v817
        %v1291 = vpack.c.bf16 %v1064, %v1036
        %v1292 = vpack.c.bf16 %v1066, %v1038
        %v1293 = vpack.c.bf16 %v1285, %v1257
        %v1294 = vpack.c.bf16 %v1287, %v1259
        %v1297 = vunpack.c.l.b16 %v1289
        %v1298 = vunpack.c.l.b16 %v1290
        %v1299 = vpack.c.b16 %v1298, %v1297
        %v1302 = vunpack.c.l.b16 %v1291
        %v1303 = vunpack.c.l.b16 %v1292
        %v1304 = vpack.c.b16 %v1303, %v1302
        %vm1305 = vcmask 523264
        %v1307 = vsel %vm1305, %v1299, 0
        %v1310 = vsel %vm1305, %v1304, 0
        %1312 = vmatpush.bf16.xpose.msra.mxu0 0
        %1313 = vmatpush.bf16.xpose.msra.mxu0 0
        %1314 = vmatpush.bf16.xpose.msra.mxu0 0
        %1315 = vmatpush.bf16.xpose.msra.mxu0 0
        %1316 = vmatpush.bf16.xpose.msra.mxu0 0
        %1317 = vmatpush.bf16.xpose.msra.mxu0 0
        %1318 = vmatpush.bf16.xpose.msra.mxu0 0
        %1319 = vmatpush.bf16.xpose.msra.mxu0 %v1310
        %1320 = vmatmul.bf16.gmra.mxu0 %v1307
        %v1321 = vpop.f32.mrf.mxu0
        %v1322 = vadd.f32 0.0, %v1321
        %v1323 = vpop.f32.mrf.mxu0
        %v1324 = vadd.f32 0.0, %v1323
        %1325 = vdwg.mxu0
        %v1326 = vmul.f32 %v1322, 0.125
        %v1327 = vmul.f32 %v1324, 0.125
        %v1328 = vadd.f32 %v1326, %v484
        %v1329 = vadd.f32 %v1327, %v485
        %vm1330 = vcmask 130048
        %v1331 = vsel %vm1330, %v1328, -inf
        %1332 = vmax.xlane.f32.xlu0 %v1331
        %v1333 = vpop.xlane.xlu0 %1332
        %v1334 = vsel %vm1330, %v1329, -inf
        %1335 = vmax.xlane.f32.xlu0 %v1334
        %v1336 = vpop.xlane.xlu0 %1335
        %v1337 = vsub.f32 %v1328, %v1333
        %v1338 = vsub.f32 %v1329, %v1336
        %v1339 = vmul.f32 %v1337, 1.442695
        %v1340 = vpow.pop %v1339
        %v1341 = vmul.f32 %v1338, 1.442695
        %v1342 = vpow.pop %v1341
        %v1343 = vsel %vm1330, %v1340, 0.0
        %1344 = vadd.xlane.f32.xlu0 %v1343
        %v1345 = vpop.xlane.xlu0 %1344
        %v1346 = vsel %vm1330, %v1342, 0.0
        %1347 = vadd.xlane.f32.xlu0 %v1346
        %v1348 = vpop.xlane.xlu0 %1347
        %v1349 = vrcp.pop %v1345
        %v1350 = vmul.f32 %v1345, %v1349
        %v1351 = vsub.f32 1.0, %v1350
        %v1352 = vmul.f32 %v1349, %v1351
        %v1353 = vadd.f32 %v1349, %v1352
        %vm1354 = vweird.f32 %v1345
        %vm1355 = vweird.f32 %v1349
        %vm1356 = vmor %vm1354, %vm1355
        %v1357 = vsel %vm1356, %v1349, %v1353
        %v1358 = vand.u32 2147483647, %v1345
        %vm1359 = vcmp.eq.f32.partialorder %v1358, 8.507059e+37
        %v1360 = vand.u32 %v1345, 2147483648
        %v1361 = vor.u32 1.1754944e-38, %v1360
        %v1362 = vsel %vm1359, %v1361, %v1357
        %v1363 = vmul.f32 %v1340, %v1362
        %v1364 = vrcp.pop %v1348
        %v1365 = vmul.f32 %v1348, %v1364
        %v1366 = vsub.f32 1.0, %v1365
        %v1367 = vmul.f32 %v1364, %v1366
        %v1368 = vadd.f32 %v1364, %v1367
        %vm1369 = vweird.f32 %v1348
        %vm1370 = vweird.f32 %v1364
        %vm1371 = vmor %vm1369, %vm1370
        %v1372 = vsel %vm1371, %v1364, %v1368
        %v1373 = vand.u32 2147483647, %v1348
        %vm1374 = vcmp.eq.f32.partialorder %v1373, 8.507059e+37
        %v1375 = vand.u32 %v1348, 2147483648
        %v1376 = vor.u32 1.1754944e-38, %v1375
        %v1377 = vsel %vm1374, %v1376, %v1372
        %v1378 = vmul.f32 %v1342, %v1377
        %v1379 = vpack.c.bf16 %v1378, %v1363
        %v1382 = vunpack.c.l.b16 %v1293
        %v1383 = vunpack.c.l.b16 %v1294
        %v1384 = vpack.c.b16 %v1383, %v1382
        %v1387 = vsel %vm1330, %v1379, 0
        %1389 = vmatpush.bf16.msra.mxu0 0
        %1390 = vmatpush.bf16.msra.mxu0 0
        %1391 = vmatpush.bf16.msra.mxu0 0
        %1392 = vmatpush.bf16.msra.mxu0 0
        %1393 = vmatpush.bf16.msra.mxu0 0
        %1394 = vmatpush.bf16.msra.mxu0 0
        %1395 = vmatpush.bf16.msra.mxu0 0
        %1396 = vmatpush.bf16.msra.mxu0 %v1384
        %1397 = vmatmul.bf16.gmra.mxu0 %v1387
        %v1398 = vpop.f32.mrf.mxu0
        %v1399 = vadd.f32 0.0, %v1398
        %v1400 = vpop.f32.mrf.mxu0
        %v1401 = vadd.f32 0.0, %v1400
        %1402 = vdwg.mxu0
        %v1403 = vpack.c.bf16 %v1401, %v1399
        %1404 = vrot.lane.b32.xlu0 %v1299, 64
        %v1405 = vpop.permute.xlu0 %1404
        %1406 = vrot.lane.b32.xlu0 %v1304, 64
        %v1407 = vpop.permute.xlu0 %1406
        %v1409 = vsel %vm1305, %v1405, 0
        %v1412 = vsel %vm1305, %v1407, 0
        %1414 = vmatpush.bf16.xpose.msra.mxu0 0
        %1415 = vmatpush.bf16.xpose.msra.mxu0 0
        %1416 = vmatpush.bf16.xpose.msra.mxu0 0
        %1417 = vmatpush.bf16.xpose.msra.mxu0 0
        %1418 = vmatpush.bf16.xpose.msra.mxu0 0
        %1419 = vmatpush.bf16.xpose.msra.mxu0 0
        %1420 = vmatpush.bf16.xpose.msra.mxu0 0
        %1421 = vmatpush.bf16.xpose.msra.mxu0 %v1412
        %1422 = vmatmul.bf16.gmra.mxu0 %v1409
        %v1423 = vpop.f32.mrf.mxu0
        %v1424 = vadd.f32 0.0, %v1423
        %v1425 = vpop.f32.mrf.mxu0
        %v1426 = vadd.f32 0.0, %v1425
        %1427 = vdwg.mxu0
        %v1428 = vmul.f32 %v1424, 0.125
        %v1429 = vmul.f32 %v1426, 0.125
        %v1430 = vadd.f32 %v1428, %v484
        %v1431 = vadd.f32 %v1429, %v485
        %v1432 = vsel %vm1330, %v1430, -inf
        %1433 = vmax.xlane.f32.xlu0 %v1432
        %v1434 = vpop.xlane.xlu0 %1433
        %v1435 = vsel %vm1330, %v1431, -inf
        %1436 = vmax.xlane.f32.xlu0 %v1435
        %v1437 = vpop.xlane.xlu0 %1436
        %v1438 = vsub.f32 %v1430, %v1434
        %v1439 = vsub.f32 %v1431, %v1437
        %v1440 = vmul.f32 %v1438, 1.442695
        %v1441 = vpow.pop %v1440
        %v1442 = vmul.f32 %v1439, 1.442695
        %v1443 = vpow.pop %v1442
        %v1444 = vsel %vm1330, %v1441, 0.0
        %1445 = vadd.xlane.f32.xlu0 %v1444
        %v1446 = vpop.xlane.xlu0 %1445
        %v1447 = vsel %vm1330, %v1443, 0.0
        %1448 = vadd.xlane.f32.xlu0 %v1447
        %v1449 = vpop.xlane.xlu0 %1448
        %v1450 = vrcp.pop %v1446
        %v1451 = vmul.f32 %v1446, %v1450
        %v1452 = vsub.f32 1.0, %v1451
        %v1453 = vmul.f32 %v1450, %v1452
        %v1454 = vadd.f32 %v1450, %v1453
        %vm1455 = vweird.f32 %v1446
        %vm1456 = vweird.f32 %v1450
        %vm1457 = vmor %vm1455, %vm1456
        %v1458 = vsel %vm1457, %v1450, %v1454
        %v1459 = vand.u32 2147483647, %v1446
        %vm1460 = vcmp.eq.f32.partialorder %v1459, 8.507059e+37
        %v1461 = vand.u32 %v1446, 2147483648
        %v1462 = vor.u32 1.1754944e-38, %v1461
        %v1463 = vsel %vm1460, %v1462, %v1458
        %v1464 = vmul.f32 %v1441, %v1463
        %v1465 = vrcp.pop %v1449
        %v1466 = vmul.f32 %v1449, %v1465
        %v1467 = vsub.f32 1.0, %v1466
        %v1468 = vmul.f32 %v1465, %v1467
        %v1469 = vadd.f32 %v1465, %v1468
        %vm1470 = vweird.f32 %v1449
        %vm1471 = vweird.f32 %v1465
        %vm1472 = vmor %vm1470, %vm1471
        %v1473 = vsel %vm1472, %v1465, %v1469
        %v1474 = vand.u32 2147483647, %v1449
        %vm1475 = vcmp.eq.f32.partialorder %v1474, 8.507059e+37
        %v1476 = vand.u32 %v1449, 2147483648
        %v1477 = vor.u32 1.1754944e-38, %v1476
        %v1478 = vsel %vm1475, %v1477, %v1473
        %v1479 = vmul.f32 %v1443, %v1478
        %v1480 = vpack.c.bf16 %v1479, %v1464
        %1481 = vrot.lane.b32.xlu0 %v1384, 64
        %v1482 = vpop.permute.xlu0 %1481
        %v1485 = vsel %vm1330, %v1480, 0
        %1487 = vmatpush.bf16.msra.mxu0 0
        %1488 = vmatpush.bf16.msra.mxu0 0
        %1489 = vmatpush.bf16.msra.mxu0 0
        %1490 = vmatpush.bf16.msra.mxu0 0
        %1491 = vmatpush.bf16.msra.mxu0 0
        %1492 = vmatpush.bf16.msra.mxu0 0
        %1493 = vmatpush.bf16.msra.mxu0 0
        %1494 = vmatpush.bf16.msra.mxu0 %v1482
        %1495 = vmatmul.bf16.gmra.mxu0 %v1485
        %v1496 = vpop.f32.mrf.mxu0
        %v1497 = vadd.f32 0.0, %v1496
        %v1498 = vpop.f32.mrf.mxu0
        %v1499 = vadd.f32 0.0, %v1498
        %1500 = vdwg.mxu0
        %v1501 = vpack.c.bf16 %v1499, %v1497
        %v1510 = vunpack.c.l.b16 %v598
        %v1511 = vunpack.c.h.b16 %v598
        %v1512 = vunpack.c.l.b16 %v599
        %v1513 = vunpack.c.h.b16 %v599
        %v1514 = vunpack.c.l.b16 %v600
        %v1515 = vunpack.c.h.b16 %v600
        %v1516 = vunpack.c.l.b16 %v601
        %v1517 = vunpack.c.h.b16 %v601
        %v1518 = vunpack.c.l.b16 %v602
        %v1519 = vunpack.c.h.b16 %v602
        %v1520 = vunpack.c.l.b16 %v603
        %v1521 = vunpack.c.h.b16 %v603
        %v1522 = vunpack.c.l.b16 %v604
        %v1523 = vunpack.c.h.b16 %v604
        %v1524 = vunpack.c.l.b16 %v605
        %v1525 = vunpack.c.h.b16 %v605
        %v1526 = vpack.c.b16 %v1512, %v1510
        %v1527 = vpack.c.b16 %v1513, %v1511
        %v1528 = vpack.c.b16 %v1516, %v1514
        %v1529 = vpack.c.b16 %v1517, %v1515
        %v1530 = vpack.c.b16 %v1520, %v1518
        %v1531 = vpack.c.b16 %v1521, %v1519
        %v1532 = vpack.c.b16 %v1524, %v1522
        %v1533 = vpack.c.b16 %v1525, %v1523
        %v1543 = vsel %vm1305, %v1501, 0
        %1545 = vmatpush.bf16.msra.mxu0 0
        %1546 = vmatpush.bf16.msra.mxu0 0
        %1547 = vmatpush.bf16.msra.mxu0 0
        %1548 = vmatpush.bf16.msra.mxu0 0
        %1549 = vmatpush.bf16.msra.mxu0 %v1532
        %1550 = vmatpush.bf16.msra.mxu0 %v1530
        %1551 = vmatpush.bf16.msra.mxu0 %v1528
        %1552 = vmatpush.bf16.msra.mxu0 %v1526
        %1553 = vmatmul.bf16.gmra.mxu0 %v1543
        %v1554 = vpop.f32.mrf.mxu0
        %v1555 = vadd.f32 0.0, %v1554
        %v1556 = vpop.f32.mrf.mxu0
        %v1557 = vadd.f32 0.0, %v1556
        %1558 = vdwg.mxu0
        %1559 = vmatpush.bf16.msra.mxu0 0
        %1560 = vmatpush.bf16.msra.mxu0 0
        %1561 = vmatpush.bf16.msra.mxu0 0
        %1562 = vmatpush.bf16.msra.mxu0 0
        %1563 = vmatpush.bf16.msra.mxu0 %v1533
        %1564 = vmatpush.bf16.msra.mxu0 %v1531
        %1565 = vmatpush.bf16.msra.mxu0 %v1529
        %1566 = vmatpush.bf16.msra.mxu0 %v1527
        %1567 = vmatmul.bf16.gmra.mxu0 %v1543
        %v1568 = vpop.f32.mrf.mxu0
        %v1569 = vadd.f32 0.0, %v1568
        %v1570 = vpop.f32.mrf.mxu0
        %v1571 = vadd.f32 0.0, %v1570
        %1572 = vdwg.mxu0
        %v1581 = vunpack.c.l.b16 %v590
        %v1582 = vunpack.c.h.b16 %v590
        %v1583 = vunpack.c.l.b16 %v591
        %v1584 = vunpack.c.h.b16 %v591
        %v1585 = vunpack.c.l.b16 %v592
        %v1586 = vunpack.c.h.b16 %v592
        %v1587 = vunpack.c.l.b16 %v593
        %v1588 = vunpack.c.h.b16 %v593
        %v1589 = vunpack.c.l.b16 %v594
        %v1590 = vunpack.c.h.b16 %v594
        %v1591 = vunpack.c.l.b16 %v595
        %v1592 = vunpack.c.h.b16 %v595
        %v1593 = vunpack.c.l.b16 %v596
        %v1594 = vunpack.c.h.b16 %v596
        %v1595 = vunpack.c.l.b16 %v597
        %v1596 = vunpack.c.h.b16 %v597
        %v1597 = vpack.c.b16 %v1583, %v1581
        %v1598 = vpack.c.b16 %v1584, %v1582
        %v1599 = vpack.c.b16 %v1587, %v1585
        %v1600 = vpack.c.b16 %v1588, %v1586
        %v1601 = vpack.c.b16 %v1591, %v1589
        %v1602 = vpack.c.b16 %v1592, %v1590
        %v1603 = vpack.c.b16 %v1595, %v1593
        %v1604 = vpack.c.b16 %v1596, %v1594
        %v1614 = vsel %vm1305, %v1403, 0
        %1616 = vmatpush.bf16.msra.mxu0 0
        %1617 = vmatpush.bf16.msra.mxu0 0
        %1618 = vmatpush.bf16.msra.mxu0 0
        %1619 = vmatpush.bf16.msra.mxu0 0
        %1620 = vmatpush.bf16.msra.mxu0 %v1603
        %1621 = vmatpush.bf16.msra.mxu0 %v1601
        %1622 = vmatpush.bf16.msra.mxu0 %v1599
        %1623 = vmatpush.bf16.msra.mxu0 %v1597
        %1624 = vmatmul.bf16.gmra.mxu0 %v1614
        %v1625 = vpop.f32.mrf.mxu0
        %v1626 = vadd.f32 %v1555, %v1625
        %v1627 = vpop.f32.mrf.mxu0
        %v1628 = vadd.f32 %v1557, %v1627
        %1629 = vdwg.mxu0
        %1630 = vmatpush.bf16.msra.mxu0 0
        %1631 = vmatpush.bf16.msra.mxu0 0
        %1632 = vmatpush.bf16.msra.mxu0 0
        %1633 = vmatpush.bf16.msra.mxu0 0
        %1634 = vmatpush.bf16.msra.mxu0 %v1604
        %1635 = vmatpush.bf16.msra.mxu0 %v1602
        %1636 = vmatpush.bf16.msra.mxu0 %v1600
        %1637 = vmatpush.bf16.msra.mxu0 %v1598
        %1638 = vmatmul.bf16.gmra.mxu0 %v1614
        %v1639 = vpop.f32.mrf.mxu0
        %v1640 = vadd.f32 %v1569, %v1639
        %v1641 = vpop.f32.mrf.mxu0
        %v1642 = vadd.f32 %v1571, %v1641
        %1643 = vdwg.mxu0
        %v1644 = vunpack.c.h.b16 %v1289
        %v1645 = vunpack.c.h.b16 %v1290
        %v1646 = vpack.c.b16 %v1645, %v1644
        %v1647 = vunpack.c.h.b16 %v1291
        %v1648 = vunpack.c.h.b16 %v1292
        %v1649 = vpack.c.b16 %v1648, %v1647
        %v1651 = vsel %vm1305, %v1646, 0
        %v1654 = vsel %vm1305, %v1649, 0
        %1656 = vmatpush.bf16.xpose.msra.mxu0 0
        %1657 = vmatpush.bf16.xpose.msra.mxu0 0
        %1658 = vmatpush.bf16.xpose.msra.mxu0 0
        %1659 = vmatpush.bf16.xpose.msra.mxu0 0
        %1660 = vmatpush.bf16.xpose.msra.mxu0 0
        %1661 = vmatpush.bf16.xpose.msra.mxu0 0
        %1662 = vmatpush.bf16.xpose.msra.mxu0 0
        %1663 = vmatpush.bf16.xpose.msra.mxu0 %v1654
        %1664 = vmatmul.bf16.gmra.mxu0 %v1651
        %v1665 = vpop.f32.mrf.mxu0
        %v1666 = vadd.f32 0.0, %v1665
        %v1667 = vpop.f32.mrf.mxu0
        %v1668 = vadd.f32 0.0, %v1667
        %1669 = vdwg.mxu0
        %v1670 = vmul.f32 %v1666, 0.125
        %v1671 = vmul.f32 %v1668, 0.125
        %v1672 = vadd.f32 %v1670, %v484
        %v1673 = vadd.f32 %v1671, %v485
        %v1674 = vsel %vm1330, %v1672, -inf
        %1675 = vmax.xlane.f32.xlu0 %v1674
        %v1676 = vpop.xlane.xlu0 %1675
        %v1677 = vsel %vm1330, %v1673, -inf
        %1678 = vmax.xlane.f32.xlu0 %v1677
        %v1679 = vpop.xlane.xlu0 %1678
        %v1680 = vsub.f32 %v1672, %v1676
        %v1681 = vsub.f32 %v1673, %v1679
        %v1682 = vmul.f32 %v1680, 1.442695
        %v1683 = vpow.pop %v1682
        %v1684 = vmul.f32 %v1681, 1.442695
        %v1685 = vpow.pop %v1684
        %v1686 = vsel %vm1330, %v1683, 0.0
        %1687 = vadd.xlane.f32.xlu0 %v1686
        %v1688 = vpop.xlane.xlu0 %1687
        %v1689 = vsel %vm1330, %v1685, 0.0
        %1690 = vadd.xlane.f32.xlu0 %v1689
        %v1691 = vpop.xlane.xlu0 %1690
        %v1692 = vrcp.pop %v1688
        %v1693 = vmul.f32 %v1688, %v1692
        %v1694 = vsub.f32 1.0, %v1693
        %v1695 = vmul.f32 %v1692, %v1694
        %v1696 = vadd.f32 %v1692, %v1695
        %vm1697 = vweird.f32 %v1688
        %vm1698 = vweird.f32 %v1692
        %vm1699 = vmor %vm1697, %vm1698
        %v1700 = vsel %vm1699, %v1692, %v1696
        %v1701 = vand.u32 2147483647, %v1688
        %vm1702 = vcmp.eq.f32.partialorder %v1701, 8.507059e+37
        %v1703 = vand.u32 %v1688, 2147483648
        %v1704 = vor.u32 1.1754944e-38, %v1703
        %v1705 = vsel %vm1702, %v1704, %v1700
        %v1706 = vmul.f32 %v1683, %v1705
        %v1707 = vrcp.pop %v1691
        %v1708 = vmul.f32 %v1691, %v1707
        %v1709 = vsub.f32 1.0, %v1708
        %v1710 = vmul.f32 %v1707, %v1709
        %v1711 = vadd.f32 %v1707, %v1710
        %vm1712 = vweird.f32 %v1691
        %vm1713 = vweird.f32 %v1707
        %vm1714 = vmor %vm1712, %vm1713
        %v1715 = vsel %vm1714, %v1707, %v1711
        %v1716 = vand.u32 2147483647, %v1691
        %vm1717 = vcmp.eq.f32.partialorder %v1716, 8.507059e+37
        %v1718 = vand.u32 %v1691, 2147483648
        %v1719 = vor.u32 1.1754944e-38, %v1718
        %v1720 = vsel %vm1717, %v1719, %v1715
        %v1721 = vmul.f32 %v1685, %v1720
        %v1722 = vpack.c.bf16 %v1721, %v1706
        %v1723 = vunpack.c.h.b16 %v1293
        %v1724 = vunpack.c.h.b16 %v1294
        %v1725 = vpack.c.b16 %v1724, %v1723
        %v1728 = vsel %vm1330, %v1722, 0
        %1730 = vmatpush.bf16.msra.mxu0 0
        %1731 = vmatpush.bf16.msra.mxu0 0
        %1732 = vmatpush.bf16.msra.mxu0 0
        %1733 = vmatpush.bf16.msra.mxu0 0
        %1734 = vmatpush.bf16.msra.mxu0 0
        %1735 = vmatpush.bf16.msra.mxu0 0
        %1736 = vmatpush.bf16.msra.mxu0 0
        %1737 = vmatpush.bf16.msra.mxu0 %v1725
        %1738 = vmatmul.bf16.gmra.mxu0 %v1728
        %v1739 = vpop.f32.mrf.mxu0
        %v1740 = vadd.f32 0.0, %v1739
        %v1741 = vpop.f32.mrf.mxu0
        %v1742 = vadd.f32 0.0, %v1741
        %1743 = vdwg.mxu0
        %v1744 = vpack.c.bf16 %v1742, %v1740
        %v1753 = vunpack.c.l.b16 %v606
        %v1754 = vunpack.c.h.b16 %v606
        %v1755 = vunpack.c.l.b16 %v607
        %v1756 = vunpack.c.h.b16 %v607
        %v1757 = vunpack.c.l.b16 %v608
        %v1758 = vunpack.c.h.b16 %v608
        %v1759 = vunpack.c.l.b16 %v609
        %v1760 = vunpack.c.h.b16 %v609
        %v1761 = vunpack.c.l.b16 %v610
        %v1762 = vunpack.c.h.b16 %v610
        %v1763 = vunpack.c.l.b16 %v611
        %v1764 = vunpack.c.h.b16 %v611
        %v1765 = vunpack.c.l.b16 %v612
        %v1766 = vunpack.c.h.b16 %v612
        %v1767 = vunpack.c.l.b16 %v613
        %v1768 = vunpack.c.h.b16 %v613
        %v1769 = vpack.c.b16 %v1755, %v1753
        %v1770 = vpack.c.b16 %v1756, %v1754
        %v1771 = vpack.c.b16 %v1759, %v1757
        %v1772 = vpack.c.b16 %v1760, %v1758
        %v1773 = vpack.c.b16 %v1763, %v1761
        %v1774 = vpack.c.b16 %v1764, %v1762
        %v1775 = vpack.c.b16 %v1767, %v1765
        %v1776 = vpack.c.b16 %v1768, %v1766
        %v1786 = vsel %vm1305, %v1744, 0
        %1788 = vmatpush.bf16.msra.mxu0 0
        %1789 = vmatpush.bf16.msra.mxu0 0
        %1790 = vmatpush.bf16.msra.mxu0 0
        %1791 = vmatpush.bf16.msra.mxu0 0
        %1792 = vmatpush.bf16.msra.mxu0 %v1775
        %1793 = vmatpush.bf16.msra.mxu0 %v1773
        %1794 = vmatpush.bf16.msra.mxu0 %v1771
        %1795 = vmatpush.bf16.msra.mxu0 %v1769
        %1796 = vmatmul.bf16.gmra.mxu0 %v1786
        %v1797 = vpop.f32.mrf.mxu0
        %v1798 = vadd.f32 0.0, %v1797
        %v1799 = vpop.f32.mrf.mxu0
        %v1800 = vadd.f32 0.0, %v1799
        %1801 = vdwg.mxu0
        %1802 = vmatpush.bf16.msra.mxu0 0
        %1803 = vmatpush.bf16.msra.mxu0 0
        %1804 = vmatpush.bf16.msra.mxu0 0
        %1805 = vmatpush.bf16.msra.mxu0 0
        %1806 = vmatpush.bf16.msra.mxu0 %v1776
        %1807 = vmatpush.bf16.msra.mxu0 %v1774
        %1808 = vmatpush.bf16.msra.mxu0 %v1772
        %1809 = vmatpush.bf16.msra.mxu0 %v1770
        %1810 = vmatmul.bf16.gmra.mxu0 %v1786
        %v1811 = vpop.f32.mrf.mxu0
        %v1812 = vadd.f32 0.0, %v1811
        %v1813 = vpop.f32.mrf.mxu0
        %v1814 = vadd.f32 0.0, %v1813
        %1815 = vdwg.mxu0
        %v1816 = vadd.f32 %v1626, %v1798
        %v1817 = vadd.f32 %v1640, %v1812
        %v1818 = vadd.f32 %v1628, %v1800
        %v1819 = vadd.f32 %v1642, %v1814
        %1820 = vrot.lane.b32.xlu0 %v1646, 64
        %v1821 = vpop.permute.xlu0 %1820
        %1822 = vrot.lane.b32.xlu0 %v1649, 64
        %v1823 = vpop.permute.xlu0 %1822
        %v1825 = vsel %vm1305, %v1821, 0
        %v1828 = vsel %vm1305, %v1823, 0
        %1830 = vmatpush.bf16.xpose.msra.mxu0 0
        %1831 = vmatpush.bf16.xpose.msra.mxu0 0
        %1832 = vmatpush.bf16.xpose.msra.mxu0 0
        %1833 = vmatpush.bf16.xpose.msra.mxu0 0
        %1834 = vmatpush.bf16.xpose.msra.mxu0 0
        %1835 = vmatpush.bf16.xpose.msra.mxu0 0
        %1836 = vmatpush.bf16.xpose.msra.mxu0 0
        %1837 = vmatpush.bf16.xpose.msra.mxu0 %v1828
        %1838 = vmatmul.bf16.gmra.mxu0 %v1825
        %v1839 = vpop.f32.mrf.mxu0
        %v1840 = vadd.f32 0.0, %v1839
        %v1841 = vpop.f32.mrf.mxu0
        %v1842 = vadd.f32 0.0, %v1841
        %1843 = vdwg.mxu0
        %v1844 = vmul.f32 %v1840, 0.125
        %v1845 = vmul.f32 %v1842, 0.125
        %v1846 = vadd.f32 %v1844, %v484
        %v1847 = vadd.f32 %v1845, %v485
        %v1848 = vsel %vm1330, %v1846, -inf
        %1849 = vmax.xlane.f32.xlu0 %v1848
        %v1850 = vpop.xlane.xlu0 %1849
        %v1851 = vsel %vm1330, %v1847, -inf
        %1852 = vmax.xlane.f32.xlu0 %v1851
        %v1853 = vpop.xlane.xlu0 %1852
        %v1854 = vsub.f32 %v1846, %v1850
        %v1855 = vsub.f32 %v1847, %v1853
        %v1856 = vmul.f32 %v1854, 1.442695
        %v1857 = vpow.pop %v1856
        %v1858 = vmul.f32 %v1855, 1.442695
        %v1859 = vpow.pop %v1858
        %v1860 = vsel %vm1330, %v1857, 0.0
        %1861 = vadd.xlane.f32.xlu0 %v1860
        %v1862 = vpop.xlane.xlu0 %1861
        %v1863 = vsel %vm1330, %v1859, 0.0
        %1864 = vadd.xlane.f32.xlu0 %v1863
        %v1865 = vpop.xlane.xlu0 %1864
        %v1866 = vrcp.pop %v1862
        %v1867 = vmul.f32 %v1862, %v1866
        %v1868 = vsub.f32 1.0, %v1867
        %v1869 = vmul.f32 %v1866, %v1868
        %v1870 = vadd.f32 %v1866, %v1869
        %vm1871 = vweird.f32 %v1862
        %vm1872 = vweird.f32 %v1866
        %vm1873 = vmor %vm1871, %vm1872
        %v1874 = vsel %vm1873, %v1866, %v1870
        %v1875 = vand.u32 2147483647, %v1862
        %vm1876 = vcmp.eq.f32.partialorder %v1875, 8.507059e+37
        %v1877 = vand.u32 %v1862, 2147483648
        %v1878 = vor.u32 1.1754944e-38, %v1877
        %v1879 = vsel %vm1876, %v1878, %v1874
        %v1880 = vmul.f32 %v1857, %v1879
        %v1881 = vrcp.pop %v1865
        %v1882 = vmul.f32 %v1865, %v1881
        %v1883 = vsub.f32 1.0, %v1882
        %v1884 = vmul.f32 %v1881, %v1883
        %v1885 = vadd.f32 %v1881, %v1884
        %vm1886 = vweird.f32 %v1865
        %vm1887 = vweird.f32 %v1881
        %vm1888 = vmor %vm1886, %vm1887
        %v1889 = vsel %vm1888, %v1881, %v1885
        %v1890 = vand.u32 2147483647, %v1865
        %vm1891 = vcmp.eq.f32.partialorder %v1890, 8.507059e+37
        %v1892 = vand.u32 %v1865, 2147483648
        %v1893 = vor.u32 1.1754944e-38, %v1892
        %v1894 = vsel %vm1891, %v1893, %v1889
        %v1895 = vmul.f32 %v1859, %v1894
        %v1896 = vpack.c.bf16 %v1895, %v1880
        %1897 = vrot.lane.b32.xlu0 %v1725, 64
        %v1898 = vpop.permute.xlu0 %1897
        %v1901 = vsel %vm1330, %v1896, 0
        %1903 = vmatpush.bf16.msra.mxu0 0
        %1904 = vmatpush.bf16.msra.mxu0 0
        %1905 = vmatpush.bf16.msra.mxu0 0
        %1906 = vmatpush.bf16.msra.mxu0 0
        %1907 = vmatpush.bf16.msra.mxu0 0
        %1908 = vmatpush.bf16.msra.mxu0 0
        %1909 = vmatpush.bf16.msra.mxu0 0
        %1910 = vmatpush.bf16.msra.mxu0 %v1898
        %1911 = vmatmul.bf16.gmra.mxu0 %v1901
        %v1912 = vpop.f32.mrf.mxu0
        %v1913 = vadd.f32 0.0, %v1912
        %v1914 = vpop.f32.mrf.mxu0
        %v1915 = vadd.f32 0.0, %v1914
        %1916 = vdwg.mxu0
        %v1917 = vpack.c.bf16 %v1915, %v1913
        %v1926 = vunpack.c.l.b16 %v614
        %v1927 = vunpack.c.h.b16 %v614
        %v1928 = vunpack.c.l.b16 %v615
        %v1929 = vunpack.c.h.b16 %v615
        %v1930 = vunpack.c.l.b16 %v616
        %v1931 = vunpack.c.h.b16 %v616
        %v1932 = vunpack.c.l.b16 %v617
        %v1933 = vunpack.c.h.b16 %v617
        %v1934 = vunpack.c.l.b16 %v618
        %v1935 = vunpack.c.h.b16 %v618
        %v1936 = vunpack.c.l.b16 %v619
        %v1937 = vunpack.c.h.b16 %v619
        %v1938 = vunpack.c.l.b16 %v620
        %v1939 = vunpack.c.h.b16 %v620
        %v1940 = vunpack.c.l.b16 %v621
        %v1941 = vunpack.c.h.b16 %v621
        %v1942 = vpack.c.b16 %v1928, %v1926
        %v1943 = vpack.c.b16 %v1929, %v1927
        %v1944 = vpack.c.b16 %v1932, %v1930
        %v1945 = vpack.c.b16 %v1933, %v1931
        %v1946 = vpack.c.b16 %v1936, %v1934
        %v1947 = vpack.c.b16 %v1937, %v1935
        %v1948 = vpack.c.b16 %v1940, %v1938
        %v1949 = vpack.c.b16 %v1941, %v1939
        %v1959 = vsel %vm1305, %v1917, 0
        %1961 = vmatpush.bf16.msra.mxu0 0
        %1962 = vmatpush.bf16.msra.mxu0 0
        %1963 = vmatpush.bf16.msra.mxu0 0
        %1964 = vmatpush.bf16.msra.mxu0 0
        %1965 = vmatpush.bf16.msra.mxu0 %v1948
        %1966 = vmatpush.bf16.msra.mxu0 %v1946
        %1967 = vmatpush.bf16.msra.mxu0 %v1944
        %1968 = vmatpush.bf16.msra.mxu0 %v1942
        %1969 = vmatmul.bf16.gmra.mxu0 %v1959
        %v1970 = vpop.f32.mrf.mxu0
        %v1971 = vadd.f32 0.0, %v1970
        %v1972 = vpop.f32.mrf.mxu0
        %v1973 = vadd.f32 0.0, %v1972
        %1974 = vdwg.mxu0
        %1975 = vmatpush.bf16.msra.mxu0 0
        %1976 = vmatpush.bf16.msra.mxu0 0
        %1977 = vmatpush.bf16.msra.mxu0 0
        %1978 = vmatpush.bf16.msra.mxu0 0
        %1979 = vmatpush.bf16.msra.mxu0 %v1949
        %1980 = vmatpush.bf16.msra.mxu0 %v1947
        %1981 = vmatpush.bf16.msra.mxu0 %v1945
        %1982 = vmatpush.bf16.msra.mxu0 %v1943
        %1983 = vmatmul.bf16.gmra.mxu0 %v1959
        %v1984 = vpop.f32.mrf.mxu0
        %v1985 = vadd.f32 0.0, %v1984
        %v1986 = vpop.f32.mrf.mxu0
        %v1987 = vadd.f32 0.0, %v1986
        %1988 = vdwg.mxu0
        %v1989 = vadd.f32 %v1816, %v1971
        %v1990 = vadd.f32 %v1817, %v1985
        %v1991 = vadd.f32 %v1818, %v1973
        %v1992 = vadd.f32 %v1819, %v1987
        %v1994 = vperm.slane %v623, 0
        %v1995 = vperm.slane %v623, 1
        %v1998 = vadd.f32 %v1989, %v1994
        %v1999 = vadd.f32 %v1990, %v1995
        %v2000 = vadd.f32 %v1991, %v1994
        %v2001 = vadd.f32 %v1992, %v1995
        %v2002 = vadd.f32 %v480, %v1998
        %v2003 = vadd.f32 %v481, %v1999
        %v2004 = vadd.f32 %v482, %v2000
        %v2005 = vadd.f32 %v483, %v2001
        %s2006 = scalar_lea.vmem %s466, 4
        %v2007 = vld [vmem:[%s2006] ss:$8 sm:$0x3]
        %s2008 = scalar_lea.vmem %s466, 5
        %v2009 = vld [vmem:[%s2008] ss:$8 sm:$0x3]
        %v2010 = vadd.f32 %v2002, %v2003
        %2011 = vadd.xlane.f32.xlu0 %v2010
        %v2012 = vpop.xlane.xlu0 %2011
        %v2013 = vadd.f32 %v2004, %v2005
        %2014 = vadd.xlane.f32.xlu0 %v2013
        %v2015 = vpop.xlane.xlu0 %2014
        %v2016 = vrcp.pop 256.0
        %v2017 = vmul.f32 256.0, %v2016
        %v2018 = vsub.f32 1.0, %v2017
        %v2019 = vmul.f32 %v2016, %v2018
        %v2020 = vadd.f32 %v2016, %v2019
        %vm2021 = vweird.f32 %v2016
        %v2022 = vsel %vm2021, %v2016, %v2020
        %v2023 = vmul.f32 %v2012, %v2022
        %v2024 = vmul.f32 %v2015, %v2022
        %v2025 = vsub.f32 %v2002, %v2023
        %v2026 = vsub.f32 %v2003, %v2023
        %v2027 = vsub.f32 %v2004, %v2024
        %v2028 = vsub.f32 %v2005, %v2024
        %v2029 = vmul.f32 %v2025, %v2025
        %v2030 = vmul.f32 %v2026, %v2026
        %v2031 = vmul.f32 %v2027, %v2027
        %v2032 = vmul.f32 %v2028, %v2028
        %v2033 = vadd.f32 %v2029, %v2030
        %2034 = vadd.xlane.f32.xlu0 %v2033
        %v2035 = vpop.xlane.xlu0 %2034
        %v2036 = vadd.f32 %v2031, %v2032
        %2037 = vadd.xlane.f32.xlu0 %v2036
        %v2038 = vpop.xlane.xlu0 %2037
        %v2039 = vmul.f32 %v2035, %v2022
        %v2040 = vmul.f32 %v2038, %v2022
        %v2041 = vadd.f32 %v2039, 1e-05
        %v2042 = vadd.f32 %v2040, 1e-05
        %v2043 = vrsqrt.pop %v2041
        %v2044 = vmul.f32 %v2043, %v2041
        %v2045 = vmul.f32 %v2044, %v2043
        %v2046 = vmul.f32 0.5, %v2045
        %v2047 = vsub.f32 1.5, %v2046
        %v2048 = vmul.f32 %v2043, %v2047
        %vm2049 = vweird.f32 %v2041
        %vm2050 = vweird.f32 %v2043
        %vm2051 = vmor %vm2049, %vm2050
        %v2052 = vsel %vm2051, %v2043, %v2048
        %v2053 = vrsqrt.pop %v2042
        %v2054 = vmul.f32 %v2053, %v2042
        %v2055 = vmul.f32 %v2054, %v2053
        %v2056 = vmul.f32 0.5, %v2055
        %v2057 = vsub.f32 1.5, %v2056
        %v2058 = vmul.f32 %v2053, %v2057
        %vm2059 = vweird.f32 %v2042
        %vm2060 = vweird.f32 %v2053
        %vm2061 = vmor %vm2059, %vm2060
        %v2062 = vsel %vm2061, %v2053, %v2058
        %v2063 = vmul.f32 %v2025, %v2052
        %v2064 = vmul.f32 %v2026, %v2052
        %v2065 = vmul.f32 %v2027, %v2062
        %v2066 = vmul.f32 %v2028, %v2062
        %v2068 = vperm.slane %v2007, 0
        %v2069 = vperm.slane %v2007, 1
        %v2072 = vmul.f32 %v2063, %v2068
        %v2073 = vmul.f32 %v2064, %v2069
        %v2074 = vmul.f32 %v2065, %v2068
        %v2075 = vmul.f32 %v2066, %v2069
        %v2077 = vperm.slane %v2009, 0
        %v2078 = vperm.slane %v2009, 1
        %v2081 = vadd.f32 %v2072, %v2077
        %v2082 = vadd.f32 %v2073, %v2078
        %v2083 = vadd.f32 %v2074, %v2077
        %v2084 = vadd.f32 %v2075, %v2078
        %v2085 = vld [vmem:[%s388] sm:$0xff]
        %v2086 = vld [vmem:[%s388 + $0x8] sm:$0xff]
        %v2087 = vld [vmem:[%s388 + $0x10] sm:$0xff]
        %v2088 = vld [vmem:[%s388 + $0x18] sm:$0xff]
        %v2089 = vld [vmem:[%s388 + $0x20] sm:$0xff]
        %v2090 = vld [vmem:[%s388 + $0x28] sm:$0xff]
        %v2091 = vld [vmem:[%s388 + $0x30] sm:$0xff]
        %v2092 = vld [vmem:[%s388 + $0x38] sm:$0xff]
        %v2093 = vld [vmem:[%s388 + $0x40] sm:$0xff]
        %v2094 = vld [vmem:[%s388 + $0x48] sm:$0xff]
        %v2095 = vld [vmem:[%s388 + $0x50] sm:$0xff]
        %v2096 = vld [vmem:[%s388 + $0x58] sm:$0xff]
        %v2097 = vld [vmem:[%s388 + $0x60] sm:$0xff]
        %v2098 = vld [vmem:[%s388 + $0x68] sm:$0xff]
        %v2099 = vld [vmem:[%s388 + $0x70] sm:$0xff]
        %v2100 = vld [vmem:[%s388 + $0x78] sm:$0xff]
        %v2101 = vld [vmem:[%s388 + $0x80] sm:$0xff]
        %v2102 = vld [vmem:[%s388 + $0x88] sm:$0xff]
        %v2103 = vld [vmem:[%s388 + $0x90] sm:$0xff]
        %v2104 = vld [vmem:[%s388 + $0x98] sm:$0xff]
        %v2105 = vld [vmem:[%s388 + $0xa0] sm:$0xff]
        %v2106 = vld [vmem:[%s388 + $0xa8] sm:$0xff]
        %v2107 = vld [vmem:[%s388 + $0xb0] sm:$0xff]
        %v2108 = vld [vmem:[%s388 + $0xb8] sm:$0xff]
        %v2109 = vld [vmem:[%s388 + $0xc0] sm:$0xff]
        %v2110 = vld [vmem:[%s388 + $0xc8] sm:$0xff]
        %v2111 = vld [vmem:[%s388 + $0xd0] sm:$0xff]
        %v2112 = vld [vmem:[%s388 + $0xd8] sm:$0xff]
        %v2113 = vld [vmem:[%s388 + $0xe0] sm:$0xff]
        %v2114 = vld [vmem:[%s388 + $0xe8] sm:$0xff]
        %v2115 = vld [vmem:[%s388 + $0xf0] sm:$0xff]
        %v2116 = vld [vmem:[%s388 + $0xf8] sm:$0xff]
        %v2117 = vld [vmem:[%s388 + $0x100] sm:$0xff]
        %v2118 = vld [vmem:[%s388 + $0x108] sm:$0xff]
        %v2119 = vld [vmem:[%s388 + $0x110] sm:$0xff]
        %v2120 = vld [vmem:[%s388 + $0x118] sm:$0xff]
        %v2121 = vld [vmem:[%s388 + $0x120] sm:$0xff]
        %v2122 = vld [vmem:[%s388 + $0x128] sm:$0xff]
        %v2123 = vld [vmem:[%s388 + $0x130] sm:$0xff]
        %v2124 = vld [vmem:[%s388 + $0x138] sm:$0xff]
        %v2125 = vld [vmem:[%s388 + $0x140] sm:$0xff]
        %v2126 = vld [vmem:[%s388 + $0x148] sm:$0xff]
        %v2127 = vld [vmem:[%s388 + $0x150] sm:$0xff]
        %v2128 = vld [vmem:[%s388 + $0x158] sm:$0xff]
        %v2129 = vld [vmem:[%s388 + $0x160] sm:$0xff]
        %v2130 = vld [vmem:[%s388 + $0x168] sm:$0xff]
        %v2131 = vld [vmem:[%s388 + $0x170] sm:$0xff]
        %v2132 = vld [vmem:[%s388 + $0x178] sm:$0xff]
        %v2133 = vld [vmem:[%s388 + $0x180] sm:$0xff]
        %v2134 = vld [vmem:[%s388 + $0x188] sm:$0xff]
        %v2135 = vld [vmem:[%s388 + $0x190] sm:$0xff]
        %v2136 = vld [vmem:[%s388 + $0x198] sm:$0xff]
        %v2137 = vld [vmem:[%s388 + $0x1a0] sm:$0xff]
        %v2138 = vld [vmem:[%s388 + $0x1a8] sm:$0xff]
        %v2139 = vld [vmem:[%s388 + $0x1b0] sm:$0xff]
        %v2140 = vld [vmem:[%s388 + $0x1b8] sm:$0xff]
        %v2141 = vld [vmem:[%s388 + $0x1c0] sm:$0xff]
        %v2142 = vld [vmem:[%s388 + $0x1c8] sm:$0xff]
        %v2143 = vld [vmem:[%s388 + $0x1d0] sm:$0xff]
        %v2144 = vld [vmem:[%s388 + $0x1d8] sm:$0xff]
        %v2145 = vld [vmem:[%s388 + $0x1e0] sm:$0xff]
        %v2146 = vld [vmem:[%s388 + $0x1e8] sm:$0xff]
        %v2147 = vld [vmem:[%s388 + $0x1f0] sm:$0xff]
        %v2148 = vld [vmem:[%s388 + $0x1f8] sm:$0xff]
        %v2149 = vld [vmem:[%s388 + $0x200] sm:$0xff]
        %v2150 = vld [vmem:[%s388 + $0x208] sm:$0xff]
        %v2151 = vld [vmem:[%s388 + $0x210] sm:$0xff]
        %v2152 = vld [vmem:[%s388 + $0x218] sm:$0xff]
        %v2153 = vld [vmem:[%s388 + $0x220] sm:$0xff]
        %v2154 = vld [vmem:[%s388 + $0x228] sm:$0xff]
        %v2155 = vld [vmem:[%s388 + $0x230] sm:$0xff]
        %v2156 = vld [vmem:[%s388 + $0x238] sm:$0xff]
        %v2157 = vld [vmem:[%s388 + $0x240] sm:$0xff]
        %v2158 = vld [vmem:[%s388 + $0x248] sm:$0xff]
        %v2159 = vld [vmem:[%s388 + $0x250] sm:$0xff]
        %v2160 = vld [vmem:[%s388 + $0x258] sm:$0xff]
        %v2161 = vld [vmem:[%s388 + $0x260] sm:$0xff]
        %v2162 = vld [vmem:[%s388 + $0x268] sm:$0xff]
        %v2163 = vld [vmem:[%s388 + $0x270] sm:$0xff]
        %v2164 = vld [vmem:[%s388 + $0x278] sm:$0xff]
        %v2165 = vld [vmem:[%s388 + $0x280] sm:$0xff]
        %v2166 = vld [vmem:[%s388 + $0x288] sm:$0xff]
        %v2167 = vld [vmem:[%s388 + $0x290] sm:$0xff]
        %v2168 = vld [vmem:[%s388 + $0x298] sm:$0xff]
        %v2169 = vld [vmem:[%s388 + $0x2a0] sm:$0xff]
        %v2170 = vld [vmem:[%s388 + $0x2a8] sm:$0xff]
        %v2171 = vld [vmem:[%s388 + $0x2b0] sm:$0xff]
        %v2172 = vld [vmem:[%s388 + $0x2b8] sm:$0xff]
        %v2173 = vld [vmem:[%s388 + $0x2c0] sm:$0xff]
        %v2174 = vld [vmem:[%s388 + $0x2c8] sm:$0xff]
        %v2175 = vld [vmem:[%s388 + $0x2d0] sm:$0xff]
        %v2176 = vld [vmem:[%s388 + $0x2d8] sm:$0xff]
        %v2177 = vld [vmem:[%s388 + $0x2e0] sm:$0xff]
        %v2178 = vld [vmem:[%s388 + $0x2e8] sm:$0xff]
        %v2179 = vld [vmem:[%s388 + $0x2f0] sm:$0xff]
        %v2180 = vld [vmem:[%s388 + $0x2f8] sm:$0xff]
        %v2181 = vld [vmem:[%s388 + $0x300] sm:$0xff]
        %v2182 = vld [vmem:[%s388 + $0x308] sm:$0xff]
        %v2183 = vld [vmem:[%s388 + $0x310] sm:$0xff]
        %v2184 = vld [vmem:[%s388 + $0x318] sm:$0xff]
        %v2185 = vld [vmem:[%s388 + $0x320] sm:$0xff]
        %v2186 = vld [vmem:[%s388 + $0x328] sm:$0xff]
        %v2187 = vld [vmem:[%s388 + $0x330] sm:$0xff]
        %v2188 = vld [vmem:[%s388 + $0x338] sm:$0xff]
        %v2189 = vld [vmem:[%s388 + $0x340] sm:$0xff]
        %v2190 = vld [vmem:[%s388 + $0x348] sm:$0xff]
        %v2191 = vld [vmem:[%s388 + $0x350] sm:$0xff]
        %v2192 = vld [vmem:[%s388 + $0x358] sm:$0xff]
        %v2193 = vld [vmem:[%s388 + $0x360] sm:$0xff]
        %v2194 = vld [vmem:[%s388 + $0x368] sm:$0xff]
        %v2195 = vld [vmem:[%s388 + $0x370] sm:$0xff]
        %v2196 = vld [vmem:[%s388 + $0x378] sm:$0xff]
        %v2197 = vld [vmem:[%s388 + $0x380] sm:$0xff]
        %v2198 = vld [vmem:[%s388 + $0x388] sm:$0xff]
        %v2199 = vld [vmem:[%s388 + $0x390] sm:$0xff]
        %v2200 = vld [vmem:[%s388 + $0x398] sm:$0xff]
        %v2201 = vld [vmem:[%s388 + $0x3a0] sm:$0xff]
        %v2202 = vld [vmem:[%s388 + $0x3a8] sm:$0xff]
        %v2203 = vld [vmem:[%s388 + $0x3b0] sm:$0xff]
        %v2204 = vld [vmem:[%s388 + $0x3b8] sm:$0xff]
        %v2205 = vld [vmem:[%s388 + $0x3c0] sm:$0xff]
        %v2206 = vld [vmem:[%s388 + $0x3c8] sm:$0xff]
        %v2207 = vld [vmem:[%s388 + $0x3d0] sm:$0xff]
        %v2208 = vld [vmem:[%s388 + $0x3d8] sm:$0xff]
        %v2209 = vld [vmem:[%s388 + $0x3e0] sm:$0xff]
        %v2210 = vld [vmem:[%s388 + $0x3e8] sm:$0xff]
        %v2211 = vld [vmem:[%s388 + $0x3f0] sm:$0xff]
        %v2212 = vld [vmem:[%s388 + $0x3f8] sm:$0xff]
        %v2213 = vld [vmem:[%s408] sm:$0xff]
        %v2214 = vld [vmem:[%s398] sm:$0xff]
        %v2215 = vld [vmem:[%s398 + $0x8] sm:$0xff]
        %v2216 = vld [vmem:[%s398 + $0x10] sm:$0xff]
        %v2217 = vld [vmem:[%s398 + $0x18] sm:$0xff]
        %v2218 = vld [vmem:[%s398 + $0x20] sm:$0xff]
        %v2219 = vld [vmem:[%s398 + $0x28] sm:$0xff]
        %v2220 = vld [vmem:[%s398 + $0x30] sm:$0xff]
        %v2221 = vld [vmem:[%s398 + $0x38] sm:$0xff]
        %v2222 = vld [vmem:[%s398 + $0x40] sm:$0xff]
        %v2223 = vld [vmem:[%s398 + $0x48] sm:$0xff]
        %v2224 = vld [vmem:[%s398 + $0x50] sm:$0xff]
        %v2225 = vld [vmem:[%s398 + $0x58] sm:$0xff]
        %v2226 = vld [vmem:[%s398 + $0x60] sm:$0xff]
        %v2227 = vld [vmem:[%s398 + $0x68] sm:$0xff]
        %v2228 = vld [vmem:[%s398 + $0x70] sm:$0xff]
        %v2229 = vld [vmem:[%s398 + $0x78] sm:$0xff]
        %v2230 = vld [vmem:[%s398 + $0x80] sm:$0xff]
        %v2231 = vld [vmem:[%s398 + $0x88] sm:$0xff]
        %v2232 = vld [vmem:[%s398 + $0x90] sm:$0xff]
        %v2233 = vld [vmem:[%s398 + $0x98] sm:$0xff]
        %v2234 = vld [vmem:[%s398 + $0xa0] sm:$0xff]
        %v2235 = vld [vmem:[%s398 + $0xa8] sm:$0xff]
        %v2236 = vld [vmem:[%s398 + $0xb0] sm:$0xff]
        %v2237 = vld [vmem:[%s398 + $0xb8] sm:$0xff]
        %v2238 = vld [vmem:[%s398 + $0xc0] sm:$0xff]
        %v2239 = vld [vmem:[%s398 + $0xc8] sm:$0xff]
        %v2240 = vld [vmem:[%s398 + $0xd0] sm:$0xff]
        %v2241 = vld [vmem:[%s398 + $0xd8] sm:$0xff]
        %v2242 = vld [vmem:[%s398 + $0xe0] sm:$0xff]
        %v2243 = vld [vmem:[%s398 + $0xe8] sm:$0xff]
        %v2244 = vld [vmem:[%s398 + $0xf0] sm:$0xff]
        %v2245 = vld [vmem:[%s398 + $0xf8] sm:$0xff]
        %v2246 = vld [vmem:[%s398 + $0x100] sm:$0xff]
        %v2247 = vld [vmem:[%s398 + $0x108] sm:$0xff]
        %v2248 = vld [vmem:[%s398 + $0x110] sm:$0xff]
        %v2249 = vld [vmem:[%s398 + $0x118] sm:$0xff]
        %v2250 = vld [vmem:[%s398 + $0x120] sm:$0xff]
        %v2251 = vld [vmem:[%s398 + $0x128] sm:$0xff]
        %v2252 = vld [vmem:[%s398 + $0x130] sm:$0xff]
        %v2253 = vld [vmem:[%s398 + $0x138] sm:$0xff]
        %v2254 = vld [vmem:[%s398 + $0x140] sm:$0xff]
        %v2255 = vld [vmem:[%s398 + $0x148] sm:$0xff]
        %v2256 = vld [vmem:[%s398 + $0x150] sm:$0xff]
        %v2257 = vld [vmem:[%s398 + $0x158] sm:$0xff]
        %v2258 = vld [vmem:[%s398 + $0x160] sm:$0xff]
        %v2259 = vld [vmem:[%s398 + $0x168] sm:$0xff]
        %v2260 = vld [vmem:[%s398 + $0x170] sm:$0xff]
        %v2261 = vld [vmem:[%s398 + $0x178] sm:$0xff]
        %v2262 = vld [vmem:[%s398 + $0x180] sm:$0xff]
        %v2263 = vld [vmem:[%s398 + $0x188] sm:$0xff]
        %v2264 = vld [vmem:[%s398 + $0x190] sm:$0xff]
        %v2265 = vld [vmem:[%s398 + $0x198] sm:$0xff]
        %v2266 = vld [vmem:[%s398 + $0x1a0] sm:$0xff]
        %v2267 = vld [vmem:[%s398 + $0x1a8] sm:$0xff]
        %v2268 = vld [vmem:[%s398 + $0x1b0] sm:$0xff]
        %v2269 = vld [vmem:[%s398 + $0x1b8] sm:$0xff]
        %v2270 = vld [vmem:[%s398 + $0x1c0] sm:$0xff]
        %v2271 = vld [vmem:[%s398 + $0x1c8] sm:$0xff]
        %v2272 = vld [vmem:[%s398 + $0x1d0] sm:$0xff]
        %v2273 = vld [vmem:[%s398 + $0x1d8] sm:$0xff]
        %v2274 = vld [vmem:[%s398 + $0x1e0] sm:$0xff]
        %v2275 = vld [vmem:[%s398 + $0x1e8] sm:$0xff]
        %v2276 = vld [vmem:[%s398 + $0x1f0] sm:$0xff]
        %v2277 = vld [vmem:[%s398 + $0x1f8] sm:$0xff]
        %v2278 = vld [vmem:[%s398 + $0x200] sm:$0xff]
        %v2279 = vld [vmem:[%s398 + $0x208] sm:$0xff]
        %v2280 = vld [vmem:[%s398 + $0x210] sm:$0xff]
        %v2281 = vld [vmem:[%s398 + $0x218] sm:$0xff]
        %v2282 = vld [vmem:[%s398 + $0x220] sm:$0xff]
        %v2283 = vld [vmem:[%s398 + $0x228] sm:$0xff]
        %v2284 = vld [vmem:[%s398 + $0x230] sm:$0xff]
        %v2285 = vld [vmem:[%s398 + $0x238] sm:$0xff]
        %v2286 = vld [vmem:[%s398 + $0x240] sm:$0xff]
        %v2287 = vld [vmem:[%s398 + $0x248] sm:$0xff]
        %v2288 = vld [vmem:[%s398 + $0x250] sm:$0xff]
        %v2289 = vld [vmem:[%s398 + $0x258] sm:$0xff]
        %v2290 = vld [vmem:[%s398 + $0x260] sm:$0xff]
        %v2291 = vld [vmem:[%s398 + $0x268] sm:$0xff]
        %v2292 = vld [vmem:[%s398 + $0x270] sm:$0xff]
        %v2293 = vld [vmem:[%s398 + $0x278] sm:$0xff]
        %v2294 = vld [vmem:[%s398 + $0x280] sm:$0xff]
        %v2295 = vld [vmem:[%s398 + $0x288] sm:$0xff]
        %v2296 = vld [vmem:[%s398 + $0x290] sm:$0xff]
        %v2297 = vld [vmem:[%s398 + $0x298] sm:$0xff]
        %v2298 = vld [vmem:[%s398 + $0x2a0] sm:$0xff]
        %v2299 = vld [vmem:[%s398 + $0x2a8] sm:$0xff]
        %v2300 = vld [vmem:[%s398 + $0x2b0] sm:$0xff]
        %v2301 = vld [vmem:[%s398 + $0x2b8] sm:$0xff]
        %v2302 = vld [vmem:[%s398 + $0x2c0] sm:$0xff]
        %v2303 = vld [vmem:[%s398 + $0x2c8] sm:$0xff]
        %v2304 = vld [vmem:[%s398 + $0x2d0] sm:$0xff]
        %v2305 = vld [vmem:[%s398 + $0x2d8] sm:$0xff]
        %v2306 = vld [vmem:[%s398 + $0x2e0] sm:$0xff]
        %v2307 = vld [vmem:[%s398 + $0x2e8] sm:$0xff]
        %v2308 = vld [vmem:[%s398 + $0x2f0] sm:$0xff]
        %v2309 = vld [vmem:[%s398 + $0x2f8] sm:$0xff]
        %v2310 = vld [vmem:[%s398 + $0x300] sm:$0xff]
        %v2311 = vld [vmem:[%s398 + $0x308] sm:$0xff]
        %v2312 = vld [vmem:[%s398 + $0x310] sm:$0xff]
        %v2313 = vld [vmem:[%s398 + $0x318] sm:$0xff]
        %v2314 = vld [vmem:[%s398 + $0x320] sm:$0xff]
        %v2315 = vld [vmem:[%s398 + $0x328] sm:$0xff]
        %v2316 = vld [vmem:[%s398 + $0x330] sm:$0xff]
        %v2317 = vld [vmem:[%s398 + $0x338] sm:$0xff]
        %v2318 = vld [vmem:[%s398 + $0x340] sm:$0xff]
        %v2319 = vld [vmem:[%s398 + $0x348] sm:$0xff]
        %v2320 = vld [vmem:[%s398 + $0x350] sm:$0xff]
        %v2321 = vld [vmem:[%s398 + $0x358] sm:$0xff]
        %v2322 = vld [vmem:[%s398 + $0x360] sm:$0xff]
        %v2323 = vld [vmem:[%s398 + $0x368] sm:$0xff]
        %v2324 = vld [vmem:[%s398 + $0x370] sm:$0xff]
        %v2325 = vld [vmem:[%s398 + $0x378] sm:$0xff]
        %v2326 = vld [vmem:[%s398 + $0x380] sm:$0xff]
        %v2327 = vld [vmem:[%s398 + $0x388] sm:$0xff]
        %v2328 = vld [vmem:[%s398 + $0x390] sm:$0xff]
        %v2329 = vld [vmem:[%s398 + $0x398] sm:$0xff]
        %v2330 = vld [vmem:[%s398 + $0x3a0] sm:$0xff]
        %v2331 = vld [vmem:[%s398 + $0x3a8] sm:$0xff]
        %v2332 = vld [vmem:[%s398 + $0x3b0] sm:$0xff]
        %v2333 = vld [vmem:[%s398 + $0x3b8] sm:$0xff]
        %v2334 = vld [vmem:[%s398 + $0x3c0] sm:$0xff]
        %v2335 = vld [vmem:[%s398 + $0x3c8] sm:$0xff]
        %v2336 = vld [vmem:[%s398 + $0x3d0] sm:$0xff]
        %v2337 = vld [vmem:[%s398 + $0x3d8] sm:$0xff]
        %v2338 = vld [vmem:[%s398 + $0x3e0] sm:$0xff]
        %v2339 = vld [vmem:[%s398 + $0x3e8] sm:$0xff]
        %v2340 = vld [vmem:[%s398 + $0x3f0] sm:$0xff]
        %v2341 = vld [vmem:[%s398 + $0x3f8] sm:$0xff]
        %s2342 = scalar_lea.vmem %s466, 6
        %v2343 = vld [vmem:[%s2342] ss:$8 sm:$0x3]
        %v2344 = vpack.c.bf16 %v2083, %v2081
        %v2345 = vpack.c.bf16 %v2084, %v2082
        %v2347 = vperm.slane %v2213, 0
        %v2348 = vperm.slane %v2213, 1
        %v2349 = vperm.slane %v2213, 2
        %v2350 = vperm.slane %v2213, 3
        %v2351 = vperm.slane %v2213, 4
        %v2352 = vperm.slane %v2213, 5
        %v2353 = vperm.slane %v2213, 6
        %v2354 = vperm.slane %v2213, 7
        %v2491 = vunpack.c.l.b16 %v2085
        %v2492 = vunpack.c.h.b16 %v2085
        %v2493 = vunpack.c.l.b16 %v2086
        %v2494 = vunpack.c.h.b16 %v2086
        %v2495 = vunpack.c.l.b16 %v2087
        %v2496 = vunpack.c.h.b16 %v2087
        %v2497 = vunpack.c.l.b16 %v2088
        %v2498 = vunpack.c.h.b16 %v2088
        %v2499 = vunpack.c.l.b16 %v2089
        %v2500 = vunpack.c.h.b16 %v2089
        %v2501 = vunpack.c.l.b16 %v2090
        %v2502 = vunpack.c.h.b16 %v2090
        %v2503 = vunpack.c.l.b16 %v2091
        %v2504 = vunpack.c.h.b16 %v2091
        %v2505 = vunpack.c.l.b16 %v2092
        %v2506 = vunpack.c.h.b16 %v2092
        %v2507 = vunpack.c.l.b16 %v2093
        %v2508 = vunpack.c.h.b16 %v2093
        %v2509 = vunpack.c.l.b16 %v2094
        %v2510 = vunpack.c.h.b16 %v2094
        %v2511 = vunpack.c.l.b16 %v2095
        %v2512 = vunpack.c.h.b16 %v2095
        %v2513 = vunpack.c.l.b16 %v2096
        %v2514 = vunpack.c.h.b16 %v2096
        %v2515 = vunpack.c.l.b16 %v2097
        %v2516 = vunpack.c.h.b16 %v2097
        %v2517 = vunpack.c.l.b16 %v2098
        %v2518 = vunpack.c.h.b16 %v2098
        %v2519 = vunpack.c.l.b16 %v2099
        %v2520 = vunpack.c.h.b16 %v2099
        %v2521 = vunpack.c.l.b16 %v2100
        %v2522 = vunpack.c.h.b16 %v2100
        %v2523 = vunpack.c.l.b16 %v2101
        %v2524 = vunpack.c.h.b16 %v2101
        %v2525 = vunpack.c.l.b16 %v2102
        %v2526 = vunpack.c.h.b16 %v2102
        %v2527 = vunpack.c.l.b16 %v2103
        %v2528 = vunpack.c.h.b16 %v2103
        %v2529 = vunpack.c.l.b16 %v2104
        %v2530 = vunpack.c.h.b16 %v2104
        %v2531 = vunpack.c.l.b16 %v2105
        %v2532 = vunpack.c.h.b16 %v2105
        %v2533 = vunpack.c.l.b16 %v2106
        %v2534 = vunpack.c.h.b16 %v2106
        %v2535 = vunpack.c.l.b16 %v2107
        %v2536 = vunpack.c.h.b16 %v2107
        %v2537 = vunpack.c.l.b16 %v2108
        %v2538 = vunpack.c.h.b16 %v2108
        %v2539 = vunpack.c.l.b16 %v2109
        %v2540 = vunpack.c.h.b16 %v2109
        %v2541 = vunpack.c.l.b16 %v2110
        %v2542 = vunpack.c.h.b16 %v2110
        %v2543 = vunpack.c.l.b16 %v2111
        %v2544 = vunpack.c.h.b16 %v2111
        %v2545 = vunpack.c.l.b16 %v2112
        %v2546 = vunpack.c.h.b16 %v2112
        %v2547 = vunpack.c.l.b16 %v2113
        %v2548 = vunpack.c.h.b16 %v2113
        %v2549 = vunpack.c.l.b16 %v2114
        %v2550 = vunpack.c.h.b16 %v2114
        %v2551 = vunpack.c.l.b16 %v2115
        %v2552 = vunpack.c.h.b16 %v2115
        %v2553 = vunpack.c.l.b16 %v2116
        %v2554 = vunpack.c.h.b16 %v2116
        %v2555 = vunpack.c.l.b16 %v2117
        %v2556 = vunpack.c.h.b16 %v2117
        %v2557 = vunpack.c.l.b16 %v2118
        %v2558 = vunpack.c.h.b16 %v2118
        %v2559 = vunpack.c.l.b16 %v2119
        %v2560 = vunpack.c.h.b16 %v2119
        %v2561 = vunpack.c.l.b16 %v2120
        %v2562 = vunpack.c.h.b16 %v2120
        %v2563 = vunpack.c.l.b16 %v2121
        %v2564 = vunpack.c.h.b16 %v2121
        %v2565 = vunpack.c.l.b16 %v2122
        %v2566 = vunpack.c.h.b16 %v2122
        %v2567 = vunpack.c.l.b16 %v2123
        %v2568 = vunpack.c.h.b16 %v2123
        %v2569 = vunpack.c.l.b16 %v2124
        %v2570 = vunpack.c.h.b16 %v2124
        %v2571 = vunpack.c.l.b16 %v2125
        %v2572 = vunpack.c.h.b16 %v2125
        %v2573 = vunpack.c.l.b16 %v2126
        %v2574 = vunpack.c.h.b16 %v2126
        %v2575 = vunpack.c.l.b16 %v2127
        %v2576 = vunpack.c.h.b16 %v2127
        %v2577 = vunpack.c.l.b16 %v2128
        %v2578 = vunpack.c.h.b16 %v2128
        %v2579 = vunpack.c.l.b16 %v2129
        %v2580 = vunpack.c.h.b16 %v2129
        %v2581 = vunpack.c.l.b16 %v2130
        %v2582 = vunpack.c.h.b16 %v2130
        %v2583 = vunpack.c.l.b16 %v2131
        %v2584 = vunpack.c.h.b16 %v2131
        %v2585 = vunpack.c.l.b16 %v2132
        %v2586 = vunpack.c.h.b16 %v2132
        %v2587 = vunpack.c.l.b16 %v2133
        %v2588 = vunpack.c.h.b16 %v2133
        %v2589 = vunpack.c.l.b16 %v2134
        %v2590 = vunpack.c.h.b16 %v2134
        %v2591 = vunpack.c.l.b16 %v2135
        %v2592 = vunpack.c.h.b16 %v2135
        %v2593 = vunpack.c.l.b16 %v2136
        %v2594 = vunpack.c.h.b16 %v2136
        %v2595 = vunpack.c.l.b16 %v2137
        %v2596 = vunpack.c.h.b16 %v2137
        %v2597 = vunpack.c.l.b16 %v2138
        %v2598 = vunpack.c.h.b16 %v2138
        %v2599 = vunpack.c.l.b16 %v2139
        %v2600 = vunpack.c.h.b16 %v2139
        %v2601 = vunpack.c.l.b16 %v2140
        %v2602 = vunpack.c.h.b16 %v2140
        %v2603 = vunpack.c.l.b16 %v2141
        %v2604 = vunpack.c.h.b16 %v2141
        %v2605 = vunpack.c.l.b16 %v2142
        %v2606 = vunpack.c.h.b16 %v2142
        %v2607 = vunpack.c.l.b16 %v2143
        %v2608 = vunpack.c.h.b16 %v2143
        %v2609 = vunpack.c.l.b16 %v2144
        %v2610 = vunpack.c.h.b16 %v2144
        %v2611 = vunpack.c.l.b16 %v2145
        %v2612 = vunpack.c.h.b16 %v2145
        %v2613 = vunpack.c.l.b16 %v2146
        %v2614 = vunpack.c.h.b16 %v2146
        %v2615 = vunpack.c.l.b16 %v2147
        %v2616 = vunpack.c.h.b16 %v2147
        %v2617 = vunpack.c.l.b16 %v2148
        %v2618 = vunpack.c.h.b16 %v2148
        %v2619 = vunpack.c.l.b16 %v2149
        %v2620 = vunpack.c.h.b16 %v2149
        %v2621 = vunpack.c.l.b16 %v2150
        %v2622 = vunpack.c.h.b16 %v2150
        %v2623 = vunpack.c.l.b16 %v2151
        %v2624 = vunpack.c.h.b16 %v2151
        %v2625 = vunpack.c.l.b16 %v2152
        %v2626 = vunpack.c.h.b16 %v2152
        %v2627 = vunpack.c.l.b16 %v2153
        %v2628 = vunpack.c.h.b16 %v2153
        %v2629 = vunpack.c.l.b16 %v2154
        %v2630 = vunpack.c.h.b16 %v2154
        %v2631 = vunpack.c.l.b16 %v2155
        %v2632 = vunpack.c.h.b16 %v2155
        %v2633 = vunpack.c.l.b16 %v2156
        %v2634 = vunpack.c.h.b16 %v2156
        %v2635 = vunpack.c.l.b16 %v2157
        %v2636 = vunpack.c.h.b16 %v2157
        %v2637 = vunpack.c.l.b16 %v2158
        %v2638 = vunpack.c.h.b16 %v2158
        %v2639 = vunpack.c.l.b16 %v2159
        %v2640 = vunpack.c.h.b16 %v2159
        %v2641 = vunpack.c.l.b16 %v2160
        %v2642 = vunpack.c.h.b16 %v2160
        %v2643 = vunpack.c.l.b16 %v2161
        %v2644 = vunpack.c.h.b16 %v2161
        %v2645 = vunpack.c.l.b16 %v2162
        %v2646 = vunpack.c.h.b16 %v2162
        %v2647 = vunpack.c.l.b16 %v2163
        %v2648 = vunpack.c.h.b16 %v2163
        %v2649 = vunpack.c.l.b16 %v2164
        %v2650 = vunpack.c.h.b16 %v2164
        %v2651 = vunpack.c.l.b16 %v2165
        %v2652 = vunpack.c.h.b16 %v2165
        %v2653 = vunpack.c.l.b16 %v2166
        %v2654 = vunpack.c.h.b16 %v2166
        %v2655 = vunpack.c.l.b16 %v2167
        %v2656 = vunpack.c.h.b16 %v2167
        %v2657 = vunpack.c.l.b16 %v2168
        %v2658 = vunpack.c.h.b16 %v2168
        %v2659 = vunpack.c.l.b16 %v2169
        %v2660 = vunpack.c.h.b16 %v2169
        %v2661 = vunpack.c.l.b16 %v2170
        %v2662 = vunpack.c.h.b16 %v2170
        %v2663 = vunpack.c.l.b16 %v2171
        %v2664 = vunpack.c.h.b16 %v2171
        %v2665 = vunpack.c.l.b16 %v2172
        %v2666 = vunpack.c.h.b16 %v2172
        %v2667 = vunpack.c.l.b16 %v2173
        %v2668 = vunpack.c.h.b16 %v2173
        %v2669 = vunpack.c.l.b16 %v2174
        %v2670 = vunpack.c.h.b16 %v2174
        %v2671 = vunpack.c.l.b16 %v2175
        %v2672 = vunpack.c.h.b16 %v2175
        %v2673 = vunpack.c.l.b16 %v2176
        %v2674 = vunpack.c.h.b16 %v2176
        %v2675 = vunpack.c.l.b16 %v2177
        %v2676 = vunpack.c.h.b16 %v2177
        %v2677 = vunpack.c.l.b16 %v2178
        %v2678 = vunpack.c.h.b16 %v2178
        %v2679 = vunpack.c.l.b16 %v2179
        %v2680 = vunpack.c.h.b16 %v2179
        %v2681 = vunpack.c.l.b16 %v2180
        %v2682 = vunpack.c.h.b16 %v2180
        %v2683 = vunpack.c.l.b16 %v2181
        %v2684 = vunpack.c.h.b16 %v2181
        %v2685 = vunpack.c.l.b16 %v2182
        %v2686 = vunpack.c.h.b16 %v2182
        %v2687 = vunpack.c.l.b16 %v2183
        %v2688 = vunpack.c.h.b16 %v2183
        %v2689 = vunpack.c.l.b16 %v2184
        %v2690 = vunpack.c.h.b16 %v2184
        %v2691 = vunpack.c.l.b16 %v2185
        %v2692 = vunpack.c.h.b16 %v2185
        %v2693 = vunpack.c.l.b16 %v2186
        %v2694 = vunpack.c.h.b16 %v2186
        %v2695 = vunpack.c.l.b16 %v2187
        %v2696 = vunpack.c.h.b16 %v2187
        %v2697 = vunpack.c.l.b16 %v2188
        %v2698 = vunpack.c.h.b16 %v2188
        %v2699 = vunpack.c.l.b16 %v2189
        %v2700 = vunpack.c.h.b16 %v2189
        %v2701 = vunpack.c.l.b16 %v2190
        %v2702 = vunpack.c.h.b16 %v2190
        %v2703 = vunpack.c.l.b16 %v2191
        %v2704 = vunpack.c.h.b16 %v2191
        %v2705 = vunpack.c.l.b16 %v2192
        %v2706 = vunpack.c.h.b16 %v2192
        %v2707 = vunpack.c.l.b16 %v2193
        %v2708 = vunpack.c.h.b16 %v2193
        %v2709 = vunpack.c.l.b16 %v2194
        %v2710 = vunpack.c.h.b16 %v2194
        %v2711 = vunpack.c.l.b16 %v2195
        %v2712 = vunpack.c.h.b16 %v2195
        %v2713 = vunpack.c.l.b16 %v2196
        %v2714 = vunpack.c.h.b16 %v2196
        %v2715 = vunpack.c.l.b16 %v2197
        %v2716 = vunpack.c.h.b16 %v2197
        %v2717 = vunpack.c.l.b16 %v2198
        %v2718 = vunpack.c.h.b16 %v2198
        %v2719 = vunpack.c.l.b16 %v2199
        %v2720 = vunpack.c.h.b16 %v2199
        %v2721 = vunpack.c.l.b16 %v2200
        %v2722 = vunpack.c.h.b16 %v2200
        %v2723 = vunpack.c.l.b16 %v2201
        %v2724 = vunpack.c.h.b16 %v2201
        %v2725 = vunpack.c.l.b16 %v2202
        %v2726 = vunpack.c.h.b16 %v2202
        %v2727 = vunpack.c.l.b16 %v2203
        %v2728 = vunpack.c.h.b16 %v2203
        %v2729 = vunpack.c.l.b16 %v2204
        %v2730 = vunpack.c.h.b16 %v2204
        %v2731 = vunpack.c.l.b16 %v2205
        %v2732 = vunpack.c.h.b16 %v2205
        %v2733 = vunpack.c.l.b16 %v2206
        %v2734 = vunpack.c.h.b16 %v2206
        %v2735 = vunpack.c.l.b16 %v2207
        %v2736 = vunpack.c.h.b16 %v2207
        %v2737 = vunpack.c.l.b16 %v2208
        %v2738 = vunpack.c.h.b16 %v2208
        %v2739 = vunpack.c.l.b16 %v2209
        %v2740 = vunpack.c.h.b16 %v2209
        %v2741 = vunpack.c.l.b16 %v2210
        %v2742 = vunpack.c.h.b16 %v2210
        %v2743 = vunpack.c.l.b16 %v2211
        %v2744 = vunpack.c.h.b16 %v2211
        %v2745 = vunpack.c.l.b16 %v2212
        %v2746 = vunpack.c.h.b16 %v2212
        %v2747 = vpack.c.b16 %v2499, %v2491
        %v2748 = vpack.c.b16 %v2500, %v2492
        %v2749 = vpack.c.b16 %v2501, %v2493
        %v2750 = vpack.c.b16 %v2502, %v2494
        %v2751 = vpack.c.b16 %v2503, %v2495
        %v2752 = vpack.c.b16 %v2504, %v2496
        %v2753 = vpack.c.b16 %v2505, %v2497
        %v2754 = vpack.c.b16 %v2506, %v2498
        %v2755 = vpack.c.b16 %v2515, %v2507
        %v2756 = vpack.c.b16 %v2516, %v2508
        %v2757 = vpack.c.b16 %v2517, %v2509
        %v2758 = vpack.c.b16 %v2518, %v2510
        %v2759 = vpack.c.b16 %v2519, %v2511
        %v2760 = vpack.c.b16 %v2520, %v2512
        %v2761 = vpack.c.b16 %v2521, %v2513
        %v2762 = vpack.c.b16 %v2522, %v2514
        %v2763 = vpack.c.b16 %v2531, %v2523
        %v2764 = vpack.c.b16 %v2532, %v2524
        %v2765 = vpack.c.b16 %v2533, %v2525
        %v2766 = vpack.c.b16 %v2534, %v2526
        %v2767 = vpack.c.b16 %v2535, %v2527
        %v2768 = vpack.c.b16 %v2536, %v2528
        %v2769 = vpack.c.b16 %v2537, %v2529
        %v2770 = vpack.c.b16 %v2538, %v2530
        %v2771 = vpack.c.b16 %v2547, %v2539
        %v2772 = vpack.c.b16 %v2548, %v2540
        %v2773 = vpack.c.b16 %v2549, %v2541
        %v2774 = vpack.c.b16 %v2550, %v2542
        %v2775 = vpack.c.b16 %v2551, %v2543
        %v2776 = vpack.c.b16 %v2552, %v2544
        %v2777 = vpack.c.b16 %v2553, %v2545
        %v2778 = vpack.c.b16 %v2554, %v2546
        %v2779 = vpack.c.b16 %v2563, %v2555
        %v2780 = vpack.c.b16 %v2564, %v2556
        %v2781 = vpack.c.b16 %v2565, %v2557
        %v2782 = vpack.c.b16 %v2566, %v2558
        %v2783 = vpack.c.b16 %v2567, %v2559
        %v2784 = vpack.c.b16 %v2568, %v2560
        %v2785 = vpack.c.b16 %v2569, %v2561
        %v2786 = vpack.c.b16 %v2570, %v2562
        %v2787 = vpack.c.b16 %v2579, %v2571
        %v2788 = vpack.c.b16 %v2580, %v2572
        %v2789 = vpack.c.b16 %v2581, %v2573
        %v2790 = vpack.c.b16 %v2582, %v2574
        %v2791 = vpack.c.b16 %v2583, %v2575
        %v2792 = vpack.c.b16 %v2584, %v2576
        %v2793 = vpack.c.b16 %v2585, %v2577
        %v2794 = vpack.c.b16 %v2586, %v2578
        %v2795 = vpack.c.b16 %v2595, %v2587
        %v2796 = vpack.c.b16 %v2596, %v2588
        %v2797 = vpack.c.b16 %v2597, %v2589
        %v2798 = vpack.c.b16 %v2598, %v2590
        %v2799 = vpack.c.b16 %v2599, %v2591
        %v2800 = vpack.c.b16 %v2600, %v2592
        %v2801 = vpack.c.b16 %v2601, %v2593
        %v2802 = vpack.c.b16 %v2602, %v2594
        %v2803 = vpack.c.b16 %v2611, %v2603
        %v2804 = vpack.c.b16 %v2612, %v2604
        %v2805 = vpack.c.b16 %v2613, %v2605
        %v2806 = vpack.c.b16 %v2614, %v2606
        %v2807 = vpack.c.b16 %v2615, %v2607
        %v2808 = vpack.c.b16 %v2616, %v2608
        %v2809 = vpack.c.b16 %v2617, %v2609
        %v2810 = vpack.c.b16 %v2618, %v2610
        %v2811 = vpack.c.b16 %v2627, %v2619
        %v2812 = vpack.c.b16 %v2628, %v2620
        %v2813 = vpack.c.b16 %v2629, %v2621
        %v2814 = vpack.c.b16 %v2630, %v2622
        %v2815 = vpack.c.b16 %v2631, %v2623
        %v2816 = vpack.c.b16 %v2632, %v2624
        %v2817 = vpack.c.b16 %v2633, %v2625
        %v2818 = vpack.c.b16 %v2634, %v2626
        %v2819 = vpack.c.b16 %v2643, %v2635
        %v2820 = vpack.c.b16 %v2644, %v2636
        %v2821 = vpack.c.b16 %v2645, %v2637
        %v2822 = vpack.c.b16 %v2646, %v2638
        %v2823 = vpack.c.b16 %v2647, %v2639
        %v2824 = vpack.c.b16 %v2648, %v2640
        %v2825 = vpack.c.b16 %v2649, %v2641
        %v2826 = vpack.c.b16 %v2650, %v2642
        %v2827 = vpack.c.b16 %v2659, %v2651
        %v2828 = vpack.c.b16 %v2660, %v2652
        %v2829 = vpack.c.b16 %v2661, %v2653
        %v2830 = vpack.c.b16 %v2662, %v2654
        %v2831 = vpack.c.b16 %v2663, %v2655
        %v2832 = vpack.c.b16 %v2664, %v2656
        %v2833 = vpack.c.b16 %v2665, %v2657
        %v2834 = vpack.c.b16 %v2666, %v2658
        %v2835 = vpack.c.b16 %v2675, %v2667
        %v2836 = vpack.c.b16 %v2676, %v2668
        %v2837 = vpack.c.b16 %v2677, %v2669
        %v2838 = vpack.c.b16 %v2678, %v2670
        %v2839 = vpack.c.b16 %v2679, %v2671
        %v2840 = vpack.c.b16 %v2680, %v2672
        %v2841 = vpack.c.b16 %v2681, %v2673
        %v2842 = vpack.c.b16 %v2682, %v2674
        %v2843 = vpack.c.b16 %v2691, %v2683
        %v2844 = vpack.c.b16 %v2692, %v2684
        %v2845 = vpack.c.b16 %v2693, %v2685
        %v2846 = vpack.c.b16 %v2694, %v2686
        %v2847 = vpack.c.b16 %v2695, %v2687
        %v2848 = vpack.c.b16 %v2696, %v2688
        %v2849 = vpack.c.b16 %v2697, %v2689
        %v2850 = vpack.c.b16 %v2698, %v2690
        %v2851 = vpack.c.b16 %v2707, %v2699
        %v2852 = vpack.c.b16 %v2708, %v2700
        %v2853 = vpack.c.b16 %v2709, %v2701
        %v2854 = vpack.c.b16 %v2710, %v2702
        %v2855 = vpack.c.b16 %v2711, %v2703
        %v2856 = vpack.c.b16 %v2712, %v2704
        %v2857 = vpack.c.b16 %v2713, %v2705
        %v2858 = vpack.c.b16 %v2714, %v2706
        %v2859 = vpack.c.b16 %v2723, %v2715
        %v2860 = vpack.c.b16 %v2724, %v2716
        %v2861 = vpack.c.b16 %v2725, %v2717
        %v2862 = vpack.c.b16 %v2726, %v2718
        %v2863 = vpack.c.b16 %v2727, %v2719
        %v2864 = vpack.c.b16 %v2728, %v2720
        %v2865 = vpack.c.b16 %v2729, %v2721
        %v2866 = vpack.c.b16 %v2730, %v2722
        %v2867 = vpack.c.b16 %v2739, %v2731
        %v2868 = vpack.c.b16 %v2740, %v2732
        %v2869 = vpack.c.b16 %v2741, %v2733
        %v2870 = vpack.c.b16 %v2742, %v2734
        %v2871 = vpack.c.b16 %v2743, %v2735
        %v2872 = vpack.c.b16 %v2744, %v2736
        %v2873 = vpack.c.b16 %v2745, %v2737
        %v2874 = vpack.c.b16 %v2746, %v2738
        %3003 = vmatpush.bf16.msra.mxu0 %v2803
        %3004 = vmatpush.bf16.msra.mxu0 %v2795
        %3005 = vmatpush.bf16.msra.mxu0 %v2787
        %3006 = vmatpush.bf16.msra.mxu0 %v2779
        %3007 = vmatpush.bf16.msra.mxu0 %v2771
        %3008 = vmatpush.bf16.msra.mxu0 %v2763
        %3009 = vmatpush.bf16.msra.mxu0 %v2755
        %3010 = vmatpush.bf16.msra.mxu0 %v2747
        %3011 = vmatmul.bf16.gmra.mxu0 %v2344
        %v3012 = vpop.f32.mrf.mxu0
        %v3013 = vadd.f32 %v2347, %v3012
        %v3014 = vpop.f32.mrf.mxu0
        %v3015 = vadd.f32 %v2347, %v3014
        %3016 = vdwg.mxu0
        %3017 = vmatpush.bf16.msra.mxu0 %v2867
        %3018 = vmatpush.bf16.msra.mxu0 %v2859
        %3019 = vmatpush.bf16.msra.mxu0 %v2851
        %3020 = vmatpush.bf16.msra.mxu0 %v2843
        %3021 = vmatpush.bf16.msra.mxu0 %v2835
        %3022 = vmatpush.bf16.msra.mxu0 %v2827
        %3023 = vmatpush.bf16.msra.mxu0 %v2819
        %3024 = vmatpush.bf16.msra.mxu0 %v2811
        %3025 = vmatmul.bf16.gmra.mxu0 %v2345
        %v3026 = vpop.f32.mrf.mxu0
        %v3027 = vadd.f32 %v3013, %v3026
        %v3028 = vpop.f32.mrf.mxu0
        %v3029 = vadd.f32 %v3015, %v3028
        %3030 = vdwg.mxu0
        %3031 = vmatpush.bf16.msra.mxu0 %v2804
        %3032 = vmatpush.bf16.msra.mxu0 %v2796
        %3033 = vmatpush.bf16.msra.mxu0 %v2788
        %3034 = vmatpush.bf16.msra.mxu0 %v2780
        %3035 = vmatpush.bf16.msra.mxu0 %v2772
        %3036 = vmatpush.bf16.msra.mxu0 %v2764
        %3037 = vmatpush.bf16.msra.mxu0 %v2756
        %3038 = vmatpush.bf16.msra.mxu0 %v2748
        %3039 = vmatmul.bf16.gmra.mxu0 %v2344
        %v3040 = vpop.f32.mrf.mxu0
        %v3041 = vadd.f32 %v2348, %v3040
        %v3042 = vpop.f32.mrf.mxu0
        %v3043 = vadd.f32 %v2348, %v3042
        %3044 = vdwg.mxu0
        %3045 = vmatpush.bf16.msra.mxu0 %v2868
        %3046 = vmatpush.bf16.msra.mxu0 %v2860
        %3047 = vmatpush.bf16.msra.mxu0 %v2852
        %3048 = vmatpush.bf16.msra.mxu0 %v2844
        %3049 = vmatpush.bf16.msra.mxu0 %v2836
        %3050 = vmatpush.bf16.msra.mxu0 %v2828
        %3051 = vmatpush.bf16.msra.mxu0 %v2820
        %3052 = vmatpush.bf16.msra.mxu0 %v2812
        %3053 = vmatmul.bf16.gmra.mxu0 %v2345
        %v3054 = vpop.f32.mrf.mxu0
        %v3055 = vadd.f32 %v3041, %v3054
        %v3056 = vpop.f32.mrf.mxu0
        %v3057 = vadd.f32 %v3043, %v3056
        %3058 = vdwg.mxu0
        %3059 = vmatpush.bf16.msra.mxu0 %v2805
        %3060 = vmatpush.bf16.msra.mxu0 %v2797
        %3061 = vmatpush.bf16.msra.mxu0 %v2789
        %3062 = vmatpush.bf16.msra.mxu0 %v2781
        %3063 = vmatpush.bf16.msra.mxu0 %v2773
        %3064 = vmatpush.bf16.msra.mxu0 %v2765
        %3065 = vmatpush.bf16.msra.mxu0 %v2757
        %3066 = vmatpush.bf16.msra.mxu0 %v2749
        %3067 = vmatmul.bf16.gmra.mxu0 %v2344
        %v3068 = vpop.f32.mrf.mxu0
        %v3069 = vadd.f32 %v2349, %v3068
        %v3070 = vpop.f32.mrf.mxu0
        %v3071 = vadd.f32 %v2349, %v3070
        %3072 = vdwg.mxu0
        %3073 = vmatpush.bf16.msra.mxu0 %v2869
        %3074 = vmatpush.bf16.msra.mxu0 %v2861
        %3075 = vmatpush.bf16.msra.mxu0 %v2853
        %3076 = vmatpush.bf16.msra.mxu0 %v2845
        %3077 = vmatpush.bf16.msra.mxu0 %v2837
        %3078 = vmatpush.bf16.msra.mxu0 %v2829
        %3079 = vmatpush.bf16.msra.mxu0 %v2821
        %3080 = vmatpush.bf16.msra.mxu0 %v2813
        %3081 = vmatmul.bf16.gmra.mxu0 %v2345
        %v3082 = vpop.f32.mrf.mxu0
        %v3083 = vadd.f32 %v3069, %v3082
        %v3084 = vpop.f32.mrf.mxu0
        %v3085 = vadd.f32 %v3071, %v3084
        %3086 = vdwg.mxu0
        %3087 = vmatpush.bf16.msra.mxu0 %v2806
        %3088 = vmatpush.bf16.msra.mxu0 %v2798
        %3089 = vmatpush.bf16.msra.mxu0 %v2790
        %3090 = vmatpush.bf16.msra.mxu0 %v2782
        %3091 = vmatpush.bf16.msra.mxu0 %v2774
        %3092 = vmatpush.bf16.msra.mxu0 %v2766
        %3093 = vmatpush.bf16.msra.mxu0 %v2758
        %3094 = vmatpush.bf16.msra.mxu0 %v2750
        %3095 = vmatmul.bf16.gmra.mxu0 %v2344
        %v3096 = vpop.f32.mrf.mxu0
        %v3097 = vadd.f32 %v2350, %v3096
        %v3098 = vpop.f32.mrf.mxu0
        %v3099 = vadd.f32 %v2350, %v3098
        %3100 = vdwg.mxu0
        %3101 = vmatpush.bf16.msra.mxu0 %v2870
        %3102 = vmatpush.bf16.msra.mxu0 %v2862
        %3103 = vmatpush.bf16.msra.mxu0 %v2854
        %3104 = vmatpush.bf16.msra.mxu0 %v2846
        %3105 = vmatpush.bf16.msra.mxu0 %v2838
        %3106 = vmatpush.bf16.msra.mxu0 %v2830
        %3107 = vmatpush.bf16.msra.mxu0 %v2822
        %3108 = vmatpush.bf16.msra.mxu0 %v2814
        %3109 = vmatmul.bf16.gmra.mxu0 %v2345
        %v3110 = vpop.f32.mrf.mxu0
        %v3111 = vadd.f32 %v3097, %v3110
        %v3112 = vpop.f32.mrf.mxu0
        %v3113 = vadd.f32 %v3099, %v3112
        %3114 = vdwg.mxu0
        %3115 = vmatpush.bf16.msra.mxu0 %v2807
        %3116 = vmatpush.bf16.msra.mxu0 %v2799
        %3117 = vmatpush.bf16.msra.mxu0 %v2791
        %3118 = vmatpush.bf16.msra.mxu0 %v2783
        %3119 = vmatpush.bf16.msra.mxu0 %v2775
        %3120 = vmatpush.bf16.msra.mxu0 %v2767
        %3121 = vmatpush.bf16.msra.mxu0 %v2759
        %3122 = vmatpush.bf16.msra.mxu0 %v2751
        %3123 = vmatmul.bf16.gmra.mxu0 %v2344
        %v3124 = vpop.f32.mrf.mxu0
        %v3125 = vadd.f32 %v2351, %v3124
        %v3126 = vpop.f32.mrf.mxu0
        %v3127 = vadd.f32 %v2351, %v3126
        %3128 = vdwg.mxu0
        %3129 = vmatpush.bf16.msra.mxu0 %v2871
        %3130 = vmatpush.bf16.msra.mxu0 %v2863
        %3131 = vmatpush.bf16.msra.mxu0 %v2855
        %3132 = vmatpush.bf16.msra.mxu0 %v2847
        %3133 = vmatpush.bf16.msra.mxu0 %v2839
        %3134 = vmatpush.bf16.msra.mxu0 %v2831
        %3135 = vmatpush.bf16.msra.mxu0 %v2823
        %3136 = vmatpush.bf16.msra.mxu0 %v2815
        %3137 = vmatmul.bf16.gmra.mxu0 %v2345
        %v3138 = vpop.f32.mrf.mxu0
        %v3139 = vadd.f32 %v3125, %v3138
        %v3140 = vpop.f32.mrf.mxu0
        %v3141 = vadd.f32 %v3127, %v3140
        %3142 = vdwg.mxu0
        %3143 = vmatpush.bf16.msra.mxu0 %v2808
        %3144 = vmatpush.bf16.msra.mxu0 %v2800
        %3145 = vmatpush.bf16.msra.mxu0 %v2792
        %3146 = vmatpush.bf16.msra.mxu0 %v2784
        %3147 = vmatpush.bf16.msra.mxu0 %v2776
        %3148 = vmatpush.bf16.msra.mxu0 %v2768
        %3149 = vmatpush.bf16.msra.mxu0 %v2760
        %3150 = vmatpush.bf16.msra.mxu0 %v2752
        %3151 = vmatmul.bf16.gmra.mxu0 %v2344
        %v3152 = vpop.f32.mrf.mxu0
        %v3153 = vadd.f32 %v2352, %v3152
        %v3154 = vpop.f32.mrf.mxu0
        %v3155 = vadd.f32 %v2352, %v3154
        %3156 = vdwg.mxu0
        %3157 = vmatpush.bf16.msra.mxu0 %v2872
        %3158 = vmatpush.bf16.msra.mxu0 %v2864
        %3159 = vmatpush.bf16.msra.mxu0 %v2856
        %3160 = vmatpush.bf16.msra.mxu0 %v2848
        %3161 = vmatpush.bf16.msra.mxu0 %v2840
        %3162 = vmatpush.bf16.msra.mxu0 %v2832
        %3163 = vmatpush.bf16.msra.mxu0 %v2824
        %3164 = vmatpush.bf16.msra.mxu0 %v2816
        %3165 = vmatmul.bf16.gmra.mxu0 %v2345
        %v3166 = vpop.f32.mrf.mxu0
        %v3167 = vadd.f32 %v3153, %v3166
        %v3168 = vpop.f32.mrf.mxu0
        %v3169 = vadd.f32 %v3155, %v3168
        %3170 = vdwg.mxu0
        %3171 = vmatpush.bf16.msra.mxu0 %v2809
        %3172 = vmatpush.bf16.msra.mxu0 %v2801
        %3173 = vmatpush.bf16.msra.mxu0 %v2793
        %3174 = vmatpush.bf16.msra.mxu0 %v2785
        %3175 = vmatpush.bf16.msra.mxu0 %v2777
        %3176 = vmatpush.bf16.msra.mxu0 %v2769
        %3177 = vmatpush.bf16.msra.mxu0 %v2761
        %3178 = vmatpush.bf16.msra.mxu0 %v2753
        %3179 = vmatmul.bf16.gmra.mxu0 %v2344
        %v3180 = vpop.f32.mrf.mxu0
        %v3181 = vadd.f32 %v2353, %v3180
        %v3182 = vpop.f32.mrf.mxu0
        %v3183 = vadd.f32 %v2353, %v3182
        %3184 = vdwg.mxu0
        %3185 = vmatpush.bf16.msra.mxu0 %v2873
        %3186 = vmatpush.bf16.msra.mxu0 %v2865
        %3187 = vmatpush.bf16.msra.mxu0 %v2857
        %3188 = vmatpush.bf16.msra.mxu0 %v2849
        %3189 = vmatpush.bf16.msra.mxu0 %v2841
        %3190 = vmatpush.bf16.msra.mxu0 %v2833
        %3191 = vmatpush.bf16.msra.mxu0 %v2825
        %3192 = vmatpush.bf16.msra.mxu0 %v2817
        %3193 = vmatmul.bf16.gmra.mxu0 %v2345
        %v3194 = vpop.f32.mrf.mxu0
        %v3195 = vadd.f32 %v3181, %v3194
        %v3196 = vpop.f32.mrf.mxu0
        %v3197 = vadd.f32 %v3183, %v3196
        %3198 = vdwg.mxu0
        %3199 = vmatpush.bf16.msra.mxu0 %v2810
        %3200 = vmatpush.bf16.msra.mxu0 %v2802
        %3201 = vmatpush.bf16.msra.mxu0 %v2794
        %3202 = vmatpush.bf16.msra.mxu0 %v2786
        %3203 = vmatpush.bf16.msra.mxu0 %v2778
        %3204 = vmatpush.bf16.msra.mxu0 %v2770
        %3205 = vmatpush.bf16.msra.mxu0 %v2762
        %3206 = vmatpush.bf16.msra.mxu0 %v2754
        %3207 = vmatmul.bf16.gmra.mxu0 %v2344
        %v3208 = vpop.f32.mrf.mxu0
        %v3209 = vadd.f32 %v2354, %v3208
        %v3210 = vpop.f32.mrf.mxu0
        %v3211 = vadd.f32 %v2354, %v3210
        %3212 = vdwg.mxu0
        %3213 = vmatpush.bf16.msra.mxu0 %v2874
        %3214 = vmatpush.bf16.msra.mxu0 %v2866
        %3215 = vmatpush.bf16.msra.mxu0 %v2858
        %3216 = vmatpush.bf16.msra.mxu0 %v2850
        %3217 = vmatpush.bf16.msra.mxu0 %v2842
        %3218 = vmatpush.bf16.msra.mxu0 %v2834
        %3219 = vmatpush.bf16.msra.mxu0 %v2826
        %3220 = vmatpush.bf16.msra.mxu0 %v2818
        %3221 = vmatmul.bf16.gmra.mxu0 %v2345
        %v3222 = vpop.f32.mrf.mxu0
        %v3223 = vadd.f32 %v3209, %v3222
        %v3224 = vpop.f32.mrf.mxu0
        %v3225 = vadd.f32 %v3211, %v3224
        %3226 = vdwg.mxu0
        %v3227 = vmax.f32 %v3027, 0.0
        %v3228 = vmax.f32 %v3055, 0.0
        %v3229 = vmax.f32 %v3083, 0.0
        %v3230 = vmax.f32 %v3111, 0.0
        %v3231 = vmax.f32 %v3139, 0.0
        %v3232 = vmax.f32 %v3167, 0.0
        %v3233 = vmax.f32 %v3195, 0.0
        %v3234 = vmax.f32 %v3223, 0.0
        %v3235 = vmax.f32 %v3029, 0.0
        %v3236 = vmax.f32 %v3057, 0.0
        %v3237 = vmax.f32 %v3085, 0.0
        %v3238 = vmax.f32 %v3113, 0.0
        %v3239 = vmax.f32 %v3141, 0.0
        %v3240 = vmax.f32 %v3169, 0.0
        %v3241 = vmax.f32 %v3197, 0.0
        %v3242 = vmax.f32 %v3225, 0.0
        %v3243 = vpack.c.bf16 %v3235, %v3227
        %v3244 = vpack.c.bf16 %v3236, %v3228
        %v3245 = vpack.c.bf16 %v3237, %v3229
        %v3246 = vpack.c.bf16 %v3238, %v3230
        %v3247 = vpack.c.bf16 %v3239, %v3231
        %v3248 = vpack.c.bf16 %v3240, %v3232
        %v3249 = vpack.c.bf16 %v3241, %v3233
        %v3250 = vpack.c.bf16 %v3242, %v3234
        %v3252 = vperm.slane %v2343, 0
        %v3253 = vperm.slane %v2343, 1
        %v3384 = vunpack.c.l.b16 %v2214
        %v3385 = vunpack.c.h.b16 %v2214
        %v3386 = vunpack.c.l.b16 %v2215
        %v3387 = vunpack.c.h.b16 %v2215
        %v3388 = vunpack.c.l.b16 %v2216
        %v3389 = vunpack.c.h.b16 %v2216
        %v3390 = vunpack.c.l.b16 %v2217
        %v3391 = vunpack.c.h.b16 %v2217
        %v3392 = vunpack.c.l.b16 %v2218
        %v3393 = vunpack.c.h.b16 %v2218
        %v3394 = vunpack.c.l.b16 %v2219
        %v3395 = vunpack.c.h.b16 %v2219
        %v3396 = vunpack.c.l.b16 %v2220
        %v3397 = vunpack.c.h.b16 %v2220
        %v3398 = vunpack.c.l.b16 %v2221
        %v3399 = vunpack.c.h.b16 %v2221
        %v3400 = vunpack.c.l.b16 %v2222
        %v3401 = vunpack.c.h.b16 %v2222
        %v3402 = vunpack.c.l.b16 %v2223
        %v3403 = vunpack.c.h.b16 %v2223
        %v3404 = vunpack.c.l.b16 %v2224
        %v3405 = vunpack.c.h.b16 %v2224
        %v3406 = vunpack.c.l.b16 %v2225
        %v3407 = vunpack.c.h.b16 %v2225
        %v3408 = vunpack.c.l.b16 %v2226
        %v3409 = vunpack.c.h.b16 %v2226
        %v3410 = vunpack.c.l.b16 %v2227
        %v3411 = vunpack.c.h.b16 %v2227
        %v3412 = vunpack.c.l.b16 %v2228
        %v3413 = vunpack.c.h.b16 %v2228
        %v3414 = vunpack.c.l.b16 %v2229
        %v3415 = vunpack.c.h.b16 %v2229
        %v3416 = vunpack.c.l.b16 %v2230
        %v3417 = vunpack.c.h.b16 %v2230
        %v3418 = vunpack.c.l.b16 %v2231
        %v3419 = vunpack.c.h.b16 %v2231
        %v3420 = vunpack.c.l.b16 %v2232
        %v3421 = vunpack.c.h.b16 %v2232
        %v3422 = vunpack.c.l.b16 %v2233
        %v3423 = vunpack.c.h.b16 %v2233
        %v3424 = vunpack.c.l.b16 %v2234
        %v3425 = vunpack.c.h.b16 %v2234
        %v3426 = vunpack.c.l.b16 %v2235
        %v3427 = vunpack.c.h.b16 %v2235
        %v3428 = vunpack.c.l.b16 %v2236
        %v3429 = vunpack.c.h.b16 %v2236
        %v3430 = vunpack.c.l.b16 %v2237
        %v3431 = vunpack.c.h.b16 %v2237
        %v3432 = vunpack.c.l.b16 %v2238
        %v3433 = vunpack.c.h.b16 %v2238
        %v3434 = vunpack.c.l.b16 %v2239
        %v3435 = vunpack.c.h.b16 %v2239
        %v3436 = vunpack.c.l.b16 %v2240
        %v3437 = vunpack.c.h.b16 %v2240
        %v3438 = vunpack.c.l.b16 %v2241
        %v3439 = vunpack.c.h.b16 %v2241
        %v3440 = vunpack.c.l.b16 %v2242
        %v3441 = vunpack.c.h.b16 %v2242
        %v3442 = vunpack.c.l.b16 %v2243
        %v3443 = vunpack.c.h.b16 %v2243
        %v3444 = vunpack.c.l.b16 %v2244
        %v3445 = vunpack.c.h.b16 %v2244
        %v3446 = vunpack.c.l.b16 %v2245
        %v3447 = vunpack.c.h.b16 %v2245
        %v3448 = vunpack.c.l.b16 %v2246
        %v3449 = vunpack.c.h.b16 %v2246
        %v3450 = vunpack.c.l.b16 %v2247
        %v3451 = vunpack.c.h.b16 %v2247
        %v3452 = vunpack.c.l.b16 %v2248
        %v3453 = vunpack.c.h.b16 %v2248
        %v3454 = vunpack.c.l.b16 %v2249
        %v3455 = vunpack.c.h.b16 %v2249
        %v3456 = vunpack.c.l.b16 %v2250
        %v3457 = vunpack.c.h.b16 %v2250
        %v3458 = vunpack.c.l.b16 %v2251
        %v3459 = vunpack.c.h.b16 %v2251
        %v3460 = vunpack.c.l.b16 %v2252
        %v3461 = vunpack.c.h.b16 %v2252
        %v3462 = vunpack.c.l.b16 %v2253
        %v3463 = vunpack.c.h.b16 %v2253
        %v3464 = vunpack.c.l.b16 %v2254
        %v3465 = vunpack.c.h.b16 %v2254
        %v3466 = vunpack.c.l.b16 %v2255
        %v3467 = vunpack.c.h.b16 %v2255
        %v3468 = vunpack.c.l.b16 %v2256
        %v3469 = vunpack.c.h.b16 %v2256
        %v3470 = vunpack.c.l.b16 %v2257
        %v3471 = vunpack.c.h.b16 %v2257
        %v3472 = vunpack.c.l.b16 %v2258
        %v3473 = vunpack.c.h.b16 %v2258
        %v3474 = vunpack.c.l.b16 %v2259
        %v3475 = vunpack.c.h.b16 %v2259
        %v3476 = vunpack.c.l.b16 %v2260
        %v3477 = vunpack.c.h.b16 %v2260
        %v3478 = vunpack.c.l.b16 %v2261
        %v3479 = vunpack.c.h.b16 %v2261
        %v3480 = vunpack.c.l.b16 %v2262
        %v3481 = vunpack.c.h.b16 %v2262
        %v3482 = vunpack.c.l.b16 %v2263
        %v3483 = vunpack.c.h.b16 %v2263
        %v3484 = vunpack.c.l.b16 %v2264
        %v3485 = vunpack.c.h.b16 %v2264
        %v3486 = vunpack.c.l.b16 %v2265
        %v3487 = vunpack.c.h.b16 %v2265
        %v3488 = vunpack.c.l.b16 %v2266
        %v3489 = vunpack.c.h.b16 %v2266
        %v3490 = vunpack.c.l.b16 %v2267
        %v3491 = vunpack.c.h.b16 %v2267
        %v3492 = vunpack.c.l.b16 %v2268
        %v3493 = vunpack.c.h.b16 %v2268
        %v3494 = vunpack.c.l.b16 %v2269
        %v3495 = vunpack.c.h.b16 %v2269
        %v3496 = vunpack.c.l.b16 %v2270
        %v3497 = vunpack.c.h.b16 %v2270
        %v3498 = vunpack.c.l.b16 %v2271
        %v3499 = vunpack.c.h.b16 %v2271
        %v3500 = vunpack.c.l.b16 %v2272
        %v3501 = vunpack.c.h.b16 %v2272
        %v3502 = vunpack.c.l.b16 %v2273
        %v3503 = vunpack.c.h.b16 %v2273
        %v3504 = vunpack.c.l.b16 %v2274
        %v3505 = vunpack.c.h.b16 %v2274
        %v3506 = vunpack.c.l.b16 %v2275
        %v3507 = vunpack.c.h.b16 %v2275
        %v3508 = vunpack.c.l.b16 %v2276
        %v3509 = vunpack.c.h.b16 %v2276
        %v3510 = vunpack.c.l.b16 %v2277
        %v3511 = vunpack.c.h.b16 %v2277
        %v3512 = vunpack.c.l.b16 %v2278
        %v3513 = vunpack.c.h.b16 %v2278
        %v3514 = vunpack.c.l.b16 %v2279
        %v3515 = vunpack.c.h.b16 %v2279
        %v3516 = vunpack.c.l.b16 %v2280
        %v3517 = vunpack.c.h.b16 %v2280
        %v3518 = vunpack.c.l.b16 %v2281
        %v3519 = vunpack.c.h.b16 %v2281
        %v3520 = vunpack.c.l.b16 %v2282
        %v3521 = vunpack.c.h.b16 %v2282
        %v3522 = vunpack.c.l.b16 %v2283
        %v3523 = vunpack.c.h.b16 %v2283
        %v3524 = vunpack.c.l.b16 %v2284
        %v3525 = vunpack.c.h.b16 %v2284
        %v3526 = vunpack.c.l.b16 %v2285
        %v3527 = vunpack.c.h.b16 %v2285
        %v3528 = vunpack.c.l.b16 %v2286
        %v3529 = vunpack.c.h.b16 %v2286
        %v3530 = vunpack.c.l.b16 %v2287
        %v3531 = vunpack.c.h.b16 %v2287
        %v3532 = vunpack.c.l.b16 %v2288
        %v3533 = vunpack.c.h.b16 %v2288
        %v3534 = vunpack.c.l.b16 %v2289
        %v3535 = vunpack.c.h.b16 %v2289
        %v3536 = vunpack.c.l.b16 %v2290
        %v3537 = vunpack.c.h.b16 %v2290
        %v3538 = vunpack.c.l.b16 %v2291
        %v3539 = vunpack.c.h.b16 %v2291
        %v3540 = vunpack.c.l.b16 %v2292
        %v3541 = vunpack.c.h.b16 %v2292
        %v3542 = vunpack.c.l.b16 %v2293
        %v3543 = vunpack.c.h.b16 %v2293
        %v3544 = vunpack.c.l.b16 %v2294
        %v3545 = vunpack.c.h.b16 %v2294
        %v3546 = vunpack.c.l.b16 %v2295
        %v3547 = vunpack.c.h.b16 %v2295
        %v3548 = vunpack.c.l.b16 %v2296
        %v3549 = vunpack.c.h.b16 %v2296
        %v3550 = vunpack.c.l.b16 %v2297
        %v3551 = vunpack.c.h.b16 %v2297
        %v3552 = vunpack.c.l.b16 %v2298
        %v3553 = vunpack.c.h.b16 %v2298
        %v3554 = vunpack.c.l.b16 %v2299
        %v3555 = vunpack.c.h.b16 %v2299
        %v3556 = vunpack.c.l.b16 %v2300
        %v3557 = vunpack.c.h.b16 %v2300
        %v3558 = vunpack.c.l.b16 %v2301
        %v3559 = vunpack.c.h.b16 %v2301
        %v3560 = vunpack.c.l.b16 %v2302
        %v3561 = vunpack.c.h.b16 %v2302
        %v3562 = vunpack.c.l.b16 %v2303
        %v3563 = vunpack.c.h.b16 %v2303
        %v3564 = vunpack.c.l.b16 %v2304
        %v3565 = vunpack.c.h.b16 %v2304
        %v3566 = vunpack.c.l.b16 %v2305
        %v3567 = vunpack.c.h.b16 %v2305
        %v3568 = vunpack.c.l.b16 %v2306
        %v3569 = vunpack.c.h.b16 %v2306
        %v3570 = vunpack.c.l.b16 %v2307
        %v3571 = vunpack.c.h.b16 %v2307
        %v3572 = vunpack.c.l.b16 %v2308
        %v3573 = vunpack.c.h.b16 %v2308
        %v3574 = vunpack.c.l.b16 %v2309
        %v3575 = vunpack.c.h.b16 %v2309
        %v3576 = vunpack.c.l.b16 %v2310
        %v3577 = vunpack.c.h.b16 %v2310
        %v3578 = vunpack.c.l.b16 %v2311
        %v3579 = vunpack.c.h.b16 %v2311
        %v3580 = vunpack.c.l.b16 %v2312
        %v3581 = vunpack.c.h.b16 %v2312
        %v3582 = vunpack.c.l.b16 %v2313
        %v3583 = vunpack.c.h.b16 %v2313
        %v3584 = vunpack.c.l.b16 %v2314
        %v3585 = vunpack.c.h.b16 %v2314
        %v3586 = vunpack.c.l.b16 %v2315
        %v3587 = vunpack.c.h.b16 %v2315
        %v3588 = vunpack.c.l.b16 %v2316
        %v3589 = vunpack.c.h.b16 %v2316
        %v3590 = vunpack.c.l.b16 %v2317
        %v3591 = vunpack.c.h.b16 %v2317
        %v3592 = vunpack.c.l.b16 %v2318
        %v3593 = vunpack.c.h.b16 %v2318
        %v3594 = vunpack.c.l.b16 %v2319
        %v3595 = vunpack.c.h.b16 %v2319
        %v3596 = vunpack.c.l.b16 %v2320
        %v3597 = vunpack.c.h.b16 %v2320
        %v3598 = vunpack.c.l.b16 %v2321
        %v3599 = vunpack.c.h.b16 %v2321
        %v3600 = vunpack.c.l.b16 %v2322
        %v3601 = vunpack.c.h.b16 %v2322
        %v3602 = vunpack.c.l.b16 %v2323
        %v3603 = vunpack.c.h.b16 %v2323
        %v3604 = vunpack.c.l.b16 %v2324
        %v3605 = vunpack.c.h.b16 %v2324
        %v3606 = vunpack.c.l.b16 %v2325
        %v3607 = vunpack.c.h.b16 %v2325
        %v3608 = vunpack.c.l.b16 %v2326
        %v3609 = vunpack.c.h.b16 %v2326
        %v3610 = vunpack.c.l.b16 %v2327
        %v3611 = vunpack.c.h.b16 %v2327
        %v3612 = vunpack.c.l.b16 %v2328
        %v3613 = vunpack.c.h.b16 %v2328
        %v3614 = vunpack.c.l.b16 %v2329
        %v3615 = vunpack.c.h.b16 %v2329
        %v3616 = vunpack.c.l.b16 %v2330
        %v3617 = vunpack.c.h.b16 %v2330
        %v3618 = vunpack.c.l.b16 %v2331
        %v3619 = vunpack.c.h.b16 %v2331
        %v3620 = vunpack.c.l.b16 %v2332
        %v3621 = vunpack.c.h.b16 %v2332
        %v3622 = vunpack.c.l.b16 %v2333
        %v3623 = vunpack.c.h.b16 %v2333
        %v3624 = vunpack.c.l.b16 %v2334
        %v3625 = vunpack.c.h.b16 %v2334
        %v3626 = vunpack.c.l.b16 %v2335
        %v3627 = vunpack.c.h.b16 %v2335
        %v3628 = vunpack.c.l.b16 %v2336
        %v3629 = vunpack.c.h.b16 %v2336
        %v3630 = vunpack.c.l.b16 %v2337
        %v3631 = vunpack.c.h.b16 %v2337
        %v3632 = vunpack.c.l.b16 %v2338
        %v3633 = vunpack.c.h.b16 %v2338
        %v3634 = vunpack.c.l.b16 %v2339
        %v3635 = vunpack.c.h.b16 %v2339
        %v3636 = vunpack.c.l.b16 %v2340
        %v3637 = vunpack.c.h.b16 %v2340
        %v3638 = vunpack.c.l.b16 %v2341
        %v3639 = vunpack.c.h.b16 %v2341
        %v3640 = vpack.c.b16 %v3386, %v3384
        %v3641 = vpack.c.b16 %v3387, %v3385
        %v3642 = vpack.c.b16 %v3390, %v3388
        %v3643 = vpack.c.b16 %v3391, %v3389
        %v3644 = vpack.c.b16 %v3394, %v3392
        %v3645 = vpack.c.b16 %v3395, %v3393
        %v3646 = vpack.c.b16 %v3398, %v3396
        %v3647 = vpack.c.b16 %v3399, %v3397
        %v3648 = vpack.c.b16 %v3402, %v3400
        %v3649 = vpack.c.b16 %v3403, %v3401
        %v3650 = vpack.c.b16 %v3406, %v3404
        %v3651 = vpack.c.b16 %v3407, %v3405
        %v3652 = vpack.c.b16 %v3410, %v3408
        %v3653 = vpack.c.b16 %v3411, %v3409
        %v3654 = vpack.c.b16 %v3414, %v3412
        %v3655 = vpack.c.b16 %v3415, %v3413
        %v3656 = vpack.c.b16 %v3418, %v3416
        %v3657 = vpack.c.b16 %v3419, %v3417
        %v3658 = vpack.c.b16 %v3422, %v3420
        %v3659 = vpack.c.b16 %v3423, %v3421
        %v3660 = vpack.c.b16 %v3426, %v3424
        %v3661 = vpack.c.b16 %v3427, %v3425
        %v3662 = vpack.c.b16 %v3430, %v3428
        %v3663 = vpack.c.b16 %v3431, %v3429
        %v3664 = vpack.c.b16 %v3434, %v3432
        %v3665 = vpack.c.b16 %v3435, %v3433
        %v3666 = vpack.c.b16 %v3438, %v3436
        %v3667 = vpack.c.b16 %v3439, %v3437
        %v3668 = vpack.c.b16 %v3442, %v3440
        %v3669 = vpack.c.b16 %v3443, %v3441
        %v3670 = vpack.c.b16 %v3446, %v3444
        %v3671 = vpack.c.b16 %v3447, %v3445
        %v3672 = vpack.c.b16 %v3450, %v3448
        %v3673 = vpack.c.b16 %v3451, %v3449
        %v3674 = vpack.c.b16 %v3454, %v3452
        %v3675 = vpack.c.b16 %v3455, %v3453
        %v3676 = vpack.c.b16 %v3458, %v3456
        %v3677 = vpack.c.b16 %v3459, %v3457
        %v3678 = vpack.c.b16 %v3462, %v3460
        %v3679 = vpack.c.b16 %v3463, %v3461
        %v3680 = vpack.c.b16 %v3466, %v3464
        %v3681 = vpack.c.b16 %v3467, %v3465
        %v3682 = vpack.c.b16 %v3470, %v3468
        %v3683 = vpack.c.b16 %v3471, %v3469
        %v3684 = vpack.c.b16 %v3474, %v3472
        %v3685 = vpack.c.b16 %v3475, %v3473
        %v3686 = vpack.c.b16 %v3478, %v3476
        %v3687 = vpack.c.b16 %v3479, %v3477
        %v3688 = vpack.c.b16 %v3482, %v3480
        %v3689 = vpack.c.b16 %v3483, %v3481
        %v3690 = vpack.c.b16 %v3486, %v3484
        %v3691 = vpack.c.b16 %v3487, %v3485
        %v3692 = vpack.c.b16 %v3490, %v3488
        %v3693 = vpack.c.b16 %v3491, %v3489
        %v3694 = vpack.c.b16 %v3494, %v3492
        %v3695 = vpack.c.b16 %v3495, %v3493
        %v3696 = vpack.c.b16 %v3498, %v3496
        %v3697 = vpack.c.b16 %v3499, %v3497
        %v3698 = vpack.c.b16 %v3502, %v3500
        %v3699 = vpack.c.b16 %v3503, %v3501
        %v3700 = vpack.c.b16 %v3506, %v3504
        %v3701 = vpack.c.b16 %v3507, %v3505
        %v3702 = vpack.c.b16 %v3510, %v3508
        %v3703 = vpack.c.b16 %v3511, %v3509
        %v3704 = vpack.c.b16 %v3514, %v3512
        %v3705 = vpack.c.b16 %v3515, %v3513
        %v3706 = vpack.c.b16 %v3518, %v3516
        %v3707 = vpack.c.b16 %v3519, %v3517
        %v3708 = vpack.c.b16 %v3522, %v3520
        %v3709 = vpack.c.b16 %v3523, %v3521
        %v3710 = vpack.c.b16 %v3526, %v3524
        %v3711 = vpack.c.b16 %v3527, %v3525
        %v3712 = vpack.c.b16 %v3530, %v3528
        %v3713 = vpack.c.b16 %v3531, %v3529
        %v3714 = vpack.c.b16 %v3534, %v3532
        %v3715 = vpack.c.b16 %v3535, %v3533
        %v3716 = vpack.c.b16 %v3538, %v3536
        %v3717 = vpack.c.b16 %v3539, %v3537
        %v3718 = vpack.c.b16 %v3542, %v3540
        %v3719 = vpack.c.b16 %v3543, %v3541
        %v3720 = vpack.c.b16 %v3546, %v3544
        %v3721 = vpack.c.b16 %v3547, %v3545
        %v3722 = vpack.c.b16 %v3550, %v3548
        %v3723 = vpack.c.b16 %v3551, %v3549
        %v3724 = vpack.c.b16 %v3554, %v3552
        %v3725 = vpack.c.b16 %v3555, %v3553
        %v3726 = vpack.c.b16 %v3558, %v3556
        %v3727 = vpack.c.b16 %v3559, %v3557
        %v3728 = vpack.c.b16 %v3562, %v3560
        %v3729 = vpack.c.b16 %v3563, %v3561
        %v3730 = vpack.c.b16 %v3566, %v3564
        %v3731 = vpack.c.b16 %v3567, %v3565
        %v3732 = vpack.c.b16 %v3570, %v3568
        %v3733 = vpack.c.b16 %v3571, %v3569
        %v3734 = vpack.c.b16 %v3574, %v3572
        %v3735 = vpack.c.b16 %v3575, %v3573
        %v3736 = vpack.c.b16 %v3578, %v3576
        %v3737 = vpack.c.b16 %v3579, %v3577
        %v3738 = vpack.c.b16 %v3582, %v3580
        %v3739 = vpack.c.b16 %v3583, %v3581
        %v3740 = vpack.c.b16 %v3586, %v3584
        %v3741 = vpack.c.b16 %v3587, %v3585
        %v3742 = vpack.c.b16 %v3590, %v3588
        %v3743 = vpack.c.b16 %v3591, %v3589
        %v3744 = vpack.c.b16 %v3594, %v3592
        %v3745 = vpack.c.b16 %v3595, %v3593
        %v3746 = vpack.c.b16 %v3598, %v3596
        %v3747 = vpack.c.b16 %v3599, %v3597
        %v3748 = vpack.c.b16 %v3602, %v3600
        %v3749 = vpack.c.b16 %v3603, %v3601
        %v3750 = vpack.c.b16 %v3606, %v3604
        %v3751 = vpack.c.b16 %v3607, %v3605
        %v3752 = vpack.c.b16 %v3610, %v3608
        %v3753 = vpack.c.b16 %v3611, %v3609
        %v3754 = vpack.c.b16 %v3614, %v3612
        %v3755 = vpack.c.b16 %v3615, %v3613
        %v3756 = vpack.c.b16 %v3618, %v3616
        %v3757 = vpack.c.b16 %v3619, %v3617
        %v3758 = vpack.c.b16 %v3622, %v3620
        %v3759 = vpack.c.b16 %v3623, %v3621
        %v3760 = vpack.c.b16 %v3626, %v3624
        %v3761 = vpack.c.b16 %v3627, %v3625
        %v3762 = vpack.c.b16 %v3630, %v3628
        %v3763 = vpack.c.b16 %v3631, %v3629
        %v3764 = vpack.c.b16 %v3634, %v3632
        %v3765 = vpack.c.b16 %v3635, %v3633
        %v3766 = vpack.c.b16 %v3638, %v3636
        %v3767 = vpack.c.b16 %v3639, %v3637
        %3896 = vmatpush.bf16.msra.mxu0 %v3654
        %3897 = vmatpush.bf16.msra.mxu0 %v3652
        %3898 = vmatpush.bf16.msra.mxu0 %v3650
        %3899 = vmatpush.bf16.msra.mxu0 %v3648
        %3900 = vmatpush.bf16.msra.mxu0 %v3646
        %3901 = vmatpush.bf16.msra.mxu0 %v3644
        %3902 = vmatpush.bf16.msra.mxu0 %v3642
        %3903 = vmatpush.bf16.msra.mxu0 %v3640
        %3904 = vmatmul.bf16.gmra.mxu0 %v3243
        %v3905 = vpop.f32.mrf.mxu0
        %v3906 = vadd.f32 %v3252, %v3905
        %v3907 = vpop.f32.mrf.mxu0
        %v3908 = vadd.f32 %v3252, %v3907
        %3909 = vdwg.mxu0
        %3910 = vmatpush.bf16.msra.mxu0 %v3670
        %3911 = vmatpush.bf16.msra.mxu0 %v3668
        %3912 = vmatpush.bf16.msra.mxu0 %v3666
        %3913 = vmatpush.bf16.msra.mxu0 %v3664
        %3914 = vmatpush.bf16.msra.mxu0 %v3662
        %3915 = vmatpush.bf16.msra.mxu0 %v3660
        %3916 = vmatpush.bf16.msra.mxu0 %v3658
        %3917 = vmatpush.bf16.msra.mxu0 %v3656
        %3918 = vmatmul.bf16.gmra.mxu0 %v3244
        %v3919 = vpop.f32.mrf.mxu0
        %v3920 = vadd.f32 %v3906, %v3919
        %v3921 = vpop.f32.mrf.mxu0
        %v3922 = vadd.f32 %v3908, %v3921
        %3923 = vdwg.mxu0
        %3924 = vmatpush.bf16.msra.mxu0 %v3686
        %3925 = vmatpush.bf16.msra.mxu0 %v3684
        %3926 = vmatpush.bf16.msra.mxu0 %v3682
        %3927 = vmatpush.bf16.msra.mxu0 %v3680
        %3928 = vmatpush.bf16.msra.mxu0 %v3678
        %3929 = vmatpush.bf16.msra.mxu0 %v3676
        %3930 = vmatpush.bf16.msra.mxu0 %v3674
        %3931 = vmatpush.bf16.msra.mxu0 %v3672
        %3932 = vmatmul.bf16.gmra.mxu0 %v3245
        %v3933 = vpop.f32.mrf.mxu0
        %v3934 = vadd.f32 %v3920, %v3933
        %v3935 = vpop.f32.mrf.mxu0
        %v3936 = vadd.f32 %v3922, %v3935
        %3937 = vdwg.mxu0
        %3938 = vmatpush.bf16.msra.mxu0 %v3702
        %3939 = vmatpush.bf16.msra.mxu0 %v3700
        %3940 = vmatpush.bf16.msra.mxu0 %v3698
        %3941 = vmatpush.bf16.msra.mxu0 %v3696
        %3942 = vmatpush.bf16.msra.mxu0 %v3694
        %3943 = vmatpush.bf16.msra.mxu0 %v3692
        %3944 = vmatpush.bf16.msra.mxu0 %v3690
        %3945 = vmatpush.bf16.msra.mxu0 %v3688
        %3946 = vmatmul.bf16.gmra.mxu0 %v3246
        %v3947 = vpop.f32.mrf.mxu0
        %v3948 = vadd.f32 %v3934, %v3947
        %v3949 = vpop.f32.mrf.mxu0
        %v3950 = vadd.f32 %v3936, %v3949
        %3951 = vdwg.mxu0
        %3952 = vmatpush.bf16.msra.mxu0 %v3718
        %3953 = vmatpush.bf16.msra.mxu0 %v3716
        %3954 = vmatpush.bf16.msra.mxu0 %v3714
        %3955 = vmatpush.bf16.msra.mxu0 %v3712
        %3956 = vmatpush.bf16.msra.mxu0 %v3710
        %3957 = vmatpush.bf16.msra.mxu0 %v3708
        %3958 = vmatpush.bf16.msra.mxu0 %v3706
        %3959 = vmatpush.bf16.msra.mxu0 %v3704
        %3960 = vmatmul.bf16.gmra.mxu0 %v3247
        %v3961 = vpop.f32.mrf.mxu0
        %v3962 = vadd.f32 %v3948, %v3961
        %v3963 = vpop.f32.mrf.mxu0
        %v3964 = vadd.f32 %v3950, %v3963
        %3965 = vdwg.mxu0
        %3966 = vmatpush.bf16.msra.mxu0 %v3734
        %3967 = vmatpush.bf16.msra.mxu0 %v3732
        %3968 = vmatpush.bf16.msra.mxu0 %v3730
        %3969 = vmatpush.bf16.msra.mxu0 %v3728
        %3970 = vmatpush.bf16.msra.mxu0 %v3726
        %3971 = vmatpush.bf16.msra.mxu0 %v3724
        %3972 = vmatpush.bf16.msra.mxu0 %v3722
        %3973 = vmatpush.bf16.msra.mxu0 %v3720
        %3974 = vmatmul.bf16.gmra.mxu0 %v3248
        %v3975 = vpop.f32.mrf.mxu0
        %v3976 = vadd.f32 %v3962, %v3975
        %v3977 = vpop.f32.mrf.mxu0
        %v3978 = vadd.f32 %v3964, %v3977
        %3979 = vdwg.mxu0
        %3980 = vmatpush.bf16.msra.mxu0 %v3750
        %3981 = vmatpush.bf16.msra.mxu0 %v3748
        %3982 = vmatpush.bf16.msra.mxu0 %v3746
        %3983 = vmatpush.bf16.msra.mxu0 %v3744
        %3984 = vmatpush.bf16.msra.mxu0 %v3742
        %3985 = vmatpush.bf16.msra.mxu0 %v3740
        %3986 = vmatpush.bf16.msra.mxu0 %v3738
        %3987 = vmatpush.bf16.msra.mxu0 %v3736
        %3988 = vmatmul.bf16.gmra.mxu0 %v3249
        %v3989 = vpop.f32.mrf.mxu0
        %v3990 = vadd.f32 %v3976, %v3989
        %v3991 = vpop.f32.mrf.mxu0
        %v3992 = vadd.f32 %v3978, %v3991
        %3993 = vdwg.mxu0
        %3994 = vmatpush.bf16.msra.mxu0 %v3766
        %3995 = vmatpush.bf16.msra.mxu0 %v3764
        %3996 = vmatpush.bf16.msra.mxu0 %v3762
        %3997 = vmatpush.bf16.msra.mxu0 %v3760
        %3998 = vmatpush.bf16.msra.mxu0 %v3758
        %3999 = vmatpush.bf16.msra.mxu0 %v3756
        %4000 = vmatpush.bf16.msra.mxu0 %v3754
        %4001 = vmatpush.bf16.msra.mxu0 %v3752
        %4002 = vmatmul.bf16.gmra.mxu0 %v3250
        %v4003 = vpop.f32.mrf.mxu0
        %v4004 = vadd.f32 %v3990, %v4003
        %v4005 = vpop.f32.mrf.mxu0
        %v4006 = vadd.f32 %v3992, %v4005
        %4007 = vdwg.mxu0
        %4008 = vmatpush.bf16.msra.mxu0 %v3655
        %4009 = vmatpush.bf16.msra.mxu0 %v3653
        %4010 = vmatpush.bf16.msra.mxu0 %v3651
        %4011 = vmatpush.bf16.msra.mxu0 %v3649
        %4012 = vmatpush.bf16.msra.mxu0 %v3647
        %4013 = vmatpush.bf16.msra.mxu0 %v3645
        %4014 = vmatpush.bf16.msra.mxu0 %v3643
        %4015 = vmatpush.bf16.msra.mxu0 %v3641
        %4016 = vmatmul.bf16.gmra.mxu0 %v3243
        %v4017 = vpop.f32.mrf.mxu0
        %v4018 = vadd.f32 %v3253, %v4017
        %v4019 = vpop.f32.mrf.mxu0
        %v4020 = vadd.f32 %v3253, %v4019
        %4021 = vdwg.mxu0
        %4022 = vmatpush.bf16.msra.mxu0 %v3671
        %4023 = vmatpush.bf16.msra.mxu0 %v3669
        %4024 = vmatpush.bf16.msra.mxu0 %v3667
        %4025 = vmatpush.bf16.msra.mxu0 %v3665
        %4026 = vmatpush.bf16.msra.mxu0 %v3663
        %4027 = vmatpush.bf16.msra.mxu0 %v3661
        %4028 = vmatpush.bf16.msra.mxu0 %v3659
        %4029 = vmatpush.bf16.msra.mxu0 %v3657
        %4030 = vmatmul.bf16.gmra.mxu0 %v3244
        %v4031 = vpop.f32.mrf.mxu0
        %v4032 = vadd.f32 %v4018, %v4031
        %v4033 = vpop.f32.mrf.mxu0
        %v4034 = vadd.f32 %v4020, %v4033
        %4035 = vdwg.mxu0
        %4036 = vmatpush.bf16.msra.mxu0 %v3687
        %4037 = vmatpush.bf16.msra.mxu0 %v3685
        %4038 = vmatpush.bf16.msra.mxu0 %v3683
        %4039 = vmatpush.bf16.msra.mxu0 %v3681
        %4040 = vmatpush.bf16.msra.mxu0 %v3679
        %4041 = vmatpush.bf16.msra.mxu0 %v3677
        %4042 = vmatpush.bf16.msra.mxu0 %v3675
        %4043 = vmatpush.bf16.msra.mxu0 %v3673
        %4044 = vmatmul.bf16.gmra.mxu0 %v3245
        %v4045 = vpop.f32.mrf.mxu0
        %v4046 = vadd.f32 %v4032, %v4045
        %v4047 = vpop.f32.mrf.mxu0
        %v4048 = vadd.f32 %v4034, %v4047
        %4049 = vdwg.mxu0
        %4050 = vmatpush.bf16.msra.mxu0 %v3703
        %4051 = vmatpush.bf16.msra.mxu0 %v3701
        %4052 = vmatpush.bf16.msra.mxu0 %v3699
        %4053 = vmatpush.bf16.msra.mxu0 %v3697
        %4054 = vmatpush.bf16.msra.mxu0 %v3695
        %4055 = vmatpush.bf16.msra.mxu0 %v3693
        %4056 = vmatpush.bf16.msra.mxu0 %v3691
        %4057 = vmatpush.bf16.msra.mxu0 %v3689
        %4058 = vmatmul.bf16.gmra.mxu0 %v3246
        %v4059 = vpop.f32.mrf.mxu0
        %v4060 = vadd.f32 %v4046, %v4059
        %v4061 = vpop.f32.mrf.mxu0
        %v4062 = vadd.f32 %v4048, %v4061
        %4063 = vdwg.mxu0
        %4064 = vmatpush.bf16.msra.mxu0 %v3719
        %4065 = vmatpush.bf16.msra.mxu0 %v3717
        %4066 = vmatpush.bf16.msra.mxu0 %v3715
        %4067 = vmatpush.bf16.msra.mxu0 %v3713
        %4068 = vmatpush.bf16.msra.mxu0 %v3711
        %4069 = vmatpush.bf16.msra.mxu0 %v3709
        %4070 = vmatpush.bf16.msra.mxu0 %v3707
        %4071 = vmatpush.bf16.msra.mxu0 %v3705
        %4072 = vmatmul.bf16.gmra.mxu0 %v3247
        %v4073 = vpop.f32.mrf.mxu0
        %v4074 = vadd.f32 %v4060, %v4073
        %v4075 = vpop.f32.mrf.mxu0
        %v4076 = vadd.f32 %v4062, %v4075
        %4077 = vdwg.mxu0
        %4078 = vmatpush.bf16.msra.mxu0 %v3735
        %4079 = vmatpush.bf16.msra.mxu0 %v3733
        %4080 = vmatpush.bf16.msra.mxu0 %v3731
        %4081 = vmatpush.bf16.msra.mxu0 %v3729
        %4082 = vmatpush.bf16.msra.mxu0 %v3727
        %4083 = vmatpush.bf16.msra.mxu0 %v3725
        %4084 = vmatpush.bf16.msra.mxu0 %v3723
        %4085 = vmatpush.bf16.msra.mxu0 %v3721
        %4086 = vmatmul.bf16.gmra.mxu0 %v3248
        %v4087 = vpop.f32.mrf.mxu0
        %v4088 = vadd.f32 %v4074, %v4087
        %v4089 = vpop.f32.mrf.mxu0
        %v4090 = vadd.f32 %v4076, %v4089
        %4091 = vdwg.mxu0
        %4092 = vmatpush.bf16.msra.mxu0 %v3751
        %4093 = vmatpush.bf16.msra.mxu0 %v3749
        %4094 = vmatpush.bf16.msra.mxu0 %v3747
        %4095 = vmatpush.bf16.msra.mxu0 %v3745
        %4096 = vmatpush.bf16.msra.mxu0 %v3743
        %4097 = vmatpush.bf16.msra.mxu0 %v3741
        %4098 = vmatpush.bf16.msra.mxu0 %v3739
        %4099 = vmatpush.bf16.msra.mxu0 %v3737
        %4100 = vmatmul.bf16.gmra.mxu0 %v3249
        %v4101 = vpop.f32.mrf.mxu0
        %v4102 = vadd.f32 %v4088, %v4101
        %v4103 = vpop.f32.mrf.mxu0
        %v4104 = vadd.f32 %v4090, %v4103
        %4105 = vdwg.mxu0
        %4106 = vmatpush.bf16.msra.mxu0 %v3767
        %4107 = vmatpush.bf16.msra.mxu0 %v3765
        %4108 = vmatpush.bf16.msra.mxu0 %v3763
        %4109 = vmatpush.bf16.msra.mxu0 %v3761
        %4110 = vmatpush.bf16.msra.mxu0 %v3759
        %4111 = vmatpush.bf16.msra.mxu0 %v3757
        %4112 = vmatpush.bf16.msra.mxu0 %v3755
        %4113 = vmatpush.bf16.msra.mxu0 %v3753
        %4114 = vmatmul.bf16.gmra.mxu0 %v3250
        %v4115 = vpop.f32.mrf.mxu0
        %v4116 = vadd.f32 %v4102, %v4115
        %v4117 = vpop.f32.mrf.mxu0
        %v4118 = vadd.f32 %v4104, %v4117
        %4119 = vdwg.mxu0
        %v4120 = vadd.f32 %v2081, %v4004
        %v4121 = vadd.f32 %v2082, %v4116
        %v4122 = vadd.f32 %v2083, %v4006
        %v4123 = vadd.f32 %v2084, %v4118
        %s4124 = scalar_lea.vmem %s466, 7
        %v4125 = vld [vmem:[%s4124] ss:$8 sm:$0x3]
        %s4126 = scalar_lea.vmem %s466, 16
        %v4127 = vld [vmem:[%s4126] ss:$8 sm:$0x3]
        %v4128 = vadd.f32 %v4120, %v4121
        %4129 = vadd.xlane.f32.xlu0 %v4128
        %v4130 = vpop.xlane.xlu0 %4129
        %v4131 = vadd.f32 %v4122, %v4123
        %4132 = vadd.xlane.f32.xlu0 %v4131
        %v4133 = vpop.xlane.xlu0 %4132
        %v4134 = vmul.f32 %v4130, %v2022
        %v4135 = vmul.f32 %v4133, %v2022
        %v4136 = vsub.f32 %v4120, %v4134
        %v4137 = vsub.f32 %v4121, %v4134
        %v4138 = vsub.f32 %v4122, %v4135
        %v4139 = vsub.f32 %v4123, %v4135
        %v4140 = vmul.f32 %v4136, %v4136
        %v4141 = vmul.f32 %v4137, %v4137
        %v4142 = vmul.f32 %v4138, %v4138
        %v4143 = vmul.f32 %v4139, %v4139
        %v4144 = vadd.f32 %v4140, %v4141
        %4145 = vadd.xlane.f32.xlu0 %v4144
        %v4146 = vpop.xlane.xlu0 %4145
        %v4147 = vadd.f32 %v4142, %v4143
        %4148 = vadd.xlane.f32.xlu0 %v4147
        %v4149 = vpop.xlane.xlu0 %4148
        %v4150 = vmul.f32 %v4146, %v2022
        %v4151 = vmul.f32 %v4149, %v2022
        %v4152 = vadd.f32 %v4150, 1e-05
        %v4153 = vadd.f32 %v4151, 1e-05
        %v4154 = vrsqrt.pop %v4152
        %v4155 = vmul.f32 %v4154, %v4152
        %v4156 = vmul.f32 %v4155, %v4154
        %v4157 = vmul.f32 0.5, %v4156
        %v4158 = vsub.f32 1.5, %v4157
        %v4159 = vmul.f32 %v4154, %v4158
        %vm4160 = vweird.f32 %v4152
        %vm4161 = vweird.f32 %v4154
        %vm4162 = vmor %vm4160, %vm4161
        %v4163 = vsel %vm4162, %v4154, %v4159
        %v4164 = vrsqrt.pop %v4153
        %v4165 = vmul.f32 %v4164, %v4153
        %v4166 = vmul.f32 %v4165, %v4164
        %v4167 = vmul.f32 0.5, %v4166
        %v4168 = vsub.f32 1.5, %v4167
        %v4169 = vmul.f32 %v4164, %v4168
        %vm4170 = vweird.f32 %v4153
        %vm4171 = vweird.f32 %v4164
        %vm4172 = vmor %vm4170, %vm4171
        %v4173 = vsel %vm4172, %v4164, %v4169
        %v4174 = vmul.f32 %v4136, %v4163
        %v4175 = vmul.f32 %v4137, %v4163
        %v4176 = vmul.f32 %v4138, %v4173
        %v4177 = vmul.f32 %v4139, %v4173
        %v4179 = vperm.slane %v4125, 0
        %v4180 = vperm.slane %v4125, 1
        %v4183 = vmul.f32 %v4174, %v4179
        %v4184 = vmul.f32 %v4175, %v4180
        %v4185 = vmul.f32 %v4176, %v4179
        %v4186 = vmul.f32 %v4177, %v4180
        %v4188 = vperm.slane %v4127, 0
        %v4189 = vperm.slane %v4127, 1
        %v4192 = vadd.f32 %v4183, %v4188
        %v4193 = vadd.f32 %v4184, %v4189
        %v4194 = vadd.f32 %v4185, %v4188
        %v4195 = vadd.f32 %v4186, %v4189
        %p4196 = scmp.ne.s32.totalorder %s28, 3
        // Predicated region
        $region77: #{transformer_forward.2} parent=51 // pred_check
          %p4197 = pneg %p4196
        $region78: #{transformer_forward.2} parent=51 // pred_check_branch
          %4199 = sbr.rel (%p4197) target = $region80
        $region79: #{transformer_forward.2} parent=51 // pred_region
          %4200 = vst [vmem:[%s8] sm:$0xff] %v4192
          %4201 = vst [vmem:[%s8 + $0x8] sm:$0xff] %v4193
          %4202 = vst [vmem:[%s8 + $0x10] sm:$0xff] %v4194
          %4203 = vst [vmem:[%s8 + $0x18] sm:$0xff] %v4195
        $region80: #{transformer_forward.2} parent=51 // pred_fallthru
          _
        %p4204 = scmp.eq.s32.totalorder %s28, 3
        // Predicated region
        $region81: #{transformer_forward.2} parent=51 // pred_check
          %p4205 = pneg %p4204
        $region82: #{transformer_forward.2} parent=51 // pred_check_branch
          %4207 = sbr.rel (%p4205) target = $region84
        $region83: #{transformer_forward.2} parent=51 // pred_region
          %v4208 = vld [vmem:[#allocation9] ss:$2 sm:$0x3]
          %s4209 = scalar_lea.vmem [#allocation9], 1
          %v4210 = vld [vmem:[%s4209] ss:$2 sm:$0x3]
          %v4211 = vadd.f32 %v4192, %v4193
          %4212 = vadd.xlane.f32.xlu0 %v4211
          %v4213 = vpop.xlane.xlu0 %4212
          %v4214 = vadd.f32 %v4194, %v4195
          %4215 = vadd.xlane.f32.xlu0 %v4214
          %v4216 = vpop.xlane.xlu0 %4215
          %v4217 = vmul.f32 %v4213, %v2022
          %v4218 = vmul.f32 %v4216, %v2022
          %v4219 = vsub.f32 %v4192, %v4217
          %v4220 = vsub.f32 %v4193, %v4217
          %v4221 = vsub.f32 %v4194, %v4218
          %v4222 = vsub.f32 %v4195, %v4218
          %v4223 = vmul.f32 %v4219, %v4219
          %v4224 = vmul.f32 %v4220, %v4220
          %v4225 = vmul.f32 %v4221, %v4221
          %v4226 = vmul.f32 %v4222, %v4222
          %v4227 = vadd.f32 %v4223, %v4224
          %4228 = vadd.xlane.f32.xlu0 %v4227
          %v4229 = vpop.xlane.xlu0 %4228
          %v4230 = vadd.f32 %v4225, %v4226
          %4231 = vadd.xlane.f32.xlu0 %v4230
          %v4232 = vpop.xlane.xlu0 %4231
          %v4233 = vmul.f32 %v4229, %v2022
          %v4234 = vmul.f32 %v4232, %v2022
          %v4235 = vadd.f32 %v4233, 1e-05
          %v4236 = vadd.f32 %v4234, 1e-05
          %v4237 = vrsqrt.pop %v4235
          %v4238 = vmul.f32 %v4237, %v4235
          %v4239 = vmul.f32 %v4238, %v4237
          %v4240 = vmul.f32 0.5, %v4239
          %v4241 = vsub.f32 1.5, %v4240
          %v4242 = vmul.f32 %v4237, %v4241
          %vm4243 = vweird.f32 %v4235
          %vm4244 = vweird.f32 %v4237
          %vm4245 = vmor %vm4243, %vm4244
          %v4246 = vsel %vm4245, %v4237, %v4242
          %v4247 = vrsqrt.pop %v4236
          %v4248 = vmul.f32 %v4247, %v4236
          %v4249 = vmul.f32 %v4248, %v4247
          %v4250 = vmul.f32 0.5, %v4249
          %v4251 = vsub.f32 1.5, %v4250
          %v4252 = vmul.f32 %v4247, %v4251
          %vm4253 = vweird.f32 %v4236
          %vm4254 = vweird.f32 %v4247
          %vm4255 = vmor %vm4253, %vm4254
          %v4256 = vsel %vm4255, %v4247, %v4252
          %v4257 = vmul.f32 %v4219, %v4246
          %v4258 = vmul.f32 %v4220, %v4246
          %v4259 = vmul.f32 %v4221, %v4256
          %v4260 = vmul.f32 %v4222, %v4256
          %v4262 = vperm.slane %v4208, 0
          %v4263 = vperm.slane %v4208, 1
          %v4266 = vmul.f32 %v4257, %v4262
          %v4267 = vmul.f32 %v4258, %v4263
          %v4268 = vmul.f32 %v4259, %v4262
          %v4269 = vmul.f32 %v4260, %v4263
          %v4271 = vperm.slane %v4210, 0
          %v4272 = vperm.slane %v4210, 1
          %v4275 = vadd.f32 %v4266, %v4271
          %v4276 = vadd.f32 %v4267, %v4272
          %v4277 = vadd.f32 %v4268, %v4271
          %v4278 = vadd.f32 %v4269, %v4272
          %4279 = vst [vmem:[%s8] sm:$0xff] %v4275
          %4280 = vst [vmem:[%s8 + $0x8] sm:$0xff] %v4276
          %4281 = vst [vmem:[%s8 + $0x10] sm:$0xff] %v4277
          %4282 = vst [vmem:[%s8 + $0x18] sm:$0xff] %v4278
        $region84: #{transformer_forward.2} parent=51 // pred_fallthru
          _
        // Predicated region
        $region85: #{transformer_forward.2} parent=51 // pred_check
          %p4283 = pneg %p234
        $region86: #{transformer_forward.2} parent=51 // pred_check_branch
          %4285 = sbr.rel (%p4283) target = $region88
        $region87: #{transformer_forward.2} parent=51 // pred_region
          _
        $region88: #{transformer_forward.2} parent=51 // pred_fallthru
          _
        // Predicated region
        $region89: #{transformer_forward.2} parent=51 // pred_check
          %p4286 = pneg %p234
        $region90: #{transformer_forward.2} parent=51 // pred_check_branch
          %4288 = sbr.rel (%p4286) target = $region92
        $region91: #{transformer_forward.2} parent=51 // pred_region
          _
        $region92: #{transformer_forward.2} parent=51 // pred_fallthru
          _
      $region52: #{transformer_forward.2} parent=5 // pred_fallthru
        _
      %p4289 = scmp.le.s32.totalorder 2, %s23
      // Predicated region
      $region93: #{transformer_forward.2} parent=5 // pred_check
        %p4290 = pneg %p4289
      $region94: #{transformer_forward.2} parent=5 // pred_check_branch
        %4292 = sbr.rel (%p4290) target = $region96
      $region95: #{transformer_forward.2} parent=5 // pred_region
        %s4293 = ssub.s32 %s23, 2
      $region96: #{transformer_forward.2} parent=5 // pred_fallthru
        _
    $region6: #{transformer_forward.2} parent=1 // loop_footer
      %s27 = sadd.s32 1, %s23
    $region7: #{transformer_forward.2} parent=1 // loop_footer_branch
      %22 = sbr.rel target = $region3
    $region8: #{transformer_forward.2} parent=1 // loop_exit
      _
    %4294 = vsyncpa [#allocation3], 1
    %s4295 = scalar_lea.sflag [#allocation3], 1
    %4296 = vsyncpa %s4295, 1
    %4297 = vsyncpa [#allocation5], 1
    %s4298 = scalar_lea.sflag [#allocation5], 1
    %4299 = vsyncpa %s4298, 1
    %4300 = vsyncpa [#allocation8], 1
    %s4301 = scalar_lea.sflag [#allocation8], 1
    %4302 = vsyncpa %s4301, 1

// kernel: transformer_forward.3
$region0: #{transformer_forward.3}
  #allocation0 [shape = 'u32[]', space=smem, size = 0x4, offset = 0x4, fixed_abs, tag = 'smem constant byte address 0x4 - core index']
  #allocation1 [shape = 'u32[72,128]{1,0:T(1,128)}', space=vmem, size = 0x9000, scoped, tag = 'internal scratch']
  #allocation2 [shape = 'f32[16,256]{1,0:T(8,128)}', space=vmem, size = 0x4000, scoped, tag = 'scratch operand']
  %s0 = inlined_call_operand.vmem [shape: f32[16,256], index: 0, kind: input, shape index: {}]
  %s1 = inlined_call_operand.vmem [shape: f32[16,256], index: 1, kind: input, shape index: {}]
  %s2 = inlined_call_operand.vmem [shape: f32[16,16], index: 2, kind: input, shape index: {}]
  %s3 = inlined_call_operand.vmem [shape: f32[16,16], index: 3, kind: input, shape index: {}]
  %s4 = inlined_call_operand.hbm [shape: bf16[4,8,256,256], index: 4, kind: input, shape index: {}]
  %s5 = inlined_call_operand.hbm [shape: bf16[4,256,1024], index: 5, kind: input, shape index: {}]
  %s6 = inlined_call_operand.hbm [shape: bf16[4,1024,256], index: 6, kind: input, shape index: {}]
  %s7 = inlined_call_operand.vmem [shape: f32[4,15,256], index: 7, kind: input, shape index: {}]
  %s8 = inlined_call_operand.hbm [shape: f32[4,1,1024], index: 8, kind: input, shape index: {}]
  %s9 = inlined_call_operand.hbm [shape: f32[2,256], index: 9, kind: input, shape index: {}]
  %s10 = inlined_call_operand.hbm [shape: bf16[256,128], index: 10, kind: input, shape index: {}]
  %s11 = inlined_call_operand.hbm [shape: f32[1,128], index: 11, kind: input, shape index: {}]
  %s12 = inlined_call_operand.hbm [shape: f32[16,128], index: 12, kind: output, shape index: {}]
  %s13 = sld [smem:[#allocation0]]
  $region117: #{transformer_forward.3} parent=0
    _
  %s15 = ssub.s32 1, %s13
  %s16 = scalar_select 0, %s15, %s13
  $region1: #{transformer_forward.3} parent=0
    #allocation3 [shape = 'u8[2097152]{0}', space=vmem, size = 0x200000, scoped, tag = 'input window, operand 4']
    #allocation4 [shape = 's32[2]{0}', space=sflag, size = 0x8, scoped, tag = 'scoped memory for transformer_forward.3']
    #allocation5 [shape = 's32[2]{0}', space=sflag, size = 0x8, scoped, tag = 'scoped memory for transformer_forward.3']
    #allocation6 [shape = 'u8[1048576]{0}', space=vmem, size = 0x100000, scoped, tag = 'input window, operand 5']
    #allocation7 [shape = 's32[2]{0}', space=sflag, size = 0x8, scoped, tag = 'scoped memory for transformer_forward.3']
    #allocation8 [shape = 'u8[1048576]{0}', space=vmem, size = 0x100000, scoped, tag = 'input window, operand 6']
    #allocation9 [shape = 'u8[8192]{0}', space=vmem, size = 0x2000, scoped, tag = 'input window, operand 8']
    #allocation10 [shape = 's32[2]{0}', space=sflag, size = 0x8, scoped, tag = 'scoped memory for transformer_forward.3']
    #allocation11 [shape = 'u8[2048]{0}', space=vmem, size = 0x800, scoped, tag = 'input window, operand 9, single buffered']
    #allocation12 [shape = 'u8[65536]{0}', space=vmem, size = 0x10000, scoped, tag = 'input window, operand 10, single buffered']
    #allocation13 [shape = 's32[1]{0}', space=sflag, size = 0x4, scoped, tag = 'scoped memory for transformer_forward.3']
    #allocation14 [shape = 'u8[512]{0}', space=vmem, size = 0x400, scoped, tag = 'input window, operand 11, single buffered']
    #allocation15 [shape = 'u8[8192]{0}', space=vmem, size = 0x2000, scoped, tag = 'output window, operand 0, single buffered']
    %17 = vsyncpa [#allocation4], 0
    %s18 = scalar_lea.sflag [#allocation4], 1
    %19 = vsyncpa %s18, 0
    %20 = vsyncpa [#allocation7], 0
    %s21 = scalar_lea.sflag [#allocation7], 1
    %22 = vsyncpa %s21, 0
    %23 = vsyncpa [#allocation10], 0
    %s24 = scalar_lea.sflag [#allocation10], 1
    %25 = vsyncpa %s24, 0
    %26 = vsyncpa [#allocation13], 0
    %27 = vsyncpa [#allocation5], 0
    loop: start=0, step=1, limit=6
    $region2: #{transformer_forward.3} parent=1 // loop_pre_header
      _
    $region3: #{transformer_forward.3} parent=1 // loop_header
      %s29 = sphi 0, %s33
      %p30 = scmp.ge.s32.totalorder %s29, 6
      %s37 = sphi 0, %s37
      %s39 = sphi 0, %s37
      %s40 = sphi 0, %s39
      %s54 = sphi 0, %s40
      %s58 = sphi 0, %s58
      %s60 = sphi 0, %s58
      %s61 = sphi 0, %s60
      %s75 = sphi 0, %s61
      %s79 = sphi 0, %s79
      %s81 = sphi 0, %s79
      %s82 = sphi 0, %s81
      %s96 = sphi 0, %s82
      %s100 = sphi 0, %s100
      %s102 = sphi 0, %s100
      %s103 = sphi 0, %s102
      %s117 = sphi 0, %s103
      %s123 = sphi 0, %s125
      %s126 = sphi 0, %s123
      %s127 = sphi 0, %s126
      %s143 = sphi 0, %s127
      %s149 = sphi 0, %s151
      %s152 = sphi 0, %s149
      %s153 = sphi 0, %s152
      %s169 = sphi 0, %s153
      %s175 = sphi 0, %s177
      %s178 = sphi 0, %s175
      %s179 = sphi 0, %s178
      %s195 = sphi 0, %s179
      %s201 = sphi 0, %s203
      %s204 = sphi 0, %s201
      %s205 = sphi 0, %s204
      %s221 = sphi 0, %s205
      %s227 = sphi 0, %s229
      %s230 = sphi 0, %s227
      %s231 = sphi 0, %s230
      %s247 = sphi 0, %s231
      %s251 = sphi 0, %s251
      %s253 = sphi 0, %s251
      %s254 = sphi 0, %s253
      %s268 = sphi 0, %s254
      %s272 = sphi 0, %s272
      %s274 = sphi 0, %s272
      %s275 = sphi 0, %s274
      %s289 = sphi 0, %s275
      %s293 = sphi 0, %s293
      %s295 = sphi 0, %s293
      %s296 = sphi 0, %s295
      %s310 = sphi 0, %s296
      %s314 = sphi 0, %s314
      %s316 = sphi 0, %s314
      %s317 = sphi 0, %s316
      %s331 = sphi 0, %s317
    $region4: #{transformer_forward.3} parent=1 // loop_header_branch
      %32 = sbr.rel (%p30) target = $region8
    $region5: #{transformer_forward.3} parent=1 // loop_body
      %s34 = ssub.s32 %s29, 1
      %s35 = ssub.s32 %s29, 2
      %s36 = sadd.s32 %s29, 1
      %s38 = sadd.s32 %s37, 1
      %p41 = scmp.eq.s32.totalorder %s29, 3
      %p42 = scmp.ne.s32.totalorder %s37, %s39
      %p43 = scmp.eq.s32.totalorder %s29, 0
      %p44 = por %p42, %p43
      %p45 = scmp.ne.s32.totalorder %s37, %s39
      %p46 = scmp.eq.s32.totalorder %s34, 3
      %p47 = por %p45, %p46
      %p48 = scmp.ne.s32.totalorder %s39, %s40
      %p49 = scmp.eq.s32.totalorder %s34, 0
      %p50 = por %p48, %p49
      %p51 = scmp.ne.s32.totalorder %s39, %s40
      %p52 = scmp.eq.s32.totalorder %s35, 3
      %p53 = por %p51, %p52
      %p55 = scmp.ne.s32.totalorder %s40, %s54
      %p56 = scmp.eq.s32.totalorder %s35, 0
      %p57 = por %p55, %p56
      %s59 = sadd.s32 %s58, 1
      %p62 = scmp.eq.s32.totalorder %s29, 3
      %p63 = scmp.ne.s32.totalorder %s58, %s60
      %p64 = scmp.eq.s32.totalorder %s29, 0
      %p65 = por %p63, %p64
      %p66 = scmp.ne.s32.totalorder %s58, %s60
      %p67 = scmp.eq.s32.totalorder %s34, 3
      %p68 = por %p66, %p67
      %p69 = scmp.ne.s32.totalorder %s60, %s61
      %p70 = scmp.eq.s32.totalorder %s34, 0
      %p71 = por %p69, %p70
      %p72 = scmp.ne.s32.totalorder %s60, %s61
      %p73 = scmp.eq.s32.totalorder %s35, 3
      %p74 = por %p72, %p73
      %p76 = scmp.ne.s32.totalorder %s61, %s75
      %p77 = scmp.eq.s32.totalorder %s35, 0
      %p78 = por %p76, %p77
      %s80 = sadd.s32 %s79, 1
      %p83 = scmp.eq.s32.totalorder %s29, 3
      %p84 = scmp.ne.s32.totalorder %s79, %s81
      %p85 = scmp.eq.s32.totalorder %s29, 0
      %p86 = por %p84, %p85
      %p87 = scmp.ne.s32.totalorder %s79, %s81
      %p88 = scmp.eq.s32.totalorder %s34, 3
      %p89 = por %p87, %p88
      %p90 = scmp.ne.s32.totalorder %s81, %s82
      %p91 = scmp.eq.s32.totalorder %s34, 0
      %p92 = por %p90, %p91
      %p93 = scmp.ne.s32.totalorder %s81, %s82
      %p94 = scmp.eq.s32.totalorder %s35, 3
      %p95 = por %p93, %p94
      %p97 = scmp.ne.s32.totalorder %s82, %s96
      %p98 = scmp.eq.s32.totalorder %s35, 0
      %p99 = por %p97, %p98
      %s101 = sadd.s32 %s100, 1
      %p104 = scmp.eq.s32.totalorder %s29, 3
      %p105 = scmp.ne.s32.totalorder %s100, %s102
      %p106 = scmp.eq.s32.totalorder %s29, 0
      %p107 = por %p105, %p106
      %p108 = scmp.ne.s32.totalorder %s100, %s102
      %p109 = scmp.eq.s32.totalorder %s34, 3
      %p110 = por %p108, %p109
      %p111 = scmp.ne.s32.totalorder %s102, %s103
      %p112 = scmp.eq.s32.totalorder %s34, 0
      %p113 = por %p111, %p112
      %p114 = scmp.ne.s32.totalorder %s102, %s103
      %p115 = scmp.eq.s32.totalorder %s35, 3
      %p116 = por %p114, %p115
      %p118 = scmp.ne.s32.totalorder %s103, %s117
      %p119 = scmp.eq.s32.totalorder %s35, 0
      %p120 = por %p118, %p119
      %s121 = ssub.s32 %s29, %s36
      %p122 = scmp.eq.s32.totalorder %s121, 0
      %s124 = sadd.s32 %s123, 1
      %s125 = scalar_select %p122, %s123, %s124
      %p128 = pneg %p122
      %p129 = scmp.eq.s32.totalorder %s29, 3
      %p130 = por %p128, %p129
      %p131 = scmp.ne.s32.totalorder %s123, %s126
      %p132 = scmp.eq.s32.totalorder %s29, 0
      %p133 = por %p131, %p132
      %p134 = scmp.ne.s32.totalorder %s123, %s126
      %p135 = scmp.eq.s32.totalorder %s34, 3
      %p136 = por %p134, %p135
      %p137 = scmp.ne.s32.totalorder %s126, %s127
      %p138 = scmp.eq.s32.totalorder %s34, 0
      %p139 = por %p137, %p138
      %p140 = scmp.ne.s32.totalorder %s126, %s127
      %p141 = scmp.eq.s32.totalorder %s35, 3
      %p142 = por %p140, %p141
      %p144 = scmp.ne.s32.totalorder %s127, %s143
      %p145 = scmp.eq.s32.totalorder %s35, 0
      %p146 = por %p144, %p145
      %s147 = ssub.s32 %s29, %s36
      %p148 = scmp.eq.s32.totalorder %s147, 0
      %s150 = sadd.s32 %s149, 1
      %s151 = scalar_select %p148, %s149, %s150
      %p154 = pneg %p148
      %p155 = scmp.eq.s32.totalorder %s29, 3
      %p156 = por %p154, %p155
      %p157 = scmp.ne.s32.totalorder %s149, %s152
      %p158 = scmp.eq.s32.totalorder %s29, 0
      %p159 = por %p157, %p158
      %p160 = scmp.ne.s32.totalorder %s149, %s152
      %p161 = scmp.eq.s32.totalorder %s34, 3
      %p162 = por %p160, %p161
      %p163 = scmp.ne.s32.totalorder %s152, %s153
      %p164 = scmp.eq.s32.totalorder %s34, 0
      %p165 = por %p163, %p164
      %p166 = scmp.ne.s32.totalorder %s152, %s153
      %p167 = scmp.eq.s32.totalorder %s35, 3
      %p168 = por %p166, %p167
      %p170 = scmp.ne.s32.totalorder %s153, %s169
      %p171 = scmp.eq.s32.totalorder %s35, 0
      %p172 = por %p170, %p171
      %s173 = ssub.s32 %s29, %s36
      %p174 = scmp.eq.s32.totalorder %s173, 0
      %s176 = sadd.s32 %s175, 1
      %s177 = scalar_select %p174, %s175, %s176
      %p180 = pneg %p174
      %p181 = scmp.eq.s32.totalorder %s29, 3
      %p182 = por %p180, %p181
      %p183 = scmp.ne.s32.totalorder %s175, %s178
      %p184 = scmp.eq.s32.totalorder %s29, 0
      %p185 = por %p183, %p184
      %p186 = scmp.ne.s32.totalorder %s175, %s178
      %p187 = scmp.eq.s32.totalorder %s34, 3
      %p188 = por %p186, %p187
      %p189 = scmp.ne.s32.totalorder %s178, %s179
      %p190 = scmp.eq.s32.totalorder %s34, 0
      %p191 = por %p189, %p190
      %p192 = scmp.ne.s32.totalorder %s178, %s179
      %p193 = scmp.eq.s32.totalorder %s35, 3
      %p194 = por %p192, %p193
      %p196 = scmp.ne.s32.totalorder %s179, %s195
      %p197 = scmp.eq.s32.totalorder %s35, 0
      %p198 = por %p196, %p197
      %s199 = ssub.s32 %s29, %s36
      %p200 = scmp.eq.s32.totalorder %s199, 0
      %s202 = sadd.s32 %s201, 1
      %s203 = scalar_select %p200, %s201, %s202
      %p206 = pneg %p200
      %p207 = scmp.eq.s32.totalorder %s29, 3
      %p208 = por %p206, %p207
      %p209 = scmp.ne.s32.totalorder %s201, %s204
      %p210 = scmp.eq.s32.totalorder %s29, 0
      %p211 = por %p209, %p210
      %p212 = scmp.ne.s32.totalorder %s201, %s204
      %p213 = scmp.eq.s32.totalorder %s34, 3
      %p214 = por %p212, %p213
      %p215 = scmp.ne.s32.totalorder %s204, %s205
      %p216 = scmp.eq.s32.totalorder %s34, 0
      %p217 = por %p215, %p216
      %p218 = scmp.ne.s32.totalorder %s204, %s205
      %p219 = scmp.eq.s32.totalorder %s35, 3
      %p220 = por %p218, %p219
      %p222 = scmp.ne.s32.totalorder %s205, %s221
      %p223 = scmp.eq.s32.totalorder %s35, 0
      %p224 = por %p222, %p223
      %s225 = ssub.s32 %s29, %s36
      %p226 = scmp.eq.s32.totalorder %s225, 0
      %s228 = sadd.s32 %s227, 1
      %s229 = scalar_select %p226, %s227, %s228
      %p232 = pneg %p226
      %p233 = scmp.eq.s32.totalorder %s29, 3
      %p234 = por %p232, %p233
      %p235 = scmp.ne.s32.totalorder %s227, %s230
      %p236 = scmp.eq.s32.totalorder %s29, 0
      %p237 = por %p235, %p236
      %p238 = scmp.ne.s32.totalorder %s227, %s230
      %p239 = scmp.eq.s32.totalorder %s34, 3
      %p240 = por %p238, %p239
      %p241 = scmp.ne.s32.totalorder %s230, %s231
      %p242 = scmp.eq.s32.totalorder %s34, 0
      %p243 = por %p241, %p242
      %p244 = scmp.ne.s32.totalorder %s230, %s231
      %p245 = scmp.eq.s32.totalorder %s35, 3
      %p246 = por %p244, %p245
      %p248 = scmp.ne.s32.totalorder %s231, %s247
      %p249 = scmp.eq.s32.totalorder %s35, 0
      %p250 = por %p248, %p249
      %s252 = sadd.s32 %s251, 1
      %p255 = scmp.eq.s32.totalorder %s29, 3
      %p256 = scmp.ne.s32.totalorder %s251, %s253
      %p257 = scmp.eq.s32.totalorder %s29, 0
      %p258 = por %p256, %p257
      %p259 = scmp.ne.s32.totalorder %s251, %s253
      %p260 = scmp.eq.s32.totalorder %s34, 3
      %p261 = por %p259, %p260
      %p262 = scmp.ne.s32.totalorder %s253, %s254
      %p263 = scmp.eq.s32.totalorder %s34, 0
      %p264 = por %p262, %p263
      %p265 = scmp.ne.s32.totalorder %s253, %s254
      %p266 = scmp.eq.s32.totalorder %s35, 3
      %p267 = por %p265, %p266
      %p269 = scmp.ne.s32.totalorder %s254, %s268
      %p270 = scmp.eq.s32.totalorder %s35, 0
      %p271 = por %p269, %p270
      %s273 = sadd.s32 %s272, 1
      %p276 = scmp.eq.s32.totalorder %s29, 3
      %p277 = scmp.ne.s32.totalorder %s272, %s274
      %p278 = scmp.eq.s32.totalorder %s29, 0
      %p279 = por %p277, %p278
      %p280 = scmp.ne.s32.totalorder %s272, %s274
      %p281 = scmp.eq.s32.totalorder %s34, 3
      %p282 = por %p280, %p281
      %p283 = scmp.ne.s32.totalorder %s274, %s275
      %p284 = scmp.eq.s32.totalorder %s34, 0
      %p285 = por %p283, %p284
      %p286 = scmp.ne.s32.totalorder %s274, %s275
      %p287 = scmp.eq.s32.totalorder %s35, 3
      %p288 = por %p286, %p287
      %p290 = scmp.ne.s32.totalorder %s275, %s289
      %p291 = scmp.eq.s32.totalorder %s35, 0
      %p292 = por %p290, %p291
      %s294 = sadd.s32 %s293, 1
      %p297 = scmp.eq.s32.totalorder %s29, 3
      %p298 = scmp.ne.s32.totalorder %s293, %s295
      %p299 = scmp.eq.s32.totalorder %s29, 0
      %p300 = por %p298, %p299
      %p301 = scmp.ne.s32.totalorder %s293, %s295
      %p302 = scmp.eq.s32.totalorder %s34, 3
      %p303 = por %p301, %p302
      %p304 = scmp.ne.s32.totalorder %s295, %s296
      %p305 = scmp.eq.s32.totalorder %s34, 0
      %p306 = por %p304, %p305
      %p307 = scmp.ne.s32.totalorder %s295, %s296
      %p308 = scmp.eq.s32.totalorder %s35, 3
      %p309 = por %p307, %p308
      %p311 = scmp.ne.s32.totalorder %s296, %s310
      %p312 = scmp.eq.s32.totalorder %s35, 0
      %p313 = por %p311, %p312
      %s315 = sadd.s32 %s314, 1
      %p318 = scmp.eq.s32.totalorder %s29, 3
      %p319 = scmp.ne.s32.totalorder %s314, %s316
      %p320 = scmp.eq.s32.totalorder %s29, 0
      %p321 = por %p319, %p320
      %p322 = scmp.ne.s32.totalorder %s314, %s316
      %p323 = scmp.eq.s32.totalorder %s34, 3
      %p324 = por %p322, %p323
      %p325 = scmp.ne.s32.totalorder %s316, %s317
      %p326 = scmp.eq.s32.totalorder %s34, 0
      %p327 = por %p325, %p326
      %p328 = scmp.ne.s32.totalorder %s316, %s317
      %p329 = scmp.eq.s32.totalorder %s35, 3
      %p330 = por %p328, %p329
      %p332 = scmp.ne.s32.totalorder %s317, %s331
      %p333 = scmp.eq.s32.totalorder %s35, 0
      %p334 = por %p332, %p333
      %p335 = scmp.le.s32.totalorder 1, %s29
      %p336 = scmp.lt.s32.totalorder %s29, 5
      %p337 = pnand %p335, %p336
      %p338 = pneg %p337
      // Predicated region
      $region9: #{transformer_forward.3} parent=5 // pred_check
        _
      $region10: #{transformer_forward.3} parent=5 // pred_check_branch
        %340 = sbr.rel (%p337) target = $region12
      $region11: #{transformer_forward.3} parent=5 // pred_region
        %s341 = ssub.s32 %s29, 1
        // Predicated region
        $region13: #{transformer_forward.3} parent=11 // pred_check
          %p342 = pneg %p50
        $region14: #{transformer_forward.3} parent=11 // pred_check_branch
          %344 = sbr.rel (%p342) target = $region16
        $region15: #{transformer_forward.3} parent=11 // pred_region
          _
        $region16: #{transformer_forward.3} parent=11 // pred_fallthru
          _
        // Predicated region
        $region17: #{transformer_forward.3} parent=11 // pred_check
          %p345 = pneg %p71
        $region18: #{transformer_forward.3} parent=11 // pred_check_branch
          %347 = sbr.rel (%p345) target = $region20
        $region19: #{transformer_forward.3} parent=11 // pred_region
          _
        $region20: #{transformer_forward.3} parent=11 // pred_fallthru
          _
        // Predicated region
        $region21: #{transformer_forward.3} parent=11 // pred_check
          %p348 = pneg %p92
        $region22: #{transformer_forward.3} parent=11 // pred_check_branch
          %350 = sbr.rel (%p348) target = $region24
        $region23: #{transformer_forward.3} parent=11 // pred_region
          _
        $region24: #{transformer_forward.3} parent=11 // pred_fallthru
          _
        // Predicated region
        $region25: #{transformer_forward.3} parent=11 // pred_check
          %p351 = pneg %p113
        $region26: #{transformer_forward.3} parent=11 // pred_check_branch
          %353 = sbr.rel (%p351) target = $region28
        $region27: #{transformer_forward.3} parent=11 // pred_region
          _
        $region28: #{transformer_forward.3} parent=11 // pred_fallthru
          _
        // Predicated region
        $region29: #{transformer_forward.3} parent=11 // pred_check
          %p354 = pneg %p264
        $region30: #{transformer_forward.3} parent=11 // pred_check_branch
          %356 = sbr.rel (%p354) target = $region32
        $region31: #{transformer_forward.3} parent=11 // pred_region
          %358 = vsyncadd [#allocation10], 0
          %s360 = sshll.u32 %s9, 4
          %s361 = int_to_ptr.hbm [resolvable:$true] %s360
          %s362 = sshll.u32 [#allocation11], 4
          %s363 = int_to_ptr.vmem [resolvable:$true] %s362
          %365 = dma.hbm_to_vmem [thread:$0]  %s361, 64, %s363, [#allocation10]
        $region32: #{transformer_forward.3} parent=11 // pred_fallthru
          _
        // Predicated region
        $region33: #{transformer_forward.3} parent=11 // pred_check
          %p366 = pneg %p285
        $region34: #{transformer_forward.3} parent=11 // pred_check_branch
          %368 = sbr.rel (%p366) target = $region36
        $region35: #{transformer_forward.3} parent=11 // pred_region
          %370 = vsyncadd [#allocation13], 0
          %s371 = sshll.u32 %s10, 4
          %s372 = int_to_ptr.hbm [resolvable:$true] %s371
          %s373 = sshll.u32 [#allocation12], 4
          %s374 = int_to_ptr.vmem [resolvable:$true] %s373
          %379 = dma.hbm_to_vmem [thread:$0]  %s372, 2048, %s374, [#allocation13], 64, 64, 4
        $region36: #{transformer_forward.3} parent=11 // pred_fallthru
          _
        // Predicated region
        $region37: #{transformer_forward.3} parent=11 // pred_check
          %p380 = pneg %p306
        $region38: #{transformer_forward.3} parent=11 // pred_check_branch
          %382 = sbr.rel (%p380) target = $region40
        $region39: #{transformer_forward.3} parent=11 // pred_region
          %384 = vsyncadd [#allocation13], 0
          %s386 = sshll.u32 %s11, 4
          %s387 = int_to_ptr.hbm [resolvable:$true] %s386
          %s388 = sshll.u32 [#allocation14], 4
          %s389 = int_to_ptr.vmem [resolvable:$true] %s388
          %391 = dma.hbm_to_vmem [thread:$0]  %s387, 16, %s389, [#allocation13]
        $region40: #{transformer_forward.3} parent=11 // pred_fallthru
          _
      $region12: #{transformer_forward.3} parent=5 // pred_fallthru
        _
      %p392 = scmp.lt.s32.totalorder %s29, 4
      // Predicated region
      $region41: #{transformer_forward.3} parent=5 // pred_check
        %p393 = pneg %p392
      $region42: #{transformer_forward.3} parent=5 // pred_check_branch
        %395 = sbr.rel (%p393) target = $region44
      $region43: #{transformer_forward.3} parent=5 // pred_region
        // Predicated region
        $region45: #{transformer_forward.3} parent=43 // pred_check
          %p396 = pneg %p133
        $region46: #{transformer_forward.3} parent=43 // pred_check_branch
          %398 = sbr.rel (%p396) target = $region48
        $region47: #{transformer_forward.3} parent=43 // pred_region
          %s399 = sand.u32 %s123, 1
          %s400 = scalar_lea.sflag [#allocation4], %s399
          %s401 = sand.u32 %s123, 1
          %s402 = smul.addr %s401, 2048
          %s403 = scalar_lea.vmem [#allocation3], %s402
          %405 = vsyncadd %s400, 0
          %s406 = smul.addr %s29, 512
          %s407 = smul.addr %s406, 4
          %s408 = scalar_lea.hbm %s4, %s407
          %s409 = sshll.u32 %s408, 4
          %s410 = int_to_ptr.hbm [resolvable:$true] %s409
          %s411 = sshll.u32 %s403, 4
          %s412 = int_to_ptr.vmem [resolvable:$true] %s411
          %417 = dma.hbm_to_vmem [thread:$0]  %s410, 32768, %s412, %s400, 128, 128, 8
        $region48: #{transformer_forward.3} parent=43 // pred_fallthru
          _
        // Predicated region
        $region49: #{transformer_forward.3} parent=43 // pred_check
          %p418 = pneg %p159
        $region50: #{transformer_forward.3} parent=43 // pred_check_branch
          %420 = sbr.rel (%p418) target = $region52
        $region51: #{transformer_forward.3} parent=43 // pred_region
          %s421 = sand.u32 %s29, 1
          %s422 = scalar_lea.sflag [#allocation7], %s421
          %s423 = sand.u32 %s149, 1
          %s424 = smul.addr %s423, 1024
          %s425 = scalar_lea.vmem [#allocation6], %s424
          %427 = vsyncadd %s422, 0
          %s428 = smul.addr %s29, 256
          %s429 = smul.addr %s428, 4
          %s430 = scalar_lea.hbm %s5, %s429
          %s431 = sshll.u32 %s430, 4
          %s432 = int_to_ptr.hbm [resolvable:$true] %s431
          %s433 = sshll.u32 %s425, 4
          %s434 = int_to_ptr.vmem [resolvable:$true] %s433
          %439 = dma.hbm_to_vmem [thread:$0]  %s432, 16384, %s434, %s422, 512, 512, 32
        $region52: #{transformer_forward.3} parent=43 // pred_fallthru
          _
        // Predicated region
        $region53: #{transformer_forward.3} parent=43 // pred_check
          %p440 = pneg %p185
        $region54: #{transformer_forward.3} parent=43 // pred_check_branch
          %442 = sbr.rel (%p440) target = $region56
        $region55: #{transformer_forward.3} parent=43 // pred_region
          %s443 = sand.u32 %s29, 1
          %s444 = scalar_lea.sflag [#allocation7], %s443
          %s445 = sand.u32 %s175, 1
          %s446 = smul.addr %s445, 1024
          %s447 = scalar_lea.vmem [#allocation8], %s446
          %449 = vsyncadd %s444, 0
          %s450 = smul.addr %s29, 256
          %s451 = smul.addr %s450, 4
          %s452 = scalar_lea.hbm %s6, %s451
          %s453 = sshll.u32 %s452, 4
          %s454 = int_to_ptr.hbm [resolvable:$true] %s453
          %s455 = sshll.u32 %s447, 4
          %s456 = int_to_ptr.vmem [resolvable:$true] %s455
          %461 = dma.hbm_to_vmem [thread:$0]  %s454, 16384, %s456, %s444, 128, 128, 8
        $region56: #{transformer_forward.3} parent=43 // pred_fallthru
          _
        // Predicated region
        $region57: #{transformer_forward.3} parent=43 // pred_check
          %p462 = pneg %p211
        $region58: #{transformer_forward.3} parent=43 // pred_check_branch
          %464 = sbr.rel (%p462) target = $region60
        $region59: #{transformer_forward.3} parent=43 // pred_region
          %p465 = scmp.lt.s32.totalorder %s29, 3
          %s466 = scalar_select %p465, %s29, 3
          %s467 = smul.addr %s466, 4
          %s468 = smul.addr %s467, 8
          %s469 = scalar_lea.vmem %s7, %s468
        $region60: #{transformer_forward.3} parent=43 // pred_fallthru
          _
        // Predicated region
        $region61: #{transformer_forward.3} parent=43 // pred_check
          %p470 = pneg %p237
        $region62: #{transformer_forward.3} parent=43 // pred_check_branch
          %472 = sbr.rel (%p470) target = $region64
        $region63: #{transformer_forward.3} parent=43 // pred_region
          %s473 = sand.u32 %s29, 1
          %s474 = scalar_lea.sflag [#allocation10], %s473
          %s475 = sand.u32 %s227, 1
          %s476 = smul.addr %s475, 8
          %s477 = scalar_lea.vmem [#allocation9], %s476
          %479 = vsyncadd %s474, 0
          %s480 = smul.addr %s29, 8
          %s481 = scalar_lea.hbm %s8, %s480
          %s483 = sshll.u32 %s481, 4
          %s484 = int_to_ptr.hbm [resolvable:$true] %s483
          %s485 = sshll.u32 %s477, 4
          %s486 = int_to_ptr.vmem [resolvable:$true] %s485
          %488 = dma.hbm_to_vmem [thread:$0]  %s484, 128, %s486, %s474
        $region64: #{transformer_forward.3} parent=43 // pred_fallthru
          _
      $region44: #{transformer_forward.3} parent=5 // pred_fallthru
        _
      %p489 = scmp.le.s32.totalorder 1, %s29
      %p490 = scmp.lt.s32.totalorder %s29, 5
      %p491 = pnand %p489, %p490
      %p492 = pneg %p491
      // Predicated region
      $region65: #{transformer_forward.3} parent=5 // pred_check
        _
      $region66: #{transformer_forward.3} parent=5 // pred_check_branch
        %494 = sbr.rel (%p491) target = $region68
      $region67: #{transformer_forward.3} parent=5 // pred_region
        %s495 = ssub.s32 %s29, 1
        %s496 = sand.u32 %s126, 1
        %s497 = scalar_lea.sflag [#allocation4], %s496
        %s498 = sand.u32 %s126, 1
        %s499 = smul.addr %s498, 2048
        %s500 = scalar_lea.vmem [#allocation3], %s499
        // Predicated region
        $region69: #{transformer_forward.3} parent=67 // pred_check
          %p501 = pneg %p139
        $region70: #{transformer_forward.3} parent=67 // pred_check_branch
          %503 = sbr.rel (%p501) target = $region72
        $region71: #{transformer_forward.3} parent=67 // pred_region
          %505 = dma.done %s497, 32768
        $region72: #{transformer_forward.3} parent=67 // pred_fallthru
          _
        %s506 = sand.u32 %s34, 1
        %s507 = scalar_lea.sflag [#allocation7], %s506
        %s508 = sand.u32 %s152, 1
        %s509 = smul.addr %s508, 1024
        %s510 = scalar_lea.vmem [#allocation6], %s509
        // Predicated region
        $region73: #{transformer_forward.3} parent=67 // pred_check
          %p511 = pneg %p165
        $region74: #{transformer_forward.3} parent=67 // pred_check_branch
          %513 = sbr.rel (%p511) target = $region76
        $region75: #{transformer_forward.3} parent=67 // pred_region
          %515 = dma.done %s507, 16384
        $region76: #{transformer_forward.3} parent=67 // pred_fallthru
          _
        %s516 = sand.u32 %s34, 1
        %s517 = scalar_lea.sflag [#allocation7], %s516
        %s518 = sand.u32 %s178, 1
        %s519 = smul.addr %s518, 1024
        %s520 = scalar_lea.vmem [#allocation8], %s519
        // Predicated region
        $region77: #{transformer_forward.3} parent=67 // pred_check
          %p521 = pneg %p191
        $region78: #{transformer_forward.3} parent=67 // pred_check_branch
          %523 = sbr.rel (%p521) target = $region80
        $region79: #{transformer_forward.3} parent=67 // pred_region
          %525 = dma.done %s517, 16384
        $region80: #{transformer_forward.3} parent=67 // pred_fallthru
          _
        %s526 = sand.u32 %s34, 1
        %s527 = scalar_lea.sflag [#allocation10], %s526
        %s528 = sand.u32 %s230, 1
        %s529 = smul.addr %s528, 8
        %s530 = scalar_lea.vmem [#allocation9], %s529
        // Predicated region
        $region81: #{transformer_forward.3} parent=67 // pred_check
          %p531 = pneg %p243
        $region82: #{transformer_forward.3} parent=67 // pred_check_branch
          %533 = sbr.rel (%p531) target = $region84
        $region83: #{transformer_forward.3} parent=67 // pred_region
          %535 = dma.done %s527, 128
        $region84: #{transformer_forward.3} parent=67 // pred_fallthru
          _
        // Predicated region
        $region85: #{transformer_forward.3} parent=67 // pred_check
          %p536 = pneg %p264
        $region86: #{transformer_forward.3} parent=67 // pred_check_branch
          %538 = sbr.rel (%p536) target = $region88
        $region87: #{transformer_forward.3} parent=67 // pred_region
          %540 = dma.done [#allocation10], 64
        $region88: #{transformer_forward.3} parent=67 // pred_fallthru
          _
        // Predicated region
        $region89: #{transformer_forward.3} parent=67 // pred_check
          %p541 = pneg %p285
        $region90: #{transformer_forward.3} parent=67 // pred_check_branch
          %543 = sbr.rel (%p541) target = $region92
        $region91: #{transformer_forward.3} parent=67 // pred_region
          %545 = dma.done [#allocation13], 2048
        $region92: #{transformer_forward.3} parent=67 // pred_fallthru
          _
        // Predicated region
        $region93: #{transformer_forward.3} parent=67 // pred_check
          %p546 = pneg %p306
        $region94: #{transformer_forward.3} parent=67 // pred_check_branch
          %548 = sbr.rel (%p546) target = $region96
        $region95: #{transformer_forward.3} parent=67 // pred_region
          %550 = dma.done [#allocation13], 16
        $region96: #{transformer_forward.3} parent=67 // pred_fallthru
          _
        %p551 = pneg %p50
        %p552 = pneg %p47
        %p553 = pneg %p71
        %p554 = pneg %p68
        %p555 = pneg %p92
        %p556 = pneg %p89
        %p557 = pneg %p113
        %p558 = pneg %p110
        %s559 = sand.u32 %s126, 1
        %s560 = scalar_lea.sflag [#allocation4], %s559
        %s561 = sand.u32 %s126, 1
        %s562 = smul.addr %s561, 2048
        %s563 = scalar_lea.vmem [#allocation3], %s562
        %p564 = pneg %p139
        %p565 = pneg %p136
        %s566 = sand.u32 %s34, 1
        %s567 = scalar_lea.sflag [#allocation7], %s566
        %s568 = sand.u32 %s152, 1
        %s569 = smul.addr %s568, 1024
        %s570 = scalar_lea.vmem [#allocation6], %s569
        %p571 = pneg %p165
        %p572 = pneg %p162
        %s573 = sand.u32 %s34, 1
        %s574 = scalar_lea.sflag [#allocation7], %s573
        %s575 = sand.u32 %s178, 1
        %s576 = smul.addr %s575, 1024
        %s577 = scalar_lea.vmem [#allocation8], %s576
        %p578 = pneg %p191
        %p579 = pneg %p188
        %p580 = scmp.lt.s32.totalorder %s34, 3
        %s581 = scalar_select %p580, %s34, 3
        %s582 = smul.addr %s581, 4
        %s583 = smul.addr %s582, 8
        %s584 = scalar_lea.vmem %s7, %s583
        %p585 = pneg %p217
        %p586 = pneg %p214
        %s587 = sand.u32 %s34, 1
        %s588 = scalar_lea.sflag [#allocation10], %s587
        %s589 = sand.u32 %s230, 1
        %s590 = smul.addr %s589, 8
        %s591 = scalar_lea.vmem [#allocation9], %s590
        %p592 = pneg %p243
        %p593 = pneg %p240
        %p594 = pneg %p264
        %p595 = pneg %p261
        %p596 = pneg %p285
        %p597 = pneg %p282
        %p598 = pneg %p306
        %p599 = pneg %p303
        %p600 = pneg %p327
        %p601 = pneg %p324
        %p602 = scmp.lt.s32.totalorder %s34, 3
        %s603 = scalar_select %p602, %s34, 3
        %s604 = smul.addr %s603, 4
        %s605 = smul.addr %s604, 8
        %s606 = scalar_lea.vmem %s7, %s605
        %p608 = scmp.eq.s32.totalorder %s34, 0
        // Predicated region
        $region97: #{transformer_forward.3} parent=67 // pred_check
          %p609 = pneg %p608
        $region98: #{transformer_forward.3} parent=67 // pred_check_branch
          %611 = sbr.rel (%p609) target = $region100
        $region99: #{transformer_forward.3} parent=67 // pred_region
          %v612 = vld [vmem:[%s0] sm:$0xff]
          %v613 = vld [vmem:[%s0 + $0x8] sm:$0xff]
          %v614 = vld [vmem:[%s0 + $0x10] sm:$0xff]
          %v615 = vld [vmem:[%s0 + $0x18] sm:$0xff]
          %616 = vst [vmem:[#allocation2] sm:$0xff] %v612
          %617 = vst [vmem:[#allocation2 + $0x8] sm:$0xff] %v613
          %618 = vst [vmem:[#allocation2 + $0x10] sm:$0xff] %v614
          %619 = vst [vmem:[#allocation2 + $0x18] sm:$0xff] %v615
        $region100: #{transformer_forward.3} parent=67 // pred_fallthru
          _
        %v620 = vld [vmem:[#allocation2] sm:$0xff]
        %v621 = vld [vmem:[#allocation2 + $0x8] sm:$0xff]
        %v622 = vld [vmem:[#allocation2 + $0x10] sm:$0xff]
        %v623 = vld [vmem:[#allocation2 + $0x18] sm:$0xff]
        %v624 = vld [vmem:[%s1] sm:$0xff]
        %v625 = vld [vmem:[%s1 + $0x8] sm:$0xff]
        %v626 = vld [vmem:[%s1 + $0x10] sm:$0xff]
        %v627 = vld [vmem:[%s1 + $0x18] sm:$0xff]
        %v628 = vld [vmem:[%s2] sm:$0xff]
        %v629 = vld [vmem:[%s2 + $0x8] sm:$0xff]
        %v630 = vld [vmem:[%s500] sm:$0xff]
        %v631 = vld [vmem:[%s500 + $0x8] sm:$0xff]
        %v632 = vld [vmem:[%s500 + $0x10] sm:$0xff]
        %v633 = vld [vmem:[%s500 + $0x18] sm:$0xff]
        %v634 = vld [vmem:[%s500 + $0x20] sm:$0xff]
        %v635 = vld [vmem:[%s500 + $0x28] sm:$0xff]
        %v636 = vld [vmem:[%s500 + $0x30] sm:$0xff]
        %v637 = vld [vmem:[%s500 + $0x38] sm:$0xff]
        %v638 = vld [vmem:[%s500 + $0x40] sm:$0xff]
        %v639 = vld [vmem:[%s500 + $0x48] sm:$0xff]
        %v640 = vld [vmem:[%s500 + $0x50] sm:$0xff]
        %v641 = vld [vmem:[%s500 + $0x58] sm:$0xff]
        %v642 = vld [vmem:[%s500 + $0x60] sm:$0xff]
        %v643 = vld [vmem:[%s500 + $0x68] sm:$0xff]
        %v644 = vld [vmem:[%s500 + $0x70] sm:$0xff]
        %v645 = vld [vmem:[%s500 + $0x78] sm:$0xff]
        %v646 = vld [vmem:[%s500 + $0x80] sm:$0xff]
        %v647 = vld [vmem:[%s500 + $0x88] sm:$0xff]
        %v648 = vld [vmem:[%s500 + $0x90] sm:$0xff]
        %v649 = vld [vmem:[%s500 + $0x98] sm:$0xff]
        %v650 = vld [vmem:[%s500 + $0xa0] sm:$0xff]
        %v651 = vld [vmem:[%s500 + $0xa8] sm:$0xff]
        %v652 = vld [vmem:[%s500 + $0xb0] sm:$0xff]
        %v653 = vld [vmem:[%s500 + $0xb8] sm:$0xff]
        %v654 = vld [vmem:[%s500 + $0xc0] sm:$0xff]
        %v655 = vld [vmem:[%s500 + $0xc8] sm:$0xff]
        %v656 = vld [vmem:[%s500 + $0xd0] sm:$0xff]
        %v657 = vld [vmem:[%s500 + $0xd8] sm:$0xff]
        %v658 = vld [vmem:[%s500 + $0xe0] sm:$0xff]
        %v659 = vld [vmem:[%s500 + $0xe8] sm:$0xff]
        %v660 = vld [vmem:[%s500 + $0xf0] sm:$0xff]
        %v661 = vld [vmem:[%s500 + $0xf8] sm:$0xff]
        %v662 = vld [vmem:[%s606] ss:$8 sm:$0x3]
        %s663 = scalar_lea.vmem %s500, 256 [#allocation3]
        %v664 = vld [vmem:[%s663] sm:$0xff]
        %v665 = vld [vmem:[%s663 + $0x8] sm:$0xff]
        %v666 = vld [vmem:[%s663 + $0x10] sm:$0xff]
        %v667 = vld [vmem:[%s663 + $0x18] sm:$0xff]
        %v668 = vld [vmem:[%s663 + $0x20] sm:$0xff]
        %v669 = vld [vmem:[%s663 + $0x28] sm:$0xff]
        %v670 = vld [vmem:[%s663 + $0x30] sm:$0xff]
        %v671 = vld [vmem:[%s663 + $0x38] sm:$0xff]
        %v672 = vld [vmem:[%s663 + $0x40] sm:$0xff]
        %v673 = vld [vmem:[%s663 + $0x48] sm:$0xff]
        %v674 = vld [vmem:[%s663 + $0x50] sm:$0xff]
        %v675 = vld [vmem:[%s663 + $0x58] sm:$0xff]
        %v676 = vld [vmem:[%s663 + $0x60] sm:$0xff]
        %v677 = vld [vmem:[%s663 + $0x68] sm:$0xff]
        %v678 = vld [vmem:[%s663 + $0x70] sm:$0xff]
        %v679 = vld [vmem:[%s663 + $0x78] sm:$0xff]
        %v680 = vld [vmem:[%s663 + $0x80] sm:$0xff]
        %v681 = vld [vmem:[%s663 + $0x88] sm:$0xff]
        %v682 = vld [vmem:[%s663 + $0x90] sm:$0xff]
        %v683 = vld [vmem:[%s663 + $0x98] sm:$0xff]
        %v684 = vld [vmem:[%s663 + $0xa0] sm:$0xff]
        %v685 = vld [vmem:[%s663 + $0xa8] sm:$0xff]
        %v686 = vld [vmem:[%s663 + $0xb0] sm:$0xff]
        %v687 = vld [vmem:[%s663 + $0xb8] sm:$0xff]
        %v688 = vld [vmem:[%s663 + $0xc0] sm:$0xff]
        %v689 = vld [vmem:[%s663 + $0xc8] sm:$0xff]
        %v690 = vld [vmem:[%s663 + $0xd0] sm:$0xff]
        %v691 = vld [vmem:[%s663 + $0xd8] sm:$0xff]
        %v692 = vld [vmem:[%s663 + $0xe0] sm:$0xff]
        %v693 = vld [vmem:[%s663 + $0xe8] sm:$0xff]
        %v694 = vld [vmem:[%s663 + $0xf0] sm:$0xff]
        %v695 = vld [vmem:[%s663 + $0xf8] sm:$0xff]
        %s696 = scalar_lea.vmem %s606, 1
        %v697 = vld [vmem:[%s696] ss:$8 sm:$0x3]
        %s698 = scalar_lea.vmem %s500, 512 [#allocation3]
        %v699 = vld [vmem:[%s698] sm:$0xff]
        %v700 = vld [vmem:[%s698 + $0x8] sm:$0xff]
        %v701 = vld [vmem:[%s698 + $0x10] sm:$0xff]
        %v702 = vld [vmem:[%s698 + $0x18] sm:$0xff]
        %v703 = vld [vmem:[%s698 + $0x20] sm:$0xff]
        %v704 = vld [vmem:[%s698 + $0x28] sm:$0xff]
        %v705 = vld [vmem:[%s698 + $0x30] sm:$0xff]
        %v706 = vld [vmem:[%s698 + $0x38] sm:$0xff]
        %v707 = vld [vmem:[%s698 + $0x40] sm:$0xff]
        %v708 = vld [vmem:[%s698 + $0x48] sm:$0xff]
        %v709 = vld [vmem:[%s698 + $0x50] sm:$0xff]
        %v710 = vld [vmem:[%s698 + $0x58] sm:$0xff]
        %v711 = vld [vmem:[%s698 + $0x60] sm:$0xff]
        %v712 = vld [vmem:[%s698 + $0x68] sm:$0xff]
        %v713 = vld [vmem:[%s698 + $0x70] sm:$0xff]
        %v714 = vld [vmem:[%s698 + $0x78] sm:$0xff]
        %v715 = vld [vmem:[%s698 + $0x80] sm:$0xff]
        %v716 = vld [vmem:[%s698 + $0x88] sm:$0xff]
        %v717 = vld [vmem:[%s698 + $0x90] sm:$0xff]
        %v718 = vld [vmem:[%s698 + $0x98] sm:$0xff]
        %v719 = vld [vmem:[%s698 + $0xa0] sm:$0xff]
        %v720 = vld [vmem:[%s698 + $0xa8] sm:$0xff]
        %v721 = vld [vmem:[%s698 + $0xb0] sm:$0xff]
        %v722 = vld [vmem:[%s698 + $0xb8] sm:$0xff]
        %v723 = vld [vmem:[%s698 + $0xc0] sm:$0xff]
        %v724 = vld [vmem:[%s698 + $0xc8] sm:$0xff]
        %v725 = vld [vmem:[%s698 + $0xd0] sm:$0xff]
        %v726 = vld [vmem:[%s698 + $0xd8] sm:$0xff]
        %v727 = vld [vmem:[%s698 + $0xe0] sm:$0xff]
        %v728 = vld [vmem:[%s698 + $0xe8] sm:$0xff]
        %v729 = vld [vmem:[%s698 + $0xf0] sm:$0xff]
        %v730 = vld [vmem:[%s698 + $0xf8] sm:$0xff]
        %s731 = scalar_lea.vmem %s606, 2
        %v732 = vld [vmem:[%s731] ss:$8 sm:$0x3]
        %s733 = scalar_lea.vmem %s500, 768 [#allocation3]
        %v734 = vld [vmem:[%s733] sm:$0xff]
        %v735 = vld [vmem:[%s733 + $0x8] sm:$0xff]
        %v736 = vld [vmem:[%s733 + $0x10] sm:$0xff]
        %v737 = vld [vmem:[%s733 + $0x18] sm:$0xff]
        %v738 = vld [vmem:[%s733 + $0x20] sm:$0xff]
        %v739 = vld [vmem:[%s733 + $0x28] sm:$0xff]
        %v740 = vld [vmem:[%s733 + $0x30] sm:$0xff]
        %v741 = vld [vmem:[%s733 + $0x38] sm:$0xff]
        %v742 = vld [vmem:[%s733 + $0x40] sm:$0xff]
        %v743 = vld [vmem:[%s733 + $0x48] sm:$0xff]
        %v744 = vld [vmem:[%s733 + $0x50] sm:$0xff]
        %v745 = vld [vmem:[%s733 + $0x58] sm:$0xff]
        %v746 = vld [vmem:[%s733 + $0x60] sm:$0xff]
        %v747 = vld [vmem:[%s733 + $0x68] sm:$0xff]
        %v748 = vld [vmem:[%s733 + $0x70] sm:$0xff]
        %v749 = vld [vmem:[%s733 + $0x78] sm:$0xff]
        %v750 = vld [vmem:[%s733 + $0x80] sm:$0xff]
        %v751 = vld [vmem:[%s733 + $0x88] sm:$0xff]
        %v752 = vld [vmem:[%s733 + $0x90] sm:$0xff]
        %v753 = vld [vmem:[%s733 + $0x98] sm:$0xff]
        %v754 = vld [vmem:[%s733 + $0xa0] sm:$0xff]
        %v755 = vld [vmem:[%s733 + $0xa8] sm:$0xff]
        %v756 = vld [vmem:[%s733 + $0xb0] sm:$0xff]
        %v757 = vld [vmem:[%s733 + $0xb8] sm:$0xff]
        %v758 = vld [vmem:[%s733 + $0xc0] sm:$0xff]
        %v759 = vld [vmem:[%s733 + $0xc8] sm:$0xff]
        %v760 = vld [vmem:[%s733 + $0xd0] sm:$0xff]
        %v761 = vld [vmem:[%s733 + $0xd8] sm:$0xff]
        %v762 = vld [vmem:[%s733 + $0xe0] sm:$0xff]
        %v763 = vld [vmem:[%s733 + $0xe8] sm:$0xff]
        %v764 = vld [vmem:[%s733 + $0xf0] sm:$0xff]
        %v765 = vld [vmem:[%s733 + $0xf8] sm:$0xff]
        %s766 = scalar_lea.vmem %s606, 3
        %v767 = vld [vmem:[%s766] ss:$8 sm:$0x3]
        %v768 = vpack.c.bf16 %v622, %v620
        %v769 = vpack.c.bf16 %v623, %v621
        %v771 = vperm.slane %v662, 0
        %v772 = vperm.slane %v662, 1
        %v807 = vunpack.c.l.b16 %v630
        %v808 = vunpack.c.h.b16 %v630
        %v809 = vunpack.c.l.b16 %v631
        %v810 = vunpack.c.h.b16 %v631
        %v811 = vunpack.c.l.b16 %v632
        %v812 = vunpack.c.h.b16 %v632
        %v813 = vunpack.c.l.b16 %v633
        %v814 = vunpack.c.h.b16 %v633
        %v815 = vunpack.c.l.b16 %v634
        %v816 = vunpack.c.h.b16 %v634
        %v817 = vunpack.c.l.b16 %v635
        %v818 = vunpack.c.h.b16 %v635
        %v819 = vunpack.c.l.b16 %v636
        %v820 = vunpack.c.h.b16 %v636
        %v821 = vunpack.c.l.b16 %v637
        %v822 = vunpack.c.h.b16 %v637
        %v823 = vunpack.c.l.b16 %v638
        %v824 = vunpack.c.h.b16 %v638
        %v825 = vunpack.c.l.b16 %v639
        %v826 = vunpack.c.h.b16 %v639
        %v827 = vunpack.c.l.b16 %v640
        %v828 = vunpack.c.h.b16 %v640
        %v829 = vunpack.c.l.b16 %v641
        %v830 = vunpack.c.h.b16 %v641
        %v831 = vunpack.c.l.b16 %v642
        %v832 = vunpack.c.h.b16 %v642
        %v833 = vunpack.c.l.b16 %v643
        %v834 = vunpack.c.h.b16 %v643
        %v835 = vunpack.c.l.b16 %v644
        %v836 = vunpack.c.h.b16 %v644
        %v837 = vunpack.c.l.b16 %v645
        %v838 = vunpack.c.h.b16 %v645
        %v839 = vunpack.c.l.b16 %v646
        %v840 = vunpack.c.h.b16 %v646
        %v841 = vunpack.c.l.b16 %v647
        %v842 = vunpack.c.h.b16 %v647
        %v843 = vunpack.c.l.b16 %v648
        %v844 = vunpack.c.h.b16 %v648
        %v845 = vunpack.c.l.b16 %v649
        %v846 = vunpack.c.h.b16 %v649
        %v847 = vunpack.c.l.b16 %v650
        %v848 = vunpack.c.h.b16 %v650
        %v849 = vunpack.c.l.b16 %v651
        %v850 = vunpack.c.h.b16 %v651
        %v851 = vunpack.c.l.b16 %v652
        %v852 = vunpack.c.h.b16 %v652
        %v853 = vunpack.c.l.b16 %v653
        %v854 = vunpack.c.h.b16 %v653
        %v855 = vunpack.c.l.b16 %v654
        %v856 = vunpack.c.h.b16 %v654
        %v857 = vunpack.c.l.b16 %v655
        %v858 = vunpack.c.h.b16 %v655
        %v859 = vunpack.c.l.b16 %v656
        %v860 = vunpack.c.h.b16 %v656
        %v861 = vunpack.c.l.b16 %v657
        %v862 = vunpack.c.h.b16 %v657
        %v863 = vunpack.c.l.b16 %v658
        %v864 = vunpack.c.h.b16 %v658
        %v865 = vunpack.c.l.b16 %v659
        %v866 = vunpack.c.h.b16 %v659
        %v867 = vunpack.c.l.b16 %v660
        %v868 = vunpack.c.h.b16 %v660
        %v869 = vunpack.c.l.b16 %v661
        %v870 = vunpack.c.h.b16 %v661
        %v871 = vpack.c.b16 %v809, %v807
        %v872 = vpack.c.b16 %v810, %v808
        %v873 = vpack.c.b16 %v813, %v811
        %v874 = vpack.c.b16 %v814, %v812
        %v875 = vpack.c.b16 %v817, %v815
        %v876 = vpack.c.b16 %v818, %v816
        %v877 = vpack.c.b16 %v821, %v819
        %v878 = vpack.c.b16 %v822, %v820
        %v879 = vpack.c.b16 %v825, %v823
        %v880 = vpack.c.b16 %v826, %v824
        %v881 = vpack.c.b16 %v829, %v827
        %v882 = vpack.c.b16 %v830, %v828
        %v883 = vpack.c.b16 %v833, %v831
        %v884 = vpack.c.b16 %v834, %v832
        %v885 = vpack.c.b16 %v837, %v835
        %v886 = vpack.c.b16 %v838, %v836
        %v887 = vpack.c.b16 %v841, %v839
        %v888 = vpack.c.b16 %v842, %v840
        %v889 = vpack.c.b16 %v845, %v843
        %v890 = vpack.c.b16 %v846, %v844
        %v891 = vpack.c.b16 %v849, %v847
        %v892 = vpack.c.b16 %v850, %v848
        %v893 = vpack.c.b16 %v853, %v851
        %v894 = vpack.c.b16 %v854, %v852
        %v895 = vpack.c.b16 %v857, %v855
        %v896 = vpack.c.b16 %v858, %v856
        %v897 = vpack.c.b16 %v861, %v859
        %v898 = vpack.c.b16 %v862, %v860
        %v899 = vpack.c.b16 %v865, %v863
        %v900 = vpack.c.b16 %v866, %v864
        %v901 = vpack.c.b16 %v869, %v867
        %v902 = vpack.c.b16 %v870, %v868
        %935 = vmatpush.bf16.msra.mxu0 %v885
        %936 = vmatpush.bf16.msra.mxu0 %v883
        %937 = vmatpush.bf16.msra.mxu0 %v881
        %938 = vmatpush.bf16.msra.mxu0 %v879
        %939 = vmatpush.bf16.msra.mxu0 %v877
        %940 = vmatpush.bf16.msra.mxu0 %v875
        %941 = vmatpush.bf16.msra.mxu0 %v873
        %942 = vmatpush.bf16.msra.mxu0 %v871
        %943 = vmatmul.bf16.gmra.mxu0 %v768
        %v944 = vpop.f32.mrf.mxu0
        %v945 = vadd.f32 %v771, %v944
        %v946 = vpop.f32.mrf.mxu0
        %v947 = vadd.f32 %v771, %v946
        %948 = vdwg.mxu0
        %949 = vmatpush.bf16.msra.mxu0 %v901
        %950 = vmatpush.bf16.msra.mxu0 %v899
        %951 = vmatpush.bf16.msra.mxu0 %v897
        %952 = vmatpush.bf16.msra.mxu0 %v895
        %953 = vmatpush.bf16.msra.mxu0 %v893
        %954 = vmatpush.bf16.msra.mxu0 %v891
        %955 = vmatpush.bf16.msra.mxu0 %v889
        %956 = vmatpush.bf16.msra.mxu0 %v887
        %957 = vmatmul.bf16.gmra.mxu0 %v769
        %v958 = vpop.f32.mrf.mxu0
        %v959 = vadd.f32 %v945, %v958
        %v960 = vpop.f32.mrf.mxu0
        %v961 = vadd.f32 %v947, %v960
        %962 = vdwg.mxu0
        %963 = vmatpush.bf16.msra.mxu0 %v886
        %964 = vmatpush.bf16.msra.mxu0 %v884
        %965 = vmatpush.bf16.msra.mxu0 %v882
        %966 = vmatpush.bf16.msra.mxu0 %v880
        %967 = vmatpush.bf16.msra.mxu0 %v878
        %968 = vmatpush.bf16.msra.mxu0 %v876
        %969 = vmatpush.bf16.msra.mxu0 %v874
        %970 = vmatpush.bf16.msra.mxu0 %v872
        %971 = vmatmul.bf16.gmra.mxu0 %v768
        %v972 = vpop.f32.mrf.mxu0
        %v973 = vadd.f32 %v772, %v972
        %v974 = vpop.f32.mrf.mxu0
        %v975 = vadd.f32 %v772, %v974
        %976 = vdwg.mxu0
        %977 = vmatpush.bf16.msra.mxu0 %v902
        %978 = vmatpush.bf16.msra.mxu0 %v900
        %979 = vmatpush.bf16.msra.mxu0 %v898
        %980 = vmatpush.bf16.msra.mxu0 %v896
        %981 = vmatpush.bf16.msra.mxu0 %v894
        %982 = vmatpush.bf16.msra.mxu0 %v892
        %983 = vmatpush.bf16.msra.mxu0 %v890
        %984 = vmatpush.bf16.msra.mxu0 %v888
        %985 = vmatmul.bf16.gmra.mxu0 %v769
        %v986 = vpop.f32.mrf.mxu0
        %v987 = vadd.f32 %v973, %v986
        %v988 = vpop.f32.mrf.mxu0
        %v989 = vadd.f32 %v975, %v988
        %990 = vdwg.mxu0
        %v992 = vperm.slane %v697, 0
        %v993 = vperm.slane %v697, 1
        %v1028 = vunpack.c.l.b16 %v664
        %v1029 = vunpack.c.h.b16 %v664
        %v1030 = vunpack.c.l.b16 %v665
        %v1031 = vunpack.c.h.b16 %v665
        %v1032 = vunpack.c.l.b16 %v666
        %v1033 = vunpack.c.h.b16 %v666
        %v1034 = vunpack.c.l.b16 %v667
        %v1035 = vunpack.c.h.b16 %v667
        %v1036 = vunpack.c.l.b16 %v668
        %v1037 = vunpack.c.h.b16 %v668
        %v1038 = vunpack.c.l.b16 %v669
        %v1039 = vunpack.c.h.b16 %v669
        %v1040 = vunpack.c.l.b16 %v670
        %v1041 = vunpack.c.h.b16 %v670
        %v1042 = vunpack.c.l.b16 %v671
        %v1043 = vunpack.c.h.b16 %v671
        %v1044 = vunpack.c.l.b16 %v672
        %v1045 = vunpack.c.h.b16 %v672
        %v1046 = vunpack.c.l.b16 %v673
        %v1047 = vunpack.c.h.b16 %v673
        %v1048 = vunpack.c.l.b16 %v674
        %v1049 = vunpack.c.h.b16 %v674
        %v1050 = vunpack.c.l.b16 %v675
        %v1051 = vunpack.c.h.b16 %v675
        %v1052 = vunpack.c.l.b16 %v676
        %v1053 = vunpack.c.h.b16 %v676
        %v1054 = vunpack.c.l.b16 %v677
        %v1055 = vunpack.c.h.b16 %v677
        %v1056 = vunpack.c.l.b16 %v678
        %v1057 = vunpack.c.h.b16 %v678
        %v1058 = vunpack.c.l.b16 %v679
        %v1059 = vunpack.c.h.b16 %v679
        %v1060 = vunpack.c.l.b16 %v680
        %v1061 = vunpack.c.h.b16 %v680
        %v1062 = vunpack.c.l.b16 %v681
        %v1063 = vunpack.c.h.b16 %v681
        %v1064 = vunpack.c.l.b16 %v682
        %v1065 = vunpack.c.h.b16 %v682
        %v1066 = vunpack.c.l.b16 %v683
        %v1067 = vunpack.c.h.b16 %v683
        %v1068 = vunpack.c.l.b16 %v684
        %v1069 = vunpack.c.h.b16 %v684
        %v1070 = vunpack.c.l.b16 %v685
        %v1071 = vunpack.c.h.b16 %v685
        %v1072 = vunpack.c.l.b16 %v686
        %v1073 = vunpack.c.h.b16 %v686
        %v1074 = vunpack.c.l.b16 %v687
        %v1075 = vunpack.c.h.b16 %v687
        %v1076 = vunpack.c.l.b16 %v688
        %v1077 = vunpack.c.h.b16 %v688
        %v1078 = vunpack.c.l.b16 %v689
        %v1079 = vunpack.c.h.b16 %v689
        %v1080 = vunpack.c.l.b16 %v690
        %v1081 = vunpack.c.h.b16 %v690
        %v1082 = vunpack.c.l.b16 %v691
        %v1083 = vunpack.c.h.b16 %v691
        %v1084 = vunpack.c.l.b16 %v692
        %v1085 = vunpack.c.h.b16 %v692
        %v1086 = vunpack.c.l.b16 %v693
        %v1087 = vunpack.c.h.b16 %v693
        %v1088 = vunpack.c.l.b16 %v694
        %v1089 = vunpack.c.h.b16 %v694
        %v1090 = vunpack.c.l.b16 %v695
        %v1091 = vunpack.c.h.b16 %v695
        %v1092 = vpack.c.b16 %v1030, %v1028
        %v1093 = vpack.c.b16 %v1031, %v1029
        %v1094 = vpack.c.b16 %v1034, %v1032
        %v1095 = vpack.c.b16 %v1035, %v1033
        %v1096 = vpack.c.b16 %v1038, %v1036
        %v1097 = vpack.c.b16 %v1039, %v1037
        %v1098 = vpack.c.b16 %v1042, %v1040
        %v1099 = vpack.c.b16 %v1043, %v1041
        %v1100 = vpack.c.b16 %v1046, %v1044
        %v1101 = vpack.c.b16 %v1047, %v1045
        %v1102 = vpack.c.b16 %v1050, %v1048
        %v1103 = vpack.c.b16 %v1051, %v1049
        %v1104 = vpack.c.b16 %v1054, %v1052
        %v1105 = vpack.c.b16 %v1055, %v1053
        %v1106 = vpack.c.b16 %v1058, %v1056
        %v1107 = vpack.c.b16 %v1059, %v1057
        %v1108 = vpack.c.b16 %v1062, %v1060
        %v1109 = vpack.c.b16 %v1063, %v1061
        %v1110 = vpack.c.b16 %v1066, %v1064
        %v1111 = vpack.c.b16 %v1067, %v1065
        %v1112 = vpack.c.b16 %v1070, %v1068
        %v1113 = vpack.c.b16 %v1071, %v1069
        %v1114 = vpack.c.b16 %v1074, %v1072
        %v1115 = vpack.c.b16 %v1075, %v1073
        %v1116 = vpack.c.b16 %v1078, %v1076
        %v1117 = vpack.c.b16 %v1079, %v1077
        %v1118 = vpack.c.b16 %v1082, %v1080
        %v1119 = vpack.c.b16 %v1083, %v1081
        %v1120 = vpack.c.b16 %v1086, %v1084
        %v1121 = vpack.c.b16 %v1087, %v1085
        %v1122 = vpack.c.b16 %v1090, %v1088
        %v1123 = vpack.c.b16 %v1091, %v1089
        %1156 = vmatpush.bf16.msra.mxu0 %v1106
        %1157 = vmatpush.bf16.msra.mxu0 %v1104
        %1158 = vmatpush.bf16.msra.mxu0 %v1102
        %1159 = vmatpush.bf16.msra.mxu0 %v1100
        %1160 = vmatpush.bf16.msra.mxu0 %v1098
        %1161 = vmatpush.bf16.msra.mxu0 %v1096
        %1162 = vmatpush.bf16.msra.mxu0 %v1094
        %1163 = vmatpush.bf16.msra.mxu0 %v1092
        %1164 = vmatmul.bf16.gmra.mxu0 %v768
        %v1165 = vpop.f32.mrf.mxu0
        %v1166 = vadd.f32 %v992, %v1165
        %v1167 = vpop.f32.mrf.mxu0
        %v1168 = vadd.f32 %v992, %v1167
        %1169 = vdwg.mxu0
        %1170 = vmatpush.bf16.msra.mxu0 %v1122
        %1171 = vmatpush.bf16.msra.mxu0 %v1120
        %1172 = vmatpush.bf16.msra.mxu0 %v1118
        %1173 = vmatpush.bf16.msra.mxu0 %v1116
        %1174 = vmatpush.bf16.msra.mxu0 %v1114
        %1175 = vmatpush.bf16.msra.mxu0 %v1112
        %1176 = vmatpush.bf16.msra.mxu0 %v1110
        %1177 = vmatpush.bf16.msra.mxu0 %v1108
        %1178 = vmatmul.bf16.gmra.mxu0 %v769
        %v1179 = vpop.f32.mrf.mxu0
        %v1180 = vadd.f32 %v1166, %v1179
        %v1181 = vpop.f32.mrf.mxu0
        %v1182 = vadd.f32 %v1168, %v1181
        %1183 = vdwg.mxu0
        %1184 = vmatpush.bf16.msra.mxu0 %v1107
        %1185 = vmatpush.bf16.msra.mxu0 %v1105
        %1186 = vmatpush.bf16.msra.mxu0 %v1103
        %1187 = vmatpush.bf16.msra.mxu0 %v1101
        %1188 = vmatpush.bf16.msra.mxu0 %v1099
        %1189 = vmatpush.bf16.msra.mxu0 %v1097
        %1190 = vmatpush.bf16.msra.mxu0 %v1095
        %1191 = vmatpush.bf16.msra.mxu0 %v1093
        %1192 = vmatmul.bf16.gmra.mxu0 %v768
        %v1193 = vpop.f32.mrf.mxu0
        %v1194 = vadd.f32 %v993, %v1193
        %v1195 = vpop.f32.mrf.mxu0
        %v1196 = vadd.f32 %v993, %v1195
        %1197 = vdwg.mxu0
        %1198 = vmatpush.bf16.msra.mxu0 %v1123
        %1199 = vmatpush.bf16.msra.mxu0 %v1121
        %1200 = vmatpush.bf16.msra.mxu0 %v1119
        %1201 = vmatpush.bf16.msra.mxu0 %v1117
        %1202 = vmatpush.bf16.msra.mxu0 %v1115
        %1203 = vmatpush.bf16.msra.mxu0 %v1113
        %1204 = vmatpush.bf16.msra.mxu0 %v1111
        %1205 = vmatpush.bf16.msra.mxu0 %v1109
        %1206 = vmatmul.bf16.gmra.mxu0 %v769
        %v1207 = vpop.f32.mrf.mxu0
        %v1208 = vadd.f32 %v1194, %v1207
        %v1209 = vpop.f32.mrf.mxu0
        %v1210 = vadd.f32 %v1196, %v1209
        %1211 = vdwg.mxu0
        %v1213 = vperm.slane %v732, 0
        %v1214 = vperm.slane %v732, 1
        %v1249 = vunpack.c.l.b16 %v699
        %v1250 = vunpack.c.h.b16 %v699
        %v1251 = vunpack.c.l.b16 %v700
        %v1252 = vunpack.c.h.b16 %v700
        %v1253 = vunpack.c.l.b16 %v701
        %v1254 = vunpack.c.h.b16 %v701
        %v1255 = vunpack.c.l.b16 %v702
        %v1256 = vunpack.c.h.b16 %v702
        %v1257 = vunpack.c.l.b16 %v703
        %v1258 = vunpack.c.h.b16 %v703
        %v1259 = vunpack.c.l.b16 %v704
        %v1260 = vunpack.c.h.b16 %v704
        %v1261 = vunpack.c.l.b16 %v705
        %v1262 = vunpack.c.h.b16 %v705
        %v1263 = vunpack.c.l.b16 %v706
        %v1264 = vunpack.c.h.b16 %v706
        %v1265 = vunpack.c.l.b16 %v707
        %v1266 = vunpack.c.h.b16 %v707
        %v1267 = vunpack.c.l.b16 %v708
        %v1268 = vunpack.c.h.b16 %v708
        %v1269 = vunpack.c.l.b16 %v709
        %v1270 = vunpack.c.h.b16 %v709
        %v1271 = vunpack.c.l.b16 %v710
        %v1272 = vunpack.c.h.b16 %v710
        %v1273 = vunpack.c.l.b16 %v711
        %v1274 = vunpack.c.h.b16 %v711
        %v1275 = vunpack.c.l.b16 %v712
        %v1276 = vunpack.c.h.b16 %v712
        %v1277 = vunpack.c.l.b16 %v713
        %v1278 = vunpack.c.h.b16 %v713
        %v1279 = vunpack.c.l.b16 %v714
        %v1280 = vunpack.c.h.b16 %v714
        %v1281 = vunpack.c.l.b16 %v715
        %v1282 = vunpack.c.h.b16 %v715
        %v1283 = vunpack.c.l.b16 %v716
        %v1284 = vunpack.c.h.b16 %v716
        %v1285 = vunpack.c.l.b16 %v717
        %v1286 = vunpack.c.h.b16 %v717
        %v1287 = vunpack.c.l.b16 %v718
        %v1288 = vunpack.c.h.b16 %v718
        %v1289 = vunpack.c.l.b16 %v719
        %v1290 = vunpack.c.h.b16 %v719
        %v1291 = vunpack.c.l.b16 %v720
        %v1292 = vunpack.c.h.b16 %v720
        %v1293 = vunpack.c.l.b16 %v721
        %v1294 = vunpack.c.h.b16 %v721
        %v1295 = vunpack.c.l.b16 %v722
        %v1296 = vunpack.c.h.b16 %v722
        %v1297 = vunpack.c.l.b16 %v723
        %v1298 = vunpack.c.h.b16 %v723
        %v1299 = vunpack.c.l.b16 %v724
        %v1300 = vunpack.c.h.b16 %v724
        %v1301 = vunpack.c.l.b16 %v725
        %v1302 = vunpack.c.h.b16 %v725
        %v1303 = vunpack.c.l.b16 %v726
        %v1304 = vunpack.c.h.b16 %v726
        %v1305 = vunpack.c.l.b16 %v727
        %v1306 = vunpack.c.h.b16 %v727
        %v1307 = vunpack.c.l.b16 %v728
        %v1308 = vunpack.c.h.b16 %v728
        %v1309 = vunpack.c.l.b16 %v729
        %v1310 = vunpack.c.h.b16 %v729
        %v1311 = vunpack.c.l.b16 %v730
        %v1312 = vunpack.c.h.b16 %v730
        %v1313 = vpack.c.b16 %v1251, %v1249
        %v1314 = vpack.c.b16 %v1252, %v1250
        %v1315 = vpack.c.b16 %v1255, %v1253
        %v1316 = vpack.c.b16 %v1256, %v1254
        %v1317 = vpack.c.b16 %v1259, %v1257
        %v1318 = vpack.c.b16 %v1260, %v1258
        %v1319 = vpack.c.b16 %v1263, %v1261
        %v1320 = vpack.c.b16 %v1264, %v1262
        %v1321 = vpack.c.b16 %v1267, %v1265
        %v1322 = vpack.c.b16 %v1268, %v1266
        %v1323 = vpack.c.b16 %v1271, %v1269
        %v1324 = vpack.c.b16 %v1272, %v1270
        %v1325 = vpack.c.b16 %v1275, %v1273
        %v1326 = vpack.c.b16 %v1276, %v1274
        %v1327 = vpack.c.b16 %v1279, %v1277
        %v1328 = vpack.c.b16 %v1280, %v1278
        %v1329 = vpack.c.b16 %v1283, %v1281
        %v1330 = vpack.c.b16 %v1284, %v1282
        %v1331 = vpack.c.b16 %v1287, %v1285
        %v1332 = vpack.c.b16 %v1288, %v1286
        %v1333 = vpack.c.b16 %v1291, %v1289
        %v1334 = vpack.c.b16 %v1292, %v1290
        %v1335 = vpack.c.b16 %v1295, %v1293
        %v1336 = vpack.c.b16 %v1296, %v1294
        %v1337 = vpack.c.b16 %v1299, %v1297
        %v1338 = vpack.c.b16 %v1300, %v1298
        %v1339 = vpack.c.b16 %v1303, %v1301
        %v1340 = vpack.c.b16 %v1304, %v1302
        %v1341 = vpack.c.b16 %v1307, %v1305
        %v1342 = vpack.c.b16 %v1308, %v1306
        %v1343 = vpack.c.b16 %v1311, %v1309
        %v1344 = vpack.c.b16 %v1312, %v1310
        %1377 = vmatpush.bf16.msra.mxu0 %v1327
        %1378 = vmatpush.bf16.msra.mxu0 %v1325
        %1379 = vmatpush.bf16.msra.mxu0 %v1323
        %1380 = vmatpush.bf16.msra.mxu0 %v1321
        %1381 = vmatpush.bf16.msra.mxu0 %v1319
        %1382 = vmatpush.bf16.msra.mxu0 %v1317
        %1383 = vmatpush.bf16.msra.mxu0 %v1315
        %1384 = vmatpush.bf16.msra.mxu0 %v1313
        %1385 = vmatmul.bf16.gmra.mxu0 %v768
        %v1386 = vpop.f32.mrf.mxu0
        %v1387 = vadd.f32 %v1213, %v1386
        %v1388 = vpop.f32.mrf.mxu0
        %v1389 = vadd.f32 %v1213, %v1388
        %1390 = vdwg.mxu0
        %1391 = vmatpush.bf16.msra.mxu0 %v1343
        %1392 = vmatpush.bf16.msra.mxu0 %v1341
        %1393 = vmatpush.bf16.msra.mxu0 %v1339
        %1394 = vmatpush.bf16.msra.mxu0 %v1337
        %1395 = vmatpush.bf16.msra.mxu0 %v1335
        %1396 = vmatpush.bf16.msra.mxu0 %v1333
        %1397 = vmatpush.bf16.msra.mxu0 %v1331
        %1398 = vmatpush.bf16.msra.mxu0 %v1329
        %1399 = vmatmul.bf16.gmra.mxu0 %v769
        %v1400 = vpop.f32.mrf.mxu0
        %v1401 = vadd.f32 %v1387, %v1400
        %v1402 = vpop.f32.mrf.mxu0
        %v1403 = vadd.f32 %v1389, %v1402
        %1404 = vdwg.mxu0
        %1405 = vmatpush.bf16.msra.mxu0 %v1328
        %1406 = vmatpush.bf16.msra.mxu0 %v1326
        %1407 = vmatpush.bf16.msra.mxu0 %v1324
        %1408 = vmatpush.bf16.msra.mxu0 %v1322
        %1409 = vmatpush.bf16.msra.mxu0 %v1320
        %1410 = vmatpush.bf16.msra.mxu0 %v1318
        %1411 = vmatpush.bf16.msra.mxu0 %v1316
        %1412 = vmatpush.bf16.msra.mxu0 %v1314
        %1413 = vmatmul.bf16.gmra.mxu0 %v768
        %v1414 = vpop.f32.mrf.mxu0
        %v1415 = vadd.f32 %v1214, %v1414
        %v1416 = vpop.f32.mrf.mxu0
        %v1417 = vadd.f32 %v1214, %v1416
        %1418 = vdwg.mxu0
        %1419 = vmatpush.bf16.msra.mxu0 %v1344
        %1420 = vmatpush.bf16.msra.mxu0 %v1342
        %1421 = vmatpush.bf16.msra.mxu0 %v1340
        %1422 = vmatpush.bf16.msra.mxu0 %v1338
        %1423 = vmatpush.bf16.msra.mxu0 %v1336
        %1424 = vmatpush.bf16.msra.mxu0 %v1334
        %1425 = vmatpush.bf16.msra.mxu0 %v1332
        %1426 = vmatpush.bf16.msra.mxu0 %v1330
        %1427 = vmatmul.bf16.gmra.mxu0 %v769
        %v1428 = vpop.f32.mrf.mxu0
        %v1429 = vadd.f32 %v1415, %v1428
        %v1430 = vpop.f32.mrf.mxu0
        %v1431 = vadd.f32 %v1417, %v1430
        %1432 = vdwg.mxu0
        %v1433 = vpack.c.bf16 %v987, %v959
        %v1434 = vpack.c.bf16 %v989, %v961
        %v1435 = vpack.c.bf16 %v1208, %v1180
        %v1436 = vpack.c.bf16 %v1210, %v1182
        %v1437 = vpack.c.bf16 %v1429, %v1401
        %v1438 = vpack.c.bf16 %v1431, %v1403
        %v1441 = vunpack.c.l.b16 %v1433
        %v1442 = vunpack.c.l.b16 %v1434
        %v1443 = vpack.c.b16 %v1442, %v1441
        %v1446 = vunpack.c.l.b16 %v1435
        %v1447 = vunpack.c.l.b16 %v1436
        %v1448 = vpack.c.b16 %v1447, %v1446
        %vm1449 = vcmask 523264
        %v1451 = vsel %vm1449, %v1443, 0
        %v1454 = vsel %vm1449, %v1448, 0
        %1456 = vmatpush.bf16.xpose.msra.mxu0 0
        %1457 = vmatpush.bf16.xpose.msra.mxu0 0
        %1458 = vmatpush.bf16.xpose.msra.mxu0 0
        %1459 = vmatpush.bf16.xpose.msra.mxu0 0
        %1460 = vmatpush.bf16.xpose.msra.mxu0 0
        %1461 = vmatpush.bf16.xpose.msra.mxu0 0
        %1462 = vmatpush.bf16.xpose.msra.mxu0 0
        %1463 = vmatpush.bf16.xpose.msra.mxu0 %v1454
        %1464 = vmatmul.bf16.gmra.mxu0 %v1451
        %v1465 = vpop.f32.mrf.mxu0
        %v1466 = vadd.f32 0.0, %v1465
        %v1467 = vpop.f32.mrf.mxu0
        %v1468 = vadd.f32 0.0, %v1467
        %1469 = vdwg.mxu0
        %v1470 = vmul.f32 %v1466, 0.125
        %v1471 = vmul.f32 %v1468, 0.125
        %v1472 = vadd.f32 %v1470, %v628
        %v1473 = vadd.f32 %v1471, %v629
        %vm1474 = vcmask 130048
        %v1475 = vsel %vm1474, %v1472, -inf
        %1476 = vmax.xlane.f32.xlu0 %v1475
        %v1477 = vpop.xlane.xlu0 %1476
        %v1478 = vsel %vm1474, %v1473, -inf
        %1479 = vmax.xlane.f32.xlu0 %v1478
        %v1480 = vpop.xlane.xlu0 %1479
        %v1481 = vsub.f32 %v1472, %v1477
        %v1482 = vsub.f32 %v1473, %v1480
        %v1483 = vmul.f32 %v1481, 1.442695
        %v1484 = vpow.pop %v1483
        %v1485 = vmul.f32 %v1482, 1.442695
        %v1486 = vpow.pop %v1485
        %v1487 = vsel %vm1474, %v1484, 0.0
        %1488 = vadd.xlane.f32.xlu0 %v1487
        %v1489 = vpop.xlane.xlu0 %1488
        %v1490 = vsel %vm1474, %v1486, 0.0
        %1491 = vadd.xlane.f32.xlu0 %v1490
        %v1492 = vpop.xlane.xlu0 %1491
        %v1493 = vrcp.pop %v1489
        %v1494 = vmul.f32 %v1489, %v1493
        %v1495 = vsub.f32 1.0, %v1494
        %v1496 = vmul.f32 %v1493, %v1495
        %v1497 = vadd.f32 %v1493, %v1496
        %vm1498 = vweird.f32 %v1489
        %vm1499 = vweird.f32 %v1493
        %vm1500 = vmor %vm1498, %vm1499
        %v1501 = vsel %vm1500, %v1493, %v1497
        %v1502 = vand.u32 2147483647, %v1489
        %vm1503 = vcmp.eq.f32.partialorder %v1502, 8.507059e+37
        %v1504 = vand.u32 %v1489, 2147483648
        %v1505 = vor.u32 1.1754944e-38, %v1504
        %v1506 = vsel %vm1503, %v1505, %v1501
        %v1507 = vmul.f32 %v1484, %v1506
        %v1508 = vrcp.pop %v1492
        %v1509 = vmul.f32 %v1492, %v1508
        %v1510 = vsub.f32 1.0, %v1509
        %v1511 = vmul.f32 %v1508, %v1510
        %v1512 = vadd.f32 %v1508, %v1511
        %vm1513 = vweird.f32 %v1492
        %vm1514 = vweird.f32 %v1508
        %vm1515 = vmor %vm1513, %vm1514
        %v1516 = vsel %vm1515, %v1508, %v1512
        %v1517 = vand.u32 2147483647, %v1492
        %vm1518 = vcmp.eq.f32.partialorder %v1517, 8.507059e+37
        %v1519 = vand.u32 %v1492, 2147483648
        %v1520 = vor.u32 1.1754944e-38, %v1519
        %v1521 = vsel %vm1518, %v1520, %v1516
        %v1522 = vmul.f32 %v1486, %v1521
        %v1523 = vpack.c.bf16 %v1522, %v1507
        %v1526 = vunpack.c.l.b16 %v1437
        %v1527 = vunpack.c.l.b16 %v1438
        %v1528 = vpack.c.b16 %v1527, %v1526
        %v1531 = vsel %vm1474, %v1523, 0
        %1533 = vmatpush.bf16.msra.mxu0 0
        %1534 = vmatpush.bf16.msra.mxu0 0
        %1535 = vmatpush.bf16.msra.mxu0 0
        %1536 = vmatpush.bf16.msra.mxu0 0
        %1537 = vmatpush.bf16.msra.mxu0 0
        %1538 = vmatpush.bf16.msra.mxu0 0
        %1539 = vmatpush.bf16.msra.mxu0 0
        %1540 = vmatpush.bf16.msra.mxu0 %v1528
        %1541 = vmatmul.bf16.gmra.mxu0 %v1531
        %v1542 = vpop.f32.mrf.mxu0
        %v1543 = vadd.f32 0.0, %v1542
        %v1544 = vpop.f32.mrf.mxu0
        %v1545 = vadd.f32 0.0, %v1544
        %1546 = vdwg.mxu0
        %v1547 = vpack.c.bf16 %v1545, %v1543
        %1548 = vrot.lane.b32.xlu0 %v1443, 64
        %v1549 = vpop.permute.xlu0 %1548
        %1550 = vrot.lane.b32.xlu0 %v1448, 64
        %v1551 = vpop.permute.xlu0 %1550
        %v1553 = vsel %vm1449, %v1549, 0
        %v1556 = vsel %vm1449, %v1551, 0
        %1558 = vmatpush.bf16.xpose.msra.mxu0 0
        %1559 = vmatpush.bf16.xpose.msra.mxu0 0
        %1560 = vmatpush.bf16.xpose.msra.mxu0 0
        %1561 = vmatpush.bf16.xpose.msra.mxu0 0
        %1562 = vmatpush.bf16.xpose.msra.mxu0 0
        %1563 = vmatpush.bf16.xpose.msra.mxu0 0
        %1564 = vmatpush.bf16.xpose.msra.mxu0 0
        %1565 = vmatpush.bf16.xpose.msra.mxu0 %v1556
        %1566 = vmatmul.bf16.gmra.mxu0 %v1553
        %v1567 = vpop.f32.mrf.mxu0
        %v1568 = vadd.f32 0.0, %v1567
        %v1569 = vpop.f32.mrf.mxu0
        %v1570 = vadd.f32 0.0, %v1569
        %1571 = vdwg.mxu0
        %v1572 = vmul.f32 %v1568, 0.125
        %v1573 = vmul.f32 %v1570, 0.125
        %v1574 = vadd.f32 %v1572, %v628
        %v1575 = vadd.f32 %v1573, %v629
        %v1576 = vsel %vm1474, %v1574, -inf
        %1577 = vmax.xlane.f32.xlu0 %v1576
        %v1578 = vpop.xlane.xlu0 %1577
        %v1579 = vsel %vm1474, %v1575, -inf
        %1580 = vmax.xlane.f32.xlu0 %v1579
        %v1581 = vpop.xlane.xlu0 %1580
        %v1582 = vsub.f32 %v1574, %v1578
        %v1583 = vsub.f32 %v1575, %v1581
        %v1584 = vmul.f32 %v1582, 1.442695
        %v1585 = vpow.pop %v1584
        %v1586 = vmul.f32 %v1583, 1.442695
        %v1587 = vpow.pop %v1586
        %v1588 = vsel %vm1474, %v1585, 0.0
        %1589 = vadd.xlane.f32.xlu0 %v1588
        %v1590 = vpop.xlane.xlu0 %1589
        %v1591 = vsel %vm1474, %v1587, 0.0
        %1592 = vadd.xlane.f32.xlu0 %v1591
        %v1593 = vpop.xlane.xlu0 %1592
        %v1594 = vrcp.pop %v1590
        %v1595 = vmul.f32 %v1590, %v1594
        %v1596 = vsub.f32 1.0, %v1595
        %v1597 = vmul.f32 %v1594, %v1596
        %v1598 = vadd.f32 %v1594, %v1597
        %vm1599 = vweird.f32 %v1590
        %vm1600 = vweird.f32 %v1594
        %vm1601 = vmor %vm1599, %vm1600
        %v1602 = vsel %vm1601, %v1594, %v1598
        %v1603 = vand.u32 2147483647, %v1590
        %vm1604 = vcmp.eq.f32.partialorder %v1603, 8.507059e+37
        %v1605 = vand.u32 %v1590, 2147483648
        %v1606 = vor.u32 1.1754944e-38, %v1605
        %v1607 = vsel %vm1604, %v1606, %v1602
        %v1608 = vmul.f32 %v1585, %v1607
        %v1609 = vrcp.pop %v1593
        %v1610 = vmul.f32 %v1593, %v1609
        %v1611 = vsub.f32 1.0, %v1610
        %v1612 = vmul.f32 %v1609, %v1611
        %v1613 = vadd.f32 %v1609, %v1612
        %vm1614 = vweird.f32 %v1593
        %vm1615 = vweird.f32 %v1609
        %vm1616 = vmor %vm1614, %vm1615
        %v1617 = vsel %vm1616, %v1609, %v1613
        %v1618 = vand.u32 2147483647, %v1593
        %vm1619 = vcmp.eq.f32.partialorder %v1618, 8.507059e+37
        %v1620 = vand.u32 %v1593, 2147483648
        %v1621 = vor.u32 1.1754944e-38, %v1620
        %v1622 = vsel %vm1619, %v1621, %v1617
        %v1623 = vmul.f32 %v1587, %v1622
        %v1624 = vpack.c.bf16 %v1623, %v1608
        %1625 = vrot.lane.b32.xlu0 %v1528, 64
        %v1626 = vpop.permute.xlu0 %1625
        %v1629 = vsel %vm1474, %v1624, 0
        %1631 = vmatpush.bf16.msra.mxu0 0
        %1632 = vmatpush.bf16.msra.mxu0 0
        %1633 = vmatpush.bf16.msra.mxu0 0
        %1634 = vmatpush.bf16.msra.mxu0 0
        %1635 = vmatpush.bf16.msra.mxu0 0
        %1636 = vmatpush.bf16.msra.mxu0 0
        %1637 = vmatpush.bf16.msra.mxu0 0
        %1638 = vmatpush.bf16.msra.mxu0 %v1626
        %1639 = vmatmul.bf16.gmra.mxu0 %v1629
        %v1640 = vpop.f32.mrf.mxu0
        %v1641 = vadd.f32 0.0, %v1640
        %v1642 = vpop.f32.mrf.mxu0
        %v1643 = vadd.f32 0.0, %v1642
        %1644 = vdwg.mxu0
        %v1645 = vpack.c.bf16 %v1643, %v1641
        %v1654 = vunpack.c.l.b16 %v742
        %v1655 = vunpack.c.h.b16 %v742
        %v1656 = vunpack.c.l.b16 %v743
        %v1657 = vunpack.c.h.b16 %v743
        %v1658 = vunpack.c.l.b16 %v744
        %v1659 = vunpack.c.h.b16 %v744
        %v1660 = vunpack.c.l.b16 %v745
        %v1661 = vunpack.c.h.b16 %v745
        %v1662 = vunpack.c.l.b16 %v746
        %v1663 = vunpack.c.h.b16 %v746
        %v1664 = vunpack.c.l.b16 %v747
        %v1665 = vunpack.c.h.b16 %v747
        %v1666 = vunpack.c.l.b16 %v748
        %v1667 = vunpack.c.h.b16 %v748
        %v1668 = vunpack.c.l.b16 %v749
        %v1669 = vunpack.c.h.b16 %v749
        %v1670 = vpack.c.b16 %v1656, %v1654
        %v1671 = vpack.c.b16 %v1657, %v1655
        %v1672 = vpack.c.b16 %v1660, %v1658
        %v1673 = vpack.c.b16 %v1661, %v1659
        %v1674 = vpack.c.b16 %v1664, %v1662
        %v1675 = vpack.c.b16 %v1665, %v1663
        %v1676 = vpack.c.b16 %v1668, %v1666
        %v1677 = vpack.c.b16 %v1669, %v1667
        %v1687 = vsel %vm1449, %v1645, 0
        %1689 = vmatpush.bf16.msra.mxu0 0
        %1690 = vmatpush.bf16.msra.mxu0 0
        %1691 = vmatpush.bf16.msra.mxu0 0
        %1692 = vmatpush.bf16.msra.mxu0 0
        %1693 = vmatpush.bf16.msra.mxu0 %v1676
        %1694 = vmatpush.bf16.msra.mxu0 %v1674
        %1695 = vmatpush.bf16.msra.mxu0 %v1672
        %1696 = vmatpush.bf16.msra.mxu0 %v1670
        %1697 = vmatmul.bf16.gmra.mxu0 %v1687
        %v1698 = vpop.f32.mrf.mxu0
        %v1699 = vadd.f32 0.0, %v1698
        %v1700 = vpop.f32.mrf.mxu0
        %v1701 = vadd.f32 0.0, %v1700
        %1702 = vdwg.mxu0
        %1703 = vmatpush.bf16.msra.mxu0 0
        %1704 = vmatpush.bf16.msra.mxu0 0
        %1705 = vmatpush.bf16.msra.mxu0 0
        %1706 = vmatpush.bf16.msra.mxu0 0
        %1707 = vmatpush.bf16.msra.mxu0 %v1677
        %1708 = vmatpush.bf16.msra.mxu0 %v1675
        %1709 = vmatpush.bf16.msra.mxu0 %v1673
        %1710 = vmatpush.bf16.msra.mxu0 %v1671
        %1711 = vmatmul.bf16.gmra.mxu0 %v1687
        %v1712 = vpop.f32.mrf.mxu0
        %v1713 = vadd.f32 0.0, %v1712
        %v1714 = vpop.f32.mrf.mxu0
        %v1715 = vadd.f32 0.0, %v1714
        %1716 = vdwg.mxu0
        %v1725 = vunpack.c.l.b16 %v734
        %v1726 = vunpack.c.h.b16 %v734
        %v1727 = vunpack.c.l.b16 %v735
        %v1728 = vunpack.c.h.b16 %v735
        %v1729 = vunpack.c.l.b16 %v736
        %v1730 = vunpack.c.h.b16 %v736
        %v1731 = vunpack.c.l.b16 %v737
        %v1732 = vunpack.c.h.b16 %v737
        %v1733 = vunpack.c.l.b16 %v738
        %v1734 = vunpack.c.h.b16 %v738
        %v1735 = vunpack.c.l.b16 %v739
        %v1736 = vunpack.c.h.b16 %v739
        %v1737 = vunpack.c.l.b16 %v740
        %v1738 = vunpack.c.h.b16 %v740
        %v1739 = vunpack.c.l.b16 %v741
        %v1740 = vunpack.c.h.b16 %v741
        %v1741 = vpack.c.b16 %v1727, %v1725
        %v1742 = vpack.c.b16 %v1728, %v1726
        %v1743 = vpack.c.b16 %v1731, %v1729
        %v1744 = vpack.c.b16 %v1732, %v1730
        %v1745 = vpack.c.b16 %v1735, %v1733
        %v1746 = vpack.c.b16 %v1736, %v1734
        %v1747 = vpack.c.b16 %v1739, %v1737
        %v1748 = vpack.c.b16 %v1740, %v1738
        %v1758 = vsel %vm1449, %v1547, 0
        %1760 = vmatpush.bf16.msra.mxu0 0
        %1761 = vmatpush.bf16.msra.mxu0 0
        %1762 = vmatpush.bf16.msra.mxu0 0
        %1763 = vmatpush.bf16.msra.mxu0 0
        %1764 = vmatpush.bf16.msra.mxu0 %v1747
        %1765 = vmatpush.bf16.msra.mxu0 %v1745
        %1766 = vmatpush.bf16.msra.mxu0 %v1743
        %1767 = vmatpush.bf16.msra.mxu0 %v1741
        %1768 = vmatmul.bf16.gmra.mxu0 %v1758
        %v1769 = vpop.f32.mrf.mxu0
        %v1770 = vadd.f32 %v1699, %v1769
        %v1771 = vpop.f32.mrf.mxu0
        %v1772 = vadd.f32 %v1701, %v1771
        %1773 = vdwg.mxu0
        %1774 = vmatpush.bf16.msra.mxu0 0
        %1775 = vmatpush.bf16.msra.mxu0 0
        %1776 = vmatpush.bf16.msra.mxu0 0
        %1777 = vmatpush.bf16.msra.mxu0 0
        %1778 = vmatpush.bf16.msra.mxu0 %v1748
        %1779 = vmatpush.bf16.msra.mxu0 %v1746
        %1780 = vmatpush.bf16.msra.mxu0 %v1744
        %1781 = vmatpush.bf16.msra.mxu0 %v1742
        %1782 = vmatmul.bf16.gmra.mxu0 %v1758
        %v1783 = vpop.f32.mrf.mxu0
        %v1784 = vadd.f32 %v1713, %v1783
        %v1785 = vpop.f32.mrf.mxu0
        %v1786 = vadd.f32 %v1715, %v1785
        %1787 = vdwg.mxu0
        %v1788 = vunpack.c.h.b16 %v1433
        %v1789 = vunpack.c.h.b16 %v1434
        %v1790 = vpack.c.b16 %v1789, %v1788
        %v1791 = vunpack.c.h.b16 %v1435
        %v1792 = vunpack.c.h.b16 %v1436
        %v1793 = vpack.c.b16 %v1792, %v1791
        %v1795 = vsel %vm1449, %v1790, 0
        %v1798 = vsel %vm1449, %v1793, 0
        %1800 = vmatpush.bf16.xpose.msra.mxu0 0
        %1801 = vmatpush.bf16.xpose.msra.mxu0 0
        %1802 = vmatpush.bf16.xpose.msra.mxu0 0
        %1803 = vmatpush.bf16.xpose.msra.mxu0 0
        %1804 = vmatpush.bf16.xpose.msra.mxu0 0
        %1805 = vmatpush.bf16.xpose.msra.mxu0 0
        %1806 = vmatpush.bf16.xpose.msra.mxu0 0
        %1807 = vmatpush.bf16.xpose.msra.mxu0 %v1798
        %1808 = vmatmul.bf16.gmra.mxu0 %v1795
        %v1809 = vpop.f32.mrf.mxu0
        %v1810 = vadd.f32 0.0, %v1809
        %v1811 = vpop.f32.mrf.mxu0
        %v1812 = vadd.f32 0.0, %v1811
        %1813 = vdwg.mxu0
        %v1814 = vmul.f32 %v1810, 0.125
        %v1815 = vmul.f32 %v1812, 0.125
        %v1816 = vadd.f32 %v1814, %v628
        %v1817 = vadd.f32 %v1815, %v629
        %v1818 = vsel %vm1474, %v1816, -inf
        %1819 = vmax.xlane.f32.xlu0 %v1818
        %v1820 = vpop.xlane.xlu0 %1819
        %v1821 = vsel %vm1474, %v1817, -inf
        %1822 = vmax.xlane.f32.xlu0 %v1821
        %v1823 = vpop.xlane.xlu0 %1822
        %v1824 = vsub.f32 %v1816, %v1820
        %v1825 = vsub.f32 %v1817, %v1823
        %v1826 = vmul.f32 %v1824, 1.442695
        %v1827 = vpow.pop %v1826
        %v1828 = vmul.f32 %v1825, 1.442695
        %v1829 = vpow.pop %v1828
        %v1830 = vsel %vm1474, %v1827, 0.0
        %1831 = vadd.xlane.f32.xlu0 %v1830
        %v1832 = vpop.xlane.xlu0 %1831
        %v1833 = vsel %vm1474, %v1829, 0.0
        %1834 = vadd.xlane.f32.xlu0 %v1833
        %v1835 = vpop.xlane.xlu0 %1834
        %v1836 = vrcp.pop %v1832
        %v1837 = vmul.f32 %v1832, %v1836
        %v1838 = vsub.f32 1.0, %v1837
        %v1839 = vmul.f32 %v1836, %v1838
        %v1840 = vadd.f32 %v1836, %v1839
        %vm1841 = vweird.f32 %v1832
        %vm1842 = vweird.f32 %v1836
        %vm1843 = vmor %vm1841, %vm1842
        %v1844 = vsel %vm1843, %v1836, %v1840
        %v1845 = vand.u32 2147483647, %v1832
        %vm1846 = vcmp.eq.f32.partialorder %v1845, 8.507059e+37
        %v1847 = vand.u32 %v1832, 2147483648
        %v1848 = vor.u32 1.1754944e-38, %v1847
        %v1849 = vsel %vm1846, %v1848, %v1844
        %v1850 = vmul.f32 %v1827, %v1849
        %v1851 = vrcp.pop %v1835
        %v1852 = vmul.f32 %v1835, %v1851
        %v1853 = vsub.f32 1.0, %v1852
        %v1854 = vmul.f32 %v1851, %v1853
        %v1855 = vadd.f32 %v1851, %v1854
        %vm1856 = vweird.f32 %v1835
        %vm1857 = vweird.f32 %v1851
        %vm1858 = vmor %vm1856, %vm1857
        %v1859 = vsel %vm1858, %v1851, %v1855
        %v1860 = vand.u32 2147483647, %v1835
        %vm1861 = vcmp.eq.f32.partialorder %v1860, 8.507059e+37
        %v1862 = vand.u32 %v1835, 2147483648
        %v1863 = vor.u32 1.1754944e-38, %v1862
        %v1864 = vsel %vm1861, %v1863, %v1859
        %v1865 = vmul.f32 %v1829, %v1864
        %v1866 = vpack.c.bf16 %v1865, %v1850
        %v1867 = vunpack.c.h.b16 %v1437
        %v1868 = vunpack.c.h.b16 %v1438
        %v1869 = vpack.c.b16 %v1868, %v1867
        %v1872 = vsel %vm1474, %v1866, 0
        %1874 = vmatpush.bf16.msra.mxu0 0
        %1875 = vmatpush.bf16.msra.mxu0 0
        %1876 = vmatpush.bf16.msra.mxu0 0
        %1877 = vmatpush.bf16.msra.mxu0 0
        %1878 = vmatpush.bf16.msra.mxu0 0
        %1879 = vmatpush.bf16.msra.mxu0 0
        %1880 = vmatpush.bf16.msra.mxu0 0
        %1881 = vmatpush.bf16.msra.mxu0 %v1869
        %1882 = vmatmul.bf16.gmra.mxu0 %v1872
        %v1883 = vpop.f32.mrf.mxu0
        %v1884 = vadd.f32 0.0, %v1883
        %v1885 = vpop.f32.mrf.mxu0
        %v1886 = vadd.f32 0.0, %v1885
        %1887 = vdwg.mxu0
        %v1888 = vpack.c.bf16 %v1886, %v1884
        %v1897 = vunpack.c.l.b16 %v750
        %v1898 = vunpack.c.h.b16 %v750
        %v1899 = vunpack.c.l.b16 %v751
        %v1900 = vunpack.c.h.b16 %v751
        %v1901 = vunpack.c.l.b16 %v752
        %v1902 = vunpack.c.h.b16 %v752
        %v1903 = vunpack.c.l.b16 %v753
        %v1904 = vunpack.c.h.b16 %v753
        %v1905 = vunpack.c.l.b16 %v754
        %v1906 = vunpack.c.h.b16 %v754
        %v1907 = vunpack.c.l.b16 %v755
        %v1908 = vunpack.c.h.b16 %v755
        %v1909 = vunpack.c.l.b16 %v756
        %v1910 = vunpack.c.h.b16 %v756
        %v1911 = vunpack.c.l.b16 %v757
        %v1912 = vunpack.c.h.b16 %v757
        %v1913 = vpack.c.b16 %v1899, %v1897
        %v1914 = vpack.c.b16 %v1900, %v1898
        %v1915 = vpack.c.b16 %v1903, %v1901
        %v1916 = vpack.c.b16 %v1904, %v1902
        %v1917 = vpack.c.b16 %v1907, %v1905
        %v1918 = vpack.c.b16 %v1908, %v1906
        %v1919 = vpack.c.b16 %v1911, %v1909
        %v1920 = vpack.c.b16 %v1912, %v1910
        %v1930 = vsel %vm1449, %v1888, 0
        %1932 = vmatpush.bf16.msra.mxu0 0
        %1933 = vmatpush.bf16.msra.mxu0 0
        %1934 = vmatpush.bf16.msra.mxu0 0
        %1935 = vmatpush.bf16.msra.mxu0 0
        %1936 = vmatpush.bf16.msra.mxu0 %v1919
        %1937 = vmatpush.bf16.msra.mxu0 %v1917
        %1938 = vmatpush.bf16.msra.mxu0 %v1915
        %1939 = vmatpush.bf16.msra.mxu0 %v1913
        %1940 = vmatmul.bf16.gmra.mxu0 %v1930
        %v1941 = vpop.f32.mrf.mxu0
        %v1942 = vadd.f32 0.0, %v1941
        %v1943 = vpop.f32.mrf.mxu0
        %v1944 = vadd.f32 0.0, %v1943
        %1945 = vdwg.mxu0
        %1946 = vmatpush.bf16.msra.mxu0 0
        %1947 = vmatpush.bf16.msra.mxu0 0
        %1948 = vmatpush.bf16.msra.mxu0 0
        %1949 = vmatpush.bf16.msra.mxu0 0
        %1950 = vmatpush.bf16.msra.mxu0 %v1920
        %1951 = vmatpush.bf16.msra.mxu0 %v1918
        %1952 = vmatpush.bf16.msra.mxu0 %v1916
        %1953 = vmatpush.bf16.msra.mxu0 %v1914
        %1954 = vmatmul.bf16.gmra.mxu0 %v1930
        %v1955 = vpop.f32.mrf.mxu0
        %v1956 = vadd.f32 0.0, %v1955
        %v1957 = vpop.f32.mrf.mxu0
        %v1958 = vadd.f32 0.0, %v1957
        %1959 = vdwg.mxu0
        %v1960 = vadd.f32 %v1770, %v1942
        %v1961 = vadd.f32 %v1784, %v1956
        %v1962 = vadd.f32 %v1772, %v1944
        %v1963 = vadd.f32 %v1786, %v1958
        %1964 = vrot.lane.b32.xlu0 %v1790, 64
        %v1965 = vpop.permute.xlu0 %1964
        %1966 = vrot.lane.b32.xlu0 %v1793, 64
        %v1967 = vpop.permute.xlu0 %1966
        %v1969 = vsel %vm1449, %v1965, 0
        %v1972 = vsel %vm1449, %v1967, 0
        %1974 = vmatpush.bf16.xpose.msra.mxu0 0
        %1975 = vmatpush.bf16.xpose.msra.mxu0 0
        %1976 = vmatpush.bf16.xpose.msra.mxu0 0
        %1977 = vmatpush.bf16.xpose.msra.mxu0 0
        %1978 = vmatpush.bf16.xpose.msra.mxu0 0
        %1979 = vmatpush.bf16.xpose.msra.mxu0 0
        %1980 = vmatpush.bf16.xpose.msra.mxu0 0
        %1981 = vmatpush.bf16.xpose.msra.mxu0 %v1972
        %1982 = vmatmul.bf16.gmra.mxu0 %v1969
        %v1983 = vpop.f32.mrf.mxu0
        %v1984 = vadd.f32 0.0, %v1983
        %v1985 = vpop.f32.mrf.mxu0
        %v1986 = vadd.f32 0.0, %v1985
        %1987 = vdwg.mxu0
        %v1988 = vmul.f32 %v1984, 0.125
        %v1989 = vmul.f32 %v1986, 0.125
        %v1990 = vadd.f32 %v1988, %v628
        %v1991 = vadd.f32 %v1989, %v629
        %v1992 = vsel %vm1474, %v1990, -inf
        %1993 = vmax.xlane.f32.xlu0 %v1992
        %v1994 = vpop.xlane.xlu0 %1993
        %v1995 = vsel %vm1474, %v1991, -inf
        %1996 = vmax.xlane.f32.xlu0 %v1995
        %v1997 = vpop.xlane.xlu0 %1996
        %v1998 = vsub.f32 %v1990, %v1994
        %v1999 = vsub.f32 %v1991, %v1997
        %v2000 = vmul.f32 %v1998, 1.442695
        %v2001 = vpow.pop %v2000
        %v2002 = vmul.f32 %v1999, 1.442695
        %v2003 = vpow.pop %v2002
        %v2004 = vsel %vm1474, %v2001, 0.0
        %2005 = vadd.xlane.f32.xlu0 %v2004
        %v2006 = vpop.xlane.xlu0 %2005
        %v2007 = vsel %vm1474, %v2003, 0.0
        %2008 = vadd.xlane.f32.xlu0 %v2007
        %v2009 = vpop.xlane.xlu0 %2008
        %v2010 = vrcp.pop %v2006
        %v2011 = vmul.f32 %v2006, %v2010
        %v2012 = vsub.f32 1.0, %v2011
        %v2013 = vmul.f32 %v2010, %v2012
        %v2014 = vadd.f32 %v2010, %v2013
        %vm2015 = vweird.f32 %v2006
        %vm2016 = vweird.f32 %v2010
        %vm2017 = vmor %vm2015, %vm2016
        %v2018 = vsel %vm2017, %v2010, %v2014
        %v2019 = vand.u32 2147483647, %v2006
        %vm2020 = vcmp.eq.f32.partialorder %v2019, 8.507059e+37
        %v2021 = vand.u32 %v2006, 2147483648
        %v2022 = vor.u32 1.1754944e-38, %v2021
        %v2023 = vsel %vm2020, %v2022, %v2018
        %v2024 = vmul.f32 %v2001, %v2023
        %v2025 = vrcp.pop %v2009
        %v2026 = vmul.f32 %v2009, %v2025
        %v2027 = vsub.f32 1.0, %v2026
        %v2028 = vmul.f32 %v2025, %v2027
        %v2029 = vadd.f32 %v2025, %v2028
        %vm2030 = vweird.f32 %v2009
        %vm2031 = vweird.f32 %v2025
        %vm2032 = vmor %vm2030, %vm2031
        %v2033 = vsel %vm2032, %v2025, %v2029
        %v2034 = vand.u32 2147483647, %v2009
        %vm2035 = vcmp.eq.f32.partialorder %v2034, 8.507059e+37
        %v2036 = vand.u32 %v2009, 2147483648
        %v2037 = vor.u32 1.1754944e-38, %v2036
        %v2038 = vsel %vm2035, %v2037, %v2033
        %v2039 = vmul.f32 %v2003, %v2038
        %v2040 = vpack.c.bf16 %v2039, %v2024
        %2041 = vrot.lane.b32.xlu0 %v1869, 64
        %v2042 = vpop.permute.xlu0 %2041
        %v2045 = vsel %vm1474, %v2040, 0
        %2047 = vmatpush.bf16.msra.mxu0 0
        %2048 = vmatpush.bf16.msra.mxu0 0
        %2049 = vmatpush.bf16.msra.mxu0 0
        %2050 = vmatpush.bf16.msra.mxu0 0
        %2051 = vmatpush.bf16.msra.mxu0 0
        %2052 = vmatpush.bf16.msra.mxu0 0
        %2053 = vmatpush.bf16.msra.mxu0 0
        %2054 = vmatpush.bf16.msra.mxu0 %v2042
        %2055 = vmatmul.bf16.gmra.mxu0 %v2045
        %v2056 = vpop.f32.mrf.mxu0
        %v2057 = vadd.f32 0.0, %v2056
        %v2058 = vpop.f32.mrf.mxu0
        %v2059 = vadd.f32 0.0, %v2058
        %2060 = vdwg.mxu0
        %v2061 = vpack.c.bf16 %v2059, %v2057
        %v2070 = vunpack.c.l.b16 %v758
        %v2071 = vunpack.c.h.b16 %v758
        %v2072 = vunpack.c.l.b16 %v759
        %v2073 = vunpack.c.h.b16 %v759
        %v2074 = vunpack.c.l.b16 %v760
        %v2075 = vunpack.c.h.b16 %v760
        %v2076 = vunpack.c.l.b16 %v761
        %v2077 = vunpack.c.h.b16 %v761
        %v2078 = vunpack.c.l.b16 %v762
        %v2079 = vunpack.c.h.b16 %v762
        %v2080 = vunpack.c.l.b16 %v763
        %v2081 = vunpack.c.h.b16 %v763
        %v2082 = vunpack.c.l.b16 %v764
        %v2083 = vunpack.c.h.b16 %v764
        %v2084 = vunpack.c.l.b16 %v765
        %v2085 = vunpack.c.h.b16 %v765
        %v2086 = vpack.c.b16 %v2072, %v2070
        %v2087 = vpack.c.b16 %v2073, %v2071
        %v2088 = vpack.c.b16 %v2076, %v2074
        %v2089 = vpack.c.b16 %v2077, %v2075
        %v2090 = vpack.c.b16 %v2080, %v2078
        %v2091 = vpack.c.b16 %v2081, %v2079
        %v2092 = vpack.c.b16 %v2084, %v2082
        %v2093 = vpack.c.b16 %v2085, %v2083
        %v2103 = vsel %vm1449, %v2061, 0
        %2105 = vmatpush.bf16.msra.mxu0 0
        %2106 = vmatpush.bf16.msra.mxu0 0
        %2107 = vmatpush.bf16.msra.mxu0 0
        %2108 = vmatpush.bf16.msra.mxu0 0
        %2109 = vmatpush.bf16.msra.mxu0 %v2092
        %2110 = vmatpush.bf16.msra.mxu0 %v2090
        %2111 = vmatpush.bf16.msra.mxu0 %v2088
        %2112 = vmatpush.bf16.msra.mxu0 %v2086
        %2113 = vmatmul.bf16.gmra.mxu0 %v2103
        %v2114 = vpop.f32.mrf.mxu0
        %v2115 = vadd.f32 0.0, %v2114
        %v2116 = vpop.f32.mrf.mxu0
        %v2117 = vadd.f32 0.0, %v2116
        %2118 = vdwg.mxu0
        %2119 = vmatpush.bf16.msra.mxu0 0
        %2120 = vmatpush.bf16.msra.mxu0 0
        %2121 = vmatpush.bf16.msra.mxu0 0
        %2122 = vmatpush.bf16.msra.mxu0 0
        %2123 = vmatpush.bf16.msra.mxu0 %v2093
        %2124 = vmatpush.bf16.msra.mxu0 %v2091
        %2125 = vmatpush.bf16.msra.mxu0 %v2089
        %2126 = vmatpush.bf16.msra.mxu0 %v2087
        %2127 = vmatmul.bf16.gmra.mxu0 %v2103
        %v2128 = vpop.f32.mrf.mxu0
        %v2129 = vadd.f32 0.0, %v2128
        %v2130 = vpop.f32.mrf.mxu0
        %v2131 = vadd.f32 0.0, %v2130
        %2132 = vdwg.mxu0
        %v2133 = vadd.f32 %v1960, %v2115
        %v2134 = vadd.f32 %v1961, %v2129
        %v2135 = vadd.f32 %v1962, %v2117
        %v2136 = vadd.f32 %v1963, %v2131
        %v2138 = vperm.slane %v767, 0
        %v2139 = vperm.slane %v767, 1
        %v2142 = vadd.f32 %v2133, %v2138
        %v2143 = vadd.f32 %v2134, %v2139
        %v2144 = vadd.f32 %v2135, %v2138
        %v2145 = vadd.f32 %v2136, %v2139
        %v2146 = vadd.f32 %v620, %v2142
        %v2147 = vadd.f32 %v621, %v2143
        %v2148 = vadd.f32 %v622, %v2144
        %v2149 = vadd.f32 %v623, %v2145
        %s2150 = scalar_lea.vmem %s606, 4
        %v2151 = vld [vmem:[%s2150] ss:$8 sm:$0x3]
        %s2152 = scalar_lea.vmem %s606, 5
        %v2153 = vld [vmem:[%s2152] ss:$8 sm:$0x3]
        %v2154 = vadd.f32 %v2146, %v2147
        %2155 = vadd.xlane.f32.xlu0 %v2154
        %v2156 = vpop.xlane.xlu0 %2155
        %v2157 = vadd.f32 %v2148, %v2149
        %2158 = vadd.xlane.f32.xlu0 %v2157
        %v2159 = vpop.xlane.xlu0 %2158
        %v2160 = vrcp.pop 256.0
        %v2161 = vmul.f32 256.0, %v2160
        %v2162 = vsub.f32 1.0, %v2161
        %v2163 = vmul.f32 %v2160, %v2162
        %v2164 = vadd.f32 %v2160, %v2163
        %vm2165 = vweird.f32 %v2160
        %v2166 = vsel %vm2165, %v2160, %v2164
        %v2167 = vmul.f32 %v2156, %v2166
        %v2168 = vmul.f32 %v2159, %v2166
        %v2169 = vsub.f32 %v2146, %v2167
        %v2170 = vsub.f32 %v2147, %v2167
        %v2171 = vsub.f32 %v2148, %v2168
        %v2172 = vsub.f32 %v2149, %v2168
        %v2173 = vmul.f32 %v2169, %v2169
        %v2174 = vmul.f32 %v2170, %v2170
        %v2175 = vmul.f32 %v2171, %v2171
        %v2176 = vmul.f32 %v2172, %v2172
        %v2177 = vadd.f32 %v2173, %v2174
        %2178 = vadd.xlane.f32.xlu0 %v2177
        %v2179 = vpop.xlane.xlu0 %2178
        %v2180 = vadd.f32 %v2175, %v2176
        %2181 = vadd.xlane.f32.xlu0 %v2180
        %v2182 = vpop.xlane.xlu0 %2181
        %v2183 = vmul.f32 %v2179, %v2166
        %v2184 = vmul.f32 %v2182, %v2166
        %v2185 = vadd.f32 %v2183, 1e-05
        %v2186 = vadd.f32 %v2184, 1e-05
        %v2187 = vrsqrt.pop %v2185
        %v2188 = vmul.f32 %v2187, %v2185
        %v2189 = vmul.f32 %v2188, %v2187
        %v2190 = vmul.f32 0.5, %v2189
        %v2191 = vsub.f32 1.5, %v2190
        %v2192 = vmul.f32 %v2187, %v2191
        %vm2193 = vweird.f32 %v2185
        %vm2194 = vweird.f32 %v2187
        %vm2195 = vmor %vm2193, %vm2194
        %v2196 = vsel %vm2195, %v2187, %v2192
        %v2197 = vrsqrt.pop %v2186
        %v2198 = vmul.f32 %v2197, %v2186
        %v2199 = vmul.f32 %v2198, %v2197
        %v2200 = vmul.f32 0.5, %v2199
        %v2201 = vsub.f32 1.5, %v2200
        %v2202 = vmul.f32 %v2197, %v2201
        %vm2203 = vweird.f32 %v2186
        %vm2204 = vweird.f32 %v2197
        %vm2205 = vmor %vm2203, %vm2204
        %v2206 = vsel %vm2205, %v2197, %v2202
        %v2207 = vmul.f32 %v2169, %v2196
        %v2208 = vmul.f32 %v2170, %v2196
        %v2209 = vmul.f32 %v2171, %v2206
        %v2210 = vmul.f32 %v2172, %v2206
        %v2212 = vperm.slane %v2151, 0
        %v2213 = vperm.slane %v2151, 1
        %v2216 = vmul.f32 %v2207, %v2212
        %v2217 = vmul.f32 %v2208, %v2213
        %v2218 = vmul.f32 %v2209, %v2212
        %v2219 = vmul.f32 %v2210, %v2213
        %v2221 = vperm.slane %v2153, 0
        %v2222 = vperm.slane %v2153, 1
        %v2225 = vadd.f32 %v2216, %v2221
        %v2226 = vadd.f32 %v2217, %v2222
        %v2227 = vadd.f32 %v2218, %v2221
        %v2228 = vadd.f32 %v2219, %v2222
        %v2229 = vld [vmem:[%s3] sm:$0xff]
        %v2230 = vld [vmem:[%s3 + $0x8] sm:$0xff]
        %s2231 = scalar_lea.vmem %s500, 1024 [#allocation3]
        %v2232 = vld [vmem:[%s2231] sm:$0xff]
        %v2233 = vld [vmem:[%s2231 + $0x8] sm:$0xff]
        %v2234 = vld [vmem:[%s2231 + $0x10] sm:$0xff]
        %v2235 = vld [vmem:[%s2231 + $0x18] sm:$0xff]
        %v2236 = vld [vmem:[%s2231 + $0x20] sm:$0xff]
        %v2237 = vld [vmem:[%s2231 + $0x28] sm:$0xff]
        %v2238 = vld [vmem:[%s2231 + $0x30] sm:$0xff]
        %v2239 = vld [vmem:[%s2231 + $0x38] sm:$0xff]
        %v2240 = vld [vmem:[%s2231 + $0x40] sm:$0xff]
        %v2241 = vld [vmem:[%s2231 + $0x48] sm:$0xff]
        %v2242 = vld [vmem:[%s2231 + $0x50] sm:$0xff]
        %v2243 = vld [vmem:[%s2231 + $0x58] sm:$0xff]
        %v2244 = vld [vmem:[%s2231 + $0x60] sm:$0xff]
        %v2245 = vld [vmem:[%s2231 + $0x68] sm:$0xff]
        %v2246 = vld [vmem:[%s2231 + $0x70] sm:$0xff]
        %v2247 = vld [vmem:[%s2231 + $0x78] sm:$0xff]
        %v2248 = vld [vmem:[%s2231 + $0x80] sm:$0xff]
        %v2249 = vld [vmem:[%s2231 + $0x88] sm:$0xff]
        %v2250 = vld [vmem:[%s2231 + $0x90] sm:$0xff]
        %v2251 = vld [vmem:[%s2231 + $0x98] sm:$0xff]
        %v2252 = vld [vmem:[%s2231 + $0xa0] sm:$0xff]
        %v2253 = vld [vmem:[%s2231 + $0xa8] sm:$0xff]
        %v2254 = vld [vmem:[%s2231 + $0xb0] sm:$0xff]
        %v2255 = vld [vmem:[%s2231 + $0xb8] sm:$0xff]
        %v2256 = vld [vmem:[%s2231 + $0xc0] sm:$0xff]
        %v2257 = vld [vmem:[%s2231 + $0xc8] sm:$0xff]
        %v2258 = vld [vmem:[%s2231 + $0xd0] sm:$0xff]
        %v2259 = vld [vmem:[%s2231 + $0xd8] sm:$0xff]
        %v2260 = vld [vmem:[%s2231 + $0xe0] sm:$0xff]
        %v2261 = vld [vmem:[%s2231 + $0xe8] sm:$0xff]
        %v2262 = vld [vmem:[%s2231 + $0xf0] sm:$0xff]
        %v2263 = vld [vmem:[%s2231 + $0xf8] sm:$0xff]
        %s2264 = scalar_lea.vmem %s606, 6
        %v2265 = vld [vmem:[%s2264] ss:$8 sm:$0x3]
        %s2266 = scalar_lea.vmem %s500, 1280 [#allocation3]
        %v2267 = vld [vmem:[%s2266] sm:$0xff]
        %v2268 = vld [vmem:[%s2266 + $0x8] sm:$0xff]
        %v2269 = vld [vmem:[%s2266 + $0x10] sm:$0xff]
        %v2270 = vld [vmem:[%s2266 + $0x18] sm:$0xff]
        %v2271 = vld [vmem:[%s2266 + $0x20] sm:$0xff]
        %v2272 = vld [vmem:[%s2266 + $0x28] sm:$0xff]
        %v2273 = vld [vmem:[%s2266 + $0x30] sm:$0xff]
        %v2274 = vld [vmem:[%s2266 + $0x38] sm:$0xff]
        %v2275 = vld [vmem:[%s2266 + $0x40] sm:$0xff]
        %v2276 = vld [vmem:[%s2266 + $0x48] sm:$0xff]
        %v2277 = vld [vmem:[%s2266 + $0x50] sm:$0xff]
        %v2278 = vld [vmem:[%s2266 + $0x58] sm:$0xff]
        %v2279 = vld [vmem:[%s2266 + $0x60] sm:$0xff]
        %v2280 = vld [vmem:[%s2266 + $0x68] sm:$0xff]
        %v2281 = vld [vmem:[%s2266 + $0x70] sm:$0xff]
        %v2282 = vld [vmem:[%s2266 + $0x78] sm:$0xff]
        %v2283 = vld [vmem:[%s2266 + $0x80] sm:$0xff]
        %v2284 = vld [vmem:[%s2266 + $0x88] sm:$0xff]
        %v2285 = vld [vmem:[%s2266 + $0x90] sm:$0xff]
        %v2286 = vld [vmem:[%s2266 + $0x98] sm:$0xff]
        %v2287 = vld [vmem:[%s2266 + $0xa0] sm:$0xff]
        %v2288 = vld [vmem:[%s2266 + $0xa8] sm:$0xff]
        %v2289 = vld [vmem:[%s2266 + $0xb0] sm:$0xff]
        %v2290 = vld [vmem:[%s2266 + $0xb8] sm:$0xff]
        %v2291 = vld [vmem:[%s2266 + $0xc0] sm:$0xff]
        %v2292 = vld [vmem:[%s2266 + $0xc8] sm:$0xff]
        %v2293 = vld [vmem:[%s2266 + $0xd0] sm:$0xff]
        %v2294 = vld [vmem:[%s2266 + $0xd8] sm:$0xff]
        %v2295 = vld [vmem:[%s2266 + $0xe0] sm:$0xff]
        %v2296 = vld [vmem:[%s2266 + $0xe8] sm:$0xff]
        %v2297 = vld [vmem:[%s2266 + $0xf0] sm:$0xff]
        %v2298 = vld [vmem:[%s2266 + $0xf8] sm:$0xff]
        %s2299 = scalar_lea.vmem %s606, 7
        %v2300 = vld [vmem:[%s2299] ss:$8 sm:$0x3]
        %s2301 = scalar_lea.vmem %s500, 1536 [#allocation3]
        %v2302 = vld [vmem:[%s2301] sm:$0xff]
        %v2303 = vld [vmem:[%s2301 + $0x8] sm:$0xff]
        %v2304 = vld [vmem:[%s2301 + $0x10] sm:$0xff]
        %v2305 = vld [vmem:[%s2301 + $0x18] sm:$0xff]
        %v2306 = vld [vmem:[%s2301 + $0x20] sm:$0xff]
        %v2307 = vld [vmem:[%s2301 + $0x28] sm:$0xff]
        %v2308 = vld [vmem:[%s2301 + $0x30] sm:$0xff]
        %v2309 = vld [vmem:[%s2301 + $0x38] sm:$0xff]
        %v2310 = vld [vmem:[%s2301 + $0x40] sm:$0xff]
        %v2311 = vld [vmem:[%s2301 + $0x48] sm:$0xff]
        %v2312 = vld [vmem:[%s2301 + $0x50] sm:$0xff]
        %v2313 = vld [vmem:[%s2301 + $0x58] sm:$0xff]
        %v2314 = vld [vmem:[%s2301 + $0x60] sm:$0xff]
        %v2315 = vld [vmem:[%s2301 + $0x68] sm:$0xff]
        %v2316 = vld [vmem:[%s2301 + $0x70] sm:$0xff]
        %v2317 = vld [vmem:[%s2301 + $0x78] sm:$0xff]
        %v2318 = vld [vmem:[%s2301 + $0x80] sm:$0xff]
        %v2319 = vld [vmem:[%s2301 + $0x88] sm:$0xff]
        %v2320 = vld [vmem:[%s2301 + $0x90] sm:$0xff]
        %v2321 = vld [vmem:[%s2301 + $0x98] sm:$0xff]
        %v2322 = vld [vmem:[%s2301 + $0xa0] sm:$0xff]
        %v2323 = vld [vmem:[%s2301 + $0xa8] sm:$0xff]
        %v2324 = vld [vmem:[%s2301 + $0xb0] sm:$0xff]
        %v2325 = vld [vmem:[%s2301 + $0xb8] sm:$0xff]
        %v2326 = vld [vmem:[%s2301 + $0xc0] sm:$0xff]
        %v2327 = vld [vmem:[%s2301 + $0xc8] sm:$0xff]
        %v2328 = vld [vmem:[%s2301 + $0xd0] sm:$0xff]
        %v2329 = vld [vmem:[%s2301 + $0xd8] sm:$0xff]
        %v2330 = vld [vmem:[%s2301 + $0xe0] sm:$0xff]
        %v2331 = vld [vmem:[%s2301 + $0xe8] sm:$0xff]
        %v2332 = vld [vmem:[%s2301 + $0xf0] sm:$0xff]
        %v2333 = vld [vmem:[%s2301 + $0xf8] sm:$0xff]
        %s2334 = scalar_lea.vmem %s606, 16
        %v2335 = vld [vmem:[%s2334] ss:$8 sm:$0x3]
        %s2336 = scalar_lea.vmem %s500, 1792 [#allocation3]
        %v2337 = vld [vmem:[%s2336] sm:$0xff]
        %v2338 = vld [vmem:[%s2336 + $0x8] sm:$0xff]
        %v2339 = vld [vmem:[%s2336 + $0x10] sm:$0xff]
        %v2340 = vld [vmem:[%s2336 + $0x18] sm:$0xff]
        %v2341 = vld [vmem:[%s2336 + $0x20] sm:$0xff]
        %v2342 = vld [vmem:[%s2336 + $0x28] sm:$0xff]
        %v2343 = vld [vmem:[%s2336 + $0x30] sm:$0xff]
        %v2344 = vld [vmem:[%s2336 + $0x38] sm:$0xff]
        %v2345 = vld [vmem:[%s2336 + $0x40] sm:$0xff]
        %v2346 = vld [vmem:[%s2336 + $0x48] sm:$0xff]
        %v2347 = vld [vmem:[%s2336 + $0x50] sm:$0xff]
        %v2348 = vld [vmem:[%s2336 + $0x58] sm:$0xff]
        %v2349 = vld [vmem:[%s2336 + $0x60] sm:$0xff]
        %v2350 = vld [vmem:[%s2336 + $0x68] sm:$0xff]
        %v2351 = vld [vmem:[%s2336 + $0x70] sm:$0xff]
        %v2352 = vld [vmem:[%s2336 + $0x78] sm:$0xff]
        %v2353 = vld [vmem:[%s2336 + $0x80] sm:$0xff]
        %v2354 = vld [vmem:[%s2336 + $0x88] sm:$0xff]
        %v2355 = vld [vmem:[%s2336 + $0x90] sm:$0xff]
        %v2356 = vld [vmem:[%s2336 + $0x98] sm:$0xff]
        %v2357 = vld [vmem:[%s2336 + $0xa0] sm:$0xff]
        %v2358 = vld [vmem:[%s2336 + $0xa8] sm:$0xff]
        %v2359 = vld [vmem:[%s2336 + $0xb0] sm:$0xff]
        %v2360 = vld [vmem:[%s2336 + $0xb8] sm:$0xff]
        %v2361 = vld [vmem:[%s2336 + $0xc0] sm:$0xff]
        %v2362 = vld [vmem:[%s2336 + $0xc8] sm:$0xff]
        %v2363 = vld [vmem:[%s2336 + $0xd0] sm:$0xff]
        %v2364 = vld [vmem:[%s2336 + $0xd8] sm:$0xff]
        %v2365 = vld [vmem:[%s2336 + $0xe0] sm:$0xff]
        %v2366 = vld [vmem:[%s2336 + $0xe8] sm:$0xff]
        %v2367 = vld [vmem:[%s2336 + $0xf0] sm:$0xff]
        %v2368 = vld [vmem:[%s2336 + $0xf8] sm:$0xff]
        %s2369 = scalar_lea.vmem %s606, 17
        %v2370 = vld [vmem:[%s2369] ss:$8 sm:$0x3]
        %v2371 = vpack.c.bf16 %v2227, %v2225
        %v2372 = vpack.c.bf16 %v2228, %v2226
        %v2373 = vpack.c.bf16 %v626, %v624
        %v2374 = vpack.c.bf16 %v627, %v625
        %v2376 = vperm.slane %v2265, 0
        %v2377 = vperm.slane %v2265, 1
        %v2412 = vunpack.c.l.b16 %v2232
        %v2413 = vunpack.c.h.b16 %v2232
        %v2414 = vunpack.c.l.b16 %v2233
        %v2415 = vunpack.c.h.b16 %v2233
        %v2416 = vunpack.c.l.b16 %v2234
        %v2417 = vunpack.c.h.b16 %v2234
        %v2418 = vunpack.c.l.b16 %v2235
        %v2419 = vunpack.c.h.b16 %v2235
        %v2420 = vunpack.c.l.b16 %v2236
        %v2421 = vunpack.c.h.b16 %v2236
        %v2422 = vunpack.c.l.b16 %v2237
        %v2423 = vunpack.c.h.b16 %v2237
        %v2424 = vunpack.c.l.b16 %v2238
        %v2425 = vunpack.c.h.b16 %v2238
        %v2426 = vunpack.c.l.b16 %v2239
        %v2427 = vunpack.c.h.b16 %v2239
        %v2428 = vunpack.c.l.b16 %v2240
        %v2429 = vunpack.c.h.b16 %v2240
        %v2430 = vunpack.c.l.b16 %v2241
        %v2431 = vunpack.c.h.b16 %v2241
        %v2432 = vunpack.c.l.b16 %v2242
        %v2433 = vunpack.c.h.b16 %v2242
        %v2434 = vunpack.c.l.b16 %v2243
        %v2435 = vunpack.c.h.b16 %v2243
        %v2436 = vunpack.c.l.b16 %v2244
        %v2437 = vunpack.c.h.b16 %v2244
        %v2438 = vunpack.c.l.b16 %v2245
        %v2439 = vunpack.c.h.b16 %v2245
        %v2440 = vunpack.c.l.b16 %v2246
        %v2441 = vunpack.c.h.b16 %v2246
        %v2442 = vunpack.c.l.b16 %v2247
        %v2443 = vunpack.c.h.b16 %v2247
        %v2444 = vunpack.c.l.b16 %v2248
        %v2445 = vunpack.c.h.b16 %v2248
        %v2446 = vunpack.c.l.b16 %v2249
        %v2447 = vunpack.c.h.b16 %v2249
        %v2448 = vunpack.c.l.b16 %v2250
        %v2449 = vunpack.c.h.b16 %v2250
        %v2450 = vunpack.c.l.b16 %v2251
        %v2451 = vunpack.c.h.b16 %v2251
        %v2452 = vunpack.c.l.b16 %v2252
        %v2453 = vunpack.c.h.b16 %v2252
        %v2454 = vunpack.c.l.b16 %v2253
        %v2455 = vunpack.c.h.b16 %v2253
        %v2456 = vunpack.c.l.b16 %v2254
        %v2457 = vunpack.c.h.b16 %v2254
        %v2458 = vunpack.c.l.b16 %v2255
        %v2459 = vunpack.c.h.b16 %v2255
        %v2460 = vunpack.c.l.b16 %v2256
        %v2461 = vunpack.c.h.b16 %v2256
        %v2462 = vunpack.c.l.b16 %v2257
        %v2463 = vunpack.c.h.b16 %v2257
        %v2464 = vunpack.c.l.b16 %v2258
        %v2465 = vunpack.c.h.b16 %v2258
        %v2466 = vunpack.c.l.b16 %v2259
        %v2467 = vunpack.c.h.b16 %v2259
        %v2468 = vunpack.c.l.b16 %v2260
        %v2469 = vunpack.c.h.b16 %v2260
        %v2470 = vunpack.c.l.b16 %v2261
        %v2471 = vunpack.c.h.b16 %v2261
        %v2472 = vunpack.c.l.b16 %v2262
        %v2473 = vunpack.c.h.b16 %v2262
        %v2474 = vunpack.c.l.b16 %v2263
        %v2475 = vunpack.c.h.b16 %v2263
        %v2476 = vpack.c.b16 %v2414, %v2412
        %v2477 = vpack.c.b16 %v2415, %v2413
        %v2478 = vpack.c.b16 %v2418, %v2416
        %v2479 = vpack.c.b16 %v2419, %v2417
        %v2480 = vpack.c.b16 %v2422, %v2420
        %v2481 = vpack.c.b16 %v2423, %v2421
        %v2482 = vpack.c.b16 %v2426, %v2424
        %v2483 = vpack.c.b16 %v2427, %v2425
        %v2484 = vpack.c.b16 %v2430, %v2428
        %v2485 = vpack.c.b16 %v2431, %v2429
        %v2486 = vpack.c.b16 %v2434, %v2432
        %v2487 = vpack.c.b16 %v2435, %v2433
        %v2488 = vpack.c.b16 %v2438, %v2436
        %v2489 = vpack.c.b16 %v2439, %v2437
        %v2490 = vpack.c.b16 %v2442, %v2440
        %v2491 = vpack.c.b16 %v2443, %v2441
        %v2492 = vpack.c.b16 %v2446, %v2444
        %v2493 = vpack.c.b16 %v2447, %v2445
        %v2494 = vpack.c.b16 %v2450, %v2448
        %v2495 = vpack.c.b16 %v2451, %v2449
        %v2496 = vpack.c.b16 %v2454, %v2452
        %v2497 = vpack.c.b16 %v2455, %v2453
        %v2498 = vpack.c.b16 %v2458, %v2456
        %v2499 = vpack.c.b16 %v2459, %v2457
        %v2500 = vpack.c.b16 %v2462, %v2460
        %v2501 = vpack.c.b16 %v2463, %v2461
        %v2502 = vpack.c.b16 %v2466, %v2464
        %v2503 = vpack.c.b16 %v2467, %v2465
        %v2504 = vpack.c.b16 %v2470, %v2468
        %v2505 = vpack.c.b16 %v2471, %v2469
        %v2506 = vpack.c.b16 %v2474, %v2472
        %v2507 = vpack.c.b16 %v2475, %v2473
        %2540 = vmatpush.bf16.msra.mxu0 %v2490
        %2541 = vmatpush.bf16.msra.mxu0 %v2488
        %2542 = vmatpush.bf16.msra.mxu0 %v2486
        %2543 = vmatpush.bf16.msra.mxu0 %v2484
        %2544 = vmatpush.bf16.msra.mxu0 %v2482
        %2545 = vmatpush.bf16.msra.mxu0 %v2480
        %2546 = vmatpush.bf16.msra.mxu0 %v2478
        %2547 = vmatpush.bf16.msra.mxu0 %v2476
        %2548 = vmatmul.bf16.gmra.mxu0 %v2371
        %v2549 = vpop.f32.mrf.mxu0
        %v2550 = vadd.f32 %v2376, %v2549
        %v2551 = vpop.f32.mrf.mxu0
        %v2552 = vadd.f32 %v2376, %v2551
        %2553 = vdwg.mxu0
        %2554 = vmatpush.bf16.msra.mxu0 %v2506
        %2555 = vmatpush.bf16.msra.mxu0 %v2504
        %2556 = vmatpush.bf16.msra.mxu0 %v2502
        %2557 = vmatpush.bf16.msra.mxu0 %v2500
        %2558 = vmatpush.bf16.msra.mxu0 %v2498
        %2559 = vmatpush.bf16.msra.mxu0 %v2496
        %2560 = vmatpush.bf16.msra.mxu0 %v2494
        %2561 = vmatpush.bf16.msra.mxu0 %v2492
        %2562 = vmatmul.bf16.gmra.mxu0 %v2372
        %v2563 = vpop.f32.mrf.mxu0
        %v2564 = vadd.f32 %v2550, %v2563
        %v2565 = vpop.f32.mrf.mxu0
        %v2566 = vadd.f32 %v2552, %v2565
        %2567 = vdwg.mxu0
        %2568 = vmatpush.bf16.msra.mxu0 %v2491
        %2569 = vmatpush.bf16.msra.mxu0 %v2489
        %2570 = vmatpush.bf16.msra.mxu0 %v2487
        %2571 = vmatpush.bf16.msra.mxu0 %v2485
        %2572 = vmatpush.bf16.msra.mxu0 %v2483
        %2573 = vmatpush.bf16.msra.mxu0 %v2481
        %2574 = vmatpush.bf16.msra.mxu0 %v2479
        %2575 = vmatpush.bf16.msra.mxu0 %v2477
        %2576 = vmatmul.bf16.gmra.mxu0 %v2371
        %v2577 = vpop.f32.mrf.mxu0
        %v2578 = vadd.f32 %v2377, %v2577
        %v2579 = vpop.f32.mrf.mxu0
        %v2580 = vadd.f32 %v2377, %v2579
        %2581 = vdwg.mxu0
        %2582 = vmatpush.bf16.msra.mxu0 %v2507
        %2583 = vmatpush.bf16.msra.mxu0 %v2505
        %2584 = vmatpush.bf16.msra.mxu0 %v2503
        %2585 = vmatpush.bf16.msra.mxu0 %v2501
        %2586 = vmatpush.bf16.msra.mxu0 %v2499
        %2587 = vmatpush.bf16.msra.mxu0 %v2497
        %2588 = vmatpush.bf16.msra.mxu0 %v2495
        %2589 = vmatpush.bf16.msra.mxu0 %v2493
        %2590 = vmatmul.bf16.gmra.mxu0 %v2372
        %v2591 = vpop.f32.mrf.mxu0
        %v2592 = vadd.f32 %v2578, %v2591
        %v2593 = vpop.f32.mrf.mxu0
        %v2594 = vadd.f32 %v2580, %v2593
        %2595 = vdwg.mxu0
        %v2597 = vperm.slane %v2300, 0
        %v2598 = vperm.slane %v2300, 1
        %v2633 = vunpack.c.l.b16 %v2267
        %v2634 = vunpack.c.h.b16 %v2267
        %v2635 = vunpack.c.l.b16 %v2268
        %v2636 = vunpack.c.h.b16 %v2268
        %v2637 = vunpack.c.l.b16 %v2269
        %v2638 = vunpack.c.h.b16 %v2269
        %v2639 = vunpack.c.l.b16 %v2270
        %v2640 = vunpack.c.h.b16 %v2270
        %v2641 = vunpack.c.l.b16 %v2271
        %v2642 = vunpack.c.h.b16 %v2271
        %v2643 = vunpack.c.l.b16 %v2272
        %v2644 = vunpack.c.h.b16 %v2272
        %v2645 = vunpack.c.l.b16 %v2273
        %v2646 = vunpack.c.h.b16 %v2273
        %v2647 = vunpack.c.l.b16 %v2274
        %v2648 = vunpack.c.h.b16 %v2274
        %v2649 = vunpack.c.l.b16 %v2275
        %v2650 = vunpack.c.h.b16 %v2275
        %v2651 = vunpack.c.l.b16 %v2276
        %v2652 = vunpack.c.h.b16 %v2276
        %v2653 = vunpack.c.l.b16 %v2277
        %v2654 = vunpack.c.h.b16 %v2277
        %v2655 = vunpack.c.l.b16 %v2278
        %v2656 = vunpack.c.h.b16 %v2278
        %v2657 = vunpack.c.l.b16 %v2279
        %v2658 = vunpack.c.h.b16 %v2279
        %v2659 = vunpack.c.l.b16 %v2280
        %v2660 = vunpack.c.h.b16 %v2280
        %v2661 = vunpack.c.l.b16 %v2281
        %v2662 = vunpack.c.h.b16 %v2281
        %v2663 = vunpack.c.l.b16 %v2282
        %v2664 = vunpack.c.h.b16 %v2282
        %v2665 = vunpack.c.l.b16 %v2283
        %v2666 = vunpack.c.h.b16 %v2283
        %v2667 = vunpack.c.l.b16 %v2284
        %v2668 = vunpack.c.h.b16 %v2284
        %v2669 = vunpack.c.l.b16 %v2285
        %v2670 = vunpack.c.h.b16 %v2285
        %v2671 = vunpack.c.l.b16 %v2286
        %v2672 = vunpack.c.h.b16 %v2286
        %v2673 = vunpack.c.l.b16 %v2287
        %v2674 = vunpack.c.h.b16 %v2287
        %v2675 = vunpack.c.l.b16 %v2288
        %v2676 = vunpack.c.h.b16 %v2288
        %v2677 = vunpack.c.l.b16 %v2289
        %v2678 = vunpack.c.h.b16 %v2289
        %v2679 = vunpack.c.l.b16 %v2290
        %v2680 = vunpack.c.h.b16 %v2290
        %v2681 = vunpack.c.l.b16 %v2291
        %v2682 = vunpack.c.h.b16 %v2291
        %v2683 = vunpack.c.l.b16 %v2292
        %v2684 = vunpack.c.h.b16 %v2292
        %v2685 = vunpack.c.l.b16 %v2293
        %v2686 = vunpack.c.h.b16 %v2293
        %v2687 = vunpack.c.l.b16 %v2294
        %v2688 = vunpack.c.h.b16 %v2294
        %v2689 = vunpack.c.l.b16 %v2295
        %v2690 = vunpack.c.h.b16 %v2295
        %v2691 = vunpack.c.l.b16 %v2296
        %v2692 = vunpack.c.h.b16 %v2296
        %v2693 = vunpack.c.l.b16 %v2297
        %v2694 = vunpack.c.h.b16 %v2297
        %v2695 = vunpack.c.l.b16 %v2298
        %v2696 = vunpack.c.h.b16 %v2298
        %v2697 = vpack.c.b16 %v2635, %v2633
        %v2698 = vpack.c.b16 %v2636, %v2634
        %v2699 = vpack.c.b16 %v2639, %v2637
        %v2700 = vpack.c.b16 %v2640, %v2638
        %v2701 = vpack.c.b16 %v2643, %v2641
        %v2702 = vpack.c.b16 %v2644, %v2642
        %v2703 = vpack.c.b16 %v2647, %v2645
        %v2704 = vpack.c.b16 %v2648, %v2646
        %v2705 = vpack.c.b16 %v2651, %v2649
        %v2706 = vpack.c.b16 %v2652, %v2650
        %v2707 = vpack.c.b16 %v2655, %v2653
        %v2708 = vpack.c.b16 %v2656, %v2654
        %v2709 = vpack.c.b16 %v2659, %v2657
        %v2710 = vpack.c.b16 %v2660, %v2658
        %v2711 = vpack.c.b16 %v2663, %v2661
        %v2712 = vpack.c.b16 %v2664, %v2662
        %v2713 = vpack.c.b16 %v2667, %v2665
        %v2714 = vpack.c.b16 %v2668, %v2666
        %v2715 = vpack.c.b16 %v2671, %v2669
        %v2716 = vpack.c.b16 %v2672, %v2670
        %v2717 = vpack.c.b16 %v2675, %v2673
        %v2718 = vpack.c.b16 %v2676, %v2674
        %v2719 = vpack.c.b16 %v2679, %v2677
        %v2720 = vpack.c.b16 %v2680, %v2678
        %v2721 = vpack.c.b16 %v2683, %v2681
        %v2722 = vpack.c.b16 %v2684, %v2682
        %v2723 = vpack.c.b16 %v2687, %v2685
        %v2724 = vpack.c.b16 %v2688, %v2686
        %v2725 = vpack.c.b16 %v2691, %v2689
        %v2726 = vpack.c.b16 %v2692, %v2690
        %v2727 = vpack.c.b16 %v2695, %v2693
        %v2728 = vpack.c.b16 %v2696, %v2694
        %2761 = vmatpush.bf16.msra.mxu0 %v2711
        %2762 = vmatpush.bf16.msra.mxu0 %v2709
        %2763 = vmatpush.bf16.msra.mxu0 %v2707
        %2764 = vmatpush.bf16.msra.mxu0 %v2705
        %2765 = vmatpush.bf16.msra.mxu0 %v2703
        %2766 = vmatpush.bf16.msra.mxu0 %v2701
        %2767 = vmatpush.bf16.msra.mxu0 %v2699
        %2768 = vmatpush.bf16.msra.mxu0 %v2697
        %2769 = vmatmul.bf16.gmra.mxu0 %v2373
        %v2770 = vpop.f32.mrf.mxu0
        %v2771 = vadd.f32 %v2597, %v2770
        %v2772 = vpop.f32.mrf.mxu0
        %v2773 = vadd.f32 %v2597, %v2772
        %2774 = vdwg.mxu0
        %2775 = vmatpush.bf16.msra.mxu0 %v2727
        %2776 = vmatpush.bf16.msra.mxu0 %v2725
        %2777 = vmatpush.bf16.msra.mxu0 %v2723
        %2778 = vmatpush.bf16.msra.mxu0 %v2721
        %2779 = vmatpush.bf16.msra.mxu0 %v2719
        %2780 = vmatpush.bf16.msra.mxu0 %v2717
        %2781 = vmatpush.bf16.msra.mxu0 %v2715
        %2782 = vmatpush.bf16.msra.mxu0 %v2713
        %2783 = vmatmul.bf16.gmra.mxu0 %v2374
        %v2784 = vpop.f32.mrf.mxu0
        %v2785 = vadd.f32 %v2771, %v2784
        %v2786 = vpop.f32.mrf.mxu0
        %v2787 = vadd.f32 %v2773, %v2786
        %2788 = vdwg.mxu0
        %2789 = vmatpush.bf16.msra.mxu0 %v2712
        %2790 = vmatpush.bf16.msra.mxu0 %v2710
        %2791 = vmatpush.bf16.msra.mxu0 %v2708
        %2792 = vmatpush.bf16.msra.mxu0 %v2706
        %2793 = vmatpush.bf16.msra.mxu0 %v2704
        %2794 = vmatpush.bf16.msra.mxu0 %v2702
        %2795 = vmatpush.bf16.msra.mxu0 %v2700
        %2796 = vmatpush.bf16.msra.mxu0 %v2698
        %2797 = vmatmul.bf16.gmra.mxu0 %v2373
        %v2798 = vpop.f32.mrf.mxu0
        %v2799 = vadd.f32 %v2598, %v2798
        %v2800 = vpop.f32.mrf.mxu0
        %v2801 = vadd.f32 %v2598, %v2800
        %2802 = vdwg.mxu0
        %2803 = vmatpush.bf16.msra.mxu0 %v2728
        %2804 = vmatpush.bf16.msra.mxu0 %v2726
        %2805 = vmatpush.bf16.msra.mxu0 %v2724
        %2806 = vmatpush.bf16.msra.mxu0 %v2722
        %2807 = vmatpush.bf16.msra.mxu0 %v2720
        %2808 = vmatpush.bf16.msra.mxu0 %v2718
        %2809 = vmatpush.bf16.msra.mxu0 %v2716
        %2810 = vmatpush.bf16.msra.mxu0 %v2714
        %2811 = vmatmul.bf16.gmra.mxu0 %v2374
        %v2812 = vpop.f32.mrf.mxu0
        %v2813 = vadd.f32 %v2799, %v2812
        %v2814 = vpop.f32.mrf.mxu0
        %v2815 = vadd.f32 %v2801, %v2814
        %2816 = vdwg.mxu0
        %v2818 = vperm.slane %v2335, 0
        %v2819 = vperm.slane %v2335, 1
        %v2854 = vunpack.c.l.b16 %v2302
        %v2855 = vunpack.c.h.b16 %v2302
        %v2856 = vunpack.c.l.b16 %v2303
        %v2857 = vunpack.c.h.b16 %v2303
        %v2858 = vunpack.c.l.b16 %v2304
        %v2859 = vunpack.c.h.b16 %v2304
        %v2860 = vunpack.c.l.b16 %v2305
        %v2861 = vunpack.c.h.b16 %v2305
        %v2862 = vunpack.c.l.b16 %v2306
        %v2863 = vunpack.c.h.b16 %v2306
        %v2864 = vunpack.c.l.b16 %v2307
        %v2865 = vunpack.c.h.b16 %v2307
        %v2866 = vunpack.c.l.b16 %v2308
        %v2867 = vunpack.c.h.b16 %v2308
        %v2868 = vunpack.c.l.b16 %v2309
        %v2869 = vunpack.c.h.b16 %v2309
        %v2870 = vunpack.c.l.b16 %v2310
        %v2871 = vunpack.c.h.b16 %v2310
        %v2872 = vunpack.c.l.b16 %v2311
        %v2873 = vunpack.c.h.b16 %v2311
        %v2874 = vunpack.c.l.b16 %v2312
        %v2875 = vunpack.c.h.b16 %v2312
        %v2876 = vunpack.c.l.b16 %v2313
        %v2877 = vunpack.c.h.b16 %v2313
        %v2878 = vunpack.c.l.b16 %v2314
        %v2879 = vunpack.c.h.b16 %v2314
        %v2880 = vunpack.c.l.b16 %v2315
        %v2881 = vunpack.c.h.b16 %v2315
        %v2882 = vunpack.c.l.b16 %v2316
        %v2883 = vunpack.c.h.b16 %v2316
        %v2884 = vunpack.c.l.b16 %v2317
        %v2885 = vunpack.c.h.b16 %v2317
        %v2886 = vunpack.c.l.b16 %v2318
        %v2887 = vunpack.c.h.b16 %v2318
        %v2888 = vunpack.c.l.b16 %v2319
        %v2889 = vunpack.c.h.b16 %v2319
        %v2890 = vunpack.c.l.b16 %v2320
        %v2891 = vunpack.c.h.b16 %v2320
        %v2892 = vunpack.c.l.b16 %v2321
        %v2893 = vunpack.c.h.b16 %v2321
        %v2894 = vunpack.c.l.b16 %v2322
        %v2895 = vunpack.c.h.b16 %v2322
        %v2896 = vunpack.c.l.b16 %v2323
        %v2897 = vunpack.c.h.b16 %v2323
        %v2898 = vunpack.c.l.b16 %v2324
        %v2899 = vunpack.c.h.b16 %v2324
        %v2900 = vunpack.c.l.b16 %v2325
        %v2901 = vunpack.c.h.b16 %v2325
        %v2902 = vunpack.c.l.b16 %v2326
        %v2903 = vunpack.c.h.b16 %v2326
        %v2904 = vunpack.c.l.b16 %v2327
        %v2905 = vunpack.c.h.b16 %v2327
        %v2906 = vunpack.c.l.b16 %v2328
        %v2907 = vunpack.c.h.b16 %v2328
        %v2908 = vunpack.c.l.b16 %v2329
        %v2909 = vunpack.c.h.b16 %v2329
        %v2910 = vunpack.c.l.b16 %v2330
        %v2911 = vunpack.c.h.b16 %v2330
        %v2912 = vunpack.c.l.b16 %v2331
        %v2913 = vunpack.c.h.b16 %v2331
        %v2914 = vunpack.c.l.b16 %v2332
        %v2915 = vunpack.c.h.b16 %v2332
        %v2916 = vunpack.c.l.b16 %v2333
        %v2917 = vunpack.c.h.b16 %v2333
        %v2918 = vpack.c.b16 %v2856, %v2854
        %v2919 = vpack.c.b16 %v2857, %v2855
        %v2920 = vpack.c.b16 %v2860, %v2858
        %v2921 = vpack.c.b16 %v2861, %v2859
        %v2922 = vpack.c.b16 %v2864, %v2862
        %v2923 = vpack.c.b16 %v2865, %v2863
        %v2924 = vpack.c.b16 %v2868, %v2866
        %v2925 = vpack.c.b16 %v2869, %v2867
        %v2926 = vpack.c.b16 %v2872, %v2870
        %v2927 = vpack.c.b16 %v2873, %v2871
        %v2928 = vpack.c.b16 %v2876, %v2874
        %v2929 = vpack.c.b16 %v2877, %v2875
        %v2930 = vpack.c.b16 %v2880, %v2878
        %v2931 = vpack.c.b16 %v2881, %v2879
        %v2932 = vpack.c.b16 %v2884, %v2882
        %v2933 = vpack.c.b16 %v2885, %v2883
        %v2934 = vpack.c.b16 %v2888, %v2886
        %v2935 = vpack.c.b16 %v2889, %v2887
        %v2936 = vpack.c.b16 %v2892, %v2890
        %v2937 = vpack.c.b16 %v2893, %v2891
        %v2938 = vpack.c.b16 %v2896, %v2894
        %v2939 = vpack.c.b16 %v2897, %v2895
        %v2940 = vpack.c.b16 %v2900, %v2898
        %v2941 = vpack.c.b16 %v2901, %v2899
        %v2942 = vpack.c.b16 %v2904, %v2902
        %v2943 = vpack.c.b16 %v2905, %v2903
        %v2944 = vpack.c.b16 %v2908, %v2906
        %v2945 = vpack.c.b16 %v2909, %v2907
        %v2946 = vpack.c.b16 %v2912, %v2910
        %v2947 = vpack.c.b16 %v2913, %v2911
        %v2948 = vpack.c.b16 %v2916, %v2914
        %v2949 = vpack.c.b16 %v2917, %v2915
        %2982 = vmatpush.bf16.msra.mxu0 %v2932
        %2983 = vmatpush.bf16.msra.mxu0 %v2930
        %2984 = vmatpush.bf16.msra.mxu0 %v2928
        %2985 = vmatpush.bf16.msra.mxu0 %v2926
        %2986 = vmatpush.bf16.msra.mxu0 %v2924
        %2987 = vmatpush.bf16.msra.mxu0 %v2922
        %2988 = vmatpush.bf16.msra.mxu0 %v2920
        %2989 = vmatpush.bf16.msra.mxu0 %v2918
        %2990 = vmatmul.bf16.gmra.mxu0 %v2373
        %v2991 = vpop.f32.mrf.mxu0
        %v2992 = vadd.f32 %v2818, %v2991
        %v2993 = vpop.f32.mrf.mxu0
        %v2994 = vadd.f32 %v2818, %v2993
        %2995 = vdwg.mxu0
        %2996 = vmatpush.bf16.msra.mxu0 %v2948
        %2997 = vmatpush.bf16.msra.mxu0 %v2946
        %2998 = vmatpush.bf16.msra.mxu0 %v2944
        %2999 = vmatpush.bf16.msra.mxu0 %v2942
        %3000 = vmatpush.bf16.msra.mxu0 %v2940
        %3001 = vmatpush.bf16.msra.mxu0 %v2938
        %3002 = vmatpush.bf16.msra.mxu0 %v2936
        %3003 = vmatpush.bf16.msra.mxu0 %v2934
        %3004 = vmatmul.bf16.gmra.mxu0 %v2374
        %v3005 = vpop.f32.mrf.mxu0
        %v3006 = vadd.f32 %v2992, %v3005
        %v3007 = vpop.f32.mrf.mxu0
        %v3008 = vadd.f32 %v2994, %v3007
        %3009 = vdwg.mxu0
        %3010 = vmatpush.bf16.msra.mxu0 %v2933
        %3011 = vmatpush.bf16.msra.mxu0 %v2931
        %3012 = vmatpush.bf16.msra.mxu0 %v2929
        %3013 = vmatpush.bf16.msra.mxu0 %v2927
        %3014 = vmatpush.bf16.msra.mxu0 %v2925
        %3015 = vmatpush.bf16.msra.mxu0 %v2923
        %3016 = vmatpush.bf16.msra.mxu0 %v2921
        %3017 = vmatpush.bf16.msra.mxu0 %v2919
        %3018 = vmatmul.bf16.gmra.mxu0 %v2373
        %v3019 = vpop.f32.mrf.mxu0
        %v3020 = vadd.f32 %v2819, %v3019
        %v3021 = vpop.f32.mrf.mxu0
        %v3022 = vadd.f32 %v2819, %v3021
        %3023 = vdwg.mxu0
        %3024 = vmatpush.bf16.msra.mxu0 %v2949
        %3025 = vmatpush.bf16.msra.mxu0 %v2947
        %3026 = vmatpush.bf16.msra.mxu0 %v2945
        %3027 = vmatpush.bf16.msra.mxu0 %v2943
        %3028 = vmatpush.bf16.msra.mxu0 %v2941
        %3029 = vmatpush.bf16.msra.mxu0 %v2939
        %3030 = vmatpush.bf16.msra.mxu0 %v2937
        %3031 = vmatpush.bf16.msra.mxu0 %v2935
        %3032 = vmatmul.bf16.gmra.mxu0 %v2374
        %v3033 = vpop.f32.mrf.mxu0
        %v3034 = vadd.f32 %v3020, %v3033
        %v3035 = vpop.f32.mrf.mxu0
        %v3036 = vadd.f32 %v3022, %v3035
        %3037 = vdwg.mxu0
        %v3038 = vpack.c.bf16 %v2592, %v2564
        %v3039 = vpack.c.bf16 %v2594, %v2566
        %v3040 = vpack.c.bf16 %v2813, %v2785
        %v3041 = vpack.c.bf16 %v2815, %v2787
        %v3042 = vpack.c.bf16 %v3034, %v3006
        %v3043 = vpack.c.bf16 %v3036, %v3008
        %v3046 = vunpack.c.l.b16 %v3038
        %v3047 = vunpack.c.l.b16 %v3039
        %v3048 = vpack.c.b16 %v3047, %v3046
        %v3051 = vunpack.c.l.b16 %v3040
        %v3052 = vunpack.c.l.b16 %v3041
        %v3053 = vpack.c.b16 %v3052, %v3051
        %v3055 = vsel %vm1449, %v3048, 0
        %v3058 = vsel %vm1449, %v3053, 0
        %3060 = vmatpush.bf16.xpose.msra.mxu0 0
        %3061 = vmatpush.bf16.xpose.msra.mxu0 0
        %3062 = vmatpush.bf16.xpose.msra.mxu0 0
        %3063 = vmatpush.bf16.xpose.msra.mxu0 0
        %3064 = vmatpush.bf16.xpose.msra.mxu0 0
        %3065 = vmatpush.bf16.xpose.msra.mxu0 0
        %3066 = vmatpush.bf16.xpose.msra.mxu0 0
        %3067 = vmatpush.bf16.xpose.msra.mxu0 %v3058
        %3068 = vmatmul.bf16.gmra.mxu0 %v3055
        %v3069 = vpop.f32.mrf.mxu0
        %v3070 = vadd.f32 0.0, %v3069
        %v3071 = vpop.f32.mrf.mxu0
        %v3072 = vadd.f32 0.0, %v3071
        %3073 = vdwg.mxu0
        %v3074 = vmul.f32 %v3070, 0.125
        %v3075 = vmul.f32 %v3072, 0.125
        %v3076 = vadd.f32 %v3074, %v2229
        %v3077 = vadd.f32 %v3075, %v2230
        %v3078 = vsel %vm1474, %v3076, -inf
        %3079 = vmax.xlane.f32.xlu0 %v3078
        %v3080 = vpop.xlane.xlu0 %3079
        %v3081 = vsel %vm1474, %v3077, -inf
        %3082 = vmax.xlane.f32.xlu0 %v3081
        %v3083 = vpop.xlane.xlu0 %3082
        %v3084 = vsub.f32 %v3076, %v3080
        %v3085 = vsub.f32 %v3077, %v3083
        %v3086 = vmul.f32 %v3084, 1.442695
        %v3087 = vpow.pop %v3086
        %v3088 = vmul.f32 %v3085, 1.442695
        %v3089 = vpow.pop %v3088
        %v3090 = vsel %vm1474, %v3087, 0.0
        %3091 = vadd.xlane.f32.xlu0 %v3090
        %v3092 = vpop.xlane.xlu0 %3091
        %v3093 = vsel %vm1474, %v3089, 0.0
        %3094 = vadd.xlane.f32.xlu0 %v3093
        %v3095 = vpop.xlane.xlu0 %3094
        %v3096 = vrcp.pop %v3092
        %v3097 = vmul.f32 %v3092, %v3096
        %v3098 = vsub.f32 1.0, %v3097
        %v3099 = vmul.f32 %v3096, %v3098
        %v3100 = vadd.f32 %v3096, %v3099
        %vm3101 = vweird.f32 %v3092
        %vm3102 = vweird.f32 %v3096
        %vm3103 = vmor %vm3101, %vm3102
        %v3104 = vsel %vm3103, %v3096, %v3100
        %v3105 = vand.u32 2147483647, %v3092
        %vm3106 = vcmp.eq.f32.partialorder %v3105, 8.507059e+37
        %v3107 = vand.u32 %v3092, 2147483648
        %v3108 = vor.u32 1.1754944e-38, %v3107
        %v3109 = vsel %vm3106, %v3108, %v3104
        %v3110 = vmul.f32 %v3087, %v3109
        %v3111 = vrcp.pop %v3095
        %v3112 = vmul.f32 %v3095, %v3111
        %v3113 = vsub.f32 1.0, %v3112
        %v3114 = vmul.f32 %v3111, %v3113
        %v3115 = vadd.f32 %v3111, %v3114
        %vm3116 = vweird.f32 %v3095
        %vm3117 = vweird.f32 %v3111
        %vm3118 = vmor %vm3116, %vm3117
        %v3119 = vsel %vm3118, %v3111, %v3115
        %v3120 = vand.u32 2147483647, %v3095
        %vm3121 = vcmp.eq.f32.partialorder %v3120, 8.507059e+37
        %v3122 = vand.u32 %v3095, 2147483648
        %v3123 = vor.u32 1.1754944e-38, %v3122
        %v3124 = vsel %vm3121, %v3123, %v3119
        %v3125 = vmul.f32 %v3089, %v3124
        %v3126 = vpack.c.bf16 %v3125, %v3110
        %v3129 = vunpack.c.l.b16 %v3042
        %v3130 = vunpack.c.l.b16 %v3043
        %v3131 = vpack.c.b16 %v3130, %v3129
        %v3134 = vsel %vm1474, %v3126, 0
        %3136 = vmatpush.bf16.msra.mxu0 0
        %3137 = vmatpush.bf16.msra.mxu0 0
        %3138 = vmatpush.bf16.msra.mxu0 0
        %3139 = vmatpush.bf16.msra.mxu0 0
        %3140 = vmatpush.bf16.msra.mxu0 0
        %3141 = vmatpush.bf16.msra.mxu0 0
        %3142 = vmatpush.bf16.msra.mxu0 0
        %3143 = vmatpush.bf16.msra.mxu0 %v3131
        %3144 = vmatmul.bf16.gmra.mxu0 %v3134
        %v3145 = vpop.f32.mrf.mxu0
        %v3146 = vadd.f32 0.0, %v3145
        %v3147 = vpop.f32.mrf.mxu0
        %v3148 = vadd.f32 0.0, %v3147
        %3149 = vdwg.mxu0
        %v3150 = vpack.c.bf16 %v3148, %v3146
        %3151 = vrot.lane.b32.xlu0 %v3048, 64
        %v3152 = vpop.permute.xlu0 %3151
        %3153 = vrot.lane.b32.xlu0 %v3053, 64
        %v3154 = vpop.permute.xlu0 %3153
        %v3156 = vsel %vm1449, %v3152, 0
        %v3159 = vsel %vm1449, %v3154, 0
        %3161 = vmatpush.bf16.xpose.msra.mxu0 0
        %3162 = vmatpush.bf16.xpose.msra.mxu0 0
        %3163 = vmatpush.bf16.xpose.msra.mxu0 0
        %3164 = vmatpush.bf16.xpose.msra.mxu0 0
        %3165 = vmatpush.bf16.xpose.msra.mxu0 0
        %3166 = vmatpush.bf16.xpose.msra.mxu0 0
        %3167 = vmatpush.bf16.xpose.msra.mxu0 0
        %3168 = vmatpush.bf16.xpose.msra.mxu0 %v3159
        %3169 = vmatmul.bf16.gmra.mxu0 %v3156
        %v3170 = vpop.f32.mrf.mxu0
        %v3171 = vadd.f32 0.0, %v3170
        %v3172 = vpop.f32.mrf.mxu0
        %v3173 = vadd.f32 0.0, %v3172
        %3174 = vdwg.mxu0
        %v3175 = vmul.f32 %v3171, 0.125
        %v3176 = vmul.f32 %v3173, 0.125
        %v3177 = vadd.f32 %v3175, %v2229
        %v3178 = vadd.f32 %v3176, %v2230
        %v3179 = vsel %vm1474, %v3177, -inf
        %3180 = vmax.xlane.f32.xlu0 %v3179
        %v3181 = vpop.xlane.xlu0 %3180
        %v3182 = vsel %vm1474, %v3178, -inf
        %3183 = vmax.xlane.f32.xlu0 %v3182
        %v3184 = vpop.xlane.xlu0 %3183
        %v3185 = vsub.f32 %v3177, %v3181
        %v3186 = vsub.f32 %v3178, %v3184
        %v3187 = vmul.f32 %v3185, 1.442695
        %v3188 = vpow.pop %v3187
        %v3189 = vmul.f32 %v3186, 1.442695
        %v3190 = vpow.pop %v3189
        %v3191 = vsel %vm1474, %v3188, 0.0
        %3192 = vadd.xlane.f32.xlu0 %v3191
        %v3193 = vpop.xlane.xlu0 %3192
        %v3194 = vsel %vm1474, %v3190, 0.0
        %3195 = vadd.xlane.f32.xlu0 %v3194
        %v3196 = vpop.xlane.xlu0 %3195
        %v3197 = vrcp.pop %v3193
        %v3198 = vmul.f32 %v3193, %v3197
        %v3199 = vsub.f32 1.0, %v3198
        %v3200 = vmul.f32 %v3197, %v3199
        %v3201 = vadd.f32 %v3197, %v3200
        %vm3202 = vweird.f32 %v3193
        %vm3203 = vweird.f32 %v3197
        %vm3204 = vmor %vm3202, %vm3203
        %v3205 = vsel %vm3204, %v3197, %v3201
        %v3206 = vand.u32 2147483647, %v3193
        %vm3207 = vcmp.eq.f32.partialorder %v3206, 8.507059e+37
        %v3208 = vand.u32 %v3193, 2147483648
        %v3209 = vor.u32 1.1754944e-38, %v3208
        %v3210 = vsel %vm3207, %v3209, %v3205
        %v3211 = vmul.f32 %v3188, %v3210
        %v3212 = vrcp.pop %v3196
        %v3213 = vmul.f32 %v3196, %v3212
        %v3214 = vsub.f32 1.0, %v3213
        %v3215 = vmul.f32 %v3212, %v3214
        %v3216 = vadd.f32 %v3212, %v3215
        %vm3217 = vweird.f32 %v3196
        %vm3218 = vweird.f32 %v3212
        %vm3219 = vmor %vm3217, %vm3218
        %v3220 = vsel %vm3219, %v3212, %v3216
        %v3221 = vand.u32 2147483647, %v3196
        %vm3222 = vcmp.eq.f32.partialorder %v3221, 8.507059e+37
        %v3223 = vand.u32 %v3196, 2147483648
        %v3224 = vor.u32 1.1754944e-38, %v3223
        %v3225 = vsel %vm3222, %v3224, %v3220
        %v3226 = vmul.f32 %v3190, %v3225
        %v3227 = vpack.c.bf16 %v3226, %v3211
        %3228 = vrot.lane.b32.xlu0 %v3131, 64
        %v3229 = vpop.permute.xlu0 %3228
        %v3232 = vsel %vm1474, %v3227, 0
        %3234 = vmatpush.bf16.msra.mxu0 0
        %3235 = vmatpush.bf16.msra.mxu0 0
        %3236 = vmatpush.bf16.msra.mxu0 0
        %3237 = vmatpush.bf16.msra.mxu0 0
        %3238 = vmatpush.bf16.msra.mxu0 0
        %3239 = vmatpush.bf16.msra.mxu0 0
        %3240 = vmatpush.bf16.msra.mxu0 0
        %3241 = vmatpush.bf16.msra.mxu0 %v3229
        %3242 = vmatmul.bf16.gmra.mxu0 %v3232
        %v3243 = vpop.f32.mrf.mxu0
        %v3244 = vadd.f32 0.0, %v3243
        %v3245 = vpop.f32.mrf.mxu0
        %v3246 = vadd.f32 0.0, %v3245
        %3247 = vdwg.mxu0
        %v3248 = vpack.c.bf16 %v3246, %v3244
        %v3257 = vunpack.c.l.b16 %v2345
        %v3258 = vunpack.c.h.b16 %v2345
        %v3259 = vunpack.c.l.b16 %v2346
        %v3260 = vunpack.c.h.b16 %v2346
        %v3261 = vunpack.c.l.b16 %v2347
        %v3262 = vunpack.c.h.b16 %v2347
        %v3263 = vunpack.c.l.b16 %v2348
        %v3264 = vunpack.c.h.b16 %v2348
        %v3265 = vunpack.c.l.b16 %v2349
        %v3266 = vunpack.c.h.b16 %v2349
        %v3267 = vunpack.c.l.b16 %v2350
        %v3268 = vunpack.c.h.b16 %v2350
        %v3269 = vunpack.c.l.b16 %v2351
        %v3270 = vunpack.c.h.b16 %v2351
        %v3271 = vunpack.c.l.b16 %v2352
        %v3272 = vunpack.c.h.b16 %v2352
        %v3273 = vpack.c.b16 %v3259, %v3257
        %v3274 = vpack.c.b16 %v3260, %v3258
        %v3275 = vpack.c.b16 %v3263, %v3261
        %v3276 = vpack.c.b16 %v3264, %v3262
        %v3277 = vpack.c.b16 %v3267, %v3265
        %v3278 = vpack.c.b16 %v3268, %v3266
        %v3279 = vpack.c.b16 %v3271, %v3269
        %v3280 = vpack.c.b16 %v3272, %v3270
        %v3290 = vsel %vm1449, %v3248, 0
        %3292 = vmatpush.bf16.msra.mxu0 0
        %3293 = vmatpush.bf16.msra.mxu0 0
        %3294 = vmatpush.bf16.msra.mxu0 0
        %3295 = vmatpush.bf16.msra.mxu0 0
        %3296 = vmatpush.bf16.msra.mxu0 %v3279
        %3297 = vmatpush.bf16.msra.mxu0 %v3277
        %3298 = vmatpush.bf16.msra.mxu0 %v3275
        %3299 = vmatpush.bf16.msra.mxu0 %v3273
        %3300 = vmatmul.bf16.gmra.mxu0 %v3290
        %v3301 = vpop.f32.mrf.mxu0
        %v3302 = vadd.f32 0.0, %v3301
        %v3303 = vpop.f32.mrf.mxu0
        %v3304 = vadd.f32 0.0, %v3303
        %3305 = vdwg.mxu0
        %3306 = vmatpush.bf16.msra.mxu0 0
        %3307 = vmatpush.bf16.msra.mxu0 0
        %3308 = vmatpush.bf16.msra.mxu0 0
        %3309 = vmatpush.bf16.msra.mxu0 0
        %3310 = vmatpush.bf16.msra.mxu0 %v3280
        %3311 = vmatpush.bf16.msra.mxu0 %v3278
        %3312 = vmatpush.bf16.msra.mxu0 %v3276
        %3313 = vmatpush.bf16.msra.mxu0 %v3274
        %3314 = vmatmul.bf16.gmra.mxu0 %v3290
        %v3315 = vpop.f32.mrf.mxu0
        %v3316 = vadd.f32 0.0, %v3315
        %v3317 = vpop.f32.mrf.mxu0
        %v3318 = vadd.f32 0.0, %v3317
        %3319 = vdwg.mxu0
        %v3328 = vunpack.c.l.b16 %v2337
        %v3329 = vunpack.c.h.b16 %v2337
        %v3330 = vunpack.c.l.b16 %v2338
        %v3331 = vunpack.c.h.b16 %v2338
        %v3332 = vunpack.c.l.b16 %v2339
        %v3333 = vunpack.c.h.b16 %v2339
        %v3334 = vunpack.c.l.b16 %v2340
        %v3335 = vunpack.c.h.b16 %v2340
        %v3336 = vunpack.c.l.b16 %v2341
        %v3337 = vunpack.c.h.b16 %v2341
        %v3338 = vunpack.c.l.b16 %v2342
        %v3339 = vunpack.c.h.b16 %v2342
        %v3340 = vunpack.c.l.b16 %v2343
        %v3341 = vunpack.c.h.b16 %v2343
        %v3342 = vunpack.c.l.b16 %v2344
        %v3343 = vunpack.c.h.b16 %v2344
        %v3344 = vpack.c.b16 %v3330, %v3328
        %v3345 = vpack.c.b16 %v3331, %v3329
        %v3346 = vpack.c.b16 %v3334, %v3332
        %v3347 = vpack.c.b16 %v3335, %v3333
        %v3348 = vpack.c.b16 %v3338, %v3336
        %v3349 = vpack.c.b16 %v3339, %v3337
        %v3350 = vpack.c.b16 %v3342, %v3340
        %v3351 = vpack.c.b16 %v3343, %v3341
        %v3361 = vsel %vm1449, %v3150, 0
        %3363 = vmatpush.bf16.msra.mxu0 0
        %3364 = vmatpush.bf16.msra.mxu0 0
        %3365 = vmatpush.bf16.msra.mxu0 0
        %3366 = vmatpush.bf16.msra.mxu0 0
        %3367 = vmatpush.bf16.msra.mxu0 %v3350
        %3368 = vmatpush.bf16.msra.mxu0 %v3348
        %3369 = vmatpush.bf16.msra.mxu0 %v3346
        %3370 = vmatpush.bf16.msra.mxu0 %v3344
        %3371 = vmatmul.bf16.gmra.mxu0 %v3361
        %v3372 = vpop.f32.mrf.mxu0
        %v3373 = vadd.f32 %v3302, %v3372
        %v3374 = vpop.f32.mrf.mxu0
        %v3375 = vadd.f32 %v3304, %v3374
        %3376 = vdwg.mxu0
        %3377 = vmatpush.bf16.msra.mxu0 0
        %3378 = vmatpush.bf16.msra.mxu0 0
        %3379 = vmatpush.bf16.msra.mxu0 0
        %3380 = vmatpush.bf16.msra.mxu0 0
        %3381 = vmatpush.bf16.msra.mxu0 %v3351
        %3382 = vmatpush.bf16.msra.mxu0 %v3349
        %3383 = vmatpush.bf16.msra.mxu0 %v3347
        %3384 = vmatpush.bf16.msra.mxu0 %v3345
        %3385 = vmatmul.bf16.gmra.mxu0 %v3361
        %v3386 = vpop.f32.mrf.mxu0
        %v3387 = vadd.f32 %v3316, %v3386
        %v3388 = vpop.f32.mrf.mxu0
        %v3389 = vadd.f32 %v3318, %v3388
        %3390 = vdwg.mxu0
        %v3391 = vunpack.c.h.b16 %v3038
        %v3392 = vunpack.c.h.b16 %v3039
        %v3393 = vpack.c.b16 %v3392, %v3391
        %v3394 = vunpack.c.h.b16 %v3040
        %v3395 = vunpack.c.h.b16 %v3041
        %v3396 = vpack.c.b16 %v3395, %v3394
        %v3398 = vsel %vm1449, %v3393, 0
        %v3401 = vsel %vm1449, %v3396, 0
        %3403 = vmatpush.bf16.xpose.msra.mxu0 0
        %3404 = vmatpush.bf16.xpose.msra.mxu0 0
        %3405 = vmatpush.bf16.xpose.msra.mxu0 0
        %3406 = vmatpush.bf16.xpose.msra.mxu0 0
        %3407 = vmatpush.bf16.xpose.msra.mxu0 0
        %3408 = vmatpush.bf16.xpose.msra.mxu0 0
        %3409 = vmatpush.bf16.xpose.msra.mxu0 0
        %3410 = vmatpush.bf16.xpose.msra.mxu0 %v3401
        %3411 = vmatmul.bf16.gmra.mxu0 %v3398
        %v3412 = vpop.f32.mrf.mxu0
        %v3413 = vadd.f32 0.0, %v3412
        %v3414 = vpop.f32.mrf.mxu0
        %v3415 = vadd.f32 0.0, %v3414
        %3416 = vdwg.mxu0
        %v3417 = vmul.f32 %v3413, 0.125
        %v3418 = vmul.f32 %v3415, 0.125
        %v3419 = vadd.f32 %v3417, %v2229
        %v3420 = vadd.f32 %v3418, %v2230
        %v3421 = vsel %vm1474, %v3419, -inf
        %3422 = vmax.xlane.f32.xlu0 %v3421
        %v3423 = vpop.xlane.xlu0 %3422
        %v3424 = vsel %vm1474, %v3420, -inf
        %3425 = vmax.xlane.f32.xlu0 %v3424
        %v3426 = vpop.xlane.xlu0 %3425
        %v3427 = vsub.f32 %v3419, %v3423
        %v3428 = vsub.f32 %v3420, %v3426
        %v3429 = vmul.f32 %v3427, 1.442695
        %v3430 = vpow.pop %v3429
        %v3431 = vmul.f32 %v3428, 1.442695
        %v3432 = vpow.pop %v3431
        %v3433 = vsel %vm1474, %v3430, 0.0
        %3434 = vadd.xlane.f32.xlu0 %v3433
        %v3435 = vpop.xlane.xlu0 %3434
        %v3436 = vsel %vm1474, %v3432, 0.0
        %3437 = vadd.xlane.f32.xlu0 %v3436
        %v3438 = vpop.xlane.xlu0 %3437
        %v3439 = vrcp.pop %v3435
        %v3440 = vmul.f32 %v3435, %v3439
        %v3441 = vsub.f32 1.0, %v3440
        %v3442 = vmul.f32 %v3439, %v3441
        %v3443 = vadd.f32 %v3439, %v3442
        %vm3444 = vweird.f32 %v3435
        %vm3445 = vweird.f32 %v3439
        %vm3446 = vmor %vm3444, %vm3445
        %v3447 = vsel %vm3446, %v3439, %v3443
        %v3448 = vand.u32 2147483647, %v3435
        %vm3449 = vcmp.eq.f32.partialorder %v3448, 8.507059e+37
        %v3450 = vand.u32 %v3435, 2147483648
        %v3451 = vor.u32 1.1754944e-38, %v3450
        %v3452 = vsel %vm3449, %v3451, %v3447
        %v3453 = vmul.f32 %v3430, %v3452
        %v3454 = vrcp.pop %v3438
        %v3455 = vmul.f32 %v3438, %v3454
        %v3456 = vsub.f32 1.0, %v3455
        %v3457 = vmul.f32 %v3454, %v3456
        %v3458 = vadd.f32 %v3454, %v3457
        %vm3459 = vweird.f32 %v3438
        %vm3460 = vweird.f32 %v3454
        %vm3461 = vmor %vm3459, %vm3460
        %v3462 = vsel %vm3461, %v3454, %v3458
        %v3463 = vand.u32 2147483647, %v3438
        %vm3464 = vcmp.eq.f32.partialorder %v3463, 8.507059e+37
        %v3465 = vand.u32 %v3438, 2147483648
        %v3466 = vor.u32 1.1754944e-38, %v3465
        %v3467 = vsel %vm3464, %v3466, %v3462
        %v3468 = vmul.f32 %v3432, %v3467
        %v3469 = vpack.c.bf16 %v3468, %v3453
        %v3470 = vunpack.c.h.b16 %v3042
        %v3471 = vunpack.c.h.b16 %v3043
        %v3472 = vpack.c.b16 %v3471, %v3470
        %v3475 = vsel %vm1474, %v3469, 0
        %3477 = vmatpush.bf16.msra.mxu0 0
        %3478 = vmatpush.bf16.msra.mxu0 0
        %3479 = vmatpush.bf16.msra.mxu0 0
        %3480 = vmatpush.bf16.msra.mxu0 0
        %3481 = vmatpush.bf16.msra.mxu0 0
        %3482 = vmatpush.bf16.msra.mxu0 0
        %3483 = vmatpush.bf16.msra.mxu0 0
        %3484 = vmatpush.bf16.msra.mxu0 %v3472
        %3485 = vmatmul.bf16.gmra.mxu0 %v3475
        %v3486 = vpop.f32.mrf.mxu0
        %v3487 = vadd.f32 0.0, %v3486
        %v3488 = vpop.f32.mrf.mxu0
        %v3489 = vadd.f32 0.0, %v3488
        %3490 = vdwg.mxu0
        %v3491 = vpack.c.bf16 %v3489, %v3487
        %v3500 = vunpack.c.l.b16 %v2353
        %v3501 = vunpack.c.h.b16 %v2353
        %v3502 = vunpack.c.l.b16 %v2354
        %v3503 = vunpack.c.h.b16 %v2354
        %v3504 = vunpack.c.l.b16 %v2355
        %v3505 = vunpack.c.h.b16 %v2355
        %v3506 = vunpack.c.l.b16 %v2356
        %v3507 = vunpack.c.h.b16 %v2356
        %v3508 = vunpack.c.l.b16 %v2357
        %v3509 = vunpack.c.h.b16 %v2357
        %v3510 = vunpack.c.l.b16 %v2358
        %v3511 = vunpack.c.h.b16 %v2358
        %v3512 = vunpack.c.l.b16 %v2359
        %v3513 = vunpack.c.h.b16 %v2359
        %v3514 = vunpack.c.l.b16 %v2360
        %v3515 = vunpack.c.h.b16 %v2360
        %v3516 = vpack.c.b16 %v3502, %v3500
        %v3517 = vpack.c.b16 %v3503, %v3501
        %v3518 = vpack.c.b16 %v3506, %v3504
        %v3519 = vpack.c.b16 %v3507, %v3505
        %v3520 = vpack.c.b16 %v3510, %v3508
        %v3521 = vpack.c.b16 %v3511, %v3509
        %v3522 = vpack.c.b16 %v3514, %v3512
        %v3523 = vpack.c.b16 %v3515, %v3513
        %v3533 = vsel %vm1449, %v3491, 0
        %3535 = vmatpush.bf16.msra.mxu0 0
        %3536 = vmatpush.bf16.msra.mxu0 0
        %3537 = vmatpush.bf16.msra.mxu0 0
        %3538 = vmatpush.bf16.msra.mxu0 0
        %3539 = vmatpush.bf16.msra.mxu0 %v3522
        %3540 = vmatpush.bf16.msra.mxu0 %v3520
        %3541 = vmatpush.bf16.msra.mxu0 %v3518
        %3542 = vmatpush.bf16.msra.mxu0 %v3516
        %3543 = vmatmul.bf16.gmra.mxu0 %v3533
        %v3544 = vpop.f32.mrf.mxu0
        %v3545 = vadd.f32 0.0, %v3544
        %v3546 = vpop.f32.mrf.mxu0
        %v3547 = vadd.f32 0.0, %v3546
        %3548 = vdwg.mxu0
        %3549 = vmatpush.bf16.msra.mxu0 0
        %3550 = vmatpush.bf16.msra.mxu0 0
        %3551 = vmatpush.bf16.msra.mxu0 0
        %3552 = vmatpush.bf16.msra.mxu0 0
        %3553 = vmatpush.bf16.msra.mxu0 %v3523
        %3554 = vmatpush.bf16.msra.mxu0 %v3521
        %3555 = vmatpush.bf16.msra.mxu0 %v3519
        %3556 = vmatpush.bf16.msra.mxu0 %v3517
        %3557 = vmatmul.bf16.gmra.mxu0 %v3533
        %v3558 = vpop.f32.mrf.mxu0
        %v3559 = vadd.f32 0.0, %v3558
        %v3560 = vpop.f32.mrf.mxu0
        %v3561 = vadd.f32 0.0, %v3560
        %3562 = vdwg.mxu0
        %v3563 = vadd.f32 %v3373, %v3545
        %v3564 = vadd.f32 %v3387, %v3559
        %v3565 = vadd.f32 %v3375, %v3547
        %v3566 = vadd.f32 %v3389, %v3561
        %3567 = vrot.lane.b32.xlu0 %v3393, 64
        %v3568 = vpop.permute.xlu0 %3567
        %3569 = vrot.lane.b32.xlu0 %v3396, 64
        %v3570 = vpop.permute.xlu0 %3569
        %v3572 = vsel %vm1449, %v3568, 0
        %v3575 = vsel %vm1449, %v3570, 0
        %3577 = vmatpush.bf16.xpose.msra.mxu0 0
        %3578 = vmatpush.bf16.xpose.msra.mxu0 0
        %3579 = vmatpush.bf16.xpose.msra.mxu0 0
        %3580 = vmatpush.bf16.xpose.msra.mxu0 0
        %3581 = vmatpush.bf16.xpose.msra.mxu0 0
        %3582 = vmatpush.bf16.xpose.msra.mxu0 0
        %3583 = vmatpush.bf16.xpose.msra.mxu0 0
        %3584 = vmatpush.bf16.xpose.msra.mxu0 %v3575
        %3585 = vmatmul.bf16.gmra.mxu0 %v3572
        %v3586 = vpop.f32.mrf.mxu0
        %v3587 = vadd.f32 0.0, %v3586
        %v3588 = vpop.f32.mrf.mxu0
        %v3589 = vadd.f32 0.0, %v3588
        %3590 = vdwg.mxu0
        %v3591 = vmul.f32 %v3587, 0.125
        %v3592 = vmul.f32 %v3589, 0.125
        %v3593 = vadd.f32 %v3591, %v2229
        %v3594 = vadd.f32 %v3592, %v2230
        %v3595 = vsel %vm1474, %v3593, -inf
        %3596 = vmax.xlane.f32.xlu0 %v3595
        %v3597 = vpop.xlane.xlu0 %3596
        %v3598 = vsel %vm1474, %v3594, -inf
        %3599 = vmax.xlane.f32.xlu0 %v3598
        %v3600 = vpop.xlane.xlu0 %3599
        %v3601 = vsub.f32 %v3593, %v3597
        %v3602 = vsub.f32 %v3594, %v3600
        %v3603 = vmul.f32 %v3601, 1.442695
        %v3604 = vpow.pop %v3603
        %v3605 = vmul.f32 %v3602, 1.442695
        %v3606 = vpow.pop %v3605
        %v3607 = vsel %vm1474, %v3604, 0.0
        %3608 = vadd.xlane.f32.xlu0 %v3607
        %v3609 = vpop.xlane.xlu0 %3608
        %v3610 = vsel %vm1474, %v3606, 0.0
        %3611 = vadd.xlane.f32.xlu0 %v3610
        %v3612 = vpop.xlane.xlu0 %3611
        %v3613 = vrcp.pop %v3609
        %v3614 = vmul.f32 %v3609, %v3613
        %v3615 = vsub.f32 1.0, %v3614
        %v3616 = vmul.f32 %v3613, %v3615
        %v3617 = vadd.f32 %v3613, %v3616
        %vm3618 = vweird.f32 %v3609
        %vm3619 = vweird.f32 %v3613
        %vm3620 = vmor %vm3618, %vm3619
        %v3621 = vsel %vm3620, %v3613, %v3617
        %v3622 = vand.u32 2147483647, %v3609
        %vm3623 = vcmp.eq.f32.partialorder %v3622, 8.507059e+37
        %v3624 = vand.u32 %v3609, 2147483648
        %v3625 = vor.u32 1.1754944e-38, %v3624
        %v3626 = vsel %vm3623, %v3625, %v3621
        %v3627 = vmul.f32 %v3604, %v3626
        %v3628 = vrcp.pop %v3612
        %v3629 = vmul.f32 %v3612, %v3628
        %v3630 = vsub.f32 1.0, %v3629
        %v3631 = vmul.f32 %v3628, %v3630
        %v3632 = vadd.f32 %v3628, %v3631
        %vm3633 = vweird.f32 %v3612
        %vm3634 = vweird.f32 %v3628
        %vm3635 = vmor %vm3633, %vm3634
        %v3636 = vsel %vm3635, %v3628, %v3632
        %v3637 = vand.u32 2147483647, %v3612
        %vm3638 = vcmp.eq.f32.partialorder %v3637, 8.507059e+37
        %v3639 = vand.u32 %v3612, 2147483648
        %v3640 = vor.u32 1.1754944e-38, %v3639
        %v3641 = vsel %vm3638, %v3640, %v3636
        %v3642 = vmul.f32 %v3606, %v3641
        %v3643 = vpack.c.bf16 %v3642, %v3627
        %3644 = vrot.lane.b32.xlu0 %v3472, 64
        %v3645 = vpop.permute.xlu0 %3644
        %v3648 = vsel %vm1474, %v3643, 0
        %3650 = vmatpush.bf16.msra.mxu0 0
        %3651 = vmatpush.bf16.msra.mxu0 0
        %3652 = vmatpush.bf16.msra.mxu0 0
        %3653 = vmatpush.bf16.msra.mxu0 0
        %3654 = vmatpush.bf16.msra.mxu0 0
        %3655 = vmatpush.bf16.msra.mxu0 0
        %3656 = vmatpush.bf16.msra.mxu0 0
        %3657 = vmatpush.bf16.msra.mxu0 %v3645
        %3658 = vmatmul.bf16.gmra.mxu0 %v3648
        %v3659 = vpop.f32.mrf.mxu0
        %v3660 = vadd.f32 0.0, %v3659
        %v3661 = vpop.f32.mrf.mxu0
        %v3662 = vadd.f32 0.0, %v3661
        %3663 = vdwg.mxu0
        %v3664 = vpack.c.bf16 %v3662, %v3660
        %v3673 = vunpack.c.l.b16 %v2361
        %v3674 = vunpack.c.h.b16 %v2361
        %v3675 = vunpack.c.l.b16 %v2362
        %v3676 = vunpack.c.h.b16 %v2362
        %v3677 = vunpack.c.l.b16 %v2363
        %v3678 = vunpack.c.h.b16 %v2363
        %v3679 = vunpack.c.l.b16 %v2364
        %v3680 = vunpack.c.h.b16 %v2364
        %v3681 = vunpack.c.l.b16 %v2365
        %v3682 = vunpack.c.h.b16 %v2365
        %v3683 = vunpack.c.l.b16 %v2366
        %v3684 = vunpack.c.h.b16 %v2366
        %v3685 = vunpack.c.l.b16 %v2367
        %v3686 = vunpack.c.h.b16 %v2367
        %v3687 = vunpack.c.l.b16 %v2368
        %v3688 = vunpack.c.h.b16 %v2368
        %v3689 = vpack.c.b16 %v3675, %v3673
        %v3690 = vpack.c.b16 %v3676, %v3674
        %v3691 = vpack.c.b16 %v3679, %v3677
        %v3692 = vpack.c.b16 %v3680, %v3678
        %v3693 = vpack.c.b16 %v3683, %v3681
        %v3694 = vpack.c.b16 %v3684, %v3682
        %v3695 = vpack.c.b16 %v3687, %v3685
        %v3696 = vpack.c.b16 %v3688, %v3686
        %v3706 = vsel %vm1449, %v3664, 0
        %3708 = vmatpush.bf16.msra.mxu0 0
        %3709 = vmatpush.bf16.msra.mxu0 0
        %3710 = vmatpush.bf16.msra.mxu0 0
        %3711 = vmatpush.bf16.msra.mxu0 0
        %3712 = vmatpush.bf16.msra.mxu0 %v3695
        %3713 = vmatpush.bf16.msra.mxu0 %v3693
        %3714 = vmatpush.bf16.msra.mxu0 %v3691
        %3715 = vmatpush.bf16.msra.mxu0 %v3689
        %3716 = vmatmul.bf16.gmra.mxu0 %v3706
        %v3717 = vpop.f32.mrf.mxu0
        %v3718 = vadd.f32 0.0, %v3717
        %v3719 = vpop.f32.mrf.mxu0
        %v3720 = vadd.f32 0.0, %v3719
        %3721 = vdwg.mxu0
        %3722 = vmatpush.bf16.msra.mxu0 0
        %3723 = vmatpush.bf16.msra.mxu0 0
        %3724 = vmatpush.bf16.msra.mxu0 0
        %3725 = vmatpush.bf16.msra.mxu0 0
        %3726 = vmatpush.bf16.msra.mxu0 %v3696
        %3727 = vmatpush.bf16.msra.mxu0 %v3694
        %3728 = vmatpush.bf16.msra.mxu0 %v3692
        %3729 = vmatpush.bf16.msra.mxu0 %v3690
        %3730 = vmatmul.bf16.gmra.mxu0 %v3706
        %v3731 = vpop.f32.mrf.mxu0
        %v3732 = vadd.f32 0.0, %v3731
        %v3733 = vpop.f32.mrf.mxu0
        %v3734 = vadd.f32 0.0, %v3733
        %3735 = vdwg.mxu0
        %v3736 = vadd.f32 %v3563, %v3718
        %v3737 = vadd.f32 %v3564, %v3732
        %v3738 = vadd.f32 %v3565, %v3720
        %v3739 = vadd.f32 %v3566, %v3734
        %v3741 = vperm.slane %v2370, 0
        %v3742 = vperm.slane %v2370, 1
        %v3745 = vadd.f32 %v3736, %v3741
        %v3746 = vadd.f32 %v3737, %v3742
        %v3747 = vadd.f32 %v3738, %v3741
        %v3748 = vadd.f32 %v3739, %v3742
        %v3749 = vadd.f32 %v2225, %v3745
        %v3750 = vadd.f32 %v2226, %v3746
        %v3751 = vadd.f32 %v2227, %v3747
        %v3752 = vadd.f32 %v2228, %v3748
        %s3753 = scalar_lea.vmem %s606, 18
        %v3754 = vld [vmem:[%s3753] ss:$8 sm:$0x3]
        %s3755 = scalar_lea.vmem %s606, 19
        %v3756 = vld [vmem:[%s3755] ss:$8 sm:$0x3]
        %v3757 = vadd.f32 %v3749, %v3750
        %3758 = vadd.xlane.f32.xlu0 %v3757
        %v3759 = vpop.xlane.xlu0 %3758
        %v3760 = vadd.f32 %v3751, %v3752
        %3761 = vadd.xlane.f32.xlu0 %v3760
        %v3762 = vpop.xlane.xlu0 %3761
        %v3763 = vmul.f32 %v3759, %v2166
        %v3764 = vmul.f32 %v3762, %v2166
        %v3765 = vsub.f32 %v3749, %v3763
        %v3766 = vsub.f32 %v3750, %v3763
        %v3767 = vsub.f32 %v3751, %v3764
        %v3768 = vsub.f32 %v3752, %v3764
        %v3769 = vmul.f32 %v3765, %v3765
        %v3770 = vmul.f32 %v3766, %v3766
        %v3771 = vmul.f32 %v3767, %v3767
        %v3772 = vmul.f32 %v3768, %v3768
        %v3773 = vadd.f32 %v3769, %v3770
        %3774 = vadd.xlane.f32.xlu0 %v3773
        %v3775 = vpop.xlane.xlu0 %3774
        %v3776 = vadd.f32 %v3771, %v3772
        %3777 = vadd.xlane.f32.xlu0 %v3776
        %v3778 = vpop.xlane.xlu0 %3777
        %v3779 = vmul.f32 %v3775, %v2166
        %v3780 = vmul.f32 %v3778, %v2166
        %v3781 = vadd.f32 %v3779, 1e-05
        %v3782 = vadd.f32 %v3780, 1e-05
        %v3783 = vrsqrt.pop %v3781
        %v3784 = vmul.f32 %v3783, %v3781
        %v3785 = vmul.f32 %v3784, %v3783
        %v3786 = vmul.f32 0.5, %v3785
        %v3787 = vsub.f32 1.5, %v3786
        %v3788 = vmul.f32 %v3783, %v3787
        %vm3789 = vweird.f32 %v3781
        %vm3790 = vweird.f32 %v3783
        %vm3791 = vmor %vm3789, %vm3790
        %v3792 = vsel %vm3791, %v3783, %v3788
        %v3793 = vrsqrt.pop %v3782
        %v3794 = vmul.f32 %v3793, %v3782
        %v3795 = vmul.f32 %v3794, %v3793
        %v3796 = vmul.f32 0.5, %v3795
        %v3797 = vsub.f32 1.5, %v3796
        %v3798 = vmul.f32 %v3793, %v3797
        %vm3799 = vweird.f32 %v3782
        %vm3800 = vweird.f32 %v3793
        %vm3801 = vmor %vm3799, %vm3800
        %v3802 = vsel %vm3801, %v3793, %v3798
        %v3803 = vmul.f32 %v3765, %v3792
        %v3804 = vmul.f32 %v3766, %v3792
        %v3805 = vmul.f32 %v3767, %v3802
        %v3806 = vmul.f32 %v3768, %v3802
        %v3808 = vperm.slane %v3754, 0
        %v3809 = vperm.slane %v3754, 1
        %v3812 = vmul.f32 %v3803, %v3808
        %v3813 = vmul.f32 %v3804, %v3809
        %v3814 = vmul.f32 %v3805, %v3808
        %v3815 = vmul.f32 %v3806, %v3809
        %v3817 = vperm.slane %v3756, 0
        %v3818 = vperm.slane %v3756, 1
        %v3821 = vadd.f32 %v3812, %v3817
        %v3822 = vadd.f32 %v3813, %v3818
        %v3823 = vadd.f32 %v3814, %v3817
        %v3824 = vadd.f32 %v3815, %v3818
        %v3825 = vld [vmem:[%s510] sm:$0xff]
        %v3826 = vld [vmem:[%s510 + $0x8] sm:$0xff]
        %v3827 = vld [vmem:[%s510 + $0x10] sm:$0xff]
        %v3828 = vld [vmem:[%s510 + $0x18] sm:$0xff]
        %v3829 = vld [vmem:[%s510 + $0x20] sm:$0xff]
        %v3830 = vld [vmem:[%s510 + $0x28] sm:$0xff]
        %v3831 = vld [vmem:[%s510 + $0x30] sm:$0xff]
        %v3832 = vld [vmem:[%s510 + $0x38] sm:$0xff]
        %v3833 = vld [vmem:[%s510 + $0x40] sm:$0xff]
        %v3834 = vld [vmem:[%s510 + $0x48] sm:$0xff]
        %v3835 = vld [vmem:[%s510 + $0x50] sm:$0xff]
        %v3836 = vld [vmem:[%s510 + $0x58] sm:$0xff]
        %v3837 = vld [vmem:[%s510 + $0x60] sm:$0xff]
        %v3838 = vld [vmem:[%s510 + $0x68] sm:$0xff]
        %v3839 = vld [vmem:[%s510 + $0x70] sm:$0xff]
        %v3840 = vld [vmem:[%s510 + $0x78] sm:$0xff]
        %v3841 = vld [vmem:[%s510 + $0x80] sm:$0xff]
        %v3842 = vld [vmem:[%s510 + $0x88] sm:$0xff]
        %v3843 = vld [vmem:[%s510 + $0x90] sm:$0xff]
        %v3844 = vld [vmem:[%s510 + $0x98] sm:$0xff]
        %v3845 = vld [vmem:[%s510 + $0xa0] sm:$0xff]
        %v3846 = vld [vmem:[%s510 + $0xa8] sm:$0xff]
        %v3847 = vld [vmem:[%s510 + $0xb0] sm:$0xff]
        %v3848 = vld [vmem:[%s510 + $0xb8] sm:$0xff]
        %v3849 = vld [vmem:[%s510 + $0xc0] sm:$0xff]
        %v3850 = vld [vmem:[%s510 + $0xc8] sm:$0xff]
        %v3851 = vld [vmem:[%s510 + $0xd0] sm:$0xff]
        %v3852 = vld [vmem:[%s510 + $0xd8] sm:$0xff]
        %v3853 = vld [vmem:[%s510 + $0xe0] sm:$0xff]
        %v3854 = vld [vmem:[%s510 + $0xe8] sm:$0xff]
        %v3855 = vld [vmem:[%s510 + $0xf0] sm:$0xff]
        %v3856 = vld [vmem:[%s510 + $0xf8] sm:$0xff]
        %v3857 = vld [vmem:[%s510 + $0x100] sm:$0xff]
        %v3858 = vld [vmem:[%s510 + $0x108] sm:$0xff]
        %v3859 = vld [vmem:[%s510 + $0x110] sm:$0xff]
        %v3860 = vld [vmem:[%s510 + $0x118] sm:$0xff]
        %v3861 = vld [vmem:[%s510 + $0x120] sm:$0xff]
        %v3862 = vld [vmem:[%s510 + $0x128] sm:$0xff]
        %v3863 = vld [vmem:[%s510 + $0x130] sm:$0xff]
        %v3864 = vld [vmem:[%s510 + $0x138] sm:$0xff]
        %v3865 = vld [vmem:[%s510 + $0x140] sm:$0xff]
        %v3866 = vld [vmem:[%s510 + $0x148] sm:$0xff]
        %v3867 = vld [vmem:[%s510 + $0x150] sm:$0xff]
        %v3868 = vld [vmem:[%s510 + $0x158] sm:$0xff]
        %v3869 = vld [vmem:[%s510 + $0x160] sm:$0xff]
        %v3870 = vld [vmem:[%s510 + $0x168] sm:$0xff]
        %v3871 = vld [vmem:[%s510 + $0x170] sm:$0xff]
        %v3872 = vld [vmem:[%s510 + $0x178] sm:$0xff]
        %v3873 = vld [vmem:[%s510 + $0x180] sm:$0xff]
        %v3874 = vld [vmem:[%s510 + $0x188] sm:$0xff]
        %v3875 = vld [vmem:[%s510 + $0x190] sm:$0xff]
        %v3876 = vld [vmem:[%s510 + $0x198] sm:$0xff]
        %v3877 = vld [vmem:[%s510 + $0x1a0] sm:$0xff]
        %v3878 = vld [vmem:[%s510 + $0x1a8] sm:$0xff]
        %v3879 = vld [vmem:[%s510 + $0x1b0] sm:$0xff]
        %v3880 = vld [vmem:[%s510 + $0x1b8] sm:$0xff]
        %v3881 = vld [vmem:[%s510 + $0x1c0] sm:$0xff]
        %v3882 = vld [vmem:[%s510 + $0x1c8] sm:$0xff]
        %v3883 = vld [vmem:[%s510 + $0x1d0] sm:$0xff]
        %v3884 = vld [vmem:[%s510 + $0x1d8] sm:$0xff]
        %v3885 = vld [vmem:[%s510 + $0x1e0] sm:$0xff]
        %v3886 = vld [vmem:[%s510 + $0x1e8] sm:$0xff]
        %v3887 = vld [vmem:[%s510 + $0x1f0] sm:$0xff]
        %v3888 = vld [vmem:[%s510 + $0x1f8] sm:$0xff]
        %v3889 = vld [vmem:[%s510 + $0x200] sm:$0xff]
        %v3890 = vld [vmem:[%s510 + $0x208] sm:$0xff]
        %v3891 = vld [vmem:[%s510 + $0x210] sm:$0xff]
        %v3892 = vld [vmem:[%s510 + $0x218] sm:$0xff]
        %v3893 = vld [vmem:[%s510 + $0x220] sm:$0xff]
        %v3894 = vld [vmem:[%s510 + $0x228] sm:$0xff]
        %v3895 = vld [vmem:[%s510 + $0x230] sm:$0xff]
        %v3896 = vld [vmem:[%s510 + $0x238] sm:$0xff]
        %v3897 = vld [vmem:[%s510 + $0x240] sm:$0xff]
        %v3898 = vld [vmem:[%s510 + $0x248] sm:$0xff]
        %v3899 = vld [vmem:[%s510 + $0x250] sm:$0xff]
        %v3900 = vld [vmem:[%s510 + $0x258] sm:$0xff]
        %v3901 = vld [vmem:[%s510 + $0x260] sm:$0xff]
        %v3902 = vld [vmem:[%s510 + $0x268] sm:$0xff]
        %v3903 = vld [vmem:[%s510 + $0x270] sm:$0xff]
        %v3904 = vld [vmem:[%s510 + $0x278] sm:$0xff]
        %v3905 = vld [vmem:[%s510 + $0x280] sm:$0xff]
        %v3906 = vld [vmem:[%s510 + $0x288] sm:$0xff]
        %v3907 = vld [vmem:[%s510 + $0x290] sm:$0xff]
        %v3908 = vld [vmem:[%s510 + $0x298] sm:$0xff]
        %v3909 = vld [vmem:[%s510 + $0x2a0] sm:$0xff]
        %v3910 = vld [vmem:[%s510 + $0x2a8] sm:$0xff]
        %v3911 = vld [vmem:[%s510 + $0x2b0] sm:$0xff]
        %v3912 = vld [vmem:[%s510 + $0x2b8] sm:$0xff]
        %v3913 = vld [vmem:[%s510 + $0x2c0] sm:$0xff]
        %v3914 = vld [vmem:[%s510 + $0x2c8] sm:$0xff]
        %v3915 = vld [vmem:[%s510 + $0x2d0] sm:$0xff]
        %v3916 = vld [vmem:[%s510 + $0x2d8] sm:$0xff]
        %v3917 = vld [vmem:[%s510 + $0x2e0] sm:$0xff]
        %v3918 = vld [vmem:[%s510 + $0x2e8] sm:$0xff]
        %v3919 = vld [vmem:[%s510 + $0x2f0] sm:$0xff]
        %v3920 = vld [vmem:[%s510 + $0x2f8] sm:$0xff]
        %v3921 = vld [vmem:[%s510 + $0x300] sm:$0xff]
        %v3922 = vld [vmem:[%s510 + $0x308] sm:$0xff]
        %v3923 = vld [vmem:[%s510 + $0x310] sm:$0xff]
        %v3924 = vld [vmem:[%s510 + $0x318] sm:$0xff]
        %v3925 = vld [vmem:[%s510 + $0x320] sm:$0xff]
        %v3926 = vld [vmem:[%s510 + $0x328] sm:$0xff]
        %v3927 = vld [vmem:[%s510 + $0x330] sm:$0xff]
        %v3928 = vld [vmem:[%s510 + $0x338] sm:$0xff]
        %v3929 = vld [vmem:[%s510 + $0x340] sm:$0xff]
        %v3930 = vld [vmem:[%s510 + $0x348] sm:$0xff]
        %v3931 = vld [vmem:[%s510 + $0x350] sm:$0xff]
        %v3932 = vld [vmem:[%s510 + $0x358] sm:$0xff]
        %v3933 = vld [vmem:[%s510 + $0x360] sm:$0xff]
        %v3934 = vld [vmem:[%s510 + $0x368] sm:$0xff]
        %v3935 = vld [vmem:[%s510 + $0x370] sm:$0xff]
        %v3936 = vld [vmem:[%s510 + $0x378] sm:$0xff]
        %v3937 = vld [vmem:[%s510 + $0x380] sm:$0xff]
        %v3938 = vld [vmem:[%s510 + $0x388] sm:$0xff]
        %v3939 = vld [vmem:[%s510 + $0x390] sm:$0xff]
        %v3940 = vld [vmem:[%s510 + $0x398] sm:$0xff]
        %v3941 = vld [vmem:[%s510 + $0x3a0] sm:$0xff]
        %v3942 = vld [vmem:[%s510 + $0x3a8] sm:$0xff]
        %v3943 = vld [vmem:[%s510 + $0x3b0] sm:$0xff]
        %v3944 = vld [vmem:[%s510 + $0x3b8] sm:$0xff]
        %v3945 = vld [vmem:[%s510 + $0x3c0] sm:$0xff]
        %v3946 = vld [vmem:[%s510 + $0x3c8] sm:$0xff]
        %v3947 = vld [vmem:[%s510 + $0x3d0] sm:$0xff]
        %v3948 = vld [vmem:[%s510 + $0x3d8] sm:$0xff]
        %v3949 = vld [vmem:[%s510 + $0x3e0] sm:$0xff]
        %v3950 = vld [vmem:[%s510 + $0x3e8] sm:$0xff]
        %v3951 = vld [vmem:[%s510 + $0x3f0] sm:$0xff]
        %v3952 = vld [vmem:[%s510 + $0x3f8] sm:$0xff]
        %v3953 = vld [vmem:[%s530] sm:$0xff]
        %v3954 = vld [vmem:[%s520] sm:$0xff]
        %v3955 = vld [vmem:[%s520 + $0x8] sm:$0xff]
        %v3956 = vld [vmem:[%s520 + $0x10] sm:$0xff]
        %v3957 = vld [vmem:[%s520 + $0x18] sm:$0xff]
        %v3958 = vld [vmem:[%s520 + $0x20] sm:$0xff]
        %v3959 = vld [vmem:[%s520 + $0x28] sm:$0xff]
        %v3960 = vld [vmem:[%s520 + $0x30] sm:$0xff]
        %v3961 = vld [vmem:[%s520 + $0x38] sm:$0xff]
        %v3962 = vld [vmem:[%s520 + $0x40] sm:$0xff]
        %v3963 = vld [vmem:[%s520 + $0x48] sm:$0xff]
        %v3964 = vld [vmem:[%s520 + $0x50] sm:$0xff]
        %v3965 = vld [vmem:[%s520 + $0x58] sm:$0xff]
        %v3966 = vld [vmem:[%s520 + $0x60] sm:$0xff]
        %v3967 = vld [vmem:[%s520 + $0x68] sm:$0xff]
        %v3968 = vld [vmem:[%s520 + $0x70] sm:$0xff]
        %v3969 = vld [vmem:[%s520 + $0x78] sm:$0xff]
        %v3970 = vld [vmem:[%s520 + $0x80] sm:$0xff]
        %v3971 = vld [vmem:[%s520 + $0x88] sm:$0xff]
        %v3972 = vld [vmem:[%s520 + $0x90] sm:$0xff]
        %v3973 = vld [vmem:[%s520 + $0x98] sm:$0xff]
        %v3974 = vld [vmem:[%s520 + $0xa0] sm:$0xff]
        %v3975 = vld [vmem:[%s520 + $0xa8] sm:$0xff]
        %v3976 = vld [vmem:[%s520 + $0xb0] sm:$0xff]
        %v3977 = vld [vmem:[%s520 + $0xb8] sm:$0xff]
        %v3978 = vld [vmem:[%s520 + $0xc0] sm:$0xff]
        %v3979 = vld [vmem:[%s520 + $0xc8] sm:$0xff]
        %v3980 = vld [vmem:[%s520 + $0xd0] sm:$0xff]
        %v3981 = vld [vmem:[%s520 + $0xd8] sm:$0xff]
        %v3982 = vld [vmem:[%s520 + $0xe0] sm:$0xff]
        %v3983 = vld [vmem:[%s520 + $0xe8] sm:$0xff]
        %v3984 = vld [vmem:[%s520 + $0xf0] sm:$0xff]
        %v3985 = vld [vmem:[%s520 + $0xf8] sm:$0xff]
        %v3986 = vld [vmem:[%s520 + $0x100] sm:$0xff]
        %v3987 = vld [vmem:[%s520 + $0x108] sm:$0xff]
        %v3988 = vld [vmem:[%s520 + $0x110] sm:$0xff]
        %v3989 = vld [vmem:[%s520 + $0x118] sm:$0xff]
        %v3990 = vld [vmem:[%s520 + $0x120] sm:$0xff]
        %v3991 = vld [vmem:[%s520 + $0x128] sm:$0xff]
        %v3992 = vld [vmem:[%s520 + $0x130] sm:$0xff]
        %v3993 = vld [vmem:[%s520 + $0x138] sm:$0xff]
        %v3994 = vld [vmem:[%s520 + $0x140] sm:$0xff]
        %v3995 = vld [vmem:[%s520 + $0x148] sm:$0xff]
        %v3996 = vld [vmem:[%s520 + $0x150] sm:$0xff]
        %v3997 = vld [vmem:[%s520 + $0x158] sm:$0xff]
        %v3998 = vld [vmem:[%s520 + $0x160] sm:$0xff]
        %v3999 = vld [vmem:[%s520 + $0x168] sm:$0xff]
        %v4000 = vld [vmem:[%s520 + $0x170] sm:$0xff]
        %v4001 = vld [vmem:[%s520 + $0x178] sm:$0xff]
        %v4002 = vld [vmem:[%s520 + $0x180] sm:$0xff]
        %v4003 = vld [vmem:[%s520 + $0x188] sm:$0xff]
        %v4004 = vld [vmem:[%s520 + $0x190] sm:$0xff]
        %v4005 = vld [vmem:[%s520 + $0x198] sm:$0xff]
        %v4006 = vld [vmem:[%s520 + $0x1a0] sm:$0xff]
        %v4007 = vld [vmem:[%s520 + $0x1a8] sm:$0xff]
        %v4008 = vld [vmem:[%s520 + $0x1b0] sm:$0xff]
        %v4009 = vld [vmem:[%s520 + $0x1b8] sm:$0xff]
        %v4010 = vld [vmem:[%s520 + $0x1c0] sm:$0xff]
        %v4011 = vld [vmem:[%s520 + $0x1c8] sm:$0xff]
        %v4012 = vld [vmem:[%s520 + $0x1d0] sm:$0xff]
        %v4013 = vld [vmem:[%s520 + $0x1d8] sm:$0xff]
        %v4014 = vld [vmem:[%s520 + $0x1e0] sm:$0xff]
        %v4015 = vld [vmem:[%s520 + $0x1e8] sm:$0xff]
        %v4016 = vld [vmem:[%s520 + $0x1f0] sm:$0xff]
        %v4017 = vld [vmem:[%s520 + $0x1f8] sm:$0xff]
        %v4018 = vld [vmem:[%s520 + $0x200] sm:$0xff]
        %v4019 = vld [vmem:[%s520 + $0x208] sm:$0xff]
        %v4020 = vld [vmem:[%s520 + $0x210] sm:$0xff]
        %v4021 = vld [vmem:[%s520 + $0x218] sm:$0xff]
        %v4022 = vld [vmem:[%s520 + $0x220] sm:$0xff]
        %v4023 = vld [vmem:[%s520 + $0x228] sm:$0xff]
        %v4024 = vld [vmem:[%s520 + $0x230] sm:$0xff]
        %v4025 = vld [vmem:[%s520 + $0x238] sm:$0xff]
        %v4026 = vld [vmem:[%s520 + $0x240] sm:$0xff]
        %v4027 = vld [vmem:[%s520 + $0x248] sm:$0xff]
        %v4028 = vld [vmem:[%s520 + $0x250] sm:$0xff]
        %v4029 = vld [vmem:[%s520 + $0x258] sm:$0xff]
        %v4030 = vld [vmem:[%s520 + $0x260] sm:$0xff]
        %v4031 = vld [vmem:[%s520 + $0x268] sm:$0xff]
        %v4032 = vld [vmem:[%s520 + $0x270] sm:$0xff]
        %v4033 = vld [vmem:[%s520 + $0x278] sm:$0xff]
        %v4034 = vld [vmem:[%s520 + $0x280] sm:$0xff]
        %v4035 = vld [vmem:[%s520 + $0x288] sm:$0xff]
        %v4036 = vld [vmem:[%s520 + $0x290] sm:$0xff]
        %v4037 = vld [vmem:[%s520 + $0x298] sm:$0xff]
        %v4038 = vld [vmem:[%s520 + $0x2a0] sm:$0xff]
        %v4039 = vld [vmem:[%s520 + $0x2a8] sm:$0xff]
        %v4040 = vld [vmem:[%s520 + $0x2b0] sm:$0xff]
        %v4041 = vld [vmem:[%s520 + $0x2b8] sm:$0xff]
        %v4042 = vld [vmem:[%s520 + $0x2c0] sm:$0xff]
        %v4043 = vld [vmem:[%s520 + $0x2c8] sm:$0xff]
        %v4044 = vld [vmem:[%s520 + $0x2d0] sm:$0xff]
        %v4045 = vld [vmem:[%s520 + $0x2d8] sm:$0xff]
        %v4046 = vld [vmem:[%s520 + $0x2e0] sm:$0xff]
        %v4047 = vld [vmem:[%s520 + $0x2e8] sm:$0xff]
        %v4048 = vld [vmem:[%s520 + $0x2f0] sm:$0xff]
        %v4049 = vld [vmem:[%s520 + $0x2f8] sm:$0xff]
        %v4050 = vld [vmem:[%s520 + $0x300] sm:$0xff]
        %v4051 = vld [vmem:[%s520 + $0x308] sm:$0xff]
        %v4052 = vld [vmem:[%s520 + $0x310] sm:$0xff]
        %v4053 = vld [vmem:[%s520 + $0x318] sm:$0xff]
        %v4054 = vld [vmem:[%s520 + $0x320] sm:$0xff]
        %v4055 = vld [vmem:[%s520 + $0x328] sm:$0xff]
        %v4056 = vld [vmem:[%s520 + $0x330] sm:$0xff]
        %v4057 = vld [vmem:[%s520 + $0x338] sm:$0xff]
        %v4058 = vld [vmem:[%s520 + $0x340] sm:$0xff]
        %v4059 = vld [vmem:[%s520 + $0x348] sm:$0xff]
        %v4060 = vld [vmem:[%s520 + $0x350] sm:$0xff]
        %v4061 = vld [vmem:[%s520 + $0x358] sm:$0xff]
        %v4062 = vld [vmem:[%s520 + $0x360] sm:$0xff]
        %v4063 = vld [vmem:[%s520 + $0x368] sm:$0xff]
        %v4064 = vld [vmem:[%s520 + $0x370] sm:$0xff]
        %v4065 = vld [vmem:[%s520 + $0x378] sm:$0xff]
        %v4066 = vld [vmem:[%s520 + $0x380] sm:$0xff]
        %v4067 = vld [vmem:[%s520 + $0x388] sm:$0xff]
        %v4068 = vld [vmem:[%s520 + $0x390] sm:$0xff]
        %v4069 = vld [vmem:[%s520 + $0x398] sm:$0xff]
        %v4070 = vld [vmem:[%s520 + $0x3a0] sm:$0xff]
        %v4071 = vld [vmem:[%s520 + $0x3a8] sm:$0xff]
        %v4072 = vld [vmem:[%s520 + $0x3b0] sm:$0xff]
        %v4073 = vld [vmem:[%s520 + $0x3b8] sm:$0xff]
        %v4074 = vld [vmem:[%s520 + $0x3c0] sm:$0xff]
        %v4075 = vld [vmem:[%s520 + $0x3c8] sm:$0xff]
        %v4076 = vld [vmem:[%s520 + $0x3d0] sm:$0xff]
        %v4077 = vld [vmem:[%s520 + $0x3d8] sm:$0xff]
        %v4078 = vld [vmem:[%s520 + $0x3e0] sm:$0xff]
        %v4079 = vld [vmem:[%s520 + $0x3e8] sm:$0xff]
        %v4080 = vld [vmem:[%s520 + $0x3f0] sm:$0xff]
        %v4081 = vld [vmem:[%s520 + $0x3f8] sm:$0xff]
        %s4082 = scalar_lea.vmem %s606, 20
        %v4083 = vld [vmem:[%s4082] ss:$8 sm:$0x3]
        %v4084 = vpack.c.bf16 %v3823, %v3821
        %v4085 = vpack.c.bf16 %v3824, %v3822
        %v4087 = vperm.slane %v3953, 0
        %v4088 = vperm.slane %v3953, 1
        %v4089 = vperm.slane %v3953, 2
        %v4090 = vperm.slane %v3953, 3
        %v4091 = vperm.slane %v3953, 4
        %v4092 = vperm.slane %v3953, 5
        %v4093 = vperm.slane %v3953, 6
        %v4094 = vperm.slane %v3953, 7
        %v4231 = vunpack.c.l.b16 %v3825
        %v4232 = vunpack.c.h.b16 %v3825
        %v4233 = vunpack.c.l.b16 %v3826
        %v4234 = vunpack.c.h.b16 %v3826
        %v4235 = vunpack.c.l.b16 %v3827
        %v4236 = vunpack.c.h.b16 %v3827
        %v4237 = vunpack.c.l.b16 %v3828
        %v4238 = vunpack.c.h.b16 %v3828
        %v4239 = vunpack.c.l.b16 %v3829
        %v4240 = vunpack.c.h.b16 %v3829
        %v4241 = vunpack.c.l.b16 %v3830
        %v4242 = vunpack.c.h.b16 %v3830
        %v4243 = vunpack.c.l.b16 %v3831
        %v4244 = vunpack.c.h.b16 %v3831
        %v4245 = vunpack.c.l.b16 %v3832
        %v4246 = vunpack.c.h.b16 %v3832
        %v4247 = vunpack.c.l.b16 %v3833
        %v4248 = vunpack.c.h.b16 %v3833
        %v4249 = vunpack.c.l.b16 %v3834
        %v4250 = vunpack.c.h.b16 %v3834
        %v4251 = vunpack.c.l.b16 %v3835
        %v4252 = vunpack.c.h.b16 %v3835
        %v4253 = vunpack.c.l.b16 %v3836
        %v4254 = vunpack.c.h.b16 %v3836
        %v4255 = vunpack.c.l.b16 %v3837
        %v4256 = vunpack.c.h.b16 %v3837
        %v4257 = vunpack.c.l.b16 %v3838
        %v4258 = vunpack.c.h.b16 %v3838
        %v4259 = vunpack.c.l.b16 %v3839
        %v4260 = vunpack.c.h.b16 %v3839
        %v4261 = vunpack.c.l.b16 %v3840
        %v4262 = vunpack.c.h.b16 %v3840
        %v4263 = vunpack.c.l.b16 %v3841
        %v4264 = vunpack.c.h.b16 %v3841
        %v4265 = vunpack.c.l.b16 %v3842
        %v4266 = vunpack.c.h.b16 %v3842
        %v4267 = vunpack.c.l.b16 %v3843
        %v4268 = vunpack.c.h.b16 %v3843
        %v4269 = vunpack.c.l.b16 %v3844
        %v4270 = vunpack.c.h.b16 %v3844
        %v4271 = vunpack.c.l.b16 %v3845
        %v4272 = vunpack.c.h.b16 %v3845
        %v4273 = vunpack.c.l.b16 %v3846
        %v4274 = vunpack.c.h.b16 %v3846
        %v4275 = vunpack.c.l.b16 %v3847
        %v4276 = vunpack.c.h.b16 %v3847
        %v4277 = vunpack.c.l.b16 %v3848
        %v4278 = vunpack.c.h.b16 %v3848
        %v4279 = vunpack.c.l.b16 %v3849
        %v4280 = vunpack.c.h.b16 %v3849
        %v4281 = vunpack.c.l.b16 %v3850
        %v4282 = vunpack.c.h.b16 %v3850
        %v4283 = vunpack.c.l.b16 %v3851
        %v4284 = vunpack.c.h.b16 %v3851
        %v4285 = vunpack.c.l.b16 %v3852
        %v4286 = vunpack.c.h.b16 %v3852
        %v4287 = vunpack.c.l.b16 %v3853
        %v4288 = vunpack.c.h.b16 %v3853
        %v4289 = vunpack.c.l.b16 %v3854
        %v4290 = vunpack.c.h.b16 %v3854
        %v4291 = vunpack.c.l.b16 %v3855
        %v4292 = vunpack.c.h.b16 %v3855
        %v4293 = vunpack.c.l.b16 %v3856
        %v4294 = vunpack.c.h.b16 %v3856
        %v4295 = vunpack.c.l.b16 %v3857
        %v4296 = vunpack.c.h.b16 %v3857
        %v4297 = vunpack.c.l.b16 %v3858
        %v4298 = vunpack.c.h.b16 %v3858
        %v4299 = vunpack.c.l.b16 %v3859
        %v4300 = vunpack.c.h.b16 %v3859
        %v4301 = vunpack.c.l.b16 %v3860
        %v4302 = vunpack.c.h.b16 %v3860
        %v4303 = vunpack.c.l.b16 %v3861
        %v4304 = vunpack.c.h.b16 %v3861
        %v4305 = vunpack.c.l.b16 %v3862
        %v4306 = vunpack.c.h.b16 %v3862
        %v4307 = vunpack.c.l.b16 %v3863
        %v4308 = vunpack.c.h.b16 %v3863
        %v4309 = vunpack.c.l.b16 %v3864
        %v4310 = vunpack.c.h.b16 %v3864
        %v4311 = vunpack.c.l.b16 %v3865
        %v4312 = vunpack.c.h.b16 %v3865
        %v4313 = vunpack.c.l.b16 %v3866
        %v4314 = vunpack.c.h.b16 %v3866
        %v4315 = vunpack.c.l.b16 %v3867
        %v4316 = vunpack.c.h.b16 %v3867
        %v4317 = vunpack.c.l.b16 %v3868
        %v4318 = vunpack.c.h.b16 %v3868
        %v4319 = vunpack.c.l.b16 %v3869
        %v4320 = vunpack.c.h.b16 %v3869
        %v4321 = vunpack.c.l.b16 %v3870
        %v4322 = vunpack.c.h.b16 %v3870
        %v4323 = vunpack.c.l.b16 %v3871
        %v4324 = vunpack.c.h.b16 %v3871
        %v4325 = vunpack.c.l.b16 %v3872
        %v4326 = vunpack.c.h.b16 %v3872
        %v4327 = vunpack.c.l.b16 %v3873
        %v4328 = vunpack.c.h.b16 %v3873
        %v4329 = vunpack.c.l.b16 %v3874
        %v4330 = vunpack.c.h.b16 %v3874
        %v4331 = vunpack.c.l.b16 %v3875
        %v4332 = vunpack.c.h.b16 %v3875
        %v4333 = vunpack.c.l.b16 %v3876
        %v4334 = vunpack.c.h.b16 %v3876
        %v4335 = vunpack.c.l.b16 %v3877
        %v4336 = vunpack.c.h.b16 %v3877
        %v4337 = vunpack.c.l.b16 %v3878
        %v4338 = vunpack.c.h.b16 %v3878
        %v4339 = vunpack.c.l.b16 %v3879
        %v4340 = vunpack.c.h.b16 %v3879
        %v4341 = vunpack.c.l.b16 %v3880
        %v4342 = vunpack.c.h.b16 %v3880
        %v4343 = vunpack.c.l.b16 %v3881
        %v4344 = vunpack.c.h.b16 %v3881
        %v4345 = vunpack.c.l.b16 %v3882
        %v4346 = vunpack.c.h.b16 %v3882
        %v4347 = vunpack.c.l.b16 %v3883
        %v4348 = vunpack.c.h.b16 %v3883
        %v4349 = vunpack.c.l.b16 %v3884
        %v4350 = vunpack.c.h.b16 %v3884
        %v4351 = vunpack.c.l.b16 %v3885
        %v4352 = vunpack.c.h.b16 %v3885
        %v4353 = vunpack.c.l.b16 %v3886
        %v4354 = vunpack.c.h.b16 %v3886
        %v4355 = vunpack.c.l.b16 %v3887
        %v4356 = vunpack.c.h.b16 %v3887
        %v4357 = vunpack.c.l.b16 %v3888
        %v4358 = vunpack.c.h.b16 %v3888
        %v4359 = vunpack.c.l.b16 %v3889
        %v4360 = vunpack.c.h.b16 %v3889
        %v4361 = vunpack.c.l.b16 %v3890
        %v4362 = vunpack.c.h.b16 %v3890
        %v4363 = vunpack.c.l.b16 %v3891
        %v4364 = vunpack.c.h.b16 %v3891
        %v4365 = vunpack.c.l.b16 %v3892
        %v4366 = vunpack.c.h.b16 %v3892
        %v4367 = vunpack.c.l.b16 %v3893
        %v4368 = vunpack.c.h.b16 %v3893
        %v4369 = vunpack.c.l.b16 %v3894
        %v4370 = vunpack.c.h.b16 %v3894
        %v4371 = vunpack.c.l.b16 %v3895
        %v4372 = vunpack.c.h.b16 %v3895
        %v4373 = vunpack.c.l.b16 %v3896
        %v4374 = vunpack.c.h.b16 %v3896
        %v4375 = vunpack.c.l.b16 %v3897
        %v4376 = vunpack.c.h.b16 %v3897
        %v4377 = vunpack.c.l.b16 %v3898
        %v4378 = vunpack.c.h.b16 %v3898
        %v4379 = vunpack.c.l.b16 %v3899
        %v4380 = vunpack.c.h.b16 %v3899
        %v4381 = vunpack.c.l.b16 %v3900
        %v4382 = vunpack.c.h.b16 %v3900
        %v4383 = vunpack.c.l.b16 %v3901
        %v4384 = vunpack.c.h.b16 %v3901
        %v4385 = vunpack.c.l.b16 %v3902
        %v4386 = vunpack.c.h.b16 %v3902
        %v4387 = vunpack.c.l.b16 %v3903
        %v4388 = vunpack.c.h.b16 %v3903
        %v4389 = vunpack.c.l.b16 %v3904
        %v4390 = vunpack.c.h.b16 %v3904
        %v4391 = vunpack.c.l.b16 %v3905
        %v4392 = vunpack.c.h.b16 %v3905
        %v4393 = vunpack.c.l.b16 %v3906
        %v4394 = vunpack.c.h.b16 %v3906
        %v4395 = vunpack.c.l.b16 %v3907
        %v4396 = vunpack.c.h.b16 %v3907
        %v4397 = vunpack.c.l.b16 %v3908
        %v4398 = vunpack.c.h.b16 %v3908
        %v4399 = vunpack.c.l.b16 %v3909
        %v4400 = vunpack.c.h.b16 %v3909
        %v4401 = vunpack.c.l.b16 %v3910
        %v4402 = vunpack.c.h.b16 %v3910
        %v4403 = vunpack.c.l.b16 %v3911
        %v4404 = vunpack.c.h.b16 %v3911
        %v4405 = vunpack.c.l.b16 %v3912
        %v4406 = vunpack.c.h.b16 %v3912
        %v4407 = vunpack.c.l.b16 %v3913
        %v4408 = vunpack.c.h.b16 %v3913
        %v4409 = vunpack.c.l.b16 %v3914
        %v4410 = vunpack.c.h.b16 %v3914
        %v4411 = vunpack.c.l.b16 %v3915
        %v4412 = vunpack.c.h.b16 %v3915
        %v4413 = vunpack.c.l.b16 %v3916
        %v4414 = vunpack.c.h.b16 %v3916
        %v4415 = vunpack.c.l.b16 %v3917
        %v4416 = vunpack.c.h.b16 %v3917
        %v4417 = vunpack.c.l.b16 %v3918
        %v4418 = vunpack.c.h.b16 %v3918
        %v4419 = vunpack.c.l.b16 %v3919
        %v4420 = vunpack.c.h.b16 %v3919
        %v4421 = vunpack.c.l.b16 %v3920
        %v4422 = vunpack.c.h.b16 %v3920
        %v4423 = vunpack.c.l.b16 %v3921
        %v4424 = vunpack.c.h.b16 %v3921
        %v4425 = vunpack.c.l.b16 %v3922
        %v4426 = vunpack.c.h.b16 %v3922
        %v4427 = vunpack.c.l.b16 %v3923
        %v4428 = vunpack.c.h.b16 %v3923
        %v4429 = vunpack.c.l.b16 %v3924
        %v4430 = vunpack.c.h.b16 %v3924
        %v4431 = vunpack.c.l.b16 %v3925
        %v4432 = vunpack.c.h.b16 %v3925
        %v4433 = vunpack.c.l.b16 %v3926
        %v4434 = vunpack.c.h.b16 %v3926
        %v4435 = vunpack.c.l.b16 %v3927
        %v4436 = vunpack.c.h.b16 %v3927
        %v4437 = vunpack.c.l.b16 %v3928
        %v4438 = vunpack.c.h.b16 %v3928
        %v4439 = vunpack.c.l.b16 %v3929
        %v4440 = vunpack.c.h.b16 %v3929
        %v4441 = vunpack.c.l.b16 %v3930
        %v4442 = vunpack.c.h.b16 %v3930
        %v4443 = vunpack.c.l.b16 %v3931
        %v4444 = vunpack.c.h.b16 %v3931
        %v4445 = vunpack.c.l.b16 %v3932
        %v4446 = vunpack.c.h.b16 %v3932
        %v4447 = vunpack.c.l.b16 %v3933
        %v4448 = vunpack.c.h.b16 %v3933
        %v4449 = vunpack.c.l.b16 %v3934
        %v4450 = vunpack.c.h.b16 %v3934
        %v4451 = vunpack.c.l.b16 %v3935
        %v4452 = vunpack.c.h.b16 %v3935
        %v4453 = vunpack.c.l.b16 %v3936
        %v4454 = vunpack.c.h.b16 %v3936
        %v4455 = vunpack.c.l.b16 %v3937
        %v4456 = vunpack.c.h.b16 %v3937
        %v4457 = vunpack.c.l.b16 %v3938
        %v4458 = vunpack.c.h.b16 %v3938
        %v4459 = vunpack.c.l.b16 %v3939
        %v4460 = vunpack.c.h.b16 %v3939
        %v4461 = vunpack.c.l.b16 %v3940
        %v4462 = vunpack.c.h.b16 %v3940
        %v4463 = vunpack.c.l.b16 %v3941
        %v4464 = vunpack.c.h.b16 %v3941
        %v4465 = vunpack.c.l.b16 %v3942
        %v4466 = vunpack.c.h.b16 %v3942
        %v4467 = vunpack.c.l.b16 %v3943
        %v4468 = vunpack.c.h.b16 %v3943
        %v4469 = vunpack.c.l.b16 %v3944
        %v4470 = vunpack.c.h.b16 %v3944
        %v4471 = vunpack.c.l.b16 %v3945
        %v4472 = vunpack.c.h.b16 %v3945
        %v4473 = vunpack.c.l.b16 %v3946
        %v4474 = vunpack.c.h.b16 %v3946
        %v4475 = vunpack.c.l.b16 %v3947
        %v4476 = vunpack.c.h.b16 %v3947
        %v4477 = vunpack.c.l.b16 %v3948
        %v4478 = vunpack.c.h.b16 %v3948
        %v4479 = vunpack.c.l.b16 %v3949
        %v4480 = vunpack.c.h.b16 %v3949
        %v4481 = vunpack.c.l.b16 %v3950
        %v4482 = vunpack.c.h.b16 %v3950
        %v4483 = vunpack.c.l.b16 %v3951
        %v4484 = vunpack.c.h.b16 %v3951
        %v4485 = vunpack.c.l.b16 %v3952
        %v4486 = vunpack.c.h.b16 %v3952
        %v4487 = vpack.c.b16 %v4239, %v4231
        %v4488 = vpack.c.b16 %v4240, %v4232
        %v4489 = vpack.c.b16 %v4241, %v4233
        %v4490 = vpack.c.b16 %v4242, %v4234
        %v4491 = vpack.c.b16 %v4243, %v4235
        %v4492 = vpack.c.b16 %v4244, %v4236
        %v4493 = vpack.c.b16 %v4245, %v4237
        %v4494 = vpack.c.b16 %v4246, %v4238
        %v4495 = vpack.c.b16 %v4255, %v4247
        %v4496 = vpack.c.b16 %v4256, %v4248
        %v4497 = vpack.c.b16 %v4257, %v4249
        %v4498 = vpack.c.b16 %v4258, %v4250
        %v4499 = vpack.c.b16 %v4259, %v4251
        %v4500 = vpack.c.b16 %v4260, %v4252
        %v4501 = vpack.c.b16 %v4261, %v4253
        %v4502 = vpack.c.b16 %v4262, %v4254
        %v4503 = vpack.c.b16 %v4271, %v4263
        %v4504 = vpack.c.b16 %v4272, %v4264
        %v4505 = vpack.c.b16 %v4273, %v4265
        %v4506 = vpack.c.b16 %v4274, %v4266
        %v4507 = vpack.c.b16 %v4275, %v4267
        %v4508 = vpack.c.b16 %v4276, %v4268
        %v4509 = vpack.c.b16 %v4277, %v4269
        %v4510 = vpack.c.b16 %v4278, %v4270
        %v4511 = vpack.c.b16 %v4287, %v4279
        %v4512 = vpack.c.b16 %v4288, %v4280
        %v4513 = vpack.c.b16 %v4289, %v4281
        %v4514 = vpack.c.b16 %v4290, %v4282
        %v4515 = vpack.c.b16 %v4291, %v4283
        %v4516 = vpack.c.b16 %v4292, %v4284
        %v4517 = vpack.c.b16 %v4293, %v4285
        %v4518 = vpack.c.b16 %v4294, %v4286
        %v4519 = vpack.c.b16 %v4303, %v4295
        %v4520 = vpack.c.b16 %v4304, %v4296
        %v4521 = vpack.c.b16 %v4305, %v4297
        %v4522 = vpack.c.b16 %v4306, %v4298
        %v4523 = vpack.c.b16 %v4307, %v4299
        %v4524 = vpack.c.b16 %v4308, %v4300
        %v4525 = vpack.c.b16 %v4309, %v4301
        %v4526 = vpack.c.b16 %v4310, %v4302
        %v4527 = vpack.c.b16 %v4319, %v4311
        %v4528 = vpack.c.b16 %v4320, %v4312
        %v4529 = vpack.c.b16 %v4321, %v4313
        %v4530 = vpack.c.b16 %v4322, %v4314
        %v4531 = vpack.c.b16 %v4323, %v4315
        %v4532 = vpack.c.b16 %v4324, %v4316
        %v4533 = vpack.c.b16 %v4325, %v4317
        %v4534 = vpack.c.b16 %v4326, %v4318
        %v4535 = vpack.c.b16 %v4335, %v4327
        %v4536 = vpack.c.b16 %v4336, %v4328
        %v4537 = vpack.c.b16 %v4337, %v4329
        %v4538 = vpack.c.b16 %v4338, %v4330
        %v4539 = vpack.c.b16 %v4339, %v4331
        %v4540 = vpack.c.b16 %v4340, %v4332
        %v4541 = vpack.c.b16 %v4341, %v4333
        %v4542 = vpack.c.b16 %v4342, %v4334
        %v4543 = vpack.c.b16 %v4351, %v4343
        %v4544 = vpack.c.b16 %v4352, %v4344
        %v4545 = vpack.c.b16 %v4353, %v4345
        %v4546 = vpack.c.b16 %v4354, %v4346
        %v4547 = vpack.c.b16 %v4355, %v4347
        %v4548 = vpack.c.b16 %v4356, %v4348
        %v4549 = vpack.c.b16 %v4357, %v4349
        %v4550 = vpack.c.b16 %v4358, %v4350
        %v4551 = vpack.c.b16 %v4367, %v4359
        %v4552 = vpack.c.b16 %v4368, %v4360
        %v4553 = vpack.c.b16 %v4369, %v4361
        %v4554 = vpack.c.b16 %v4370, %v4362
        %v4555 = vpack.c.b16 %v4371, %v4363
        %v4556 = vpack.c.b16 %v4372, %v4364
        %v4557 = vpack.c.b16 %v4373, %v4365
        %v4558 = vpack.c.b16 %v4374, %v4366
        %v4559 = vpack.c.b16 %v4383, %v4375
        %v4560 = vpack.c.b16 %v4384, %v4376
        %v4561 = vpack.c.b16 %v4385, %v4377
        %v4562 = vpack.c.b16 %v4386, %v4378
        %v4563 = vpack.c.b16 %v4387, %v4379
        %v4564 = vpack.c.b16 %v4388, %v4380
        %v4565 = vpack.c.b16 %v4389, %v4381
        %v4566 = vpack.c.b16 %v4390, %v4382
        %v4567 = vpack.c.b16 %v4399, %v4391
        %v4568 = vpack.c.b16 %v4400, %v4392
        %v4569 = vpack.c.b16 %v4401, %v4393
        %v4570 = vpack.c.b16 %v4402, %v4394
        %v4571 = vpack.c.b16 %v4403, %v4395
        %v4572 = vpack.c.b16 %v4404, %v4396
        %v4573 = vpack.c.b16 %v4405, %v4397
        %v4574 = vpack.c.b16 %v4406, %v4398
        %v4575 = vpack.c.b16 %v4415, %v4407
        %v4576 = vpack.c.b16 %v4416, %v4408
        %v4577 = vpack.c.b16 %v4417, %v4409
        %v4578 = vpack.c.b16 %v4418, %v4410
        %v4579 = vpack.c.b16 %v4419, %v4411
        %v4580 = vpack.c.b16 %v4420, %v4412
        %v4581 = vpack.c.b16 %v4421, %v4413
        %v4582 = vpack.c.b16 %v4422, %v4414
        %v4583 = vpack.c.b16 %v4431, %v4423
        %v4584 = vpack.c.b16 %v4432, %v4424
        %v4585 = vpack.c.b16 %v4433, %v4425
        %v4586 = vpack.c.b16 %v4434, %v4426
        %v4587 = vpack.c.b16 %v4435, %v4427
        %v4588 = vpack.c.b16 %v4436, %v4428
        %v4589 = vpack.c.b16 %v4437, %v4429
        %v4590 = vpack.c.b16 %v4438, %v4430
        %v4591 = vpack.c.b16 %v4447, %v4439
        %v4592 = vpack.c.b16 %v4448, %v4440
        %v4593 = vpack.c.b16 %v4449, %v4441
        %v4594 = vpack.c.b16 %v4450, %v4442
        %v4595 = vpack.c.b16 %v4451, %v4443
        %v4596 = vpack.c.b16 %v4452, %v4444
        %v4597 = vpack.c.b16 %v4453, %v4445
        %v4598 = vpack.c.b16 %v4454, %v4446
        %v4599 = vpack.c.b16 %v4463, %v4455
        %v4600 = vpack.c.b16 %v4464, %v4456
        %v4601 = vpack.c.b16 %v4465, %v4457
        %v4602 = vpack.c.b16 %v4466, %v4458
        %v4603 = vpack.c.b16 %v4467, %v4459
        %v4604 = vpack.c.b16 %v4468, %v4460
        %v4605 = vpack.c.b16 %v4469, %v4461
        %v4606 = vpack.c.b16 %v4470, %v4462
        %v4607 = vpack.c.b16 %v4479, %v4471
        %v4608 = vpack.c.b16 %v4480, %v4472
        %v4609 = vpack.c.b16 %v4481, %v4473
        %v4610 = vpack.c.b16 %v4482, %v4474
        %v4611 = vpack.c.b16 %v4483, %v4475
        %v4612 = vpack.c.b16 %v4484, %v4476
        %v4613 = vpack.c.b16 %v4485, %v4477
        %v4614 = vpack.c.b16 %v4486, %v4478
        %4743 = vmatpush.bf16.msra.mxu0 %v4543
        %4744 = vmatpush.bf16.msra.mxu0 %v4535
        %4745 = vmatpush.bf16.msra.mxu0 %v4527
        %4746 = vmatpush.bf16.msra.mxu0 %v4519
        %4747 = vmatpush.bf16.msra.mxu0 %v4511
        %4748 = vmatpush.bf16.msra.mxu0 %v4503
        %4749 = vmatpush.bf16.msra.mxu0 %v4495
        %4750 = vmatpush.bf16.msra.mxu0 %v4487
        %4751 = vmatmul.bf16.gmra.mxu0 %v4084
        %v4752 = vpop.f32.mrf.mxu0
        %v4753 = vadd.f32 %v4087, %v4752
        %v4754 = vpop.f32.mrf.mxu0
        %v4755 = vadd.f32 %v4087, %v4754
        %4756 = vdwg.mxu0
        %4757 = vmatpush.bf16.msra.mxu0 %v4607
        %4758 = vmatpush.bf16.msra.mxu0 %v4599
        %4759 = vmatpush.bf16.msra.mxu0 %v4591
        %4760 = vmatpush.bf16.msra.mxu0 %v4583
        %4761 = vmatpush.bf16.msra.mxu0 %v4575
        %4762 = vmatpush.bf16.msra.mxu0 %v4567
        %4763 = vmatpush.bf16.msra.mxu0 %v4559
        %4764 = vmatpush.bf16.msra.mxu0 %v4551
        %4765 = vmatmul.bf16.gmra.mxu0 %v4085
        %v4766 = vpop.f32.mrf.mxu0
        %v4767 = vadd.f32 %v4753, %v4766
        %v4768 = vpop.f32.mrf.mxu0
        %v4769 = vadd.f32 %v4755, %v4768
        %4770 = vdwg.mxu0
        %4771 = vmatpush.bf16.msra.mxu0 %v4544
        %4772 = vmatpush.bf16.msra.mxu0 %v4536
        %4773 = vmatpush.bf16.msra.mxu0 %v4528
        %4774 = vmatpush.bf16.msra.mxu0 %v4520
        %4775 = vmatpush.bf16.msra.mxu0 %v4512
        %4776 = vmatpush.bf16.msra.mxu0 %v4504
        %4777 = vmatpush.bf16.msra.mxu0 %v4496
        %4778 = vmatpush.bf16.msra.mxu0 %v4488
        %4779 = vmatmul.bf16.gmra.mxu0 %v4084
        %v4780 = vpop.f32.mrf.mxu0
        %v4781 = vadd.f32 %v4088, %v4780
        %v4782 = vpop.f32.mrf.mxu0
        %v4783 = vadd.f32 %v4088, %v4782
        %4784 = vdwg.mxu0
        %4785 = vmatpush.bf16.msra.mxu0 %v4608
        %4786 = vmatpush.bf16.msra.mxu0 %v4600
        %4787 = vmatpush.bf16.msra.mxu0 %v4592
        %4788 = vmatpush.bf16.msra.mxu0 %v4584
        %4789 = vmatpush.bf16.msra.mxu0 %v4576
        %4790 = vmatpush.bf16.msra.mxu0 %v4568
        %4791 = vmatpush.bf16.msra.mxu0 %v4560
        %4792 = vmatpush.bf16.msra.mxu0 %v4552
        %4793 = vmatmul.bf16.gmra.mxu0 %v4085
        %v4794 = vpop.f32.mrf.mxu0
        %v4795 = vadd.f32 %v4781, %v4794
        %v4796 = vpop.f32.mrf.mxu0
        %v4797 = vadd.f32 %v4783, %v4796
        %4798 = vdwg.mxu0
        %4799 = vmatpush.bf16.msra.mxu0 %v4545
        %4800 = vmatpush.bf16.msra.mxu0 %v4537
        %4801 = vmatpush.bf16.msra.mxu0 %v4529
        %4802 = vmatpush.bf16.msra.mxu0 %v4521
        %4803 = vmatpush.bf16.msra.mxu0 %v4513
        %4804 = vmatpush.bf16.msra.mxu0 %v4505
        %4805 = vmatpush.bf16.msra.mxu0 %v4497
        %4806 = vmatpush.bf16.msra.mxu0 %v4489
        %4807 = vmatmul.bf16.gmra.mxu0 %v4084
        %v4808 = vpop.f32.mrf.mxu0
        %v4809 = vadd.f32 %v4089, %v4808
        %v4810 = vpop.f32.mrf.mxu0
        %v4811 = vadd.f32 %v4089, %v4810
        %4812 = vdwg.mxu0
        %4813 = vmatpush.bf16.msra.mxu0 %v4609
        %4814 = vmatpush.bf16.msra.mxu0 %v4601
        %4815 = vmatpush.bf16.msra.mxu0 %v4593
        %4816 = vmatpush.bf16.msra.mxu0 %v4585
        %4817 = vmatpush.bf16.msra.mxu0 %v4577
        %4818 = vmatpush.bf16.msra.mxu0 %v4569
        %4819 = vmatpush.bf16.msra.mxu0 %v4561
        %4820 = vmatpush.bf16.msra.mxu0 %v4553
        %4821 = vmatmul.bf16.gmra.mxu0 %v4085
        %v4822 = vpop.f32.mrf.mxu0
        %v4823 = vadd.f32 %v4809, %v4822
        %v4824 = vpop.f32.mrf.mxu0
        %v4825 = vadd.f32 %v4811, %v4824
        %4826 = vdwg.mxu0
        %4827 = vmatpush.bf16.msra.mxu0 %v4546
        %4828 = vmatpush.bf16.msra.mxu0 %v4538
        %4829 = vmatpush.bf16.msra.mxu0 %v4530
        %4830 = vmatpush.bf16.msra.mxu0 %v4522
        %4831 = vmatpush.bf16.msra.mxu0 %v4514
        %4832 = vmatpush.bf16.msra.mxu0 %v4506
        %4833 = vmatpush.bf16.msra.mxu0 %v4498
        %4834 = vmatpush.bf16.msra.mxu0 %v4490
        %4835 = vmatmul.bf16.gmra.mxu0 %v4084
        %v4836 = vpop.f32.mrf.mxu0
        %v4837 = vadd.f32 %v4090, %v4836
        %v4838 = vpop.f32.mrf.mxu0
        %v4839 = vadd.f32 %v4090, %v4838
        %4840 = vdwg.mxu0
        %4841 = vmatpush.bf16.msra.mxu0 %v4610
        %4842 = vmatpush.bf16.msra.mxu0 %v4602
        %4843 = vmatpush.bf16.msra.mxu0 %v4594
        %4844 = vmatpush.bf16.msra.mxu0 %v4586
        %4845 = vmatpush.bf16.msra.mxu0 %v4578
        %4846 = vmatpush.bf16.msra.mxu0 %v4570
        %4847 = vmatpush.bf16.msra.mxu0 %v4562
        %4848 = vmatpush.bf16.msra.mxu0 %v4554
        %4849 = vmatmul.bf16.gmra.mxu0 %v4085
        %v4850 = vpop.f32.mrf.mxu0
        %v4851 = vadd.f32 %v4837, %v4850
        %v4852 = vpop.f32.mrf.mxu0
        %v4853 = vadd.f32 %v4839, %v4852
        %4854 = vdwg.mxu0
        %4855 = vmatpush.bf16.msra.mxu0 %v4547
        %4856 = vmatpush.bf16.msra.mxu0 %v4539
        %4857 = vmatpush.bf16.msra.mxu0 %v4531
        %4858 = vmatpush.bf16.msra.mxu0 %v4523
        %4859 = vmatpush.bf16.msra.mxu0 %v4515
        %4860 = vmatpush.bf16.msra.mxu0 %v4507
        %4861 = vmatpush.bf16.msra.mxu0 %v4499
        %4862 = vmatpush.bf16.msra.mxu0 %v4491
        %4863 = vmatmul.bf16.gmra.mxu0 %v4084
        %v4864 = vpop.f32.mrf.mxu0
        %v4865 = vadd.f32 %v4091, %v4864
        %v4866 = vpop.f32.mrf.mxu0
        %v4867 = vadd.f32 %v4091, %v4866
        %4868 = vdwg.mxu0
        %4869 = vmatpush.bf16.msra.mxu0 %v4611
        %4870 = vmatpush.bf16.msra.mxu0 %v4603
        %4871 = vmatpush.bf16.msra.mxu0 %v4595
        %4872 = vmatpush.bf16.msra.mxu0 %v4587
        %4873 = vmatpush.bf16.msra.mxu0 %v4579
        %4874 = vmatpush.bf16.msra.mxu0 %v4571
        %4875 = vmatpush.bf16.msra.mxu0 %v4563
        %4876 = vmatpush.bf16.msra.mxu0 %v4555
        %4877 = vmatmul.bf16.gmra.mxu0 %v4085
        %v4878 = vpop.f32.mrf.mxu0
        %v4879 = vadd.f32 %v4865, %v4878
        %v4880 = vpop.f32.mrf.mxu0
        %v4881 = vadd.f32 %v4867, %v4880
        %4882 = vdwg.mxu0
        %4883 = vmatpush.bf16.msra.mxu0 %v4548
        %4884 = vmatpush.bf16.msra.mxu0 %v4540
        %4885 = vmatpush.bf16.msra.mxu0 %v4532
        %4886 = vmatpush.bf16.msra.mxu0 %v4524
        %4887 = vmatpush.bf16.msra.mxu0 %v4516
        %4888 = vmatpush.bf16.msra.mxu0 %v4508
        %4889 = vmatpush.bf16.msra.mxu0 %v4500
        %4890 = vmatpush.bf16.msra.mxu0 %v4492
        %4891 = vmatmul.bf16.gmra.mxu0 %v4084
        %v4892 = vpop.f32.mrf.mxu0
        %v4893 = vadd.f32 %v4092, %v4892
        %v4894 = vpop.f32.mrf.mxu0
        %v4895 = vadd.f32 %v4092, %v4894
        %4896 = vdwg.mxu0
        %4897 = vmatpush.bf16.msra.mxu0 %v4612
        %4898 = vmatpush.bf16.msra.mxu0 %v4604
        %4899 = vmatpush.bf16.msra.mxu0 %v4596
        %4900 = vmatpush.bf16.msra.mxu0 %v4588
        %4901 = vmatpush.bf16.msra.mxu0 %v4580
        %4902 = vmatpush.bf16.msra.mxu0 %v4572
        %4903 = vmatpush.bf16.msra.mxu0 %v4564
        %4904 = vmatpush.bf16.msra.mxu0 %v4556
        %4905 = vmatmul.bf16.gmra.mxu0 %v4085
        %v4906 = vpop.f32.mrf.mxu0
        %v4907 = vadd.f32 %v4893, %v4906
        %v4908 = vpop.f32.mrf.mxu0
        %v4909 = vadd.f32 %v4895, %v4908
        %4910 = vdwg.mxu0
        %4911 = vmatpush.bf16.msra.mxu0 %v4549
        %4912 = vmatpush.bf16.msra.mxu0 %v4541
        %4913 = vmatpush.bf16.msra.mxu0 %v4533
        %4914 = vmatpush.bf16.msra.mxu0 %v4525
        %4915 = vmatpush.bf16.msra.mxu0 %v4517
        %4916 = vmatpush.bf16.msra.mxu0 %v4509
        %4917 = vmatpush.bf16.msra.mxu0 %v4501
        %4918 = vmatpush.bf16.msra.mxu0 %v4493
        %4919 = vmatmul.bf16.gmra.mxu0 %v4084
        %v4920 = vpop.f32.mrf.mxu0
        %v4921 = vadd.f32 %v4093, %v4920
        %v4922 = vpop.f32.mrf.mxu0
        %v4923 = vadd.f32 %v4093, %v4922
        %4924 = vdwg.mxu0
        %4925 = vmatpush.bf16.msra.mxu0 %v4613
        %4926 = vmatpush.bf16.msra.mxu0 %v4605
        %4927 = vmatpush.bf16.msra.mxu0 %v4597
        %4928 = vmatpush.bf16.msra.mxu0 %v4589
        %4929 = vmatpush.bf16.msra.mxu0 %v4581
        %4930 = vmatpush.bf16.msra.mxu0 %v4573
        %4931 = vmatpush.bf16.msra.mxu0 %v4565
        %4932 = vmatpush.bf16.msra.mxu0 %v4557
        %4933 = vmatmul.bf16.gmra.mxu0 %v4085
        %v4934 = vpop.f32.mrf.mxu0
        %v4935 = vadd.f32 %v4921, %v4934
        %v4936 = vpop.f32.mrf.mxu0
        %v4937 = vadd.f32 %v4923, %v4936
        %4938 = vdwg.mxu0
        %4939 = vmatpush.bf16.msra.mxu0 %v4550
        %4940 = vmatpush.bf16.msra.mxu0 %v4542
        %4941 = vmatpush.bf16.msra.mxu0 %v4534
        %4942 = vmatpush.bf16.msra.mxu0 %v4526
        %4943 = vmatpush.bf16.msra.mxu0 %v4518
        %4944 = vmatpush.bf16.msra.mxu0 %v4510
        %4945 = vmatpush.bf16.msra.mxu0 %v4502
        %4946 = vmatpush.bf16.msra.mxu0 %v4494
        %4947 = vmatmul.bf16.gmra.mxu0 %v4084
        %v4948 = vpop.f32.mrf.mxu0
        %v4949 = vadd.f32 %v4094, %v4948
        %v4950 = vpop.f32.mrf.mxu0
        %v4951 = vadd.f32 %v4094, %v4950
        %4952 = vdwg.mxu0
        %4953 = vmatpush.bf16.msra.mxu0 %v4614
        %4954 = vmatpush.bf16.msra.mxu0 %v4606
        %4955 = vmatpush.bf16.msra.mxu0 %v4598
        %4956 = vmatpush.bf16.msra.mxu0 %v4590
        %4957 = vmatpush.bf16.msra.mxu0 %v4582
        %4958 = vmatpush.bf16.msra.mxu0 %v4574
        %4959 = vmatpush.bf16.msra.mxu0 %v4566
        %4960 = vmatpush.bf16.msra.mxu0 %v4558
        %4961 = vmatmul.bf16.gmra.mxu0 %v4085
        %v4962 = vpop.f32.mrf.mxu0
        %v4963 = vadd.f32 %v4949, %v4962
        %v4964 = vpop.f32.mrf.mxu0
        %v4965 = vadd.f32 %v4951, %v4964
        %4966 = vdwg.mxu0
        %v4967 = vmax.f32 %v4767, 0.0
        %v4968 = vmax.f32 %v4795, 0.0
        %v4969 = vmax.f32 %v4823, 0.0
        %v4970 = vmax.f32 %v4851, 0.0
        %v4971 = vmax.f32 %v4879, 0.0
        %v4972 = vmax.f32 %v4907, 0.0
        %v4973 = vmax.f32 %v4935, 0.0
        %v4974 = vmax.f32 %v4963, 0.0
        %v4975 = vmax.f32 %v4769, 0.0
        %v4976 = vmax.f32 %v4797, 0.0
        %v4977 = vmax.f32 %v4825, 0.0
        %v4978 = vmax.f32 %v4853, 0.0
        %v4979 = vmax.f32 %v4881, 0.0
        %v4980 = vmax.f32 %v4909, 0.0
        %v4981 = vmax.f32 %v4937, 0.0
        %v4982 = vmax.f32 %v4965, 0.0
        %v4983 = vpack.c.bf16 %v4975, %v4967
        %v4984 = vpack.c.bf16 %v4976, %v4968
        %v4985 = vpack.c.bf16 %v4977, %v4969
        %v4986 = vpack.c.bf16 %v4978, %v4970
        %v4987 = vpack.c.bf16 %v4979, %v4971
        %v4988 = vpack.c.bf16 %v4980, %v4972
        %v4989 = vpack.c.bf16 %v4981, %v4973
        %v4990 = vpack.c.bf16 %v4982, %v4974
        %v4992 = vperm.slane %v4083, 0
        %v4993 = vperm.slane %v4083, 1
        %v5124 = vunpack.c.l.b16 %v3954
        %v5125 = vunpack.c.h.b16 %v3954
        %v5126 = vunpack.c.l.b16 %v3955
        %v5127 = vunpack.c.h.b16 %v3955
        %v5128 = vunpack.c.l.b16 %v3956
        %v5129 = vunpack.c.h.b16 %v3956
        %v5130 = vunpack.c.l.b16 %v3957
        %v5131 = vunpack.c.h.b16 %v3957
        %v5132 = vunpack.c.l.b16 %v3958
        %v5133 = vunpack.c.h.b16 %v3958
        %v5134 = vunpack.c.l.b16 %v3959
        %v5135 = vunpack.c.h.b16 %v3959
        %v5136 = vunpack.c.l.b16 %v3960
        %v5137 = vunpack.c.h.b16 %v3960
        %v5138 = vunpack.c.l.b16 %v3961
        %v5139 = vunpack.c.h.b16 %v3961
        %v5140 = vunpack.c.l.b16 %v3962
        %v5141 = vunpack.c.h.b16 %v3962
        %v5142 = vunpack.c.l.b16 %v3963
        %v5143 = vunpack.c.h.b16 %v3963
        %v5144 = vunpack.c.l.b16 %v3964
        %v5145 = vunpack.c.h.b16 %v3964
        %v5146 = vunpack.c.l.b16 %v3965
        %v5147 = vunpack.c.h.b16 %v3965
        %v5148 = vunpack.c.l.b16 %v3966
        %v5149 = vunpack.c.h.b16 %v3966
        %v5150 = vunpack.c.l.b16 %v3967
        %v5151 = vunpack.c.h.b16 %v3967
        %v5152 = vunpack.c.l.b16 %v3968
        %v5153 = vunpack.c.h.b16 %v3968
        %v5154 = vunpack.c.l.b16 %v3969
        %v5155 = vunpack.c.h.b16 %v3969
        %v5156 = vunpack.c.l.b16 %v3970
        %v5157 = vunpack.c.h.b16 %v3970
        %v5158 = vunpack.c.l.b16 %v3971
        %v5159 = vunpack.c.h.b16 %v3971
        %v5160 = vunpack.c.l.b16 %v3972
        %v5161 = vunpack.c.h.b16 %v3972
        %v5162 = vunpack.c.l.b16 %v3973
        %v5163 = vunpack.c.h.b16 %v3973
        %v5164 = vunpack.c.l.b16 %v3974
        %v5165 = vunpack.c.h.b16 %v3974
        %v5166 = vunpack.c.l.b16 %v3975
        %v5167 = vunpack.c.h.b16 %v3975
        %v5168 = vunpack.c.l.b16 %v3976
        %v5169 = vunpack.c.h.b16 %v3976
        %v5170 = vunpack.c.l.b16 %v3977
        %v5171 = vunpack.c.h.b16 %v3977
        %v5172 = vunpack.c.l.b16 %v3978
        %v5173 = vunpack.c.h.b16 %v3978
        %v5174 = vunpack.c.l.b16 %v3979
        %v5175 = vunpack.c.h.b16 %v3979
        %v5176 = vunpack.c.l.b16 %v3980
        %v5177 = vunpack.c.h.b16 %v3980
        %v5178 = vunpack.c.l.b16 %v3981
        %v5179 = vunpack.c.h.b16 %v3981
        %v5180 = vunpack.c.l.b16 %v3982
        %v5181 = vunpack.c.h.b16 %v3982
        %v5182 = vunpack.c.l.b16 %v3983
        %v5183 = vunpack.c.h.b16 %v3983
        %v5184 = vunpack.c.l.b16 %v3984
        %v5185 = vunpack.c.h.b16 %v3984
        %v5186 = vunpack.c.l.b16 %v3985
        %v5187 = vunpack.c.h.b16 %v3985
        %v5188 = vunpack.c.l.b16 %v3986
        %v5189 = vunpack.c.h.b16 %v3986
        %v5190 = vunpack.c.l.b16 %v3987
        %v5191 = vunpack.c.h.b16 %v3987
        %v5192 = vunpack.c.l.b16 %v3988
        %v5193 = vunpack.c.h.b16 %v3988
        %v5194 = vunpack.c.l.b16 %v3989
        %v5195 = vunpack.c.h.b16 %v3989
        %v5196 = vunpack.c.l.b16 %v3990
        %v5197 = vunpack.c.h.b16 %v3990
        %v5198 = vunpack.c.l.b16 %v3991
        %v5199 = vunpack.c.h.b16 %v3991
        %v5200 = vunpack.c.l.b16 %v3992
        %v5201 = vunpack.c.h.b16 %v3992
        %v5202 = vunpack.c.l.b16 %v3993
        %v5203 = vunpack.c.h.b16 %v3993
        %v5204 = vunpack.c.l.b16 %v3994
        %v5205 = vunpack.c.h.b16 %v3994
        %v5206 = vunpack.c.l.b16 %v3995
        %v5207 = vunpack.c.h.b16 %v3995
        %v5208 = vunpack.c.l.b16 %v3996
        %v5209 = vunpack.c.h.b16 %v3996
        %v5210 = vunpack.c.l.b16 %v3997
        %v5211 = vunpack.c.h.b16 %v3997
        %v5212 = vunpack.c.l.b16 %v3998
        %v5213 = vunpack.c.h.b16 %v3998
        %v5214 = vunpack.c.l.b16 %v3999
        %v5215 = vunpack.c.h.b16 %v3999
        %v5216 = vunpack.c.l.b16 %v4000
        %v5217 = vunpack.c.h.b16 %v4000
        %v5218 = vunpack.c.l.b16 %v4001
        %v5219 = vunpack.c.h.b16 %v4001
        %v5220 = vunpack.c.l.b16 %v4002
        %v5221 = vunpack.c.h.b16 %v4002
        %v5222 = vunpack.c.l.b16 %v4003
        %v5223 = vunpack.c.h.b16 %v4003
        %v5224 = vunpack.c.l.b16 %v4004
        %v5225 = vunpack.c.h.b16 %v4004
        %v5226 = vunpack.c.l.b16 %v4005
        %v5227 = vunpack.c.h.b16 %v4005
        %v5228 = vunpack.c.l.b16 %v4006
        %v5229 = vunpack.c.h.b16 %v4006
        %v5230 = vunpack.c.l.b16 %v4007
        %v5231 = vunpack.c.h.b16 %v4007
        %v5232 = vunpack.c.l.b16 %v4008
        %v5233 = vunpack.c.h.b16 %v4008
        %v5234 = vunpack.c.l.b16 %v4009
        %v5235 = vunpack.c.h.b16 %v4009
        %v5236 = vunpack.c.l.b16 %v4010
        %v5237 = vunpack.c.h.b16 %v4010
        %v5238 = vunpack.c.l.b16 %v4011
        %v5239 = vunpack.c.h.b16 %v4011
        %v5240 = vunpack.c.l.b16 %v4012
        %v5241 = vunpack.c.h.b16 %v4012
        %v5242 = vunpack.c.l.b16 %v4013
        %v5243 = vunpack.c.h.b16 %v4013
        %v5244 = vunpack.c.l.b16 %v4014
        %v5245 = vunpack.c.h.b16 %v4014
        %v5246 = vunpack.c.l.b16 %v4015
        %v5247 = vunpack.c.h.b16 %v4015
        %v5248 = vunpack.c.l.b16 %v4016
        %v5249 = vunpack.c.h.b16 %v4016
        %v5250 = vunpack.c.l.b16 %v4017
        %v5251 = vunpack.c.h.b16 %v4017
        %v5252 = vunpack.c.l.b16 %v4018
        %v5253 = vunpack.c.h.b16 %v4018
        %v5254 = vunpack.c.l.b16 %v4019
        %v5255 = vunpack.c.h.b16 %v4019
        %v5256 = vunpack.c.l.b16 %v4020
        %v5257 = vunpack.c.h.b16 %v4020
        %v5258 = vunpack.c.l.b16 %v4021
        %v5259 = vunpack.c.h.b16 %v4021
        %v5260 = vunpack.c.l.b16 %v4022
        %v5261 = vunpack.c.h.b16 %v4022
        %v5262 = vunpack.c.l.b16 %v4023
        %v5263 = vunpack.c.h.b16 %v4023
        %v5264 = vunpack.c.l.b16 %v4024
        %v5265 = vunpack.c.h.b16 %v4024
        %v5266 = vunpack.c.l.b16 %v4025
        %v5267 = vunpack.c.h.b16 %v4025
        %v5268 = vunpack.c.l.b16 %v4026
        %v5269 = vunpack.c.h.b16 %v4026
        %v5270 = vunpack.c.l.b16 %v4027
        %v5271 = vunpack.c.h.b16 %v4027
        %v5272 = vunpack.c.l.b16 %v4028
        %v5273 = vunpack.c.h.b16 %v4028
        %v5274 = vunpack.c.l.b16 %v4029
        %v5275 = vunpack.c.h.b16 %v4029
        %v5276 = vunpack.c.l.b16 %v4030
        %v5277 = vunpack.c.h.b16 %v4030
        %v5278 = vunpack.c.l.b16 %v4031
        %v5279 = vunpack.c.h.b16 %v4031
        %v5280 = vunpack.c.l.b16 %v4032
        %v5281 = vunpack.c.h.b16 %v4032
        %v5282 = vunpack.c.l.b16 %v4033
        %v5283 = vunpack.c.h.b16 %v4033
        %v5284 = vunpack.c.l.b16 %v4034
        %v5285 = vunpack.c.h.b16 %v4034
        %v5286 = vunpack.c.l.b16 %v4035
        %v5287 = vunpack.c.h.b16 %v4035
        %v5288 = vunpack.c.l.b16 %v4036
        %v5289 = vunpack.c.h.b16 %v4036
        %v5290 = vunpack.c.l.b16 %v4037
        %v5291 = vunpack.c.h.b16 %v4037
        %v5292 = vunpack.c.l.b16 %v4038
        %v5293 = vunpack.c.h.b16 %v4038
        %v5294 = vunpack.c.l.b16 %v4039
        %v5295 = vunpack.c.h.b16 %v4039
        %v5296 = vunpack.c.l.b16 %v4040
        %v5297 = vunpack.c.h.b16 %v4040
        %v5298 = vunpack.c.l.b16 %v4041
        %v5299 = vunpack.c.h.b16 %v4041
        %v5300 = vunpack.c.l.b16 %v4042
        %v5301 = vunpack.c.h.b16 %v4042
        %v5302 = vunpack.c.l.b16 %v4043
        %v5303 = vunpack.c.h.b16 %v4043
        %v5304 = vunpack.c.l.b16 %v4044
        %v5305 = vunpack.c.h.b16 %v4044
        %v5306 = vunpack.c.l.b16 %v4045
        %v5307 = vunpack.c.h.b16 %v4045
        %v5308 = vunpack.c.l.b16 %v4046
        %v5309 = vunpack.c.h.b16 %v4046
        %v5310 = vunpack.c.l.b16 %v4047
        %v5311 = vunpack.c.h.b16 %v4047
        %v5312 = vunpack.c.l.b16 %v4048
        %v5313 = vunpack.c.h.b16 %v4048
        %v5314 = vunpack.c.l.b16 %v4049
        %v5315 = vunpack.c.h.b16 %v4049
        %v5316 = vunpack.c.l.b16 %v4050
        %v5317 = vunpack.c.h.b16 %v4050
        %v5318 = vunpack.c.l.b16 %v4051
        %v5319 = vunpack.c.h.b16 %v4051
        %v5320 = vunpack.c.l.b16 %v4052
        %v5321 = vunpack.c.h.b16 %v4052
        %v5322 = vunpack.c.l.b16 %v4053
        %v5323 = vunpack.c.h.b16 %v4053
        %v5324 = vunpack.c.l.b16 %v4054
        %v5325 = vunpack.c.h.b16 %v4054
        %v5326 = vunpack.c.l.b16 %v4055
        %v5327 = vunpack.c.h.b16 %v4055
        %v5328 = vunpack.c.l.b16 %v4056
        %v5329 = vunpack.c.h.b16 %v4056
        %v5330 = vunpack.c.l.b16 %v4057
        %v5331 = vunpack.c.h.b16 %v4057
        %v5332 = vunpack.c.l.b16 %v4058
        %v5333 = vunpack.c.h.b16 %v4058
        %v5334 = vunpack.c.l.b16 %v4059
        %v5335 = vunpack.c.h.b16 %v4059
        %v5336 = vunpack.c.l.b16 %v4060
        %v5337 = vunpack.c.h.b16 %v4060
        %v5338 = vunpack.c.l.b16 %v4061
        %v5339 = vunpack.c.h.b16 %v4061
        %v5340 = vunpack.c.l.b16 %v4062
        %v5341 = vunpack.c.h.b16 %v4062
        %v5342 = vunpack.c.l.b16 %v4063
        %v5343 = vunpack.c.h.b16 %v4063
        %v5344 = vunpack.c.l.b16 %v4064
        %v5345 = vunpack.c.h.b16 %v4064
        %v5346 = vunpack.c.l.b16 %v4065
        %v5347 = vunpack.c.h.b16 %v4065
        %v5348 = vunpack.c.l.b16 %v4066
        %v5349 = vunpack.c.h.b16 %v4066
        %v5350 = vunpack.c.l.b16 %v4067
        %v5351 = vunpack.c.h.b16 %v4067
        %v5352 = vunpack.c.l.b16 %v4068
        %v5353 = vunpack.c.h.b16 %v4068
        %v5354 = vunpack.c.l.b16 %v4069
        %v5355 = vunpack.c.h.b16 %v4069
        %v5356 = vunpack.c.l.b16 %v4070
        %v5357 = vunpack.c.h.b16 %v4070
        %v5358 = vunpack.c.l.b16 %v4071
        %v5359 = vunpack.c.h.b16 %v4071
        %v5360 = vunpack.c.l.b16 %v4072
        %v5361 = vunpack.c.h.b16 %v4072
        %v5362 = vunpack.c.l.b16 %v4073
        %v5363 = vunpack.c.h.b16 %v4073
        %v5364 = vunpack.c.l.b16 %v4074
        %v5365 = vunpack.c.h.b16 %v4074
        %v5366 = vunpack.c.l.b16 %v4075
        %v5367 = vunpack.c.h.b16 %v4075
        %v5368 = vunpack.c.l.b16 %v4076
        %v5369 = vunpack.c.h.b16 %v4076
        %v5370 = vunpack.c.l.b16 %v4077
        %v5371 = vunpack.c.h.b16 %v4077
        %v5372 = vunpack.c.l.b16 %v4078
        %v5373 = vunpack.c.h.b16 %v4078
        %v5374 = vunpack.c.l.b16 %v4079
        %v5375 = vunpack.c.h.b16 %v4079
        %v5376 = vunpack.c.l.b16 %v4080
        %v5377 = vunpack.c.h.b16 %v4080
        %v5378 = vunpack.c.l.b16 %v4081
        %v5379 = vunpack.c.h.b16 %v4081
        %v5380 = vpack.c.b16 %v5126, %v5124
        %v5381 = vpack.c.b16 %v5127, %v5125
        %v5382 = vpack.c.b16 %v5130, %v5128
        %v5383 = vpack.c.b16 %v5131, %v5129
        %v5384 = vpack.c.b16 %v5134, %v5132
        %v5385 = vpack.c.b16 %v5135, %v5133
        %v5386 = vpack.c.b16 %v5138, %v5136
        %v5387 = vpack.c.b16 %v5139, %v5137
        %v5388 = vpack.c.b16 %v5142, %v5140
        %v5389 = vpack.c.b16 %v5143, %v5141
        %v5390 = vpack.c.b16 %v5146, %v5144
        %v5391 = vpack.c.b16 %v5147, %v5145
        %v5392 = vpack.c.b16 %v5150, %v5148
        %v5393 = vpack.c.b16 %v5151, %v5149
        %v5394 = vpack.c.b16 %v5154, %v5152
        %v5395 = vpack.c.b16 %v5155, %v5153
        %v5396 = vpack.c.b16 %v5158, %v5156
        %v5397 = vpack.c.b16 %v5159, %v5157
        %v5398 = vpack.c.b16 %v5162, %v5160
        %v5399 = vpack.c.b16 %v5163, %v5161
        %v5400 = vpack.c.b16 %v5166, %v5164
        %v5401 = vpack.c.b16 %v5167, %v5165
        %v5402 = vpack.c.b16 %v5170, %v5168
        %v5403 = vpack.c.b16 %v5171, %v5169
        %v5404 = vpack.c.b16 %v5174, %v5172
        %v5405 = vpack.c.b16 %v5175, %v5173
        %v5406 = vpack.c.b16 %v5178, %v5176
        %v5407 = vpack.c.b16 %v5179, %v5177
        %v5408 = vpack.c.b16 %v5182, %v5180
        %v5409 = vpack.c.b16 %v5183, %v5181
        %v5410 = vpack.c.b16 %v5186, %v5184
        %v5411 = vpack.c.b16 %v5187, %v5185
        %v5412 = vpack.c.b16 %v5190, %v5188
        %v5413 = vpack.c.b16 %v5191, %v5189
        %v5414 = vpack.c.b16 %v5194, %v5192
        %v5415 = vpack.c.b16 %v5195, %v5193
        %v5416 = vpack.c.b16 %v5198, %v5196
        %v5417 = vpack.c.b16 %v5199, %v5197
        %v5418 = vpack.c.b16 %v5202, %v5200
        %v5419 = vpack.c.b16 %v5203, %v5201
        %v5420 = vpack.c.b16 %v5206, %v5204
        %v5421 = vpack.c.b16 %v5207, %v5205
        %v5422 = vpack.c.b16 %v5210, %v5208
        %v5423 = vpack.c.b16 %v5211, %v5209
        %v5424 = vpack.c.b16 %v5214, %v5212
        %v5425 = vpack.c.b16 %v5215, %v5213
        %v5426 = vpack.c.b16 %v5218, %v5216
        %v5427 = vpack.c.b16 %v5219, %v5217
        %v5428 = vpack.c.b16 %v5222, %v5220
        %v5429 = vpack.c.b16 %v5223, %v5221
        %v5430 = vpack.c.b16 %v5226, %v5224
        %v5431 = vpack.c.b16 %v5227, %v5225
        %v5432 = vpack.c.b16 %v5230, %v5228
        %v5433 = vpack.c.b16 %v5231, %v5229
        %v5434 = vpack.c.b16 %v5234, %v5232
        %v5435 = vpack.c.b16 %v5235, %v5233
        %v5436 = vpack.c.b16 %v5238, %v5236
        %v5437 = vpack.c.b16 %v5239, %v5237
        %v5438 = vpack.c.b16 %v5242, %v5240
        %v5439 = vpack.c.b16 %v5243, %v5241
        %v5440 = vpack.c.b16 %v5246, %v5244
        %v5441 = vpack.c.b16 %v5247, %v5245
        %v5442 = vpack.c.b16 %v5250, %v5248
        %v5443 = vpack.c.b16 %v5251, %v5249
        %v5444 = vpack.c.b16 %v5254, %v5252
        %v5445 = vpack.c.b16 %v5255, %v5253
        %v5446 = vpack.c.b16 %v5258, %v5256
        %v5447 = vpack.c.b16 %v5259, %v5257
        %v5448 = vpack.c.b16 %v5262, %v5260
        %v5449 = vpack.c.b16 %v5263, %v5261
        %v5450 = vpack.c.b16 %v5266, %v5264
        %v5451 = vpack.c.b16 %v5267, %v5265
        %v5452 = vpack.c.b16 %v5270, %v5268
        %v5453 = vpack.c.b16 %v5271, %v5269
        %v5454 = vpack.c.b16 %v5274, %v5272
        %v5455 = vpack.c.b16 %v5275, %v5273
        %v5456 = vpack.c.b16 %v5278, %v5276
        %v5457 = vpack.c.b16 %v5279, %v5277
        %v5458 = vpack.c.b16 %v5282, %v5280
        %v5459 = vpack.c.b16 %v5283, %v5281
        %v5460 = vpack.c.b16 %v5286, %v5284
        %v5461 = vpack.c.b16 %v5287, %v5285
        %v5462 = vpack.c.b16 %v5290, %v5288
        %v5463 = vpack.c.b16 %v5291, %v5289
        %v5464 = vpack.c.b16 %v5294, %v5292
        %v5465 = vpack.c.b16 %v5295, %v5293
        %v5466 = vpack.c.b16 %v5298, %v5296
        %v5467 = vpack.c.b16 %v5299, %v5297
        %v5468 = vpack.c.b16 %v5302, %v5300
        %v5469 = vpack.c.b16 %v5303, %v5301
        %v5470 = vpack.c.b16 %v5306, %v5304
        %v5471 = vpack.c.b16 %v5307, %v5305
        %v5472 = vpack.c.b16 %v5310, %v5308
        %v5473 = vpack.c.b16 %v5311, %v5309
        %v5474 = vpack.c.b16 %v5314, %v5312
        %v5475 = vpack.c.b16 %v5315, %v5313
        %v5476 = vpack.c.b16 %v5318, %v5316
        %v5477 = vpack.c.b16 %v5319, %v5317
        %v5478 = vpack.c.b16 %v5322, %v5320
        %v5479 = vpack.c.b16 %v5323, %v5321
        %v5480 = vpack.c.b16 %v5326, %v5324
        %v5481 = vpack.c.b16 %v5327, %v5325
        %v5482 = vpack.c.b16 %v5330, %v5328
        %v5483 = vpack.c.b16 %v5331, %v5329
        %v5484 = vpack.c.b16 %v5334, %v5332
        %v5485 = vpack.c.b16 %v5335, %v5333
        %v5486 = vpack.c.b16 %v5338, %v5336
        %v5487 = vpack.c.b16 %v5339, %v5337
        %v5488 = vpack.c.b16 %v5342, %v5340
        %v5489 = vpack.c.b16 %v5343, %v5341
        %v5490 = vpack.c.b16 %v5346, %v5344
        %v5491 = vpack.c.b16 %v5347, %v5345
        %v5492 = vpack.c.b16 %v5350, %v5348
        %v5493 = vpack.c.b16 %v5351, %v5349
        %v5494 = vpack.c.b16 %v5354, %v5352
        %v5495 = vpack.c.b16 %v5355, %v5353
        %v5496 = vpack.c.b16 %v5358, %v5356
        %v5497 = vpack.c.b16 %v5359, %v5357
        %v5498 = vpack.c.b16 %v5362, %v5360
        %v5499 = vpack.c.b16 %v5363, %v5361
        %v5500 = vpack.c.b16 %v5366, %v5364
        %v5501 = vpack.c.b16 %v5367, %v5365
        %v5502 = vpack.c.b16 %v5370, %v5368
        %v5503 = vpack.c.b16 %v5371, %v5369
        %v5504 = vpack.c.b16 %v5374, %v5372
        %v5505 = vpack.c.b16 %v5375, %v5373
        %v5506 = vpack.c.b16 %v5378, %v5376
        %v5507 = vpack.c.b16 %v5379, %v5377
        %5636 = vmatpush.bf16.msra.mxu0 %v5394
        %5637 = vmatpush.bf16.msra.mxu0 %v5392
        %5638 = vmatpush.bf16.msra.mxu0 %v5390
        %5639 = vmatpush.bf16.msra.mxu0 %v5388
        %5640 = vmatpush.bf16.msra.mxu0 %v5386
        %5641 = vmatpush.bf16.msra.mxu0 %v5384
        %5642 = vmatpush.bf16.msra.mxu0 %v5382
        %5643 = vmatpush.bf16.msra.mxu0 %v5380
        %5644 = vmatmul.bf16.gmra.mxu0 %v4983
        %v5645 = vpop.f32.mrf.mxu0
        %v5646 = vadd.f32 %v4992, %v5645
        %v5647 = vpop.f32.mrf.mxu0
        %v5648 = vadd.f32 %v4992, %v5647
        %5649 = vdwg.mxu0
        %5650 = vmatpush.bf16.msra.mxu0 %v5410
        %5651 = vmatpush.bf16.msra.mxu0 %v5408
        %5652 = vmatpush.bf16.msra.mxu0 %v5406
        %5653 = vmatpush.bf16.msra.mxu0 %v5404
        %5654 = vmatpush.bf16.msra.mxu0 %v5402
        %5655 = vmatpush.bf16.msra.mxu0 %v5400
        %5656 = vmatpush.bf16.msra.mxu0 %v5398
        %5657 = vmatpush.bf16.msra.mxu0 %v5396
        %5658 = vmatmul.bf16.gmra.mxu0 %v4984
        %v5659 = vpop.f32.mrf.mxu0
        %v5660 = vadd.f32 %v5646, %v5659
        %v5661 = vpop.f32.mrf.mxu0
        %v5662 = vadd.f32 %v5648, %v5661
        %5663 = vdwg.mxu0
        %5664 = vmatpush.bf16.msra.mxu0 %v5426
        %5665 = vmatpush.bf16.msra.mxu0 %v5424
        %5666 = vmatpush.bf16.msra.mxu0 %v5422
        %5667 = vmatpush.bf16.msra.mxu0 %v5420
        %5668 = vmatpush.bf16.msra.mxu0 %v5418
        %5669 = vmatpush.bf16.msra.mxu0 %v5416
        %5670 = vmatpush.bf16.msra.mxu0 %v5414
        %5671 = vmatpush.bf16.msra.mxu0 %v5412
        %5672 = vmatmul.bf16.gmra.mxu0 %v4985
        %v5673 = vpop.f32.mrf.mxu0
        %v5674 = vadd.f32 %v5660, %v5673
        %v5675 = vpop.f32.mrf.mxu0
        %v5676 = vadd.f32 %v5662, %v5675
        %5677 = vdwg.mxu0
        %5678 = vmatpush.bf16.msra.mxu0 %v5442
        %5679 = vmatpush.bf16.msra.mxu0 %v5440
        %5680 = vmatpush.bf16.msra.mxu0 %v5438
        %5681 = vmatpush.bf16.msra.mxu0 %v5436
        %5682 = vmatpush.bf16.msra.mxu0 %v5434
        %5683 = vmatpush.bf16.msra.mxu0 %v5432
        %5684 = vmatpush.bf16.msra.mxu0 %v5430
        %5685 = vmatpush.bf16.msra.mxu0 %v5428
        %5686 = vmatmul.bf16.gmra.mxu0 %v4986
        %v5687 = vpop.f32.mrf.mxu0
        %v5688 = vadd.f32 %v5674, %v5687
        %v5689 = vpop.f32.mrf.mxu0
        %v5690 = vadd.f32 %v5676, %v5689
        %5691 = vdwg.mxu0
        %5692 = vmatpush.bf16.msra.mxu0 %v5458
        %5693 = vmatpush.bf16.msra.mxu0 %v5456
        %5694 = vmatpush.bf16.msra.mxu0 %v5454
        %5695 = vmatpush.bf16.msra.mxu0 %v5452
        %5696 = vmatpush.bf16.msra.mxu0 %v5450
        %5697 = vmatpush.bf16.msra.mxu0 %v5448
        %5698 = vmatpush.bf16.msra.mxu0 %v5446
        %5699 = vmatpush.bf16.msra.mxu0 %v5444
        %5700 = vmatmul.bf16.gmra.mxu0 %v4987
        %v5701 = vpop.f32.mrf.mxu0
        %v5702 = vadd.f32 %v5688, %v5701
        %v5703 = vpop.f32.mrf.mxu0
        %v5704 = vadd.f32 %v5690, %v5703
        %5705 = vdwg.mxu0
        %5706 = vmatpush.bf16.msra.mxu0 %v5474
        %5707 = vmatpush.bf16.msra.mxu0 %v5472
        %5708 = vmatpush.bf16.msra.mxu0 %v5470
        %5709 = vmatpush.bf16.msra.mxu0 %v5468
        %5710 = vmatpush.bf16.msra.mxu0 %v5466
        %5711 = vmatpush.bf16.msra.mxu0 %v5464
        %5712 = vmatpush.bf16.msra.mxu0 %v5462
        %5713 = vmatpush.bf16.msra.mxu0 %v5460
        %5714 = vmatmul.bf16.gmra.mxu0 %v4988
        %v5715 = vpop.f32.mrf.mxu0
        %v5716 = vadd.f32 %v5702, %v5715
        %v5717 = vpop.f32.mrf.mxu0
        %v5718 = vadd.f32 %v5704, %v5717
        %5719 = vdwg.mxu0
        %5720 = vmatpush.bf16.msra.mxu0 %v5490
        %5721 = vmatpush.bf16.msra.mxu0 %v5488
        %5722 = vmatpush.bf16.msra.mxu0 %v5486
        %5723 = vmatpush.bf16.msra.mxu0 %v5484
        %5724 = vmatpush.bf16.msra.mxu0 %v5482
        %5725 = vmatpush.bf16.msra.mxu0 %v5480
        %5726 = vmatpush.bf16.msra.mxu0 %v5478
        %5727 = vmatpush.bf16.msra.mxu0 %v5476
        %5728 = vmatmul.bf16.gmra.mxu0 %v4989
        %v5729 = vpop.f32.mrf.mxu0
        %v5730 = vadd.f32 %v5716, %v5729
        %v5731 = vpop.f32.mrf.mxu0
        %v5732 = vadd.f32 %v5718, %v5731
        %5733 = vdwg.mxu0
        %5734 = vmatpush.bf16.msra.mxu0 %v5506
        %5735 = vmatpush.bf16.msra.mxu0 %v5504
        %5736 = vmatpush.bf16.msra.mxu0 %v5502
        %5737 = vmatpush.bf16.msra.mxu0 %v5500
        %5738 = vmatpush.bf16.msra.mxu0 %v5498
        %5739 = vmatpush.bf16.msra.mxu0 %v5496
        %5740 = vmatpush.bf16.msra.mxu0 %v5494
        %5741 = vmatpush.bf16.msra.mxu0 %v5492
        %5742 = vmatmul.bf16.gmra.mxu0 %v4990
        %v5743 = vpop.f32.mrf.mxu0
        %v5744 = vadd.f32 %v5730, %v5743
        %v5745 = vpop.f32.mrf.mxu0
        %v5746 = vadd.f32 %v5732, %v5745
        %5747 = vdwg.mxu0
        %5748 = vmatpush.bf16.msra.mxu0 %v5395
        %5749 = vmatpush.bf16.msra.mxu0 %v5393
        %5750 = vmatpush.bf16.msra.mxu0 %v5391
        %5751 = vmatpush.bf16.msra.mxu0 %v5389
        %5752 = vmatpush.bf16.msra.mxu0 %v5387
        %5753 = vmatpush.bf16.msra.mxu0 %v5385
        %5754 = vmatpush.bf16.msra.mxu0 %v5383
        %5755 = vmatpush.bf16.msra.mxu0 %v5381
        %5756 = vmatmul.bf16.gmra.mxu0 %v4983
        %v5757 = vpop.f32.mrf.mxu0
        %v5758 = vadd.f32 %v4993, %v5757
        %v5759 = vpop.f32.mrf.mxu0
        %v5760 = vadd.f32 %v4993, %v5759
        %5761 = vdwg.mxu0
        %5762 = vmatpush.bf16.msra.mxu0 %v5411
        %5763 = vmatpush.bf16.msra.mxu0 %v5409
        %5764 = vmatpush.bf16.msra.mxu0 %v5407
        %5765 = vmatpush.bf16.msra.mxu0 %v5405
        %5766 = vmatpush.bf16.msra.mxu0 %v5403
        %5767 = vmatpush.bf16.msra.mxu0 %v5401
        %5768 = vmatpush.bf16.msra.mxu0 %v5399
        %5769 = vmatpush.bf16.msra.mxu0 %v5397
        %5770 = vmatmul.bf16.gmra.mxu0 %v4984
        %v5771 = vpop.f32.mrf.mxu0
        %v5772 = vadd.f32 %v5758, %v5771
        %v5773 = vpop.f32.mrf.mxu0
        %v5774 = vadd.f32 %v5760, %v5773
        %5775 = vdwg.mxu0
        %5776 = vmatpush.bf16.msra.mxu0 %v5427
        %5777 = vmatpush.bf16.msra.mxu0 %v5425
        %5778 = vmatpush.bf16.msra.mxu0 %v5423
        %5779 = vmatpush.bf16.msra.mxu0 %v5421
        %5780 = vmatpush.bf16.msra.mxu0 %v5419
        %5781 = vmatpush.bf16.msra.mxu0 %v5417
        %5782 = vmatpush.bf16.msra.mxu0 %v5415
        %5783 = vmatpush.bf16.msra.mxu0 %v5413
        %5784 = vmatmul.bf16.gmra.mxu0 %v4985
        %v5785 = vpop.f32.mrf.mxu0
        %v5786 = vadd.f32 %v5772, %v5785
        %v5787 = vpop.f32.mrf.mxu0
        %v5788 = vadd.f32 %v5774, %v5787
        %5789 = vdwg.mxu0
        %5790 = vmatpush.bf16.msra.mxu0 %v5443
        %5791 = vmatpush.bf16.msra.mxu0 %v5441
        %5792 = vmatpush.bf16.msra.mxu0 %v5439
        %5793 = vmatpush.bf16.msra.mxu0 %v5437
        %5794 = vmatpush.bf16.msra.mxu0 %v5435
        %5795 = vmatpush.bf16.msra.mxu0 %v5433
        %5796 = vmatpush.bf16.msra.mxu0 %v5431
        %5797 = vmatpush.bf16.msra.mxu0 %v5429
        %5798 = vmatmul.bf16.gmra.mxu0 %v4986
        %v5799 = vpop.f32.mrf.mxu0
        %v5800 = vadd.f32 %v5786, %v5799
        %v5801 = vpop.f32.mrf.mxu0
        %v5802 = vadd.f32 %v5788, %v5801
        %5803 = vdwg.mxu0
        %5804 = vmatpush.bf16.msra.mxu0 %v5459
        %5805 = vmatpush.bf16.msra.mxu0 %v5457
        %5806 = vmatpush.bf16.msra.mxu0 %v5455
        %5807 = vmatpush.bf16.msra.mxu0 %v5453
        %5808 = vmatpush.bf16.msra.mxu0 %v5451
        %5809 = vmatpush.bf16.msra.mxu0 %v5449
        %5810 = vmatpush.bf16.msra.mxu0 %v5447
        %5811 = vmatpush.bf16.msra.mxu0 %v5445
        %5812 = vmatmul.bf16.gmra.mxu0 %v4987
        %v5813 = vpop.f32.mrf.mxu0
        %v5814 = vadd.f32 %v5800, %v5813
        %v5815 = vpop.f32.mrf.mxu0
        %v5816 = vadd.f32 %v5802, %v5815
        %5817 = vdwg.mxu0
        %5818 = vmatpush.bf16.msra.mxu0 %v5475
        %5819 = vmatpush.bf16.msra.mxu0 %v5473
        %5820 = vmatpush.bf16.msra.mxu0 %v5471
        %5821 = vmatpush.bf16.msra.mxu0 %v5469
        %5822 = vmatpush.bf16.msra.mxu0 %v5467
        %5823 = vmatpush.bf16.msra.mxu0 %v5465
        %5824 = vmatpush.bf16.msra.mxu0 %v5463
        %5825 = vmatpush.bf16.msra.mxu0 %v5461
        %5826 = vmatmul.bf16.gmra.mxu0 %v4988
        %v5827 = vpop.f32.mrf.mxu0
        %v5828 = vadd.f32 %v5814, %v5827
        %v5829 = vpop.f32.mrf.mxu0
        %v5830 = vadd.f32 %v5816, %v5829
        %5831 = vdwg.mxu0
        %5832 = vmatpush.bf16.msra.mxu0 %v5491
        %5833 = vmatpush.bf16.msra.mxu0 %v5489
        %5834 = vmatpush.bf16.msra.mxu0 %v5487
        %5835 = vmatpush.bf16.msra.mxu0 %v5485
        %5836 = vmatpush.bf16.msra.mxu0 %v5483
        %5837 = vmatpush.bf16.msra.mxu0 %v5481
        %5838 = vmatpush.bf16.msra.mxu0 %v5479
        %5839 = vmatpush.bf16.msra.mxu0 %v5477
        %5840 = vmatmul.bf16.gmra.mxu0 %v4989
        %v5841 = vpop.f32.mrf.mxu0
        %v5842 = vadd.f32 %v5828, %v5841
        %v5843 = vpop.f32.mrf.mxu0
        %v5844 = vadd.f32 %v5830, %v5843
        %5845 = vdwg.mxu0
        %5846 = vmatpush.bf16.msra.mxu0 %v5507
        %5847 = vmatpush.bf16.msra.mxu0 %v5505
        %5848 = vmatpush.bf16.msra.mxu0 %v5503
        %5849 = vmatpush.bf16.msra.mxu0 %v5501
        %5850 = vmatpush.bf16.msra.mxu0 %v5499
        %5851 = vmatpush.bf16.msra.mxu0 %v5497
        %5852 = vmatpush.bf16.msra.mxu0 %v5495
        %5853 = vmatpush.bf16.msra.mxu0 %v5493
        %5854 = vmatmul.bf16.gmra.mxu0 %v4990
        %v5855 = vpop.f32.mrf.mxu0
        %v5856 = vadd.f32 %v5842, %v5855
        %v5857 = vpop.f32.mrf.mxu0
        %v5858 = vadd.f32 %v5844, %v5857
        %5859 = vdwg.mxu0
        %v5860 = vadd.f32 %v3821, %v5744
        %v5861 = vadd.f32 %v3822, %v5856
        %v5862 = vadd.f32 %v3823, %v5746
        %v5863 = vadd.f32 %v3824, %v5858
        %s5864 = scalar_lea.vmem %s606, 21
        %v5865 = vld [vmem:[%s5864] ss:$8 sm:$0x3]
        %s5866 = scalar_lea.vmem %s606, 22
        %v5867 = vld [vmem:[%s5866] ss:$8 sm:$0x3]
        %v5868 = vadd.f32 %v5860, %v5861
        %5869 = vadd.xlane.f32.xlu0 %v5868
        %v5870 = vpop.xlane.xlu0 %5869
        %v5871 = vadd.f32 %v5862, %v5863
        %5872 = vadd.xlane.f32.xlu0 %v5871
        %v5873 = vpop.xlane.xlu0 %5872
        %v5874 = vmul.f32 %v5870, %v2166
        %v5875 = vmul.f32 %v5873, %v2166
        %v5876 = vsub.f32 %v5860, %v5874
        %v5877 = vsub.f32 %v5861, %v5874
        %v5878 = vsub.f32 %v5862, %v5875
        %v5879 = vsub.f32 %v5863, %v5875
        %v5880 = vmul.f32 %v5876, %v5876
        %v5881 = vmul.f32 %v5877, %v5877
        %v5882 = vmul.f32 %v5878, %v5878
        %v5883 = vmul.f32 %v5879, %v5879
        %v5884 = vadd.f32 %v5880, %v5881
        %5885 = vadd.xlane.f32.xlu0 %v5884
        %v5886 = vpop.xlane.xlu0 %5885
        %v5887 = vadd.f32 %v5882, %v5883
        %5888 = vadd.xlane.f32.xlu0 %v5887
        %v5889 = vpop.xlane.xlu0 %5888
        %v5890 = vmul.f32 %v5886, %v2166
        %v5891 = vmul.f32 %v5889, %v2166
        %v5892 = vadd.f32 %v5890, 1e-05
        %v5893 = vadd.f32 %v5891, 1e-05
        %v5894 = vrsqrt.pop %v5892
        %v5895 = vmul.f32 %v5894, %v5892
        %v5896 = vmul.f32 %v5895, %v5894
        %v5897 = vmul.f32 0.5, %v5896
        %v5898 = vsub.f32 1.5, %v5897
        %v5899 = vmul.f32 %v5894, %v5898
        %vm5900 = vweird.f32 %v5892
        %vm5901 = vweird.f32 %v5894
        %vm5902 = vmor %vm5900, %vm5901
        %v5903 = vsel %vm5902, %v5894, %v5899
        %v5904 = vrsqrt.pop %v5893
        %v5905 = vmul.f32 %v5904, %v5893
        %v5906 = vmul.f32 %v5905, %v5904
        %v5907 = vmul.f32 0.5, %v5906
        %v5908 = vsub.f32 1.5, %v5907
        %v5909 = vmul.f32 %v5904, %v5908
        %vm5910 = vweird.f32 %v5893
        %vm5911 = vweird.f32 %v5904
        %vm5912 = vmor %vm5910, %vm5911
        %v5913 = vsel %vm5912, %v5904, %v5909
        %v5914 = vmul.f32 %v5876, %v5903
        %v5915 = vmul.f32 %v5877, %v5903
        %v5916 = vmul.f32 %v5878, %v5913
        %v5917 = vmul.f32 %v5879, %v5913
        %v5919 = vperm.slane %v5865, 0
        %v5920 = vperm.slane %v5865, 1
        %v5923 = vmul.f32 %v5914, %v5919
        %v5924 = vmul.f32 %v5915, %v5920
        %v5925 = vmul.f32 %v5916, %v5919
        %v5926 = vmul.f32 %v5917, %v5920
        %v5928 = vperm.slane %v5867, 0
        %v5929 = vperm.slane %v5867, 1
        %v5932 = vadd.f32 %v5923, %v5928
        %v5933 = vadd.f32 %v5924, %v5929
        %v5934 = vadd.f32 %v5925, %v5928
        %v5935 = vadd.f32 %v5926, %v5929
        %5936 = vst [vmem:[#allocation2] sm:$0xff] %v5932
        %5937 = vst [vmem:[#allocation2 + $0x8] sm:$0xff] %v5933
        %5938 = vst [vmem:[#allocation2 + $0x10] sm:$0xff] %v5934
        %5939 = vst [vmem:[#allocation2 + $0x18] sm:$0xff] %v5935
        %p5940 = scmp.eq.s32.totalorder %s34, 3
        // Predicated region
        $region101: #{transformer_forward.3} parent=67 // pred_check
          %p5941 = pneg %p5940
        $region102: #{transformer_forward.3} parent=67 // pred_check_branch
          %5943 = sbr.rel (%p5941) target = $region104
        $region103: #{transformer_forward.3} parent=67 // pred_region
          %v5944 = vld [vmem:[#allocation11] ss:$2 sm:$0x3]
          %s5945 = scalar_lea.vmem [#allocation11], 1
          %v5946 = vld [vmem:[%s5945] ss:$2 sm:$0x3]
          %v5947 = vadd.f32 %v5932, %v5933
          %5948 = vadd.xlane.f32.xlu0 %v5947
          %v5949 = vpop.xlane.xlu0 %5948
          %v5950 = vadd.f32 %v5934, %v5935
          %5951 = vadd.xlane.f32.xlu0 %v5950
          %v5952 = vpop.xlane.xlu0 %5951
          %v5953 = vmul.f32 %v5949, %v2166
          %v5954 = vmul.f32 %v5952, %v2166
          %v5955 = vsub.f32 %v5932, %v5953
          %v5956 = vsub.f32 %v5933, %v5953
          %v5957 = vsub.f32 %v5934, %v5954
          %v5958 = vsub.f32 %v5935, %v5954
          %v5959 = vmul.f32 %v5955, %v5955
          %v5960 = vmul.f32 %v5956, %v5956
          %v5961 = vmul.f32 %v5957, %v5957
          %v5962 = vmul.f32 %v5958, %v5958
          %v5963 = vadd.f32 %v5959, %v5960
          %5964 = vadd.xlane.f32.xlu0 %v5963
          %v5965 = vpop.xlane.xlu0 %5964
          %v5966 = vadd.f32 %v5961, %v5962
          %5967 = vadd.xlane.f32.xlu0 %v5966
          %v5968 = vpop.xlane.xlu0 %5967
          %v5969 = vmul.f32 %v5965, %v2166
          %v5970 = vmul.f32 %v5968, %v2166
          %v5971 = vadd.f32 %v5969, 1e-05
          %v5972 = vadd.f32 %v5970, 1e-05
          %v5973 = vrsqrt.pop %v5971
          %v5974 = vmul.f32 %v5973, %v5971
          %v5975 = vmul.f32 %v5974, %v5973
          %v5976 = vmul.f32 0.5, %v5975
          %v5977 = vsub.f32 1.5, %v5976
          %v5978 = vmul.f32 %v5973, %v5977
          %vm5979 = vweird.f32 %v5971
          %vm5980 = vweird.f32 %v5973
          %vm5981 = vmor %vm5979, %vm5980
          %v5982 = vsel %vm5981, %v5973, %v5978
          %v5983 = vrsqrt.pop %v5972
          %v5984 = vmul.f32 %v5983, %v5972
          %v5985 = vmul.f32 %v5984, %v5983
          %v5986 = vmul.f32 0.5, %v5985
          %v5987 = vsub.f32 1.5, %v5986
          %v5988 = vmul.f32 %v5983, %v5987
          %vm5989 = vweird.f32 %v5972
          %vm5990 = vweird.f32 %v5983
          %vm5991 = vmor %vm5989, %vm5990
          %v5992 = vsel %vm5991, %v5983, %v5988
          %v5993 = vmul.f32 %v5955, %v5982
          %v5994 = vmul.f32 %v5956, %v5982
          %v5995 = vmul.f32 %v5957, %v5992
          %v5996 = vmul.f32 %v5958, %v5992
          %v5998 = vperm.slane %v5944, 0
          %v5999 = vperm.slane %v5944, 1
          %v6002 = vmul.f32 %v5993, %v5998
          %v6003 = vmul.f32 %v5994, %v5999
          %v6004 = vmul.f32 %v5995, %v5998
          %v6005 = vmul.f32 %v5996, %v5999
          %v6007 = vperm.slane %v5946, 0
          %v6008 = vperm.slane %v5946, 1
          %v6011 = vadd.f32 %v6002, %v6007
          %v6012 = vadd.f32 %v6003, %v6008
          %v6013 = vadd.f32 %v6004, %v6007
          %v6014 = vadd.f32 %v6005, %v6008
          %v6015 = vpack.c.bf16 %v6013, %v6011
          %v6016 = vpack.c.bf16 %v6014, %v6012
          %v6017 = vld [vmem:[#allocation12] sm:$0xf]
          %v6018 = vld [vmem:[#allocation12 + $0x4] sm:$0xf]
          %v6019 = vld [vmem:[#allocation12 + $0x8] sm:$0xf]
          %v6020 = vld [vmem:[#allocation12 + $0xc] sm:$0xf]
          %v6021 = vld [vmem:[#allocation12 + $0x10] sm:$0xf]
          %v6022 = vld [vmem:[#allocation12 + $0x14] sm:$0xf]
          %v6023 = vld [vmem:[#allocation12 + $0x18] sm:$0xf]
          %v6024 = vld [vmem:[#allocation12 + $0x1c] sm:$0xf]
          %v6025 = vld [vmem:[#allocation12 + $0x20] sm:$0xf]
          %v6026 = vld [vmem:[#allocation12 + $0x24] sm:$0xf]
          %v6027 = vld [vmem:[#allocation12 + $0x28] sm:$0xf]
          %v6028 = vld [vmem:[#allocation12 + $0x2c] sm:$0xf]
          %v6029 = vld [vmem:[#allocation12 + $0x30] sm:$0xf]
          %v6030 = vld [vmem:[#allocation12 + $0x34] sm:$0xf]
          %v6031 = vld [vmem:[#allocation12 + $0x38] sm:$0xf]
          %v6032 = vld [vmem:[#allocation12 + $0x3c] sm:$0xf]
          %v6033 = vld [vmem:[#allocation12 + $0x40] sm:$0xf]
          %v6034 = vld [vmem:[#allocation12 + $0x44] sm:$0xf]
          %v6035 = vld [vmem:[#allocation12 + $0x48] sm:$0xf]
          %v6036 = vld [vmem:[#allocation12 + $0x4c] sm:$0xf]
          %v6037 = vld [vmem:[#allocation12 + $0x50] sm:$0xf]
          %v6038 = vld [vmem:[#allocation12 + $0x54] sm:$0xf]
          %v6039 = vld [vmem:[#allocation12 + $0x58] sm:$0xf]
          %v6040 = vld [vmem:[#allocation12 + $0x5c] sm:$0xf]
          %v6041 = vld [vmem:[#allocation12 + $0x60] sm:$0xf]
          %v6042 = vld [vmem:[#allocation12 + $0x64] sm:$0xf]
          %v6043 = vld [vmem:[#allocation12 + $0x68] sm:$0xf]
          %v6044 = vld [vmem:[#allocation12 + $0x6c] sm:$0xf]
          %v6045 = vld [vmem:[#allocation12 + $0x70] sm:$0xf]
          %v6046 = vld [vmem:[#allocation12 + $0x74] sm:$0xf]
          %v6047 = vld [vmem:[#allocation12 + $0x78] sm:$0xf]
          %v6048 = vld [vmem:[#allocation12 + $0x7c] sm:$0xf]
          %v6049 = vld [vmem:[#allocation14] sm:$0x1]
          %v6051 = vperm.slane %v6049, 0
          %v6085 = vunpack.c.l.b16 %v6017
          %v6086 = vunpack.c.l.b16 %v6018
          %v6087 = vunpack.c.l.b16 %v6019
          %v6088 = vunpack.c.l.b16 %v6020
          %v6089 = vunpack.c.l.b16 %v6021
          %v6090 = vunpack.c.l.b16 %v6022
          %v6091 = vunpack.c.l.b16 %v6023
          %v6092 = vunpack.c.l.b16 %v6024
          %v6093 = vunpack.c.l.b16 %v6025
          %v6094 = vunpack.c.l.b16 %v6026
          %v6095 = vunpack.c.l.b16 %v6027
          %v6096 = vunpack.c.l.b16 %v6028
          %v6097 = vunpack.c.l.b16 %v6029
          %v6098 = vunpack.c.l.b16 %v6030
          %v6099 = vunpack.c.l.b16 %v6031
          %v6100 = vunpack.c.l.b16 %v6032
          %v6101 = vunpack.c.l.b16 %v6033
          %v6102 = vunpack.c.l.b16 %v6034
          %v6103 = vunpack.c.l.b16 %v6035
          %v6104 = vunpack.c.l.b16 %v6036
          %v6105 = vunpack.c.l.b16 %v6037
          %v6106 = vunpack.c.l.b16 %v6038
          %v6107 = vunpack.c.l.b16 %v6039
          %v6108 = vunpack.c.l.b16 %v6040
          %v6109 = vunpack.c.l.b16 %v6041
          %v6110 = vunpack.c.l.b16 %v6042
          %v6111 = vunpack.c.l.b16 %v6043
          %v6112 = vunpack.c.l.b16 %v6044
          %v6113 = vunpack.c.l.b16 %v6045
          %v6114 = vunpack.c.l.b16 %v6046
          %v6115 = vunpack.c.l.b16 %v6047
          %v6116 = vunpack.c.l.b16 %v6048
          %v6117 = vpack.c.b16 %v6086, %v6085
          %v6118 = vpack.c.b16 %v6088, %v6087
          %v6119 = vpack.c.b16 %v6090, %v6089
          %v6120 = vpack.c.b16 %v6092, %v6091
          %v6121 = vpack.c.b16 %v6094, %v6093
          %v6122 = vpack.c.b16 %v6096, %v6095
          %v6123 = vpack.c.b16 %v6098, %v6097
          %v6124 = vpack.c.b16 %v6100, %v6099
          %v6125 = vpack.c.b16 %v6102, %v6101
          %v6126 = vpack.c.b16 %v6104, %v6103
          %v6127 = vpack.c.b16 %v6106, %v6105
          %v6128 = vpack.c.b16 %v6108, %v6107
          %v6129 = vpack.c.b16 %v6110, %v6109
          %v6130 = vpack.c.b16 %v6112, %v6111
          %v6131 = vpack.c.b16 %v6114, %v6113
          %v6132 = vpack.c.b16 %v6116, %v6115
          %6149 = vmatpush.bf16.msra.mxu0 %v6124
          %6150 = vmatpush.bf16.msra.mxu0 %v6123
          %6151 = vmatpush.bf16.msra.mxu0 %v6122
          %6152 = vmatpush.bf16.msra.mxu0 %v6121
          %6153 = vmatpush.bf16.msra.mxu0 %v6120
          %6154 = vmatpush.bf16.msra.mxu0 %v6119
          %6155 = vmatpush.bf16.msra.mxu0 %v6118
          %6156 = vmatpush.bf16.msra.mxu0 %v6117
          %6157 = vmatmul.bf16.gmra.mxu0 %v6015
          %v6158 = vpop.f32.mrf.mxu0
          %v6159 = vadd.f32 %v6051, %v6158
          %v6160 = vpop.f32.mrf.mxu0
          %v6161 = vadd.f32 %v6051, %v6160
          %6162 = vdwg.mxu0
          %6163 = vmatpush.bf16.msra.mxu0 %v6132
          %6164 = vmatpush.bf16.msra.mxu0 %v6131
          %6165 = vmatpush.bf16.msra.mxu0 %v6130
          %6166 = vmatpush.bf16.msra.mxu0 %v6129
          %6167 = vmatpush.bf16.msra.mxu0 %v6128
          %6168 = vmatpush.bf16.msra.mxu0 %v6127
          %6169 = vmatpush.bf16.msra.mxu0 %v6126
          %6170 = vmatpush.bf16.msra.mxu0 %v6125
          %6171 = vmatmul.bf16.gmra.mxu0 %v6016
          %v6172 = vpop.f32.mrf.mxu0
          %v6173 = vadd.f32 %v6159, %v6172
          %v6174 = vpop.f32.mrf.mxu0
          %v6175 = vadd.f32 %v6161, %v6174
          %6176 = vdwg.mxu0
          %6177 = vst [vmem:[#allocation15] sm:$0xff] %v6173
          %6178 = vst [vmem:[#allocation15 + $0x8] sm:$0xff] %v6175
        $region104: #{transformer_forward.3} parent=67 // pred_fallthru
          _
        // Predicated region
        $region105: #{transformer_forward.3} parent=67 // pred_check
          %p6179 = pneg %p324
        $region106: #{transformer_forward.3} parent=67 // pred_check_branch
          %6181 = sbr.rel (%p6179) target = $region108
        $region107: #{transformer_forward.3} parent=67 // pred_region
          %6183 = vsyncadd [#allocation5], 0
          %s6184 = sshll.u32 [#allocation15], 4
          %s6185 = int_to_ptr.vmem [resolvable:$true] %s6184
          %s6186 = sshll.u32 %s12, 4
          %s6187 = int_to_ptr.hbm [resolvable:$true] %s6186
          %6192 = dma.vmem_to_hbm [thread:$0]  %s6185, 256, %s6187, [#allocation5], 128, 128, 8
        $region108: #{transformer_forward.3} parent=67 // pred_fallthru
          _
        // Predicated region
        $region109: #{transformer_forward.3} parent=67 // pred_check
          %p6193 = pneg %p324
        $region110: #{transformer_forward.3} parent=67 // pred_check_branch
          %6195 = sbr.rel (%p6193) target = $region112
        $region111: #{transformer_forward.3} parent=67 // pred_region
          %6197 = dma.done [#allocation5], 256
        $region112: #{transformer_forward.3} parent=67 // pred_fallthru
          _
      $region68: #{transformer_forward.3} parent=5 // pred_fallthru
        _
      %p6198 = scmp.le.s32.totalorder 2, %s29
      // Predicated region
      $region113: #{transformer_forward.3} parent=5 // pred_check
        %p6199 = pneg %p6198
      $region114: #{transformer_forward.3} parent=5 // pred_check_branch
        %6201 = sbr.rel (%p6199) target = $region116
      $region115: #{transformer_forward.3} parent=5 // pred_region
        %s6202 = ssub.s32 %s29, 2
      $region116: #{transformer_forward.3} parent=5 // pred_fallthru
        _
    $region6: #{transformer_forward.3} parent=1 // loop_footer
      %s33 = sadd.s32 1, %s29
    $region7: #{transformer_forward.3} parent=1 // loop_footer_branch
      %28 = sbr.rel target = $region3
    $region8: #{transformer_forward.3} parent=1 // loop_exit
      _
    %6203 = vsyncpa [#allocation4], 1
    %s6204 = scalar_lea.sflag [#allocation4], 1
    %6205 = vsyncpa %s6204, 1
    %6206 = vsyncpa [#allocation7], 1
    %s6207 = scalar_lea.sflag [#allocation7], 1
    %6208 = vsyncpa %s6207, 1
    %6209 = vsyncpa [#allocation10], 1
    %s6210 = scalar_lea.sflag [#allocation10], 1
    %6211 = vsyncpa %s6210, 1
    %6212 = vsyncpa [#allocation13], 1
    %6213 = vsyncpa [#allocation5], 1
    %s6214 = scalar_lea.sflag [#allocation5], 1
    %6215 = vsyncpa %s6214, 1

</llo_original>
